<compile_context>
chip_gen: v5e
topology: v5e:2x2
jax: 0.10.0
libtpu: 0.0.40
codegen_flags: <defaults>
</compile_context>

<pallas_src>
import math
from functools import partial

import jax
import jax.numpy as jnp
import numpy as np
from jax.experimental import pallas as pl
from jax.experimental.pallas import tpu as pltpu

LN_EPS = 1e-5


# --------------------------------------------------------------------------- helpers
def _layernorm(v, gamma, beta, eps=LN_EPS):
    mu = jnp.mean(v, axis=-1, keepdims=True)
    var = jnp.mean(jnp.square(v - mu), axis=-1, keepdims=True)
    return (v - mu) * jax.lax.rsqrt(var + eps) * gamma + beta


def _erf_poly(x):
    # Abramowitz & Stegun 7.1.26 (max abs error ~1.5e-7); only exp/mul/add/where.
    a = jnp.abs(x)
    t = 1.0 / (1.0 + 0.3275911 * a)
    poly = t * (0.254829592 + t * (-0.284496736 + t * (1.421413741
                + t * (-1.453152027 + t * 1.061405429))))
    y = 1.0 - poly * jnp.exp(-(a * a))
    return jnp.where(x < 0.0, -y, y)


def _gelu_exact(x):
    return 0.5 * x * (1.0 + _erf_poly(x * (1.0 / math.sqrt(2.0))))


# ----------------------------------------------------------------------------- kernel
def fused_encoder_kernel(skel_ref, pc_ref,
                         basis_ref, w_sin_ref, w_cos_ref, w_p_ref, b_emb_ref,
                         gx_ref, bx_ref, gc_ref, bc_ref,
                         wq_ref, wk_ref, wv_ref, wo_ref, bo_ref,
                         gf_ref, bf_ref,
                         w1v_ref, w1g_ref, b1v_ref, b1g_ref,
                         w2_ref, b2_ref,
                         o_ref, *, group):
    nq = skel_ref.shape[0] // group          # rows per batch in the skel slab
    nk = pc_ref.shape[0] // group            # rows per batch in the pc slab
    cdt = wq_ref.dtype                       # MXU operand dtype (f32 or bf16); accum always f32

    def mm(a, b):
        return jnp.dot(a.astype(cdt), b.astype(cdt), preferred_element_type=jnp.float32)

    # ---- PointEmbed on the batch-folded slab --------------------------------------
    # Basis is block-sparse, so the projection is exact pure-VPU broadcast mul-adds
    # (no wasted K=3 MXU push); the 51-wide embed matmul is three accumulating dots
    # (sin/cos/xyz) instead of a lane-misaligned concat.
    def point_embed(p):                                            # p: (rows, 3) f32
        proj = (p[:, 0:1] * basis_ref[0:1, :]
                + p[:, 1:2] * basis_ref[1:2, :]
                + p[:, 2:3] * basis_ref[2:3, :])                   # (rows, E) f32
        return (mm(jnp.sin(proj), w_sin_ref[...])
                + mm(jnp.cos(proj), w_cos_ref[...])
                + mm(p, w_p_ref[...])
                + b_emb_ref[...])

    skel_emb = point_embed(skel_ref[...])                          # (group*nq, D)
    pc_emb = point_embed(pc_ref[...])                              # (group*nk, D)

    # ---- PreNorm + cross-attention (heads=1, dim_head=D) --------------------------
    xn = _layernorm(skel_emb, gx_ref[...], bx_ref[...])
    cn = _layernorm(pc_emb, gc_ref[...], bc_ref[...])

    q = mm(xn, wq_ref[...])                  # 1/sqrt(dim_head) already folded into Wq
    k = mm(cn, wk_ref[...])
    v = mm(cn, wv_ref[...])

    # Block-diagonal attention over the batches folded into this grid step (static loop).
    ctx_parts = []
    for g in range(group):
        qg = q[g * nq:(g + 1) * nq, :]
        kg = k[g * nk:(g + 1) * nk, :]
        vg = v[g * nk:(g + 1) * nk, :]
        sim = jax.lax.dot_general(qg.astype(cdt), kg.astype(cdt),
                                  (((1,), (1,)), ((), ())),
                                  preferred_element_type=jnp.float32)   # (nq, nk)
        sim = sim - jnp.max(sim, axis=-1, keepdims=True)
        p_ = jnp.exp(sim)
        attn = p_ / jnp.sum(p_, axis=-1, keepdims=True)            # exact reciprocal (f32)
        ctx_parts.append(mm(attn, vg))
    ctx = ctx_parts[0] if group == 1 else jnp.concatenate(ctx_parts, axis=0)

    x = mm(ctx, wo_ref[...]) + bo_ref[...] + skel_emb              # residual

    # ---- PreNorm + FeedForward (GEGLU, mult=4); w1/b1 pre-split into value/gate ----
    xn2 = _layernorm(x, gf_ref[...], bf_ref[...])
    val = mm(xn2, w1v_ref[...]) + b1v_ref[...]                     # (rows, H)
    gate = mm(xn2, w1g_ref[...]) + b1g_ref[...]                    # (rows, H)
    y = mm(val * _gelu_exact(gate), w2_ref[...]) + b2_ref[...] + x # residual

    o_ref[...] = y


# --------------------------------------------------------------------------- wrapper
def encode_pallas(params, pc, skel, *, matmul_dtype=jnp.float32,
                  grid_steps=None, single_buffer_weights=True):
    pe, ca, ff = params["point_embed"], params["cross_attn"], params["cross_ff"]
    B, Nk, _ = pc.shape
    _, Nq, _ = skel.shape
    E = pe["basis"].shape[1]
    D = pe["w"].shape[1]
    H = ff["w2"].shape[0]

    if grid_steps is None:
        # >=2 parallel grid steps keep both v7x TensorCores busy; on single-TC v5e/v6e the
        # extra step costs only ~0.35us since the constant-index weights are fetched once.
        grid_steps = 2 if (B % 2 == 0 and B >= 2) else 1
    assert B % grid_steps == 0
    group = B // grid_steps
    assert (group * Nq) % 8 == 0 and (group * Nk) % 8 == 0, \
        "batch-folded slabs must be sublane(8)-aligned"

    wd = matmul_dtype
    # Host-side one-time weight preprocessing / constant folds (see header comment).
    w_sin = pe["w"][:E].astype(wd)
    w_cos = pe["w"][E:2 * E].astype(wd)
    w_p = pe["w"][2 * E:].astype(wd)
    wq = (ca["wq"] * (float(D) ** -0.5)).astype(wd)
    wk = ca["wkv"][:, :D].astype(wd)
    wv = ca["wkv"][:, D:].astype(wd)
    wo = ca["wo"].astype(wd)
    w1v = ff["w1"][:, :H].astype(wd)
    w1g = ff["w1"][:, H:].astype(wd)
    b1v = ff["b1"][:, :H]
    b1g = ff["b1"][:, H:]
    w2 = ff["w2"].astype(wd)

    weights = (pe["basis"], w_sin, w_cos, w_p, pe["b"],
               ca["gx"], ca["bx"], ca["gc"], ca["bc"],
               wq, wk, wv, wo, ca["bo"],
               ff["g"], ff["b"],
               w1v, w1g, b1v, b1g,
               w2, ff["b2"])

    def rep(a):
        # Grid-invariant weight block: constant index map, so double-buffering buys nothing.
        if single_buffer_weights:
            return pl.BlockSpec(a.shape, lambda i: (0, 0), pipeline_mode=pl.Buffered(1))
        return pl.BlockSpec(a.shape, lambda i: (0, 0))

    # Batch folded into the row dimension -> lane-dense 2-D slabs, no in-kernel reshapes.
    skel2d = skel.reshape(B * Nq, 3)
    pc2d = pc.reshape(B * Nk, 3)

    flops = 2 * B * (
        (Nq + Nk) * (3 * E + (2 * E + 3) * D)        # PointEmbed (both clouds)
        + Nq * D * D + 2 * Nk * D * D                # q / k / v projections
        + 2 * Nq * Nk * D                            # sim + attn @ v
        + Nq * D * D                                 # output projection
        + 3 * Nq * D * H                             # GEGLU feed-forward
    )
    transcendentals = B * (2 * E * (Nq + Nk) + Nq * Nk + Nq * H)
    weight_bytes = sum(int(np.prod(a.shape)) * a.dtype.itemsize for a in weights)
    bytes_accessed = 4 * (pc.size + skel.size + B * Nq * D) + weight_bytes

    out2d = pl.pallas_call(
        partial(fused_encoder_kernel, group=group),
        out_shape=jax.ShapeDtypeStruct((B * Nq, D), jnp.float32),
        grid=(grid_steps,),
        in_specs=[pl.BlockSpec((group * Nq, 3), lambda i: (i, 0)),   # skel points slab
                  pl.BlockSpec((group * Nk, 3), lambda i: (i, 0))]   # pc points slab
                 + [rep(a) for a in weights],
        out_specs=pl.BlockSpec((group * Nq, D), lambda i: (i, 0)),
        compiler_params=pltpu.CompilerParams(dimension_semantics=("parallel",)),
        cost_estimate=pl.CostEstimate(flops=int(flops),
                                      transcendentals=int(transcendentals),
                                      bytes_accessed=int(bytes_accessed)),
    )(skel2d, pc2d, *weights)

    return out2d.reshape(B, Nq, D)


def vecset_encoder_forward(params, pc, skel, *, matmul_dtype=jnp.float32,
                           grid_steps=None, single_buffer_weights=True):
    """VecSetEncoder.forward(pc, skel) -> (latents, skel, (None, None))."""
    latents = encode_pallas(params, pc, skel, matmul_dtype=matmul_dtype,
                            grid_steps=grid_steps,
                            single_buffer_weights=single_buffer_weights)
    return latents, skel, (None, None)


# ------------------------------------------------------------------------- reference
def reference_forward(params, pc, skel):
    pe, ca, ff = params["point_embed"], params["cross_attn"], params["cross_ff"]

    with jax.default_matmul_precision("float32"):
        def point_embed(p):
            # basis is block-sparse -> this is exactly einsum('bnd,de->bne', p, basis)
            proj = (p[..., 0:1] * pe["basis"][0]
                    + p[..., 1:2] * pe["basis"][1]
                    + p[..., 2:3] * pe["basis"][2])
            emb = jnp.concatenate([jnp.sin(proj), jnp.cos(proj), p], axis=-1)
            return emb @ pe["w"] + pe["b"][0]

        def layernorm(v, g, b):
            mu = jnp.mean(v, axis=-1, keepdims=True)
            var = jnp.mean(jnp.square(v - mu), axis=-1, keepdims=True)
            return (v - mu) / jnp.sqrt(var + LN_EPS) * g[0] + b[0]

        skel_emb = point_embed(skel)
        pc_emb = point_embed(pc)

        xn = layernorm(skel_emb, ca["gx"], ca["bx"])
        cn = layernorm(pc_emb, ca["gc"], ca["bc"])
        D = xn.shape[-1]
        q = xn @ ca["wq"]
        kv = cn @ ca["wkv"]
        k, v = kv[..., :D], kv[..., D:]
        sim = jnp.einsum("bid,bjd->bij", q, k) * (float(D) ** -0.5)
        attn = jax.nn.softmax(sim, axis=-1)
        out = jnp.einsum("bij,bjd->bid", attn, v)
        x = out @ ca["wo"] + ca["bo"][0] + skel_emb

        xn2 = layernorm(x, ff["g"], ff["b"])
        h = xn2 @ ff["w1"] + ff["b1"][0]
        Hh = h.shape[-1] // 2
        y = (h[..., :Hh] * jax.nn.gelu(h[..., Hh:], approximate=False)) @ ff["w2"] \
            + ff["b2"][0] + x
    return y, skel, (None, None)


# ----------------------------------------------------------------------------- params
def init_params(key, dim=128, hidden_dim=48):
    assert hidden_dim % 6 == 0
    h6 = hidden_dim // 6
    E = 3 * h6                                   # basis width (= hidden_dim / 2)
    freqs = (2.0 ** jnp.arange(h6, dtype=jnp.float32)) * jnp.pi
    basis = jnp.zeros((3, E), dtype=jnp.float32)
    basis = basis.at[0, 0:h6].set(freqs)
    basis = basis.at[1, h6:2 * h6].set(freqs)
    basis = basis.at[2, 2 * h6:3 * h6].set(freqs)

    ks = jax.random.split(key, 10)
    w = lambda k, s: jax.random.normal(k, s, dtype=jnp.float32) * 0.05
    ones = lambda s: jnp.ones(s, dtype=jnp.float32)
    zeros = lambda s: jnp.zeros(s, dtype=jnp.float32)

    return {
        "point_embed": {
            "basis": basis,                                  # (3, E)
            "w": w(ks[0], (2 * E + 3, dim)),                 # nn.Linear(hidden_dim+3, dim)
            "b": w(ks[1], (1, dim)),
        },
        "cross_attn": {
            "gx": ones((1, dim)), "bx": zeros((1, dim)),     # PreNorm(dim)
            "gc": ones((1, dim)), "bc": zeros((1, dim)),     # norm_context
            "wq": w(ks[2], (dim, dim)),                      # to_q (no bias)
            "wkv": w(ks[3], (dim, 2 * dim)),                 # to_kv (no bias)
            "wo": w(ks[4], (dim, dim)),                      # to_out
            "bo": w(ks[5], (1, dim)),
        },
        "cross_ff": {
            "g": ones((1, dim)), "b": zeros((1, dim)),       # PreNorm(dim)
            "w1": w(ks[6], (dim, 8 * dim)),                  # Linear(dim, dim*mult*2), mult=4
            "b1": w(ks[7], (1, 8 * dim)),
            "w2": w(ks[8], (4 * dim, dim)),                  # Linear(dim*mult, dim)
            "b2": w(ks[9], (1, dim)),
        },
    }


# ------------------------------------------------------------------------------- main
if __name__ == "__main__":
    # Small shapes: M == num_inputs, num_skel latents, dim = 128 (PointEmbed default).
    # B = 4 so both the batch-fold path (group=2 per grid step) and the 2-step parallel
    # grid (feeds both v7x TensorCores) are exercised.
    B, M, num_skel, dim = 4, 16, 8, 128
    key = jax.random.PRNGKey(0)
    kp, kpc, ksk = jax.random.split(key, 3)

    params = init_params(kp, dim=dim, hidden_dim=48)
    pc = jax.random.normal(kpc, (B, M, 3), dtype=jnp.float32)
    skel = jax.random.normal(ksk, (B, num_skel, 3), dtype=jnp.float32)

    ref_latents, _, _ = reference_forward(params, pc, skel)

    def run(matmul_dtype, single_buffer):
        fwd = jax.jit(partial(vecset_encoder_forward, matmul_dtype=matmul_dtype,
                              single_buffer_weights=single_buffer))
        latents, skel_out, aux = fwd(params, pc, skel)
        return jax.block_until_ready(latents), skel_out, aux

    # f32 MXU operands: exact softmax reciprocal + erf-poly GELU -> tight tolerance.
    try:
        latents32, skel_out, (m, lv) = run(jnp.float32, True)
        single_buffer = True
    except Exception:
        # Fallback if this jax build rejects pl.Buffered(1): default double buffering.
        latents32, skel_out, (m, lv) = run(jnp.float32, False)
        single_buffer = False
    np.testing.assert_allclose(np.asarray(latents32), np.asarray(ref_latents),
                               rtol=5e-4, atol=5e-4)

    # bf16 MXU-operand path (weights + matmul inputs bf16; f32 accumulate / LN / softmax /
    # GELU): tolerance here is governed by the bf16 mantissa, not by kernel structure.
    latents16, _, _ = run(jnp.bfloat16, single_buffer)
    np.testing.assert_allclose(np.asarray(latents16), np.asarray(ref_latents),
                               rtol=4e-2, atol=4e-2)

    assert latents32.shape == (B, num_skel, dim)
    assert m is None and lv is None
    print("KERNEL_OK")
</pallas_src>

<mosaic_0001>
module attributes {stable_mosaic.version = 11 : i64} {
  func.func @fused_encoder_kernel(%arg0: i32, %arg1: memref<16x3xf32, #tpu.memory_space<vmem>>, %arg2: memref<32x3xf32, #tpu.memory_space<vmem>>, %arg3: memref<3x24xf32, #tpu.memory_space<vmem>>, %arg4: memref<24x128xf32, #tpu.memory_space<vmem>>, %arg5: memref<24x128xf32, #tpu.memory_space<vmem>>, %arg6: memref<3x128xf32, #tpu.memory_space<vmem>>, %arg7: memref<1x128xf32, #tpu.memory_space<vmem>>, %arg8: memref<1x128xf32, #tpu.memory_space<vmem>>, %arg9: memref<1x128xf32, #tpu.memory_space<vmem>>, %arg10: memref<1x128xf32, #tpu.memory_space<vmem>>, %arg11: memref<1x128xf32, #tpu.memory_space<vmem>>, %arg12: memref<128x128xf32, #tpu.memory_space<vmem>>, %arg13: memref<128x128xf32, #tpu.memory_space<vmem>>, %arg14: memref<128x128xf32, #tpu.memory_space<vmem>>, %arg15: memref<128x128xf32, #tpu.memory_space<vmem>>, %arg16: memref<1x128xf32, #tpu.memory_space<vmem>>, %arg17: memref<1x128xf32, #tpu.memory_space<vmem>>, %arg18: memref<1x128xf32, #tpu.memory_space<vmem>>, %arg19: memref<128x512xf32, #tpu.memory_space<vmem>>, %arg20: memref<128x512xf32, #tpu.memory_space<vmem>>, %arg21: memref<1x512xf32, #tpu.memory_space<vmem>>, %arg22: memref<1x512xf32, #tpu.memory_space<vmem>>, %arg23: memref<512x128xf32, #tpu.memory_space<vmem>>, %arg24: memref<1x128xf32, #tpu.memory_space<vmem>>, %arg25: memref<16x128xf32, #tpu.memory_space<vmem>>) attributes {dimension_semantics = [#tpu.dimension_semantics<parallel>], iteration_bounds = array<i64: 2>, scalar_prefetch = 0 : i64, scratch_operands = 0 : i64, tpu.core_type = #tpu.core_type<tc>, window_params = [{transform_indices = @transform_0, window_bounds = array<i64: 16, 3>}, {transform_indices = @transform_1, window_bounds = array<i64: 32, 3>}, {pipeline_mode = #tpu.pipeline_mode<synchronous>, transform_indices = @transform_2, window_bounds = array<i64: 3, 24>}, {pipeline_mode = #tpu.pipeline_mode<synchronous>, transform_indices = @transform_3, window_bounds = array<i64: 24, 128>}, {pipeline_mode = #tpu.pipeline_mode<synchronous>, transform_indices = @transform_4, window_bounds = array<i64: 24, 128>}, {pipeline_mode = #tpu.pipeline_mode<synchronous>, transform_indices = @transform_5, window_bounds = array<i64: 3, 128>}, {pipeline_mode = #tpu.pipeline_mode<synchronous>, transform_indices = @transform_6, window_bounds = array<i64: 1, 128>}, {pipeline_mode = #tpu.pipeline_mode<synchronous>, transform_indices = @transform_7, window_bounds = array<i64: 1, 128>}, {pipeline_mode = #tpu.pipeline_mode<synchronous>, transform_indices = @transform_8, window_bounds = array<i64: 1, 128>}, {pipeline_mode = #tpu.pipeline_mode<synchronous>, transform_indices = @transform_9, window_bounds = array<i64: 1, 128>}, {pipeline_mode = #tpu.pipeline_mode<synchronous>, transform_indices = @transform_10, window_bounds = array<i64: 1, 128>}, {pipeline_mode = #tpu.pipeline_mode<synchronous>, transform_indices = @transform_11, window_bounds = array<i64: 128, 128>}, {pipeline_mode = #tpu.pipeline_mode<synchronous>, transform_indices = @transform_12, window_bounds = array<i64: 128, 128>}, {pipeline_mode = #tpu.pipeline_mode<synchronous>, transform_indices = @transform_13, window_bounds = array<i64: 128, 128>}, {pipeline_mode = #tpu.pipeline_mode<synchronous>, transform_indices = @transform_14, window_bounds = array<i64: 128, 128>}, {pipeline_mode = #tpu.pipeline_mode<synchronous>, transform_indices = @transform_15, window_bounds = array<i64: 1, 128>}, {pipeline_mode = #tpu.pipeline_mode<synchronous>, transform_indices = @transform_16, window_bounds = array<i64: 1, 128>}, {pipeline_mode = #tpu.pipeline_mode<synchronous>, transform_indices = @transform_17, window_bounds = array<i64: 1, 128>}, {pipeline_mode = #tpu.pipeline_mode<synchronous>, transform_indices = @transform_18, window_bounds = array<i64: 128, 512>}, {pipeline_mode = #tpu.pipeline_mode<synchronous>, transform_indices = @transform_19, window_bounds = array<i64: 128, 512>}, {pipeline_mode = #tpu.pipeline_mode<synchronous>, transform_indices = @transform_20, window_bounds = array<i64: 1, 512>}, {pipeline_mode = #tpu.pipeline_mode<synchronous>, transform_indices = @transform_21, window_bounds = array<i64: 1, 512>}, {pipeline_mode = #tpu.pipeline_mode<synchronous>, transform_indices = @transform_22, window_bounds = array<i64: 512, 128>}, {pipeline_mode = #tpu.pipeline_mode<synchronous>, transform_indices = @transform_23, window_bounds = array<i64: 1, 128>}, {transform_indices = @transform_24, window_bounds = array<i64: 16, 128>}]} {
    %c0 = arith.constant 0 : index
    %c0_0 = arith.constant 0 : index
    %0 = vector.load %arg1[%c0, %c0_0] : memref<16x3xf32, #tpu.memory_space<vmem>>, vector<16x3xf32>
    %1 = vector.extract_strided_slice %0 {offsets = [0, 0], sizes = [16, 1], strides = [1, 1]} : vector<16x3xf32> to vector<16x1xf32>
    %c0_1 = arith.constant 0 : index
    %c0_2 = arith.constant 0 : index
    %2 = vector.load %arg3[%c0_1, %c0_2] : memref<3x24xf32, #tpu.memory_space<vmem>>, vector<1x24xf32>
    %3 = vector.broadcast %1 : vector<16x1xf32> to vector<16x24xf32>
    %4 = vector.broadcast %2 : vector<1x24xf32> to vector<16x24xf32>
    %5 = arith.mulf %3, %4 : vector<16x24xf32>
    %6 = vector.extract_strided_slice %0 {offsets = [0, 1], sizes = [16, 1], strides = [1, 1]} : vector<16x3xf32> to vector<16x1xf32>
    %c1 = arith.constant 1 : index
    %c0_3 = arith.constant 0 : index
    %7 = vector.load %arg3[%c1, %c0_3] : memref<3x24xf32, #tpu.memory_space<vmem>>, vector<1x24xf32>
    %8 = vector.broadcast %6 : vector<16x1xf32> to vector<16x24xf32>
    %9 = vector.broadcast %7 : vector<1x24xf32> to vector<16x24xf32>
    %10 = arith.mulf %8, %9 : vector<16x24xf32>
    %11 = arith.addf %5, %10 : vector<16x24xf32>
    %12 = vector.extract_strided_slice %0 {offsets = [0, 2], sizes = [16, 1], strides = [1, 1]} : vector<16x3xf32> to vector<16x1xf32>
    %c2 = arith.constant 2 : index
    %c0_4 = arith.constant 0 : index
    %13 = vector.load %arg3[%c2, %c0_4] : memref<3x24xf32, #tpu.memory_space<vmem>>, vector<1x24xf32>
    %14 = vector.broadcast %12 : vector<16x1xf32> to vector<16x24xf32>
    %15 = vector.broadcast %13 : vector<1x24xf32> to vector<16x24xf32>
    %16 = arith.mulf %14, %15 : vector<16x24xf32>
    %17 = arith.addf %11, %16 : vector<16x24xf32>
    %18 = math.sin %17 : vector<16x24xf32>
    %c0_5 = arith.constant 0 : index
    %c0_6 = arith.constant 0 : index
    %19 = vector.load %arg4[%c0_5, %c0_6] : memref<24x128xf32, #tpu.memory_space<vmem>>, vector<24x128xf32>
    %cst = arith.constant dense<0.000000e+00> : vector<16x128xf32>
    %20 = tpu.matmul %18, %19, %cst {dimension_numbers = #tpu.dot_dimension_numbers<[1], [0], [0], [1], [0, 0, 1, 1], [], []>} : vector<16x24xf32>, vector<24x128xf32>, vector<16x128xf32> -> vector<16x128xf32>
    %21 = math.cos %17 : vector<16x24xf32>
    %c0_7 = arith.constant 0 : index
    %c0_8 = arith.constant 0 : index
    %22 = vector.load %arg5[%c0_7, %c0_8] : memref<24x128xf32, #tpu.memory_space<vmem>>, vector<24x128xf32>
    %cst_9 = arith.constant dense<0.000000e+00> : vector<16x128xf32>
    %23 = tpu.matmul %21, %22, %cst_9 {dimension_numbers = #tpu.dot_dimension_numbers<[1], [0], [0], [1], [0, 0, 1, 1], [], []>} : vector<16x24xf32>, vector<24x128xf32>, vector<16x128xf32> -> vector<16x128xf32>
    %24 = arith.addf %20, %23 : vector<16x128xf32>
    %c0_10 = arith.constant 0 : index
    %c0_11 = arith.constant 0 : index
    %25 = vector.load %arg6[%c0_10, %c0_11] : memref<3x128xf32, #tpu.memory_space<vmem>>, vector<3x128xf32>
    %cst_12 = arith.constant dense<0.000000e+00> : vector<16x128xf32>
    %26 = tpu.matmul %0, %25, %cst_12 {dimension_numbers = #tpu.dot_dimension_numbers<[1], [0], [0], [1], [0, 0, 1, 1], [], []>} : vector<16x3xf32>, vector<3x128xf32>, vector<16x128xf32> -> vector<16x128xf32>
    %27 = arith.addf %24, %26 : vector<16x128xf32>
    %c0_13 = arith.constant 0 : index
    %c0_14 = arith.constant 0 : index
    %28 = vector.load %arg7[%c0_13, %c0_14] : memref<1x128xf32, #tpu.memory_space<vmem>>, vector<1x128xf32>
    %29 = vector.broadcast %28 : vector<1x128xf32> to vector<16x128xf32>
    %30 = arith.addf %27, %29 : vector<16x128xf32>
    %c0_15 = arith.constant 0 : index
    %c0_16 = arith.constant 0 : index
    %31 = vector.load %arg2[%c0_15, %c0_16] : memref<32x3xf32, #tpu.memory_space<vmem>>, vector<32x3xf32>
    %32 = vector.extract_strided_slice %31 {offsets = [0, 0], sizes = [32, 1], strides = [1, 1]} : vector<32x3xf32> to vector<32x1xf32>
    %c0_17 = arith.constant 0 : index
    %c0_18 = arith.constant 0 : index
    %33 = vector.load %arg3[%c0_17, %c0_18] : memref<3x24xf32, #tpu.memory_space<vmem>>, vector<1x24xf32>
    %34 = vector.broadcast %32 : vector<32x1xf32> to vector<32x24xf32>
    %35 = vector.broadcast %33 : vector<1x24xf32> to vector<32x24xf32>
    %36 = arith.mulf %34, %35 : vector<32x24xf32>
    %37 = vector.extract_strided_slice %31 {offsets = [0, 1], sizes = [32, 1], strides = [1, 1]} : vector<32x3xf32> to vector<32x1xf32>
    %c1_19 = arith.constant 1 : index
    %c0_20 = arith.constant 0 : index
    %38 = vector.load %arg3[%c1_19, %c0_20] : memref<3x24xf32, #tpu.memory_space<vmem>>, vector<1x24xf32>
    %39 = vector.broadcast %37 : vector<32x1xf32> to vector<32x24xf32>
    %40 = vector.broadcast %38 : vector<1x24xf32> to vector<32x24xf32>
    %41 = arith.mulf %39, %40 : vector<32x24xf32>
    %42 = arith.addf %36, %41 : vector<32x24xf32>
    %43 = vector.extract_strided_slice %31 {offsets = [0, 2], sizes = [32, 1], strides = [1, 1]} : vector<32x3xf32> to vector<32x1xf32>
    %c2_21 = arith.constant 2 : index
    %c0_22 = arith.constant 0 : index
    %44 = vector.load %arg3[%c2_21, %c0_22] : memref<3x24xf32, #tpu.memory_space<vmem>>, vector<1x24xf32>
    %45 = vector.broadcast %43 : vector<32x1xf32> to vector<32x24xf32>
    %46 = vector.broadcast %44 : vector<1x24xf32> to vector<32x24xf32>
    %47 = arith.mulf %45, %46 : vector<32x24xf32>
    %48 = arith.addf %42, %47 : vector<32x24xf32>
    %49 = math.sin %48 : vector<32x24xf32>
    %c0_23 = arith.constant 0 : index
    %c0_24 = arith.constant 0 : index
    %50 = vector.load %arg4[%c0_23, %c0_24] : memref<24x128xf32, #tpu.memory_space<vmem>>, vector<24x128xf32>
    %cst_25 = arith.constant dense<0.000000e+00> : vector<32x128xf32>
    %51 = tpu.matmul %49, %50, %cst_25 {dimension_numbers = #tpu.dot_dimension_numbers<[1], [0], [0], [1], [0, 0, 1, 1], [], []>} : vector<32x24xf32>, vector<24x128xf32>, vector<32x128xf32> -> vector<32x128xf32>
    %52 = math.cos %48 : vector<32x24xf32>
    %c0_26 = arith.constant 0 : index
    %c0_27 = arith.constant 0 : index
    %53 = vector.load %arg5[%c0_26, %c0_27] : memref<24x128xf32, #tpu.memory_space<vmem>>, vector<24x128xf32>
    %cst_28 = arith.constant dense<0.000000e+00> : vector<32x128xf32>
    %54 = tpu.matmul %52, %53, %cst_28 {dimension_numbers = #tpu.dot_dimension_numbers<[1], [0], [0], [1], [0, 0, 1, 1], [], []>} : vector<32x24xf32>, vector<24x128xf32>, vector<32x128xf32> -> vector<32x128xf32>
    %55 = arith.addf %51, %54 : vector<32x128xf32>
    %c0_29 = arith.constant 0 : index
    %c0_30 = arith.constant 0 : index
    %56 = vector.load %arg6[%c0_29, %c0_30] : memref<3x128xf32, #tpu.memory_space<vmem>>, vector<3x128xf32>
    %cst_31 = arith.constant dense<0.000000e+00> : vector<32x128xf32>
    %57 = tpu.matmul %31, %56, %cst_31 {dimension_numbers = #tpu.dot_dimension_numbers<[1], [0], [0], [1], [0, 0, 1, 1], [], []>} : vector<32x3xf32>, vector<3x128xf32>, vector<32x128xf32> -> vector<32x128xf32>
    %58 = arith.addf %55, %57 : vector<32x128xf32>
    %c0_32 = arith.constant 0 : index
    %c0_33 = arith.constant 0 : index
    %59 = vector.load %arg7[%c0_32, %c0_33] : memref<1x128xf32, #tpu.memory_space<vmem>>, vector<1x128xf32>
    %60 = vector.broadcast %59 : vector<1x128xf32> to vector<32x128xf32>
    %61 = arith.addf %58, %60 : vector<32x128xf32>
    %c0_34 = arith.constant 0 : index
    %c0_35 = arith.constant 0 : index
    %62 = vector.load %arg8[%c0_34, %c0_35] : memref<1x128xf32, #tpu.memory_space<vmem>>, vector<1x128xf32>
    %c0_36 = arith.constant 0 : index
    %c0_37 = arith.constant 0 : index
    %63 = vector.load %arg9[%c0_36, %c0_37] : memref<1x128xf32, #tpu.memory_space<vmem>>, vector<1x128xf32>
    %cst_38 = arith.constant dense<0.000000e+00> : vector<16xf32>
    %64 = vector.multi_reduction <add>, %30, %cst_38 [1] : vector<16x128xf32> to vector<16xf32>
    %65 = vector.shape_cast %64 : vector<16xf32> to vector<16x1xf32>
    %cst_39 = arith.constant 1.280000e+02 : f32
    %66 = vector.broadcast %cst_39 : f32 to vector<16x1xf32>
    %67 = arith.divf %65, %66 : vector<16x1xf32>
    %68 = vector.broadcast %67 : vector<16x1xf32> to vector<16x128xf32>
    %69 = arith.subf %30, %68 : vector<16x128xf32>
    %70 = arith.mulf %69, %69 : vector<16x128xf32>
    %cst_40 = arith.constant dense<0.000000e+00> : vector<16xf32>
    %71 = vector.multi_reduction <add>, %70, %cst_40 [1] : vector<16x128xf32> to vector<16xf32>
    %72 = vector.shape_cast %71 : vector<16xf32> to vector<16x1xf32>
    %cst_41 = arith.constant 1.280000e+02 : f32
    %73 = vector.broadcast %cst_41 : f32 to vector<16x1xf32>
    %74 = arith.divf %72, %73 : vector<16x1xf32>
    %75 = vector.broadcast %67 : vector<16x1xf32> to vector<16x128xf32>
    %76 = arith.subf %30, %75 : vector<16x128xf32>
    %cst_42 = arith.constant 9.99999974E-6 : f32
    %77 = vector.broadcast %cst_42 : f32 to vector<16x1xf32>
    %78 = arith.addf %74, %77 : vector<16x1xf32>
    %79 = math.rsqrt %78 : vector<16x1xf32>
    %80 = vector.broadcast %79 : vector<16x1xf32> to vector<16x128xf32>
    %81 = arith.mulf %76, %80 : vector<16x128xf32>
    %82 = vector.broadcast %62 : vector<1x128xf32> to vector<16x128xf32>
    %83 = arith.mulf %81, %82 : vector<16x128xf32>
    %84 = vector.broadcast %63 : vector<1x128xf32> to vector<16x128xf32>
    %85 = arith.addf %83, %84 : vector<16x128xf32>
    %c0_43 = arith.constant 0 : index
    %c0_44 = arith.constant 0 : index
    %86 = vector.load %arg10[%c0_43, %c0_44] : memref<1x128xf32, #tpu.memory_space<vmem>>, vector<1x128xf32>
    %c0_45 = arith.constant 0 : index
    %c0_46 = arith.constant 0 : index
    %87 = vector.load %arg11[%c0_45, %c0_46] : memref<1x128xf32, #tpu.memory_space<vmem>>, vector<1x128xf32>
    %cst_47 = arith.constant dense<0.000000e+00> : vector<32xf32>
    %88 = vector.multi_reduction <add>, %61, %cst_47 [1] : vector<32x128xf32> to vector<32xf32>
    %89 = vector.shape_cast %88 : vector<32xf32> to vector<32x1xf32>
    %cst_48 = arith.constant 1.280000e+02 : f32
    %90 = vector.broadcast %cst_48 : f32 to vector<32x1xf32>
    %91 = arith.divf %89, %90 : vector<32x1xf32>
    %92 = vector.broadcast %91 : vector<32x1xf32> to vector<32x128xf32>
    %93 = arith.subf %61, %92 : vector<32x128xf32>
    %94 = arith.mulf %93, %93 : vector<32x128xf32>
    %cst_49 = arith.constant dense<0.000000e+00> : vector<32xf32>
    %95 = vector.multi_reduction <add>, %94, %cst_49 [1] : vector<32x128xf32> to vector<32xf32>
    %96 = vector.shape_cast %95 : vector<32xf32> to vector<32x1xf32>
    %cst_50 = arith.constant 1.280000e+02 : f32
    %97 = vector.broadcast %cst_50 : f32 to vector<32x1xf32>
    %98 = arith.divf %96, %97 : vector<32x1xf32>
    %99 = vector.broadcast %91 : vector<32x1xf32> to vector<32x128xf32>
    %100 = arith.subf %61, %99 : vector<32x128xf32>
    %cst_51 = arith.constant 9.99999974E-6 : f32
    %101 = vector.broadcast %cst_51 : f32 to vector<32x1xf32>
    %102 = arith.addf %98, %101 : vector<32x1xf32>
    %103 = math.rsqrt %102 : vector<32x1xf32>
    %104 = vector.broadcast %103 : vector<32x1xf32> to vector<32x128xf32>
    %105 = arith.mulf %100, %104 : vector<32x128xf32>
    %106 = vector.broadcast %86 : vector<1x128xf32> to vector<32x128xf32>
    %107 = arith.mulf %105, %106 : vector<32x128xf32>
    %108 = vector.broadcast %87 : vector<1x128xf32> to vector<32x128xf32>
    %109 = arith.addf %107, %108 : vector<32x128xf32>
    %c0_52 = arith.constant 0 : index
    %c0_53 = arith.constant 0 : index
    %110 = vector.load %arg12[%c0_52, %c0_53] : memref<128x128xf32, #tpu.memory_space<vmem>>, vector<128x128xf32>
    %cst_54 = arith.constant dense<0.000000e+00> : vector<16x128xf32>
    %111 = tpu.matmul %85, %110, %cst_54 {dimension_numbers = #tpu.dot_dimension_numbers<[1], [0], [0], [1], [0, 0, 1, 1], [], []>} : vector<16x128xf32>, vector<128x128xf32>, vector<16x128xf32> -> vector<16x128xf32>
    %c0_55 = arith.constant 0 : index
    %c0_56 = arith.constant 0 : index
    %112 = vector.load %arg13[%c0_55, %c0_56] : memref<128x128xf32, #tpu.memory_space<vmem>>, vector<128x128xf32>
    %cst_57 = arith.constant dense<0.000000e+00> : vector<32x128xf32>
    %113 = tpu.matmul %109, %112, %cst_57 {dimension_numbers = #tpu.dot_dimension_numbers<[1], [0], [0], [1], [0, 0, 1, 1], [], []>} : vector<32x128xf32>, vector<128x128xf32>, vector<32x128xf32> -> vector<32x128xf32>
    %c0_58 = arith.constant 0 : index
    %c0_59 = arith.constant 0 : index
    %114 = vector.load %arg14[%c0_58, %c0_59] : memref<128x128xf32, #tpu.memory_space<vmem>>, vector<128x128xf32>
    %cst_60 = arith.constant dense<0.000000e+00> : vector<32x128xf32>
    %115 = tpu.matmul %109, %114, %cst_60 {dimension_numbers = #tpu.dot_dimension_numbers<[1], [0], [0], [1], [0, 0, 1, 1], [], []>} : vector<32x128xf32>, vector<128x128xf32>, vector<32x128xf32> -> vector<32x128xf32>
    %116 = vector.extract_strided_slice %111 {offsets = [0, 0], sizes = [8, 128], strides = [1, 1]} : vector<16x128xf32> to vector<8x128xf32>
    %117 = vector.extract_strided_slice %113 {offsets = [0, 0], sizes = [16, 128], strides = [1, 1]} : vector<32x128xf32> to vector<16x128xf32>
    %118 = vector.extract_strided_slice %115 {offsets = [0, 0], sizes = [16, 128], strides = [1, 1]} : vector<32x128xf32> to vector<16x128xf32>
    %cst_61 = arith.constant dense<0.000000e+00> : vector<8x16xf32>
    %119 = tpu.matmul %116, %117, %cst_61 {dimension_numbers = #tpu.dot_dimension_numbers<[1], [1], [0], [0], [0, 0, 1, 0], [], []>} : vector<8x128xf32>, vector<16x128xf32>, vector<8x16xf32> -> vector<8x16xf32>
    %cst_62 = arith.constant dense<0xFF800000> : vector<8xf32>
    %120 = vector.multi_reduction <maximumf>, %119, %cst_62 [1] : vector<8x16xf32> to vector<8xf32>
    %121 = vector.shape_cast %120 : vector<8xf32> to vector<8x1xf32>
    %122 = vector.broadcast %121 : vector<8x1xf32> to vector<8x16xf32>
    %123 = arith.subf %119, %122 : vector<8x16xf32>
    %124 = math.exp %123 : vector<8x16xf32>
    %cst_63 = arith.constant dense<0.000000e+00> : vector<8xf32>
    %125 = vector.multi_reduction <add>, %124, %cst_63 [1] : vector<8x16xf32> to vector<8xf32>
    %126 = vector.shape_cast %125 : vector<8xf32> to vector<8x1xf32>
    %127 = vector.broadcast %126 : vector<8x1xf32> to vector<8x16xf32>
    %128 = arith.divf %124, %127 : vector<8x16xf32>
    %cst_64 = arith.constant dense<0.000000e+00> : vector<8x128xf32>
    %129 = tpu.matmul %128, %118, %cst_64 {dimension_numbers = #tpu.dot_dimension_numbers<[1], [0], [0], [1], [0, 0, 1, 1], [], []>} : vector<8x16xf32>, vector<16x128xf32>, vector<8x128xf32> -> vector<8x128xf32>
    %130 = vector.extract_strided_slice %111 {offsets = [8, 0], sizes = [8, 128], strides = [1, 1]} : vector<16x128xf32> to vector<8x128xf32>
    %131 = vector.extract_strided_slice %113 {offsets = [16, 0], sizes = [16, 128], strides = [1, 1]} : vector<32x128xf32> to vector<16x128xf32>
    %132 = vector.extract_strided_slice %115 {offsets = [16, 0], sizes = [16, 128], strides = [1, 1]} : vector<32x128xf32> to vector<16x128xf32>
    %cst_65 = arith.constant dense<0.000000e+00> : vector<8x16xf32>
    %133 = tpu.matmul %130, %131, %cst_65 {dimension_numbers = #tpu.dot_dimension_numbers<[1], [1], [0], [0], [0, 0, 1, 0], [], []>} : vector<8x128xf32>, vector<16x128xf32>, vector<8x16xf32> -> vector<8x16xf32>
    %cst_66 = arith.constant dense<0xFF800000> : vector<8xf32>
    %134 = vector.multi_reduction <maximumf>, %133, %cst_66 [1] : vector<8x16xf32> to vector<8xf32>
    %135 = vector.shape_cast %134 : vector<8xf32> to vector<8x1xf32>
    %136 = vector.broadcast %135 : vector<8x1xf32> to vector<8x16xf32>
    %137 = arith.subf %133, %136 : vector<8x16xf32>
    %138 = math.exp %137 : vector<8x16xf32>
    %cst_67 = arith.constant dense<0.000000e+00> : vector<8xf32>
    %139 = vector.multi_reduction <add>, %138, %cst_67 [1] : vector<8x16xf32> to vector<8xf32>
    %140 = vector.shape_cast %139 : vector<8xf32> to vector<8x1xf32>
    %141 = vector.broadcast %140 : vector<8x1xf32> to vector<8x16xf32>
    %142 = arith.divf %138, %141 : vector<8x16xf32>
    %cst_68 = arith.constant dense<0.000000e+00> : vector<8x128xf32>
    %143 = tpu.matmul %142, %132, %cst_68 {dimension_numbers = #tpu.dot_dimension_numbers<[1], [0], [0], [1], [0, 0, 1, 1], [], []>} : vector<8x16xf32>, vector<16x128xf32>, vector<8x128xf32> -> vector<8x128xf32>
    %144 = tpu.concatenate %129, %143 in 0 : vector<8x128xf32>, vector<8x128xf32> -> vector<16x128xf32>
    %c0_69 = arith.constant 0 : index
    %c0_70 = arith.constant 0 : index
    %145 = vector.load %arg15[%c0_69, %c0_70] : memref<128x128xf32, #tpu.memory_space<vmem>>, vector<128x128xf32>
    %cst_71 = arith.constant dense<0.000000e+00> : vector<16x128xf32>
    %146 = tpu.matmul %144, %145, %cst_71 {dimension_numbers = #tpu.dot_dimension_numbers<[1], [0], [0], [1], [0, 0, 1, 1], [], []>} : vector<16x128xf32>, vector<128x128xf32>, vector<16x128xf32> -> vector<16x128xf32>
    %c0_72 = arith.constant 0 : index
    %c0_73 = arith.constant 0 : index
    %147 = vector.load %arg16[%c0_72, %c0_73] : memref<1x128xf32, #tpu.memory_space<vmem>>, vector<1x128xf32>
    %148 = vector.broadcast %147 : vector<1x128xf32> to vector<16x128xf32>
    %149 = arith.addf %146, %148 : vector<16x128xf32>
    %150 = arith.addf %149, %30 : vector<16x128xf32>
    %c0_74 = arith.constant 0 : index
    %c0_75 = arith.constant 0 : index
    %151 = vector.load %arg17[%c0_74, %c0_75] : memref<1x128xf32, #tpu.memory_space<vmem>>, vector<1x128xf32>
    %c0_76 = arith.constant 0 : index
    %c0_77 = arith.constant 0 : index
    %152 = vector.load %arg18[%c0_76, %c0_77] : memref<1x128xf32, #tpu.memory_space<vmem>>, vector<1x128xf32>
    %cst_78 = arith.constant dense<0.000000e+00> : vector<16xf32>
    %153 = vector.multi_reduction <add>, %150, %cst_78 [1] : vector<16x128xf32> to vector<16xf32>
    %154 = vector.shape_cast %153 : vector<16xf32> to vector<16x1xf32>
    %cst_79 = arith.constant 1.280000e+02 : f32
    %155 = vector.broadcast %cst_79 : f32 to vector<16x1xf32>
    %156 = arith.divf %154, %155 : vector<16x1xf32>
    %157 = vector.broadcast %156 : vector<16x1xf32> to vector<16x128xf32>
    %158 = arith.subf %150, %157 : vector<16x128xf32>
    %159 = arith.mulf %158, %158 : vector<16x128xf32>
    %cst_80 = arith.constant dense<0.000000e+00> : vector<16xf32>
    %160 = vector.multi_reduction <add>, %159, %cst_80 [1] : vector<16x128xf32> to vector<16xf32>
    %161 = vector.shape_cast %160 : vector<16xf32> to vector<16x1xf32>
    %cst_81 = arith.constant 1.280000e+02 : f32
    %162 = vector.broadcast %cst_81 : f32 to vector<16x1xf32>
    %163 = arith.divf %161, %162 : vector<16x1xf32>
    %164 = vector.broadcast %156 : vector<16x1xf32> to vector<16x128xf32>
    %165 = arith.subf %150, %164 : vector<16x128xf32>
    %cst_82 = arith.constant 9.99999974E-6 : f32
    %166 = vector.broadcast %cst_82 : f32 to vector<16x1xf32>
    %167 = arith.addf %163, %166 : vector<16x1xf32>
    %168 = math.rsqrt %167 : vector<16x1xf32>
    %169 = vector.broadcast %168 : vector<16x1xf32> to vector<16x128xf32>
    %170 = arith.mulf %165, %169 : vector<16x128xf32>
    %171 = vector.broadcast %151 : vector<1x128xf32> to vector<16x128xf32>
    %172 = arith.mulf %170, %171 : vector<16x128xf32>
    %173 = vector.broadcast %152 : vector<1x128xf32> to vector<16x128xf32>
    %174 = arith.addf %172, %173 : vector<16x128xf32>
    %c0_83 = arith.constant 0 : index
    %c0_84 = arith.constant 0 : index
    %175 = vector.load %arg19[%c0_83, %c0_84] : memref<128x512xf32, #tpu.memory_space<vmem>>, vector<128x512xf32>
    %cst_85 = arith.constant dense<0.000000e+00> : vector<16x512xf32>
    %176 = tpu.matmul %174, %175, %cst_85 {dimension_numbers = #tpu.dot_dimension_numbers<[1], [0], [0], [1], [0, 0, 1, 1], [], []>} : vector<16x128xf32>, vector<128x512xf32>, vector<16x512xf32> -> vector<16x512xf32>
    %c0_86 = arith.constant 0 : index
    %c0_87 = arith.constant 0 : index
    %177 = vector.load %arg21[%c0_86, %c0_87] : memref<1x512xf32, #tpu.memory_space<vmem>>, vector<1x512xf32>
    %178 = vector.broadcast %177 : vector<1x512xf32> to vector<16x512xf32>
    %179 = arith.addf %176, %178 : vector<16x512xf32>
    %c0_88 = arith.constant 0 : index
    %c0_89 = arith.constant 0 : index
    %180 = vector.load %arg20[%c0_88, %c0_89] : memref<128x512xf32, #tpu.memory_space<vmem>>, vector<128x512xf32>
    %cst_90 = arith.constant dense<0.000000e+00> : vector<16x512xf32>
    %181 = tpu.matmul %174, %180, %cst_90 {dimension_numbers = #tpu.dot_dimension_numbers<[1], [0], [0], [1], [0, 0, 1, 1], [], []>} : vector<16x128xf32>, vector<128x512xf32>, vector<16x512xf32> -> vector<16x512xf32>
    %c0_91 = arith.constant 0 : index
    %c0_92 = arith.constant 0 : index
    %182 = vector.load %arg22[%c0_91, %c0_92] : memref<1x512xf32, #tpu.memory_space<vmem>>, vector<1x512xf32>
    %183 = vector.broadcast %182 : vector<1x512xf32> to vector<16x512xf32>
    %184 = arith.addf %181, %183 : vector<16x512xf32>
    %cst_93 = arith.constant 5.000000e-01 : f32
    %185 = vector.broadcast %cst_93 : f32 to vector<16x512xf32>
    %186 = arith.mulf %185, %184 : vector<16x512xf32>
    %cst_94 = arith.constant 0.707106769 : f32
    %187 = vector.broadcast %cst_94 : f32 to vector<16x512xf32>
    %188 = arith.mulf %184, %187 : vector<16x512xf32>
    %189 = math.absf %188 : vector<16x512xf32>
    %cst_95 = arith.constant 0.327591091 : f32
    %190 = vector.broadcast %cst_95 : f32 to vector<16x512xf32>
    %191 = arith.mulf %190, %189 : vector<16x512xf32>
    %cst_96 = arith.constant 1.000000e+00 : f32
    %192 = vector.broadcast %cst_96 : f32 to vector<16x512xf32>
    %193 = arith.addf %192, %191 : vector<16x512xf32>
    %cst_97 = arith.constant 1.000000e+00 : f32
    %194 = vector.broadcast %cst_97 : f32 to vector<16x512xf32>
    %195 = arith.divf %194, %193 : vector<16x512xf32>
    %cst_98 = arith.constant 1.06140542 : f32
    %196 = vector.broadcast %cst_98 : f32 to vector<16x512xf32>
    %197 = arith.mulf %195, %196 : vector<16x512xf32>
    %cst_99 = arith.constant -1.45315206 : f32
    %198 = vector.broadcast %cst_99 : f32 to vector<16x512xf32>
    %199 = arith.addf %198, %197 : vector<16x512xf32>
    %200 = arith.mulf %195, %199 : vector<16x512xf32>
    %cst_100 = arith.constant 1.42141378 : f32
    %201 = vector.broadcast %cst_100 : f32 to vector<16x512xf32>
    %202 = arith.addf %201, %200 : vector<16x512xf32>
    %203 = arith.mulf %195, %202 : vector<16x512xf32>
    %cst_101 = arith.constant -0.284496725 : f32
    %204 = vector.broadcast %cst_101 : f32 to vector<16x512xf32>
    %205 = arith.addf %204, %203 : vector<16x512xf32>
    %206 = arith.mulf %195, %205 : vector<16x512xf32>
    %cst_102 = arith.constant 0.254829586 : f32
    %207 = vector.broadcast %cst_102 : f32 to vector<16x512xf32>
    %208 = arith.addf %207, %206 : vector<16x512xf32>
    %209 = arith.mulf %195, %208 : vector<16x512xf32>
    %210 = arith.mulf %189, %189 : vector<16x512xf32>
    %cst_103 = arith.constant 0.000000e+00 : f32
    %211 = vector.broadcast %cst_103 : f32 to vector<16x512xf32>
    %212 = arith.subf %211, %210 : vector<16x512xf32>
    %213 = math.exp %212 : vector<16x512xf32>
    %214 = arith.mulf %209, %213 : vector<16x512xf32>
    %cst_104 = arith.constant 1.000000e+00 : f32
    %215 = vector.broadcast %cst_104 : f32 to vector<16x512xf32>
    %216 = arith.subf %215, %214 : vector<16x512xf32>
    %cst_105 = arith.constant 0.000000e+00 : f32
    %217 = vector.broadcast %cst_105 : f32 to vector<16x512xf32>
    %218 = arith.cmpf olt, %188, %217 : vector<16x512xf32>
    %cst_106 = arith.constant 0.000000e+00 : f32
    %219 = vector.broadcast %cst_106 : f32 to vector<16x512xf32>
    %220 = arith.subf %219, %216 : vector<16x512xf32>
    %221 = arith.select %218, %220, %216 : vector<16x512xi1>, vector<16x512xf32>
    %cst_107 = arith.constant 1.000000e+00 : f32
    %222 = vector.broadcast %cst_107 : f32 to vector<16x512xf32>
    %223 = arith.addf %222, %221 : vector<16x512xf32>
    %224 = arith.mulf %186, %223 : vector<16x512xf32>
    %225 = arith.mulf %179, %224 : vector<16x512xf32>
    %c0_108 = arith.constant 0 : index
    %c0_109 = arith.constant 0 : index
    %226 = vector.load %arg23[%c0_108, %c0_109] : memref<512x128xf32, #tpu.memory_space<vmem>>, vector<512x128xf32>
    %cst_110 = arith.constant dense<0.000000e+00> : vector<16x128xf32>
    %227 = tpu.matmul %225, %226, %cst_110 {dimension_numbers = #tpu.dot_dimension_numbers<[1], [0], [0], [1], [0, 0, 1, 1], [], []>} : vector<16x512xf32>, vector<512x128xf32>, vector<16x128xf32> -> vector<16x128xf32>
    %c0_111 = arith.constant 0 : index
    %c0_112 = arith.constant 0 : index
    %228 = vector.load %arg24[%c0_111, %c0_112] : memref<1x128xf32, #tpu.memory_space<vmem>>, vector<1x128xf32>
    %229 = vector.broadcast %228 : vector<1x128xf32> to vector<16x128xf32>
    %230 = arith.addf %227, %229 : vector<16x128xf32>
    %231 = arith.addf %230, %150 : vector<16x128xf32>
    %c0_113 = arith.constant 0 : index
    %c0_114 = arith.constant 0 : index
    %232 = vector.load %arg25[%c0_113, %c0_114] : memref<16x128xf32, #tpu.memory_space<vmem>>, vector<16x128xf32>
    tpu.vector_store %arg25[%c0_113, %c0_114], %231 {strides = array<i32>} : memref<16x128xf32, #tpu.memory_space<vmem>>, vector<16x128xf32>,
    return
  }
  func.func @transform_0(%arg0: i32) -> (i32, i32) {
    %c0_i32 = arith.constant 0 : i32
    %c0_i32_0 = arith.constant 0 : i32
    return %arg0, %c0_i32 : i32, i32
  }
  func.func @transform_1(%arg0: i32) -> (i32, i32) {
    %c0_i32 = arith.constant 0 : i32
    %c0_i32_0 = arith.constant 0 : i32
    return %arg0, %c0_i32 : i32, i32
  }
  func.func @transform_2(%arg0: i32) -> (i32, i32) {
    %c0_i32 = arith.constant 0 : i32
    %c0_i32_0 = arith.constant 0 : i32
    %c0_i32_1 = arith.constant 0 : i32
    return %c0_i32, %c0_i32_0 : i32, i32
  }
  func.func @transform_3(%arg0: i32) -> (i32, i32) {
    %c0_i32 = arith.constant 0 : i32
    %c0_i32_0 = arith.constant 0 : i32
    %c0_i32_1 = arith.constant 0 : i32
    return %c0_i32, %c0_i32_0 : i32, i32
  }
  func.func @transform_4(%arg0: i32) -> (i32, i32) {
    %c0_i32 = arith.constant 0 : i32
    %c0_i32_0 = arith.constant 0 : i32
    %c0_i32_1 = arith.constant 0 : i32
    return %c0_i32, %c0_i32_0 : i32, i32
  }
  func.func @transform_5(%arg0: i32) -> (i32, i32) {
    %c0_i32 = arith.constant 0 : i32
    %c0_i32_0 = arith.constant 0 : i32
    %c0_i32_1 = arith.constant 0 : i32
    return %c0_i32, %c0_i32_0 : i32, i32
  }
  func.func @transform_6(%arg0: i32) -> (i32, i32) {
    %c0_i32 = arith.constant 0 : i32
    %c0_i32_0 = arith.constant 0 : i32
    %c0_i32_1 = arith.constant 0 : i32
    return %c0_i32, %c0_i32_0 : i32, i32
  }
  func.func @transform_7(%arg0: i32) -> (i32, i32) {
    %c0_i32 = arith.constant 0 : i32
    %c0_i32_0 = arith.constant 0 : i32
    %c0_i32_1 = arith.constant 0 : i32
    return %c0_i32, %c0_i32_0 : i32, i32
  }
  func.func @transform_8(%arg0: i32) -> (i32, i32) {
    %c0_i32 = arith.constant 0 : i32
    %c0_i32_0 = arith.constant 0 : i32
    %c0_i32_1 = arith.constant 0 : i32
    return %c0_i32, %c0_i32_0 : i32, i32
  }
  func.func @transform_9(%arg0: i32) -> (i32, i32) {
    %c0_i32 = arith.constant 0 : i32
    %c0_i32_0 = arith.constant 0 : i32
    %c0_i32_1 = arith.constant 0 : i32
    return %c0_i32, %c0_i32_0 : i32, i32
  }
  func.func @transform_10(%arg0: i32) -> (i32, i32) {
    %c0_i32 = arith.constant 0 : i32
    %c0_i32_0 = arith.constant 0 : i32
    %c0_i32_1 = arith.constant 0 : i32
    return %c0_i32, %c0_i32_0 : i32, i32
  }
  func.func @transform_11(%arg0: i32) -> (i32, i32) {
    %c0_i32 = arith.constant 0 : i32
    %c0_i32_0 = arith.constant 0 : i32
    %c0_i32_1 = arith.constant 0 : i32
    return %c0_i32, %c0_i32_0 : i32, i32
  }
  func.func @transform_12(%arg0: i32) -> (i32, i32) {
    %c0_i32 = arith.constant 0 : i32
    %c0_i32_0 = arith.constant 0 : i32
    %c0_i32_1 = arith.constant 0 : i32
    return %c0_i32, %c0_i32_0 : i32, i32
  }
  func.func @transform_13(%arg0: i32) -> (i32, i32) {
    %c0_i32 = arith.constant 0 : i32
    %c0_i32_0 = arith.constant 0 : i32
    %c0_i32_1 = arith.constant 0 : i32
    return %c0_i32, %c0_i32_0 : i32, i32
  }
  func.func @transform_14(%arg0: i32) -> (i32, i32) {
    %c0_i32 = arith.constant 0 : i32
    %c0_i32_0 = arith.constant 0 : i32
    %c0_i32_1 = arith.constant 0 : i32
    return %c0_i32, %c0_i32_0 : i32, i32
  }
  func.func @transform_15(%arg0: i32) -> (i32, i32) {
    %c0_i32 = arith.constant 0 : i32
    %c0_i32_0 = arith.constant 0 : i32
    %c0_i32_1 = arith.constant 0 : i32
    return %c0_i32, %c0_i32_0 : i32, i32
  }
  func.func @transform_16(%arg0: i32) -> (i32, i32) {
    %c0_i32 = arith.constant 0 : i32
    %c0_i32_0 = arith.constant 0 : i32
    %c0_i32_1 = arith.constant 0 : i32
    return %c0_i32, %c0_i32_0 : i32, i32
  }
  func.func @transform_17(%arg0: i32) -> (i32, i32) {
    %c0_i32 = arith.constant 0 : i32
    %c0_i32_0 = arith.constant 0 : i32
    %c0_i32_1 = arith.constant 0 : i32
    return %c0_i32, %c0_i32_0 : i32, i32
  }
  func.func @transform_18(%arg0: i32) -> (i32, i32) {
    %c0_i32 = arith.constant 0 : i32
    %c0_i32_0 = arith.constant 0 : i32
    %c0_i32_1 = arith.constant 0 : i32
    return %c0_i32, %c0_i32_0 : i32, i32
  }
  func.func @transform_19(%arg0: i32) -> (i32, i32) {
    %c0_i32 = arith.constant 0 : i32
    %c0_i32_0 = arith.constant 0 : i32
    %c0_i32_1 = arith.constant 0 : i32
    return %c0_i32, %c0_i32_0 : i32, i32
  }
  func.func @transform_20(%arg0: i32) -> (i32, i32) {
    %c0_i32 = arith.constant 0 : i32
    %c0_i32_0 = arith.constant 0 : i32
    %c0_i32_1 = arith.constant 0 : i32
    return %c0_i32, %c0_i32_0 : i32, i32
  }
  func.func @transform_21(%arg0: i32) -> (i32, i32) {
    %c0_i32 = arith.constant 0 : i32
    %c0_i32_0 = arith.constant 0 : i32
    %c0_i32_1 = arith.constant 0 : i32
    return %c0_i32, %c0_i32_0 : i32, i32
  }
  func.func @transform_22(%arg0: i32) -> (i32, i32) {
    %c0_i32 = arith.constant 0 : i32
    %c0_i32_0 = arith.constant 0 : i32
    %c0_i32_1 = arith.constant 0 : i32
    return %c0_i32, %c0_i32_0 : i32, i32
  }
  func.func @transform_23(%arg0: i32) -> (i32, i32) {
    %c0_i32 = arith.constant 0 : i32
    %c0_i32_0 = arith.constant 0 : i32
    %c0_i32_1 = arith.constant 0 : i32
    return %c0_i32, %c0_i32_0 : i32, i32
  }
  func.func @transform_24(%arg0: i32) -> (i32, i32) {
    %c0_i32 = arith.constant 0 : i32
    %c0_i32_0 = arith.constant 0 : i32
    return %arg0, %c0_i32 : i32, i32
  }
}

module attributes {stable_mosaic.version = 11 : i64} {
  func.func @fused_encoder_kernel(%arg0: i32, %arg1: memref<16x3xf32, #tpu.memory_space<vmem>>, %arg2: memref<32x3xf32, #tpu.memory_space<vmem>>, %arg3: memref<3x24xf32, #tpu.memory_space<vmem>>, %arg4: memref<24x128xf32, #tpu.memory_space<vmem>>, %arg5: memref<24x128xf32, #tpu.memory_space<vmem>>, %arg6: memref<3x128xf32, #tpu.memory_space<vmem>>, %arg7: memref<1x128xf32, #tpu.memory_space<vmem>>, %arg8: memref<1x128xf32, #tpu.memory_space<vmem>>, %arg9: memref<1x128xf32, #tpu.memory_space<vmem>>, %arg10: memref<1x128xf32, #tpu.memory_space<vmem>>, %arg11: memref<1x128xf32, #tpu.memory_space<vmem>>, %arg12: memref<128x128xf32, #tpu.memory_space<vmem>>, %arg13: memref<128x128xf32, #tpu.memory_space<vmem>>, %arg14: memref<128x128xf32, #tpu.memory_space<vmem>>, %arg15: memref<128x128xf32, #tpu.memory_space<vmem>>, %arg16: memref<1x128xf32, #tpu.memory_space<vmem>>, %arg17: memref<1x128xf32, #tpu.memory_space<vmem>>, %arg18: memref<1x128xf32, #tpu.memory_space<vmem>>, %arg19: memref<128x512xf32, #tpu.memory_space<vmem>>, %arg20: memref<128x512xf32, #tpu.memory_space<vmem>>, %arg21: memref<1x512xf32, #tpu.memory_space<vmem>>, %arg22: memref<1x512xf32, #tpu.memory_space<vmem>>, %arg23: memref<512x128xf32, #tpu.memory_space<vmem>>, %arg24: memref<1x128xf32, #tpu.memory_space<vmem>>, %arg25: memref<16x128xf32, #tpu.memory_space<vmem>>) attributes {dimension_semantics = [#tpu.dimension_semantics<parallel>], iteration_bounds = array<i64: 2>, scalar_prefetch = 0 : i64, scratch_operands = 0 : i64, tpu.core_type = #tpu.core_type<tc>, window_params = [{transform_indices = @transform_0, window_bounds = array<i64: 16, 3>}, {transform_indices = @transform_1, window_bounds = array<i64: 32, 3>}, {pipeline_mode = #tpu.pipeline_mode<synchronous>, transform_indices = @transform_2, window_bounds = array<i64: 3, 24>}, {pipeline_mode = #tpu.pipeline_mode<synchronous>, transform_indices = @transform_3, window_bounds = array<i64: 24, 128>}, {pipeline_mode = #tpu.pipeline_mode<synchronous>, transform_indices = @transform_4, window_bounds = array<i64: 24, 128>}, {pipeline_mode = #tpu.pipeline_mode<synchronous>, transform_indices = @transform_5, window_bounds = array<i64: 3, 128>}, {pipeline_mode = #tpu.pipeline_mode<synchronous>, transform_indices = @transform_6, window_bounds = array<i64: 1, 128>}, {pipeline_mode = #tpu.pipeline_mode<synchronous>, transform_indices = @transform_7, window_bounds = array<i64: 1, 128>}, {pipeline_mode = #tpu.pipeline_mode<synchronous>, transform_indices = @transform_8, window_bounds = array<i64: 1, 128>}, {pipeline_mode = #tpu.pipeline_mode<synchronous>, transform_indices = @transform_9, window_bounds = array<i64: 1, 128>}, {pipeline_mode = #tpu.pipeline_mode<synchronous>, transform_indices = @transform_10, window_bounds = array<i64: 1, 128>}, {pipeline_mode = #tpu.pipeline_mode<synchronous>, transform_indices = @transform_11, window_bounds = array<i64: 128, 128>}, {pipeline_mode = #tpu.pipeline_mode<synchronous>, transform_indices = @transform_12, window_bounds = array<i64: 128, 128>}, {pipeline_mode = #tpu.pipeline_mode<synchronous>, transform_indices = @transform_13, window_bounds = array<i64: 128, 128>}, {pipeline_mode = #tpu.pipeline_mode<synchronous>, transform_indices = @transform_14, window_bounds = array<i64: 128, 128>}, {pipeline_mode = #tpu.pipeline_mode<synchronous>, transform_indices = @transform_15, window_bounds = array<i64: 1, 128>}, {pipeline_mode = #tpu.pipeline_mode<synchronous>, transform_indices = @transform_16, window_bounds = array<i64: 1, 128>}, {pipeline_mode = #tpu.pipeline_mode<synchronous>, transform_indices = @transform_17, window_bounds = array<i64: 1, 128>}, {pipeline_mode = #tpu.pipeline_mode<synchronous>, transform_indices = @transform_18, window_bounds = array<i64: 128, 512>}, {pipeline_mode = #tpu.pipeline_mode<synchronous>, transform_indices = @transform_19, window_bounds = array<i64: 128, 512>}, {pipeline_mode = #tpu.pipeline_mode<synchronous>, transform_indices = @transform_20, window_bounds = array<i64: 1, 512>}, {pipeline_mode = #tpu.pipeline_mode<synchronous>, transform_indices = @transform_21, window_bounds = array<i64: 1, 512>}, {pipeline_mode = #tpu.pipeline_mode<synchronous>, transform_indices = @transform_22, window_bounds = array<i64: 512, 128>}, {pipeline_mode = #tpu.pipeline_mode<synchronous>, transform_indices = @transform_23, window_bounds = array<i64: 1, 128>}, {transform_indices = @transform_24, window_bounds = array<i64: 16, 128>}]} {
    %c0 = arith.constant 0 : index
    %c0_0 = arith.constant 0 : index
    %0 = vector.load %arg1[%c0, %c0_0] : memref<16x3xf32, #tpu.memory_space<vmem>>, vector<16x3xf32>
    %1 = vector.extract_strided_slice %0 {offsets = [0, 0], sizes = [16, 1], strides = [1, 1]} : vector<16x3xf32> to vector<16x1xf32>
    %c0_1 = arith.constant 0 : index
    %c0_2 = arith.constant 0 : index
    %2 = vector.load %arg3[%c0_1, %c0_2] : memref<3x24xf32, #tpu.memory_space<vmem>>, vector<1x24xf32>
    %3 = vector.broadcast %1 : vector<16x1xf32> to vector<16x24xf32>
    %4 = vector.broadcast %2 : vector<1x24xf32> to vector<16x24xf32>
    %5 = arith.mulf %3, %4 : vector<16x24xf32>
    %6 = vector.extract_strided_slice %0 {offsets = [0, 1], sizes = [16, 1], strides = [1, 1]} : vector<16x3xf32> to vector<16x1xf32>
    %c1 = arith.constant 1 : index
    %c0_3 = arith.constant 0 : index
    %7 = vector.load %arg3[%c1, %c0_3] : memref<3x24xf32, #tpu.memory_space<vmem>>, vector<1x24xf32>
    %8 = vector.broadcast %6 : vector<16x1xf32> to vector<16x24xf32>
    %9 = vector.broadcast %7 : vector<1x24xf32> to vector<16x24xf32>
    %10 = arith.mulf %8, %9 : vector<16x24xf32>
    %11 = arith.addf %5, %10 : vector<16x24xf32>
    %12 = vector.extract_strided_slice %0 {offsets = [0, 2], sizes = [16, 1], strides = [1, 1]} : vector<16x3xf32> to vector<16x1xf32>
    %c2 = arith.constant 2 : index
    %c0_4 = arith.constant 0 : index
    %13 = vector.load %arg3[%c2, %c0_4] : memref<3x24xf32, #tpu.memory_space<vmem>>, vector<1x24xf32>
    %14 = vector.broadcast %12 : vector<16x1xf32> to vector<16x24xf32>
    %15 = vector.broadcast %13 : vector<1x24xf32> to vector<16x24xf32>
    %16 = arith.mulf %14, %15 : vector<16x24xf32>
    %17 = arith.addf %11, %16 : vector<16x24xf32>
    %18 = math.sin %17 : vector<16x24xf32>
    %c0_5 = arith.constant 0 : index
    %c0_6 = arith.constant 0 : index
    %19 = vector.load %arg4[%c0_5, %c0_6] : memref<24x128xf32, #tpu.memory_space<vmem>>, vector<24x128xf32>
    %cst = arith.constant dense<0.000000e+00> : vector<16x128xf32>
    %20 = tpu.matmul %18, %19, %cst {dimension_numbers = #tpu.dot_dimension_numbers<[1], [0], [0], [1], [0, 0, 1, 1], [], []>} : vector<16x24xf32>, vector<24x128xf32>, vector<16x128xf32> -> vector<16x128xf32>
    %21 = math.cos %17 : vector<16x24xf32>
    %c0_7 = arith.constant 0 : index
    %c0_8 = arith.constant 0 : index
    %22 = vector.load %arg5[%c0_7, %c0_8] : memref<24x128xf32, #tpu.memory_space<vmem>>, vector<24x128xf32>
    %cst_9 = arith.constant dense<0.000000e+00> : vector<16x128xf32>
    %23 = tpu.matmul %21, %22, %cst_9 {dimension_numbers = #tpu.dot_dimension_numbers<[1], [0], [0], [1], [0, 0, 1, 1], [], []>} : vector<16x24xf32>, vector<24x128xf32>, vector<16x128xf32> -> vector<16x128xf32>
    %24 = arith.addf %20, %23 : vector<16x128xf32>
    %c0_10 = arith.constant 0 : index
    %c0_11 = arith.constant 0 : index
    %25 = vector.load %arg6[%c0_10, %c0_11] : memref<3x128xf32, #tpu.memory_space<vmem>>, vector<3x128xf32>
    %cst_12 = arith.constant dense<0.000000e+00> : vector<16x128xf32>
    %26 = tpu.matmul %0, %25, %cst_12 {dimension_numbers = #tpu.dot_dimension_numbers<[1], [0], [0], [1], [0, 0, 1, 1], [], []>} : vector<16x3xf32>, vector<3x128xf32>, vector<16x128xf32> -> vector<16x128xf32>
    %27 = arith.addf %24, %26 : vector<16x128xf32>
    %c0_13 = arith.constant 0 : index
    %c0_14 = arith.constant 0 : index
    %28 = vector.load %arg7[%c0_13, %c0_14] : memref<1x128xf32, #tpu.memory_space<vmem>>, vector<1x128xf32>
    %29 = vector.broadcast %28 : vector<1x128xf32> to vector<16x128xf32>
    %30 = arith.addf %27, %29 : vector<16x128xf32>
    %c0_15 = arith.constant 0 : index
    %c0_16 = arith.constant 0 : index
    %31 = vector.load %arg2[%c0_15, %c0_16] : memref<32x3xf32, #tpu.memory_space<vmem>>, vector<32x3xf32>
    %32 = vector.extract_strided_slice %31 {offsets = [0, 0], sizes = [32, 1], strides = [1, 1]} : vector<32x3xf32> to vector<32x1xf32>
    %c0_17 = arith.constant 0 : index
    %c0_18 = arith.constant 0 : index
    %33 = vector.load %arg3[%c0_17, %c0_18] : memref<3x24xf32, #tpu.memory_space<vmem>>, vector<1x24xf32>
    %34 = vector.broadcast %32 : vector<32x1xf32> to vector<32x24xf32>
    %35 = vector.broadcast %33 : vector<1x24xf32> to vector<32x24xf32>
    %36 = arith.mulf %34, %35 : vector<32x24xf32>
    %37 = vector.extract_strided_slice %31 {offsets = [0, 1], sizes = [32, 1], strides = [1, 1]} : vector<32x3xf32> to vector<32x1xf32>
    %c1_19 = arith.constant 1 : index
    %c0_20 = arith.constant 0 : index
    %38 = vector.load %arg3[%c1_19, %c0_20] : memref<3x24xf32, #tpu.memory_space<vmem>>, vector<1x24xf32>
    %39 = vector.broadcast %37 : vector<32x1xf32> to vector<32x24xf32>
    %40 = vector.broadcast %38 : vector<1x24xf32> to vector<32x24xf32>
    %41 = arith.mulf %39, %40 : vector<32x24xf32>
    %42 = arith.addf %36, %41 : vector<32x24xf32>
    %43 = vector.extract_strided_slice %31 {offsets = [0, 2], sizes = [32, 1], strides = [1, 1]} : vector<32x3xf32> to vector<32x1xf32>
    %c2_21 = arith.constant 2 : index
    %c0_22 = arith.constant 0 : index
    %44 = vector.load %arg3[%c2_21, %c0_22] : memref<3x24xf32, #tpu.memory_space<vmem>>, vector<1x24xf32>
    %45 = vector.broadcast %43 : vector<32x1xf32> to vector<32x24xf32>
    %46 = vector.broadcast %44 : vector<1x24xf32> to vector<32x24xf32>
    %47 = arith.mulf %45, %46 : vector<32x24xf32>
    %48 = arith.addf %42, %47 : vector<32x24xf32>
    %49 = math.sin %48 : vector<32x24xf32>
    %c0_23 = arith.constant 0 : index
    %c0_24 = arith.constant 0 : index
    %50 = vector.load %arg4[%c0_23, %c0_24] : memref<24x128xf32, #tpu.memory_space<vmem>>, vector<24x128xf32>
    %cst_25 = arith.constant dense<0.000000e+00> : vector<32x128xf32>
    %51 = tpu.matmul %49, %50, %cst_25 {dimension_numbers = #tpu.dot_dimension_numbers<[1], [0], [0], [1], [0, 0, 1, 1], [], []>} : vector<32x24xf32>, vector<24x128xf32>, vector<32x128xf32> -> vector<32x128xf32>
    %52 = math.cos %48 : vector<32x24xf32>
    %c0_26 = arith.constant 0 : index
    %c0_27 = arith.constant 0 : index
    %53 = vector.load %arg5[%c0_26, %c0_27] : memref<24x128xf32, #tpu.memory_space<vmem>>, vector<24x128xf32>
    %cst_28 = arith.constant dense<0.000000e+00> : vector<32x128xf32>
    %54 = tpu.matmul %52, %53, %cst_28 {dimension_numbers = #tpu.dot_dimension_numbers<[1], [0], [0], [1], [0, 0, 1, 1], [], []>} : vector<32x24xf32>, vector<24x128xf32>, vector<32x128xf32> -> vector<32x128xf32>
    %55 = arith.addf %51, %54 : vector<32x128xf32>
    %c0_29 = arith.constant 0 : index
    %c0_30 = arith.constant 0 : index
    %56 = vector.load %arg6[%c0_29, %c0_30] : memref<3x128xf32, #tpu.memory_space<vmem>>, vector<3x128xf32>
    %cst_31 = arith.constant dense<0.000000e+00> : vector<32x128xf32>
    %57 = tpu.matmul %31, %56, %cst_31 {dimension_numbers = #tpu.dot_dimension_numbers<[1], [0], [0], [1], [0, 0, 1, 1], [], []>} : vector<32x3xf32>, vector<3x128xf32>, vector<32x128xf32> -> vector<32x128xf32>
    %58 = arith.addf %55, %57 : vector<32x128xf32>
    %c0_32 = arith.constant 0 : index
    %c0_33 = arith.constant 0 : index
    %59 = vector.load %arg7[%c0_32, %c0_33] : memref<1x128xf32, #tpu.memory_space<vmem>>, vector<1x128xf32>
    %60 = vector.broadcast %59 : vector<1x128xf32> to vector<32x128xf32>
    %61 = arith.addf %58, %60 : vector<32x128xf32>
    %c0_34 = arith.constant 0 : index
    %c0_35 = arith.constant 0 : index
    %62 = vector.load %arg8[%c0_34, %c0_35] : memref<1x128xf32, #tpu.memory_space<vmem>>, vector<1x128xf32>
    %c0_36 = arith.constant 0 : index
    %c0_37 = arith.constant 0 : index
    %63 = vector.load %arg9[%c0_36, %c0_37] : memref<1x128xf32, #tpu.memory_space<vmem>>, vector<1x128xf32>
    %cst_38 = arith.constant dense<0.000000e+00> : vector<16xf32>
    %64 = vector.multi_reduction <add>, %30, %cst_38 [1] : vector<16x128xf32> to vector<16xf32>
    %65 = vector.shape_cast %64 : vector<16xf32> to vector<16x1xf32>
    %cst_39 = arith.constant 1.280000e+02 : f32
    %66 = vector.broadcast %cst_39 : f32 to vector<16x1xf32>
    %67 = arith.divf %65, %66 : vector<16x1xf32>
    %68 = vector.broadcast %67 : vector<16x1xf32> to vector<16x128xf32>
    %69 = arith.subf %30, %68 : vector<16x128xf32>
    %70 = arith.mulf %69, %69 : vector<16x128xf32>
    %cst_40 = arith.constant dense<0.000000e+00> : vector<16xf32>
    %71 = vector.multi_reduction <add>, %70, %cst_40 [1] : vector<16x128xf32> to vector<16xf32>
    %72 = vector.shape_cast %71 : vector<16xf32> to vector<16x1xf32>
    %cst_41 = arith.constant 1.280000e+02 : f32
    %73 = vector.broadcast %cst_41 : f32 to vector<16x1xf32>
    %74 = arith.divf %72, %73 : vector<16x1xf32>
    %75 = vector.broadcast %67 : vector<16x1xf32> to vector<16x128xf32>
    %76 = arith.subf %30, %75 : vector<16x128xf32>
    %cst_42 = arith.constant 9.99999974E-6 : f32
    %77 = vector.broadcast %cst_42 : f32 to vector<16x1xf32>
    %78 = arith.addf %74, %77 : vector<16x1xf32>
    %79 = math.rsqrt %78 : vector<16x1xf32>
    %80 = vector.broadcast %79 : vector<16x1xf32> to vector<16x128xf32>
    %81 = arith.mulf %76, %80 : vector<16x128xf32>
    %82 = vector.broadcast %62 : vector<1x128xf32> to vector<16x128xf32>
    %83 = arith.mulf %81, %82 : vector<16x128xf32>
    %84 = vector.broadcast %63 : vector<1x128xf32> to vector<16x128xf32>
    %85 = arith.addf %83, %84 : vector<16x128xf32>
    %c0_43 = arith.constant 0 : index
    %c0_44 = arith.constant 0 : index
    %86 = vector.load %arg10[%c0_43, %c0_44] : memref<1x128xf32, #tpu.memory_space<vmem>>, vector<1x128xf32>
    %c0_45 = arith.constant 0 : index
    %c0_46 = arith.constant 0 : index
    %87 = vector.load %arg11[%c0_45, %c0_46] : memref<1x128xf32, #tpu.memory_space<vmem>>, vector<1x128xf32>
    %cst_47 = arith.constant dense<0.000000e+00> : vector<32xf32>
    %88 = vector.multi_reduction <add>, %61, %cst_47 [1] : vector<32x128xf32> to vector<32xf32>
    %89 = vector.shape_cast %88 : vector<32xf32> to vector<32x1xf32>
    %cst_48 = arith.constant 1.280000e+02 : f32
    %90 = vector.broadcast %cst_48 : f32 to vector<32x1xf32>
    %91 = arith.divf %89, %90 : vector<32x1xf32>
    %92 = vector.broadcast %91 : vector<32x1xf32> to vector<32x128xf32>
    %93 = arith.subf %61, %92 : vector<32x128xf32>
    %94 = arith.mulf %93, %93 : vector<32x128xf32>
    %cst_49 = arith.constant dense<0.000000e+00> : vector<32xf32>
    %95 = vector.multi_reduction <add>, %94, %cst_49 [1] : vector<32x128xf32> to vector<32xf32>
    %96 = vector.shape_cast %95 : vector<32xf32> to vector<32x1xf32>
    %cst_50 = arith.constant 1.280000e+02 : f32
    %97 = vector.broadcast %cst_50 : f32 to vector<32x1xf32>
    %98 = arith.divf %96, %97 : vector<32x1xf32>
    %99 = vector.broadcast %91 : vector<32x1xf32> to vector<32x128xf32>
    %100 = arith.subf %61, %99 : vector<32x128xf32>
    %cst_51 = arith.constant 9.99999974E-6 : f32
    %101 = vector.broadcast %cst_51 : f32 to vector<32x1xf32>
    %102 = arith.addf %98, %101 : vector<32x1xf32>
    %103 = math.rsqrt %102 : vector<32x1xf32>
    %104 = vector.broadcast %103 : vector<32x1xf32> to vector<32x128xf32>
    %105 = arith.mulf %100, %104 : vector<32x128xf32>
    %106 = vector.broadcast %86 : vector<1x128xf32> to vector<32x128xf32>
    %107 = arith.mulf %105, %106 : vector<32x128xf32>
    %108 = vector.broadcast %87 : vector<1x128xf32> to vector<32x128xf32>
    %109 = arith.addf %107, %108 : vector<32x128xf32>
    %c0_52 = arith.constant 0 : index
    %c0_53 = arith.constant 0 : index
    %110 = vector.load %arg12[%c0_52, %c0_53] : memref<128x128xf32, #tpu.memory_space<vmem>>, vector<128x128xf32>
    %cst_54 = arith.constant dense<0.000000e+00> : vector<16x128xf32>
    %111 = tpu.matmul %85, %110, %cst_54 {dimension_numbers = #tpu.dot_dimension_numbers<[1], [0], [0], [1], [0, 0, 1, 1], [], []>} : vector<16x128xf32>, vector<128x128xf32>, vector<16x128xf32> -> vector<16x128xf32>
    %c0_55 = arith.constant 0 : index
    %c0_56 = arith.constant 0 : index
    %112 = vector.load %arg13[%c0_55, %c0_56] : memref<128x128xf32, #tpu.memory_space<vmem>>, vector<128x128xf32>
    %cst_57 = arith.constant dense<0.000000e+00> : vector<32x128xf32>
    %113 = tpu.matmul %109, %112, %cst_57 {dimension_numbers = #tpu.dot_dimension_numbers<[1], [0], [0], [1], [0, 0, 1, 1], [], []>} : vector<32x128xf32>, vector<128x128xf32>, vector<32x128xf32> -> vector<32x128xf32>
    %c0_58 = arith.constant 0 : index
    %c0_59 = arith.constant 0 : index
    %114 = vector.load %arg14[%c0_58, %c0_59] : memref<128x128xf32, #tpu.memory_space<vmem>>, vector<128x128xf32>
    %cst_60 = arith.constant dense<0.000000e+00> : vector<32x128xf32>
    %115 = tpu.matmul %109, %114, %cst_60 {dimension_numbers = #tpu.dot_dimension_numbers<[1], [0], [0], [1], [0, 0, 1, 1], [], []>} : vector<32x128xf32>, vector<128x128xf32>, vector<32x128xf32> -> vector<32x128xf32>
    %116 = vector.extract_strided_slice %111 {offsets = [0, 0], sizes = [8, 128], strides = [1, 1]} : vector<16x128xf32> to vector<8x128xf32>
    %117 = vector.extract_strided_slice %113 {offsets = [0, 0], sizes = [16, 128], strides = [1, 1]} : vector<32x128xf32> to vector<16x128xf32>
    %118 = vector.extract_strided_slice %115 {offsets = [0, 0], sizes = [16, 128], strides = [1, 1]} : vector<32x128xf32> to vector<16x128xf32>
    %cst_61 = arith.constant dense<0.000000e+00> : vector<8x16xf32>
    %119 = tpu.matmul %116, %117, %cst_61 {dimension_numbers = #tpu.dot_dimension_numbers<[1], [1], [0], [0], [0, 0, 1, 0], [], []>} : vector<8x128xf32>, vector<16x128xf32>, vector<8x16xf32> -> vector<8x16xf32>
    %cst_62 = arith.constant dense<0xFF800000> : vector<8xf32>
    %120 = vector.multi_reduction <maximumf>, %119, %cst_62 [1] : vector<8x16xf32> to vector<8xf32>
    %121 = vector.shape_cast %120 : vector<8xf32> to vector<8x1xf32>
    %122 = vector.broadcast %121 : vector<8x1xf32> to vector<8x16xf32>
    %123 = arith.subf %119, %122 : vector<8x16xf32>
    %124 = math.exp %123 : vector<8x16xf32>
    %cst_63 = arith.constant dense<0.000000e+00> : vector<8xf32>
    %125 = vector.multi_reduction <add>, %124, %cst_63 [1] : vector<8x16xf32> to vector<8xf32>
    %126 = vector.shape_cast %125 : vector<8xf32> to vector<8x1xf32>
    %127 = vector.broadcast %126 : vector<8x1xf32> to vector<8x16xf32>
    %128 = arith.divf %124, %127 : vector<8x16xf32>
    %cst_64 = arith.constant dense<0.000000e+00> : vector<8x128xf32>
    %129 = tpu.matmul %128, %118, %cst_64 {dimension_numbers = #tpu.dot_dimension_numbers<[1], [0], [0], [1], [0, 0, 1, 1], [], []>} : vector<8x16xf32>, vector<16x128xf32>, vector<8x128xf32> -> vector<8x128xf32>
    %130 = vector.extract_strided_slice %111 {offsets = [8, 0], sizes = [8, 128], strides = [1, 1]} : vector<16x128xf32> to vector<8x128xf32>
    %131 = vector.extract_strided_slice %113 {offsets = [16, 0], sizes = [16, 128], strides = [1, 1]} : vector<32x128xf32> to vector<16x128xf32>
    %132 = vector.extract_strided_slice %115 {offsets = [16, 0], sizes = [16, 128], strides = [1, 1]} : vector<32x128xf32> to vector<16x128xf32>
    %cst_65 = arith.constant dense<0.000000e+00> : vector<8x16xf32>
    %133 = tpu.matmul %130, %131, %cst_65 {dimension_numbers = #tpu.dot_dimension_numbers<[1], [1], [0], [0], [0, 0, 1, 0], [], []>} : vector<8x128xf32>, vector<16x128xf32>, vector<8x16xf32> -> vector<8x16xf32>
    %cst_66 = arith.constant dense<0xFF800000> : vector<8xf32>
    %134 = vector.multi_reduction <maximumf>, %133, %cst_66 [1] : vector<8x16xf32> to vector<8xf32>
    %135 = vector.shape_cast %134 : vector<8xf32> to vector<8x1xf32>
    %136 = vector.broadcast %135 : vector<8x1xf32> to vector<8x16xf32>
    %137 = arith.subf %133, %136 : vector<8x16xf32>
    %138 = math.exp %137 : vector<8x16xf32>
    %cst_67 = arith.constant dense<0.000000e+00> : vector<8xf32>
    %139 = vector.multi_reduction <add>, %138, %cst_67 [1] : vector<8x16xf32> to vector<8xf32>
    %140 = vector.shape_cast %139 : vector<8xf32> to vector<8x1xf32>
    %141 = vector.broadcast %140 : vector<8x1xf32> to vector<8x16xf32>
    %142 = arith.divf %138, %141 : vector<8x16xf32>
    %cst_68 = arith.constant dense<0.000000e+00> : vector<8x128xf32>
    %143 = tpu.matmul %142, %132, %cst_68 {dimension_numbers = #tpu.dot_dimension_numbers<[1], [0], [0], [1], [0, 0, 1, 1], [], []>} : vector<8x16xf32>, vector<16x128xf32>, vector<8x128xf32> -> vector<8x128xf32>
    %144 = tpu.concatenate %129, %143 in 0 : vector<8x128xf32>, vector<8x128xf32> -> vector<16x128xf32>
    %c0_69 = arith.constant 0 : index
    %c0_70 = arith.constant 0 : index
    %145 = vector.load %arg15[%c0_69, %c0_70] : memref<128x128xf32, #tpu.memory_space<vmem>>, vector<128x128xf32>
    %cst_71 = arith.constant dense<0.000000e+00> : vector<16x128xf32>
    %146 = tpu.matmul %144, %145, %cst_71 {dimension_numbers = #tpu.dot_dimension_numbers<[1], [0], [0], [1], [0, 0, 1, 1], [], []>} : vector<16x128xf32>, vector<128x128xf32>, vector<16x128xf32> -> vector<16x128xf32>
    %c0_72 = arith.constant 0 : index
    %c0_73 = arith.constant 0 : index
    %147 = vector.load %arg16[%c0_72, %c0_73] : memref<1x128xf32, #tpu.memory_space<vmem>>, vector<1x128xf32>
    %148 = vector.broadcast %147 : vector<1x128xf32> to vector<16x128xf32>
    %149 = arith.addf %146, %148 : vector<16x128xf32>
    %150 = arith.addf %149, %30 : vector<16x128xf32>
    %c0_74 = arith.constant 0 : index
    %c0_75 = arith.constant 0 : index
    %151 = vector.load %arg17[%c0_74, %c0_75] : memref<1x128xf32, #tpu.memory_space<vmem>>, vector<1x128xf32>
    %c0_76 = arith.constant 0 : index
    %c0_77 = arith.constant 0 : index
    %152 = vector.load %arg18[%c0_76, %c0_77] : memref<1x128xf32, #tpu.memory_space<vmem>>, vector<1x128xf32>
    %cst_78 = arith.constant dense<0.000000e+00> : vector<16xf32>
    %153 = vector.multi_reduction <add>, %150, %cst_78 [1] : vector<16x128xf32> to vector<16xf32>
    %154 = vector.shape_cast %153 : vector<16xf32> to vector<16x1xf32>
    %cst_79 = arith.constant 1.280000e+02 : f32
    %155 = vector.broadcast %cst_79 : f32 to vector<16x1xf32>
    %156 = arith.divf %154, %155 : vector<16x1xf32>
    %157 = vector.broadcast %156 : vector<16x1xf32> to vector<16x128xf32>
    %158 = arith.subf %150, %157 : vector<16x128xf32>
    %159 = arith.mulf %158, %158 : vector<16x128xf32>
    %cst_80 = arith.constant dense<0.000000e+00> : vector<16xf32>
    %160 = vector.multi_reduction <add>, %159, %cst_80 [1] : vector<16x128xf32> to vector<16xf32>
    %161 = vector.shape_cast %160 : vector<16xf32> to vector<16x1xf32>
    %cst_81 = arith.constant 1.280000e+02 : f32
    %162 = vector.broadcast %cst_81 : f32 to vector<16x1xf32>
    %163 = arith.divf %161, %162 : vector<16x1xf32>
    %164 = vector.broadcast %156 : vector<16x1xf32> to vector<16x128xf32>
    %165 = arith.subf %150, %164 : vector<16x128xf32>
    %cst_82 = arith.constant 9.99999974E-6 : f32
    %166 = vector.broadcast %cst_82 : f32 to vector<16x1xf32>
    %167 = arith.addf %163, %166 : vector<16x1xf32>
    %168 = math.rsqrt %167 : vector<16x1xf32>
    %169 = vector.broadcast %168 : vector<16x1xf32> to vector<16x128xf32>
    %170 = arith.mulf %165, %169 : vector<16x128xf32>
    %171 = vector.broadcast %151 : vector<1x128xf32> to vector<16x128xf32>
    %172 = arith.mulf %170, %171 : vector<16x128xf32>
    %173 = vector.broadcast %152 : vector<1x128xf32> to vector<16x128xf32>
    %174 = arith.addf %172, %173 : vector<16x128xf32>
    %c0_83 = arith.constant 0 : index
    %c0_84 = arith.constant 0 : index
    %175 = vector.load %arg19[%c0_83, %c0_84] : memref<128x512xf32, #tpu.memory_space<vmem>>, vector<128x512xf32>
    %cst_85 = arith.constant dense<0.000000e+00> : vector<16x512xf32>
    %176 = tpu.matmul %174, %175, %cst_85 {dimension_numbers = #tpu.dot_dimension_numbers<[1], [0], [0], [1], [0, 0, 1, 1], [], []>} : vector<16x128xf32>, vector<128x512xf32>, vector<16x512xf32> -> vector<16x512xf32>
    %c0_86 = arith.constant 0 : index
    %c0_87 = arith.constant 0 : index
    %177 = vector.load %arg21[%c0_86, %c0_87] : memref<1x512xf32, #tpu.memory_space<vmem>>, vector<1x512xf32>
    %178 = vector.broadcast %177 : vector<1x512xf32> to vector<16x512xf32>
    %179 = arith.addf %176, %178 : vector<16x512xf32>
    %c0_88 = arith.constant 0 : index
    %c0_89 = arith.constant 0 : index
    %180 = vector.load %arg20[%c0_88, %c0_89] : memref<128x512xf32, #tpu.memory_space<vmem>>, vector<128x512xf32>
    %cst_90 = arith.constant dense<0.000000e+00> : vector<16x512xf32>
    %181 = tpu.matmul %174, %180, %cst_90 {dimension_numbers = #tpu.dot_dimension_numbers<[1], [0], [0], [1], [0, 0, 1, 1], [], []>} : vector<16x128xf32>, vector<128x512xf32>, vector<16x512xf32> -> vector<16x512xf32>
    %c0_91 = arith.constant 0 : index
    %c0_92 = arith.constant 0 : index
    %182 = vector.load %arg22[%c0_91, %c0_92] : memref<1x512xf32, #tpu.memory_space<vmem>>, vector<1x512xf32>
    %183 = vector.broadcast %182 : vector<1x512xf32> to vector<16x512xf32>
    %184 = arith.addf %181, %183 : vector<16x512xf32>
    %cst_93 = arith.constant 5.000000e-01 : f32
    %185 = vector.broadcast %cst_93 : f32 to vector<16x512xf32>
    %186 = arith.mulf %185, %184 : vector<16x512xf32>
    %cst_94 = arith.constant 0.707106769 : f32
    %187 = vector.broadcast %cst_94 : f32 to vector<16x512xf32>
    %188 = arith.mulf %184, %187 : vector<16x512xf32>
    %189 = math.absf %188 : vector<16x512xf32>
    %cst_95 = arith.constant 0.327591091 : f32
    %190 = vector.broadcast %cst_95 : f32 to vector<16x512xf32>
    %191 = arith.mulf %190, %189 : vector<16x512xf32>
    %cst_96 = arith.constant 1.000000e+00 : f32
    %192 = vector.broadcast %cst_96 : f32 to vector<16x512xf32>
    %193 = arith.addf %192, %191 : vector<16x512xf32>
    %cst_97 = arith.constant 1.000000e+00 : f32
    %194 = vector.broadcast %cst_97 : f32 to vector<16x512xf32>
    %195 = arith.divf %194, %193 : vector<16x512xf32>
    %cst_98 = arith.constant 1.06140542 : f32
    %196 = vector.broadcast %cst_98 : f32 to vector<16x512xf32>
    %197 = arith.mulf %195, %196 : vector<16x512xf32>
    %cst_99 = arith.constant -1.45315206 : f32
    %198 = vector.broadcast %cst_99 : f32 to vector<16x512xf32>
    %199 = arith.addf %198, %197 : vector<16x512xf32>
    %200 = arith.mulf %195, %199 : vector<16x512xf32>
    %cst_100 = arith.constant 1.42141378 : f32
    %201 = vector.broadcast %cst_100 : f32 to vector<16x512xf32>
    %202 = arith.addf %201, %200 : vector<16x512xf32>
    %203 = arith.mulf %195, %202 : vector<16x512xf32>
    %cst_101 = arith.constant -0.284496725 : f32
    %204 = vector.broadcast %cst_101 : f32 to vector<16x512xf32>
    %205 = arith.addf %204, %203 : vector<16x512xf32>
    %206 = arith.mulf %195, %205 : vector<16x512xf32>
    %cst_102 = arith.constant 0.254829586 : f32
    %207 = vector.broadcast %cst_102 : f32 to vector<16x512xf32>
    %208 = arith.addf %207, %206 : vector<16x512xf32>
    %209 = arith.mulf %195, %208 : vector<16x512xf32>
    %210 = arith.mulf %189, %189 : vector<16x512xf32>
    %cst_103 = arith.constant 0.000000e+00 : f32
    %211 = vector.broadcast %cst_103 : f32 to vector<16x512xf32>
    %212 = arith.subf %211, %210 : vector<16x512xf32>
    %213 = math.exp %212 : vector<16x512xf32>
    %214 = arith.mulf %209, %213 : vector<16x512xf32>
    %cst_104 = arith.constant 1.000000e+00 : f32
    %215 = vector.broadcast %cst_104 : f32 to vector<16x512xf32>
    %216 = arith.subf %215, %214 : vector<16x512xf32>
    %cst_105 = arith.constant 0.000000e+00 : f32
    %217 = vector.broadcast %cst_105 : f32 to vector<16x512xf32>
    %218 = arith.cmpf olt, %188, %217 : vector<16x512xf32>
    %cst_106 = arith.constant 0.000000e+00 : f32
    %219 = vector.broadcast %cst_106 : f32 to vector<16x512xf32>
    %220 = arith.subf %219, %216 : vector<16x512xf32>
    %221 = arith.select %218, %220, %216 : vector<16x512xi1>, vector<16x512xf32>
    %cst_107 = arith.constant 1.000000e+00 : f32
    %222 = vector.broadcast %cst_107 : f32 to vector<16x512xf32>
    %223 = arith.addf %222, %221 : vector<16x512xf32>
    %224 = arith.mulf %186, %223 : vector<16x512xf32>
    %225 = arith.mulf %179, %224 : vector<16x512xf32>
    %c0_108 = arith.constant 0 : index
    %c0_109 = arith.constant 0 : index
    %226 = vector.load %arg23[%c0_108, %c0_109] : memref<512x128xf32, #tpu.memory_space<vmem>>, vector<512x128xf32>
    %cst_110 = arith.constant dense<0.000000e+00> : vector<16x128xf32>
    %227 = tpu.matmul %225, %226, %cst_110 {dimension_numbers = #tpu.dot_dimension_numbers<[1], [0], [0], [1], [0, 0, 1, 1], [], []>} : vector<16x512xf32>, vector<512x128xf32>, vector<16x128xf32> -> vector<16x128xf32>
    %c0_111 = arith.constant 0 : index
    %c0_112 = arith.constant 0 : index
    %228 = vector.load %arg24[%c0_111, %c0_112] : memref<1x128xf32, #tpu.memory_space<vmem>>, vector<1x128xf32>
    %229 = vector.broadcast %228 : vector<1x128xf32> to vector<16x128xf32>
    %230 = arith.addf %227, %229 : vector<16x128xf32>
    %231 = arith.addf %230, %150 : vector<16x128xf32>
    %c0_113 = arith.constant 0 : index
    %c0_114 = arith.constant 0 : index
    %232 = vector.load %arg25[%c0_113, %c0_114] : memref<16x128xf32, #tpu.memory_space<vmem>>, vector<16x128xf32>
    tpu.vector_store %arg25[%c0_113, %c0_114], %231 {strides = array<i32>} : memref<16x128xf32, #tpu.memory_space<vmem>>, vector<16x128xf32>,
    return
  }
  func.func @transform_0(%arg0: i32) -> (i32, i32) {
    %c0_i32 = arith.constant 0 : i32
    %c0_i32_0 = arith.constant 0 : i32
    return %arg0, %c0_i32 : i32, i32
  }
  func.func @transform_1(%arg0: i32) -> (i32, i32) {
    %c0_i32 = arith.constant 0 : i32
    %c0_i32_0 = arith.constant 0 : i32
    return %arg0, %c0_i32 : i32, i32
  }
  func.func @transform_2(%arg0: i32) -> (i32, i32) {
    %c0_i32 = arith.constant 0 : i32
    %c0_i32_0 = arith.constant 0 : i32
    %c0_i32_1 = arith.constant 0 : i32
    return %c0_i32, %c0_i32_0 : i32, i32
  }
  func.func @transform_3(%arg0: i32) -> (i32, i32) {
    %c0_i32 = arith.constant 0 : i32
    %c0_i32_0 = arith.constant 0 : i32
    %c0_i32_1 = arith.constant 0 : i32
    return %c0_i32, %c0_i32_0 : i32, i32
  }
  func.func @transform_4(%arg0: i32) -> (i32, i32) {
    %c0_i32 = arith.constant 0 : i32
    %c0_i32_0 = arith.constant 0 : i32
    %c0_i32_1 = arith.constant 0 : i32
    return %c0_i32, %c0_i32_0 : i32, i32
  }
  func.func @transform_5(%arg0: i32) -> (i32, i32) {
    %c0_i32 = arith.constant 0 : i32
    %c0_i32_0 = arith.constant 0 : i32
    %c0_i32_1 = arith.constant 0 : i32
    return %c0_i32, %c0_i32_0 : i32, i32
  }
  func.func @transform_6(%arg0: i32) -> (i32, i32) {
    %c0_i32 = arith.constant 0 : i32
    %c0_i32_0 = arith.constant 0 : i32
    %c0_i32_1 = arith.constant 0 : i32
    return %c0_i32, %c0_i32_0 : i32, i32
  }
  func.func @transform_7(%arg0: i32) -> (i32, i32) {
    %c0_i32 = arith.constant 0 : i32
    %c0_i32_0 = arith.constant 0 : i32
    %c0_i32_1 = arith.constant 0 : i32
    return %c0_i32, %c0_i32_0 : i32, i32
  }
  func.func @transform_8(%arg0: i32) -> (i32, i32) {
    %c0_i32 = arith.constant 0 : i32
    %c0_i32_0 = arith.constant 0 : i32
    %c0_i32_1 = arith.constant 0 : i32
    return %c0_i32, %c0_i32_0 : i32, i32
  }
  func.func @transform_9(%arg0: i32) -> (i32, i32) {
    %c0_i32 = arith.constant 0 : i32
    %c0_i32_0 = arith.constant 0 : i32
    %c0_i32_1 = arith.constant 0 : i32
    return %c0_i32, %c0_i32_0 : i32, i32
  }
  func.func @transform_10(%arg0: i32) -> (i32, i32) {
    %c0_i32 = arith.constant 0 : i32
    %c0_i32_0 = arith.constant 0 : i32
    %c0_i32_1 = arith.constant 0 : i32
    return %c0_i32, %c0_i32_0 : i32, i32
  }
  func.func @transform_11(%arg0: i32) -> (i32, i32) {
    %c0_i32 = arith.constant 0 : i32
    %c0_i32_0 = arith.constant 0 : i32
    %c0_i32_1 = arith.constant 0 : i32
    return %c0_i32, %c0_i32_0 : i32, i32
  }
  func.func @transform_12(%arg0: i32) -> (i32, i32) {
    %c0_i32 = arith.constant 0 : i32
    %c0_i32_0 = arith.constant 0 : i32
    %c0_i32_1 = arith.constant 0 : i32
    return %c0_i32, %c0_i32_0 : i32, i32
  }
  func.func @transform_13(%arg0: i32) -> (i32, i32) {
    %c0_i32 = arith.constant 0 : i32
    %c0_i32_0 = arith.constant 0 : i32
    %c0_i32_1 = arith.constant 0 : i32
    return %c0_i32, %c0_i32_0 : i32, i32
  }
  func.func @transform_14(%arg0: i32) -> (i32, i32) {
    %c0_i32 = arith.constant 0 : i32
    %c0_i32_0 = arith.constant 0 : i32
    %c0_i32_1 = arith.constant 0 : i32
    return %c0_i32, %c0_i32_0 : i32, i32
  }
  func.func @transform_15(%arg0: i32) -> (i32, i32) {
    %c0_i32 = arith.constant 0 : i32
    %c0_i32_0 = arith.constant 0 : i32
    %c0_i32_1 = arith.constant 0 : i32
    return %c0_i32, %c0_i32_0 : i32, i32
  }
  func.func @transform_16(%arg0: i32) -> (i32, i32) {
    %c0_i32 = arith.constant 0 : i32
    %c0_i32_0 = arith.constant 0 : i32
    %c0_i32_1 = arith.constant 0 : i32
    return %c0_i32, %c0_i32_0 : i32, i32
  }
  func.func @transform_17(%arg0: i32) -> (i32, i32) {
    %c0_i32 = arith.constant 0 : i32
    %c0_i32_0 = arith.constant 0 : i32
    %c0_i32_1 = arith.constant 0 : i32
    return %c0_i32, %c0_i32_0 : i32, i32
  }
  func.func @transform_18(%arg0: i32) -> (i32, i32) {
    %c0_i32 = arith.constant 0 : i32
    %c0_i32_0 = arith.constant 0 : i32
    %c0_i32_1 = arith.constant 0 : i32
    return %c0_i32, %c0_i32_0 : i32, i32
  }
  func.func @transform_19(%arg0: i32) -> (i32, i32) {
    %c0_i32 = arith.constant 0 : i32
    %c0_i32_0 = arith.constant 0 : i32
    %c0_i32_1 = arith.constant 0 : i32
    return %c0_i32, %c0_i32_0 : i32, i32
  }
  func.func @transform_20(%arg0: i32) -> (i32, i32) {
    %c0_i32 = arith.constant 0 : i32
    %c0_i32_0 = arith.constant 0 : i32
    %c0_i32_1 = arith.constant 0 : i32
    return %c0_i32, %c0_i32_0 : i32, i32
  }
  func.func @transform_21(%arg0: i32) -> (i32, i32) {
    %c0_i32 = arith.constant 0 : i32
    %c0_i32_0 = arith.constant 0 : i32
    %c0_i32_1 = arith.constant 0 : i32
    return %c0_i32, %c0_i32_0 : i32, i32
  }
  func.func @transform_22(%arg0: i32) -> (i32, i32) {
    %c0_i32 = arith.constant 0 : i32
    %c0_i32_0 = arith.constant 0 : i32
    %c0_i32_1 = arith.constant 0 : i32
    return %c0_i32, %c0_i32_0 : i32, i32
  }
  func.func @transform_23(%arg0: i32) -> (i32, i32) {
    %c0_i32 = arith.constant 0 : i32
    %c0_i32_0 = arith.constant 0 : i32
    %c0_i32_1 = arith.constant 0 : i32
    return %c0_i32, %c0_i32_0 : i32, i32
  }
  func.func @transform_24(%arg0: i32) -> (i32, i32) {
    %c0_i32 = arith.constant 0 : i32
    %c0_i32_0 = arith.constant 0 : i32
    return %arg0, %c0_i32 : i32, i32
  }
}

</mosaic_0001>

<llo_original>
// kernel: vecset_encoder_forward.1
$region0: #{vecset_encoder_forward.1}
  #allocation0 [shape = 'u32[]', space=smem, size = 0x4, offset = 0x4, fixed_abs, tag = 'smem constant byte address 0x4 - core index']
  #allocation1 [shape = 'u32[72,128]{1,0:T(1,128)}', space=vmem, size = 0x9000, scoped, tag = 'internal scratch']
  %s0 = inlined_call_operand.vmem [shape: f32[32,3], index: 0, kind: input, shape index: {}]
  %s1 = inlined_call_operand.vmem [shape: f32[64,3], index: 1, kind: input, shape index: {}]
  %s2 = inlined_call_operand.vmem [shape: f32[3,24], index: 2, kind: input, shape index: {}]
  %s3 = inlined_call_operand.vmem [shape: f32[24,128], index: 3, kind: input, shape index: {}]
  %s4 = inlined_call_operand.vmem [shape: f32[24,128], index: 4, kind: input, shape index: {}]
  %s5 = inlined_call_operand.vmem [shape: f32[3,128], index: 5, kind: input, shape index: {}]
  %s6 = inlined_call_operand.vmem [shape: f32[1,128], index: 6, kind: input, shape index: {}]
  %s7 = inlined_call_operand.vmem [shape: f32[1,128], index: 7, kind: input, shape index: {}]
  %s8 = inlined_call_operand.vmem [shape: f32[1,128], index: 8, kind: input, shape index: {}]
  %s9 = inlined_call_operand.vmem [shape: f32[1,128], index: 9, kind: input, shape index: {}]
  %s10 = inlined_call_operand.vmem [shape: f32[1,128], index: 10, kind: input, shape index: {}]
  %s11 = inlined_call_operand.vmem [shape: f32[128,128], index: 11, kind: input, shape index: {}]
  %s12 = inlined_call_operand.vmem [shape: f32[128,128], index: 12, kind: input, shape index: {}]
  %s13 = inlined_call_operand.vmem [shape: f32[128,128], index: 13, kind: input, shape index: {}]
  %s14 = inlined_call_operand.vmem [shape: f32[128,128], index: 14, kind: input, shape index: {}]
  %s15 = inlined_call_operand.vmem [shape: f32[1,128], index: 15, kind: input, shape index: {}]
  %s16 = inlined_call_operand.vmem [shape: f32[1,128], index: 16, kind: input, shape index: {}]
  %s17 = inlined_call_operand.vmem [shape: f32[1,128], index: 17, kind: input, shape index: {}]
  %s18 = inlined_call_operand.vmem [shape: f32[128,512], index: 18, kind: input, shape index: {}]
  %s19 = inlined_call_operand.vmem [shape: f32[128,512], index: 19, kind: input, shape index: {}]
  %s20 = inlined_call_operand.vmem [shape: f32[1,512], index: 20, kind: input, shape index: {}]
  %s21 = inlined_call_operand.vmem [shape: f32[1,512], index: 21, kind: input, shape index: {}]
  %s22 = inlined_call_operand.vmem [shape: f32[512,128], index: 22, kind: input, shape index: {}]
  %s23 = inlined_call_operand.vmem [shape: f32[1,128], index: 23, kind: input, shape index: {}]
  %s24 = inlined_call_operand.hbm [shape: f32[32,128], index: 24, kind: output, shape index: {}]
  %s25 = sld [smem:[#allocation0]]
  $region129: #{vecset_encoder_forward.1} parent=0
    _
  %s27 = ssub.s32 1, %s25
  %s28 = scalar_select 0, %s27, %s25
  $region1: #{vecset_encoder_forward.1} parent=0
    #allocation2 [shape = 'u8[16384]{0}', space=vmem, size = 0x4000, scoped, tag = 'output window, operand 0']
    #allocation3 [shape = 's32[2]{0}', space=sflag, size = 0x8, scoped, tag = 'scoped memory for vecset_encoder_forward.1']
    %29 = vsyncpa [#allocation3], 0
    %s30 = scalar_lea.sflag [#allocation3], 1
    %31 = vsyncpa %s30, 0
    loop: start=0, step=1, limit=4
    $region2: #{vecset_encoder_forward.1} parent=1 // loop_pre_header
      _
    $region3: #{vecset_encoder_forward.1} parent=1 // loop_header
      %s33 = sphi 0, %s37
      %p34 = scmp.ge.s32.totalorder %s33, 4
      %s43 = sphi 0, %s45
      %s46 = sphi 0, %s43
      %s47 = sphi 0, %s46
      %s63 = sphi 0, %s47
      %s69 = sphi 0, %s71
      %s72 = sphi 0, %s69
      %s73 = sphi 0, %s72
      %s89 = sphi 0, %s73
      %s93 = sphi 0, %s93
      %s95 = sphi 0, %s93
      %s96 = sphi 0, %s95
      %s110 = sphi 0, %s96
      %s114 = sphi 0, %s114
      %s116 = sphi 0, %s114
      %s117 = sphi 0, %s116
      %s131 = sphi 0, %s117
      %s135 = sphi 0, %s135
      %s137 = sphi 0, %s135
      %s138 = sphi 0, %s137
      %s152 = sphi 0, %s138
      %s156 = sphi 0, %s156
      %s158 = sphi 0, %s156
      %s159 = sphi 0, %s158
      %s173 = sphi 0, %s159
      %s177 = sphi 0, %s177
      %s179 = sphi 0, %s177
      %s180 = sphi 0, %s179
      %s194 = sphi 0, %s180
      %s198 = sphi 0, %s198
      %s200 = sphi 0, %s198
      %s201 = sphi 0, %s200
      %s215 = sphi 0, %s201
      %s219 = sphi 0, %s219
      %s221 = sphi 0, %s219
      %s222 = sphi 0, %s221
      %s236 = sphi 0, %s222
      %s240 = sphi 0, %s240
      %s242 = sphi 0, %s240
      %s243 = sphi 0, %s242
      %s257 = sphi 0, %s243
      %s261 = sphi 0, %s261
      %s263 = sphi 0, %s261
      %s264 = sphi 0, %s263
      %s278 = sphi 0, %s264
      %s282 = sphi 0, %s282
      %s284 = sphi 0, %s282
      %s285 = sphi 0, %s284
      %s299 = sphi 0, %s285
      %s303 = sphi 0, %s303
      %s305 = sphi 0, %s303
      %s306 = sphi 0, %s305
      %s320 = sphi 0, %s306
      %s324 = sphi 0, %s324
      %s326 = sphi 0, %s324
      %s327 = sphi 0, %s326
      %s341 = sphi 0, %s327
      %s345 = sphi 0, %s345
      %s347 = sphi 0, %s345
      %s348 = sphi 0, %s347
      %s362 = sphi 0, %s348
      %s366 = sphi 0, %s366
      %s368 = sphi 0, %s366
      %s369 = sphi 0, %s368
      %s383 = sphi 0, %s369
      %s387 = sphi 0, %s387
      %s389 = sphi 0, %s387
      %s390 = sphi 0, %s389
      %s404 = sphi 0, %s390
      %s408 = sphi 0, %s408
      %s410 = sphi 0, %s408
      %s411 = sphi 0, %s410
      %s425 = sphi 0, %s411
      %s429 = sphi 0, %s429
      %s431 = sphi 0, %s429
      %s432 = sphi 0, %s431
      %s446 = sphi 0, %s432
      %s450 = sphi 0, %s450
      %s452 = sphi 0, %s450
      %s453 = sphi 0, %s452
      %s467 = sphi 0, %s453
      %s471 = sphi 0, %s471
      %s473 = sphi 0, %s471
      %s474 = sphi 0, %s473
      %s488 = sphi 0, %s474
      %s492 = sphi 0, %s492
      %s494 = sphi 0, %s492
      %s495 = sphi 0, %s494
      %s509 = sphi 0, %s495
      %s513 = sphi 0, %s513
      %s515 = sphi 0, %s513
      %s516 = sphi 0, %s515
      %s530 = sphi 0, %s516
      %s534 = sphi 0, %s534
      %s536 = sphi 0, %s534
      %s537 = sphi 0, %s536
      %s551 = sphi 0, %s537
      %s557 = sphi 0, %s559
      %s560 = sphi 0, %s557
      %s561 = sphi 0, %s560
      %s577 = sphi 0, %s561
    $region4: #{vecset_encoder_forward.1} parent=1 // loop_header_branch
      %36 = sbr.rel (%p34) target = $region8
    $region5: #{vecset_encoder_forward.1} parent=1 // loop_body
      %s38 = ssub.s32 %s33, 1
      %s39 = ssub.s32 %s33, 2
      %s40 = sadd.s32 %s33, 1
      %s41 = ssub.s32 %s33, %s40
      %p42 = scmp.eq.s32.totalorder %s41, 0
      %s44 = sadd.s32 %s43, 1
      %s45 = scalar_select %p42, %s43, %s44
      %p48 = pneg %p42
      %p49 = scmp.eq.s32.totalorder %s33, 1
      %p50 = por %p48, %p49
      %p51 = scmp.ne.s32.totalorder %s43, %s46
      %p52 = scmp.eq.s32.totalorder %s33, 0
      %p53 = por %p51, %p52
      %p54 = scmp.ne.s32.totalorder %s43, %s46
      %p55 = scmp.eq.s32.totalorder %s38, 1
      %p56 = por %p54, %p55
      %p57 = scmp.ne.s32.totalorder %s46, %s47
      %p58 = scmp.eq.s32.totalorder %s38, 0
      %p59 = por %p57, %p58
      %p60 = scmp.ne.s32.totalorder %s46, %s47
      %p61 = scmp.eq.s32.totalorder %s39, 1
      %p62 = por %p60, %p61
      %p64 = scmp.ne.s32.totalorder %s47, %s63
      %p65 = scmp.eq.s32.totalorder %s39, 0
      %p66 = por %p64, %p65
      %s67 = ssub.s32 %s33, %s40
      %p68 = scmp.eq.s32.totalorder %s67, 0
      %s70 = sadd.s32 %s69, 1
      %s71 = scalar_select %p68, %s69, %s70
      %p74 = pneg %p68
      %p75 = scmp.eq.s32.totalorder %s33, 1
      %p76 = por %p74, %p75
      %p77 = scmp.ne.s32.totalorder %s69, %s72
      %p78 = scmp.eq.s32.totalorder %s33, 0
      %p79 = por %p77, %p78
      %p80 = scmp.ne.s32.totalorder %s69, %s72
      %p81 = scmp.eq.s32.totalorder %s38, 1
      %p82 = por %p80, %p81
      %p83 = scmp.ne.s32.totalorder %s72, %s73
      %p84 = scmp.eq.s32.totalorder %s38, 0
      %p85 = por %p83, %p84
      %p86 = scmp.ne.s32.totalorder %s72, %s73
      %p87 = scmp.eq.s32.totalorder %s39, 1
      %p88 = por %p86, %p87
      %p90 = scmp.ne.s32.totalorder %s73, %s89
      %p91 = scmp.eq.s32.totalorder %s39, 0
      %p92 = por %p90, %p91
      %s94 = sadd.s32 %s93, 1
      %p97 = scmp.eq.s32.totalorder %s33, 1
      %p98 = scmp.ne.s32.totalorder %s93, %s95
      %p99 = scmp.eq.s32.totalorder %s33, 0
      %p100 = por %p98, %p99
      %p101 = scmp.ne.s32.totalorder %s93, %s95
      %p102 = scmp.eq.s32.totalorder %s38, 1
      %p103 = por %p101, %p102
      %p104 = scmp.ne.s32.totalorder %s95, %s96
      %p105 = scmp.eq.s32.totalorder %s38, 0
      %p106 = por %p104, %p105
      %p107 = scmp.ne.s32.totalorder %s95, %s96
      %p108 = scmp.eq.s32.totalorder %s39, 1
      %p109 = por %p107, %p108
      %p111 = scmp.ne.s32.totalorder %s96, %s110
      %p112 = scmp.eq.s32.totalorder %s39, 0
      %p113 = por %p111, %p112
      %s115 = sadd.s32 %s114, 1
      %p118 = scmp.eq.s32.totalorder %s33, 1
      %p119 = scmp.ne.s32.totalorder %s114, %s116
      %p120 = scmp.eq.s32.totalorder %s33, 0
      %p121 = por %p119, %p120
      %p122 = scmp.ne.s32.totalorder %s114, %s116
      %p123 = scmp.eq.s32.totalorder %s38, 1
      %p124 = por %p122, %p123
      %p125 = scmp.ne.s32.totalorder %s116, %s117
      %p126 = scmp.eq.s32.totalorder %s38, 0
      %p127 = por %p125, %p126
      %p128 = scmp.ne.s32.totalorder %s116, %s117
      %p129 = scmp.eq.s32.totalorder %s39, 1
      %p130 = por %p128, %p129
      %p132 = scmp.ne.s32.totalorder %s117, %s131
      %p133 = scmp.eq.s32.totalorder %s39, 0
      %p134 = por %p132, %p133
      %s136 = sadd.s32 %s135, 1
      %p139 = scmp.eq.s32.totalorder %s33, 1
      %p140 = scmp.ne.s32.totalorder %s135, %s137
      %p141 = scmp.eq.s32.totalorder %s33, 0
      %p142 = por %p140, %p141
      %p143 = scmp.ne.s32.totalorder %s135, %s137
      %p144 = scmp.eq.s32.totalorder %s38, 1
      %p145 = por %p143, %p144
      %p146 = scmp.ne.s32.totalorder %s137, %s138
      %p147 = scmp.eq.s32.totalorder %s38, 0
      %p148 = por %p146, %p147
      %p149 = scmp.ne.s32.totalorder %s137, %s138
      %p150 = scmp.eq.s32.totalorder %s39, 1
      %p151 = por %p149, %p150
      %p153 = scmp.ne.s32.totalorder %s138, %s152
      %p154 = scmp.eq.s32.totalorder %s39, 0
      %p155 = por %p153, %p154
      %s157 = sadd.s32 %s156, 1
      %p160 = scmp.eq.s32.totalorder %s33, 1
      %p161 = scmp.ne.s32.totalorder %s156, %s158
      %p162 = scmp.eq.s32.totalorder %s33, 0
      %p163 = por %p161, %p162
      %p164 = scmp.ne.s32.totalorder %s156, %s158
      %p165 = scmp.eq.s32.totalorder %s38, 1
      %p166 = por %p164, %p165
      %p167 = scmp.ne.s32.totalorder %s158, %s159
      %p168 = scmp.eq.s32.totalorder %s38, 0
      %p169 = por %p167, %p168
      %p170 = scmp.ne.s32.totalorder %s158, %s159
      %p171 = scmp.eq.s32.totalorder %s39, 1
      %p172 = por %p170, %p171
      %p174 = scmp.ne.s32.totalorder %s159, %s173
      %p175 = scmp.eq.s32.totalorder %s39, 0
      %p176 = por %p174, %p175
      %s178 = sadd.s32 %s177, 1
      %p181 = scmp.eq.s32.totalorder %s33, 1
      %p182 = scmp.ne.s32.totalorder %s177, %s179
      %p183 = scmp.eq.s32.totalorder %s33, 0
      %p184 = por %p182, %p183
      %p185 = scmp.ne.s32.totalorder %s177, %s179
      %p186 = scmp.eq.s32.totalorder %s38, 1
      %p187 = por %p185, %p186
      %p188 = scmp.ne.s32.totalorder %s179, %s180
      %p189 = scmp.eq.s32.totalorder %s38, 0
      %p190 = por %p188, %p189
      %p191 = scmp.ne.s32.totalorder %s179, %s180
      %p192 = scmp.eq.s32.totalorder %s39, 1
      %p193 = por %p191, %p192
      %p195 = scmp.ne.s32.totalorder %s180, %s194
      %p196 = scmp.eq.s32.totalorder %s39, 0
      %p197 = por %p195, %p196
      %s199 = sadd.s32 %s198, 1
      %p202 = scmp.eq.s32.totalorder %s33, 1
      %p203 = scmp.ne.s32.totalorder %s198, %s200
      %p204 = scmp.eq.s32.totalorder %s33, 0
      %p205 = por %p203, %p204
      %p206 = scmp.ne.s32.totalorder %s198, %s200
      %p207 = scmp.eq.s32.totalorder %s38, 1
      %p208 = por %p206, %p207
      %p209 = scmp.ne.s32.totalorder %s200, %s201
      %p210 = scmp.eq.s32.totalorder %s38, 0
      %p211 = por %p209, %p210
      %p212 = scmp.ne.s32.totalorder %s200, %s201
      %p213 = scmp.eq.s32.totalorder %s39, 1
      %p214 = por %p212, %p213
      %p216 = scmp.ne.s32.totalorder %s201, %s215
      %p217 = scmp.eq.s32.totalorder %s39, 0
      %p218 = por %p216, %p217
      %s220 = sadd.s32 %s219, 1
      %p223 = scmp.eq.s32.totalorder %s33, 1
      %p224 = scmp.ne.s32.totalorder %s219, %s221
      %p225 = scmp.eq.s32.totalorder %s33, 0
      %p226 = por %p224, %p225
      %p227 = scmp.ne.s32.totalorder %s219, %s221
      %p228 = scmp.eq.s32.totalorder %s38, 1
      %p229 = por %p227, %p228
      %p230 = scmp.ne.s32.totalorder %s221, %s222
      %p231 = scmp.eq.s32.totalorder %s38, 0
      %p232 = por %p230, %p231
      %p233 = scmp.ne.s32.totalorder %s221, %s222
      %p234 = scmp.eq.s32.totalorder %s39, 1
      %p235 = por %p233, %p234
      %p237 = scmp.ne.s32.totalorder %s222, %s236
      %p238 = scmp.eq.s32.totalorder %s39, 0
      %p239 = por %p237, %p238
      %s241 = sadd.s32 %s240, 1
      %p244 = scmp.eq.s32.totalorder %s33, 1
      %p245 = scmp.ne.s32.totalorder %s240, %s242
      %p246 = scmp.eq.s32.totalorder %s33, 0
      %p247 = por %p245, %p246
      %p248 = scmp.ne.s32.totalorder %s240, %s242
      %p249 = scmp.eq.s32.totalorder %s38, 1
      %p250 = por %p248, %p249
      %p251 = scmp.ne.s32.totalorder %s242, %s243
      %p252 = scmp.eq.s32.totalorder %s38, 0
      %p253 = por %p251, %p252
      %p254 = scmp.ne.s32.totalorder %s242, %s243
      %p255 = scmp.eq.s32.totalorder %s39, 1
      %p256 = por %p254, %p255
      %p258 = scmp.ne.s32.totalorder %s243, %s257
      %p259 = scmp.eq.s32.totalorder %s39, 0
      %p260 = por %p258, %p259
      %s262 = sadd.s32 %s261, 1
      %p265 = scmp.eq.s32.totalorder %s33, 1
      %p266 = scmp.ne.s32.totalorder %s261, %s263
      %p267 = scmp.eq.s32.totalorder %s33, 0
      %p268 = por %p266, %p267
      %p269 = scmp.ne.s32.totalorder %s261, %s263
      %p270 = scmp.eq.s32.totalorder %s38, 1
      %p271 = por %p269, %p270
      %p272 = scmp.ne.s32.totalorder %s263, %s264
      %p273 = scmp.eq.s32.totalorder %s38, 0
      %p274 = por %p272, %p273
      %p275 = scmp.ne.s32.totalorder %s263, %s264
      %p276 = scmp.eq.s32.totalorder %s39, 1
      %p277 = por %p275, %p276
      %p279 = scmp.ne.s32.totalorder %s264, %s278
      %p280 = scmp.eq.s32.totalorder %s39, 0
      %p281 = por %p279, %p280
      %s283 = sadd.s32 %s282, 1
      %p286 = scmp.eq.s32.totalorder %s33, 1
      %p287 = scmp.ne.s32.totalorder %s282, %s284
      %p288 = scmp.eq.s32.totalorder %s33, 0
      %p289 = por %p287, %p288
      %p290 = scmp.ne.s32.totalorder %s282, %s284
      %p291 = scmp.eq.s32.totalorder %s38, 1
      %p292 = por %p290, %p291
      %p293 = scmp.ne.s32.totalorder %s284, %s285
      %p294 = scmp.eq.s32.totalorder %s38, 0
      %p295 = por %p293, %p294
      %p296 = scmp.ne.s32.totalorder %s284, %s285
      %p297 = scmp.eq.s32.totalorder %s39, 1
      %p298 = por %p296, %p297
      %p300 = scmp.ne.s32.totalorder %s285, %s299
      %p301 = scmp.eq.s32.totalorder %s39, 0
      %p302 = por %p300, %p301
      %s304 = sadd.s32 %s303, 1
      %p307 = scmp.eq.s32.totalorder %s33, 1
      %p308 = scmp.ne.s32.totalorder %s303, %s305
      %p309 = scmp.eq.s32.totalorder %s33, 0
      %p310 = por %p308, %p309
      %p311 = scmp.ne.s32.totalorder %s303, %s305
      %p312 = scmp.eq.s32.totalorder %s38, 1
      %p313 = por %p311, %p312
      %p314 = scmp.ne.s32.totalorder %s305, %s306
      %p315 = scmp.eq.s32.totalorder %s38, 0
      %p316 = por %p314, %p315
      %p317 = scmp.ne.s32.totalorder %s305, %s306
      %p318 = scmp.eq.s32.totalorder %s39, 1
      %p319 = por %p317, %p318
      %p321 = scmp.ne.s32.totalorder %s306, %s320
      %p322 = scmp.eq.s32.totalorder %s39, 0
      %p323 = por %p321, %p322
      %s325 = sadd.s32 %s324, 1
      %p328 = scmp.eq.s32.totalorder %s33, 1
      %p329 = scmp.ne.s32.totalorder %s324, %s326
      %p330 = scmp.eq.s32.totalorder %s33, 0
      %p331 = por %p329, %p330
      %p332 = scmp.ne.s32.totalorder %s324, %s326
      %p333 = scmp.eq.s32.totalorder %s38, 1
      %p334 = por %p332, %p333
      %p335 = scmp.ne.s32.totalorder %s326, %s327
      %p336 = scmp.eq.s32.totalorder %s38, 0
      %p337 = por %p335, %p336
      %p338 = scmp.ne.s32.totalorder %s326, %s327
      %p339 = scmp.eq.s32.totalorder %s39, 1
      %p340 = por %p338, %p339
      %p342 = scmp.ne.s32.totalorder %s327, %s341
      %p343 = scmp.eq.s32.totalorder %s39, 0
      %p344 = por %p342, %p343
      %s346 = sadd.s32 %s345, 1
      %p349 = scmp.eq.s32.totalorder %s33, 1
      %p350 = scmp.ne.s32.totalorder %s345, %s347
      %p351 = scmp.eq.s32.totalorder %s33, 0
      %p352 = por %p350, %p351
      %p353 = scmp.ne.s32.totalorder %s345, %s347
      %p354 = scmp.eq.s32.totalorder %s38, 1
      %p355 = por %p353, %p354
      %p356 = scmp.ne.s32.totalorder %s347, %s348
      %p357 = scmp.eq.s32.totalorder %s38, 0
      %p358 = por %p356, %p357
      %p359 = scmp.ne.s32.totalorder %s347, %s348
      %p360 = scmp.eq.s32.totalorder %s39, 1
      %p361 = por %p359, %p360
      %p363 = scmp.ne.s32.totalorder %s348, %s362
      %p364 = scmp.eq.s32.totalorder %s39, 0
      %p365 = por %p363, %p364
      %s367 = sadd.s32 %s366, 1
      %p370 = scmp.eq.s32.totalorder %s33, 1
      %p371 = scmp.ne.s32.totalorder %s366, %s368
      %p372 = scmp.eq.s32.totalorder %s33, 0
      %p373 = por %p371, %p372
      %p374 = scmp.ne.s32.totalorder %s366, %s368
      %p375 = scmp.eq.s32.totalorder %s38, 1
      %p376 = por %p374, %p375
      %p377 = scmp.ne.s32.totalorder %s368, %s369
      %p378 = scmp.eq.s32.totalorder %s38, 0
      %p379 = por %p377, %p378
      %p380 = scmp.ne.s32.totalorder %s368, %s369
      %p381 = scmp.eq.s32.totalorder %s39, 1
      %p382 = por %p380, %p381
      %p384 = scmp.ne.s32.totalorder %s369, %s383
      %p385 = scmp.eq.s32.totalorder %s39, 0
      %p386 = por %p384, %p385
      %s388 = sadd.s32 %s387, 1
      %p391 = scmp.eq.s32.totalorder %s33, 1
      %p392 = scmp.ne.s32.totalorder %s387, %s389
      %p393 = scmp.eq.s32.totalorder %s33, 0
      %p394 = por %p392, %p393
      %p395 = scmp.ne.s32.totalorder %s387, %s389
      %p396 = scmp.eq.s32.totalorder %s38, 1
      %p397 = por %p395, %p396
      %p398 = scmp.ne.s32.totalorder %s389, %s390
      %p399 = scmp.eq.s32.totalorder %s38, 0
      %p400 = por %p398, %p399
      %p401 = scmp.ne.s32.totalorder %s389, %s390
      %p402 = scmp.eq.s32.totalorder %s39, 1
      %p403 = por %p401, %p402
      %p405 = scmp.ne.s32.totalorder %s390, %s404
      %p406 = scmp.eq.s32.totalorder %s39, 0
      %p407 = por %p405, %p406
      %s409 = sadd.s32 %s408, 1
      %p412 = scmp.eq.s32.totalorder %s33, 1
      %p413 = scmp.ne.s32.totalorder %s408, %s410
      %p414 = scmp.eq.s32.totalorder %s33, 0
      %p415 = por %p413, %p414
      %p416 = scmp.ne.s32.totalorder %s408, %s410
      %p417 = scmp.eq.s32.totalorder %s38, 1
      %p418 = por %p416, %p417
      %p419 = scmp.ne.s32.totalorder %s410, %s411
      %p420 = scmp.eq.s32.totalorder %s38, 0
      %p421 = por %p419, %p420
      %p422 = scmp.ne.s32.totalorder %s410, %s411
      %p423 = scmp.eq.s32.totalorder %s39, 1
      %p424 = por %p422, %p423
      %p426 = scmp.ne.s32.totalorder %s411, %s425
      %p427 = scmp.eq.s32.totalorder %s39, 0
      %p428 = por %p426, %p427
      %s430 = sadd.s32 %s429, 1
      %p433 = scmp.eq.s32.totalorder %s33, 1
      %p434 = scmp.ne.s32.totalorder %s429, %s431
      %p435 = scmp.eq.s32.totalorder %s33, 0
      %p436 = por %p434, %p435
      %p437 = scmp.ne.s32.totalorder %s429, %s431
      %p438 = scmp.eq.s32.totalorder %s38, 1
      %p439 = por %p437, %p438
      %p440 = scmp.ne.s32.totalorder %s431, %s432
      %p441 = scmp.eq.s32.totalorder %s38, 0
      %p442 = por %p440, %p441
      %p443 = scmp.ne.s32.totalorder %s431, %s432
      %p444 = scmp.eq.s32.totalorder %s39, 1
      %p445 = por %p443, %p444
      %p447 = scmp.ne.s32.totalorder %s432, %s446
      %p448 = scmp.eq.s32.totalorder %s39, 0
      %p449 = por %p447, %p448
      %s451 = sadd.s32 %s450, 1
      %p454 = scmp.eq.s32.totalorder %s33, 1
      %p455 = scmp.ne.s32.totalorder %s450, %s452
      %p456 = scmp.eq.s32.totalorder %s33, 0
      %p457 = por %p455, %p456
      %p458 = scmp.ne.s32.totalorder %s450, %s452
      %p459 = scmp.eq.s32.totalorder %s38, 1
      %p460 = por %p458, %p459
      %p461 = scmp.ne.s32.totalorder %s452, %s453
      %p462 = scmp.eq.s32.totalorder %s38, 0
      %p463 = por %p461, %p462
      %p464 = scmp.ne.s32.totalorder %s452, %s453
      %p465 = scmp.eq.s32.totalorder %s39, 1
      %p466 = por %p464, %p465
      %p468 = scmp.ne.s32.totalorder %s453, %s467
      %p469 = scmp.eq.s32.totalorder %s39, 0
      %p470 = por %p468, %p469
      %s472 = sadd.s32 %s471, 1
      %p475 = scmp.eq.s32.totalorder %s33, 1
      %p476 = scmp.ne.s32.totalorder %s471, %s473
      %p477 = scmp.eq.s32.totalorder %s33, 0
      %p478 = por %p476, %p477
      %p479 = scmp.ne.s32.totalorder %s471, %s473
      %p480 = scmp.eq.s32.totalorder %s38, 1
      %p481 = por %p479, %p480
      %p482 = scmp.ne.s32.totalorder %s473, %s474
      %p483 = scmp.eq.s32.totalorder %s38, 0
      %p484 = por %p482, %p483
      %p485 = scmp.ne.s32.totalorder %s473, %s474
      %p486 = scmp.eq.s32.totalorder %s39, 1
      %p487 = por %p485, %p486
      %p489 = scmp.ne.s32.totalorder %s474, %s488
      %p490 = scmp.eq.s32.totalorder %s39, 0
      %p491 = por %p489, %p490
      %s493 = sadd.s32 %s492, 1
      %p496 = scmp.eq.s32.totalorder %s33, 1
      %p497 = scmp.ne.s32.totalorder %s492, %s494
      %p498 = scmp.eq.s32.totalorder %s33, 0
      %p499 = por %p497, %p498
      %p500 = scmp.ne.s32.totalorder %s492, %s494
      %p501 = scmp.eq.s32.totalorder %s38, 1
      %p502 = por %p500, %p501
      %p503 = scmp.ne.s32.totalorder %s494, %s495
      %p504 = scmp.eq.s32.totalorder %s38, 0
      %p505 = por %p503, %p504
      %p506 = scmp.ne.s32.totalorder %s494, %s495
      %p507 = scmp.eq.s32.totalorder %s39, 1
      %p508 = por %p506, %p507
      %p510 = scmp.ne.s32.totalorder %s495, %s509
      %p511 = scmp.eq.s32.totalorder %s39, 0
      %p512 = por %p510, %p511
      %s514 = sadd.s32 %s513, 1
      %p517 = scmp.eq.s32.totalorder %s33, 1
      %p518 = scmp.ne.s32.totalorder %s513, %s515
      %p519 = scmp.eq.s32.totalorder %s33, 0
      %p520 = por %p518, %p519
      %p521 = scmp.ne.s32.totalorder %s513, %s515
      %p522 = scmp.eq.s32.totalorder %s38, 1
      %p523 = por %p521, %p522
      %p524 = scmp.ne.s32.totalorder %s515, %s516
      %p525 = scmp.eq.s32.totalorder %s38, 0
      %p526 = por %p524, %p525
      %p527 = scmp.ne.s32.totalorder %s515, %s516
      %p528 = scmp.eq.s32.totalorder %s39, 1
      %p529 = por %p527, %p528
      %p531 = scmp.ne.s32.totalorder %s516, %s530
      %p532 = scmp.eq.s32.totalorder %s39, 0
      %p533 = por %p531, %p532
      %s535 = sadd.s32 %s534, 1
      %p538 = scmp.eq.s32.totalorder %s33, 1
      %p539 = scmp.ne.s32.totalorder %s534, %s536
      %p540 = scmp.eq.s32.totalorder %s33, 0
      %p541 = por %p539, %p540
      %p542 = scmp.ne.s32.totalorder %s534, %s536
      %p543 = scmp.eq.s32.totalorder %s38, 1
      %p544 = por %p542, %p543
      %p545 = scmp.ne.s32.totalorder %s536, %s537
      %p546 = scmp.eq.s32.totalorder %s38, 0
      %p547 = por %p545, %p546
      %p548 = scmp.ne.s32.totalorder %s536, %s537
      %p549 = scmp.eq.s32.totalorder %s39, 1
      %p550 = por %p548, %p549
      %p552 = scmp.ne.s32.totalorder %s537, %s551
      %p553 = scmp.eq.s32.totalorder %s39, 0
      %p554 = por %p552, %p553
      %s555 = ssub.s32 %s33, %s40
      %p556 = scmp.eq.s32.totalorder %s555, 0
      %s558 = sadd.s32 %s557, 1
      %s559 = scalar_select %p556, %s557, %s558
      %p562 = pneg %p556
      %p563 = scmp.eq.s32.totalorder %s33, 1
      %p564 = por %p562, %p563
      %p565 = scmp.ne.s32.totalorder %s557, %s560
      %p566 = scmp.eq.s32.totalorder %s33, 0
      %p567 = por %p565, %p566
      %p568 = scmp.ne.s32.totalorder %s557, %s560
      %p569 = scmp.eq.s32.totalorder %s38, 1
      %p570 = por %p568, %p569
      %p571 = scmp.ne.s32.totalorder %s560, %s561
      %p572 = scmp.eq.s32.totalorder %s38, 0
      %p573 = por %p571, %p572
      %p574 = scmp.ne.s32.totalorder %s560, %s561
      %p575 = scmp.eq.s32.totalorder %s39, 1
      %p576 = por %p574, %p575
      %p578 = scmp.ne.s32.totalorder %s561, %s577
      %p579 = scmp.eq.s32.totalorder %s39, 0
      %p580 = por %p578, %p579
      %p581 = scmp.le.s32.totalorder 1, %s33
      %p582 = scmp.lt.s32.totalorder %s33, 3
      %p583 = pnand %p581, %p582
      %p584 = pneg %p583
      // Predicated region
      $region9: #{vecset_encoder_forward.1} parent=5 // pred_check
        _
      $region10: #{vecset_encoder_forward.1} parent=5 // pred_check_branch
        %586 = sbr.rel (%p583) target = $region12
      $region11: #{vecset_encoder_forward.1} parent=5 // pred_region
        %s587 = ssub.s32 %s33, 1
        // Predicated region
        $region13: #{vecset_encoder_forward.1} parent=11 // pred_check
          %p588 = pneg %p106
        $region14: #{vecset_encoder_forward.1} parent=11 // pred_check_branch
          %590 = sbr.rel (%p588) target = $region16
        $region15: #{vecset_encoder_forward.1} parent=11 // pred_region
          _
        $region16: #{vecset_encoder_forward.1} parent=11 // pred_fallthru
          _
        // Predicated region
        $region17: #{vecset_encoder_forward.1} parent=11 // pred_check
          %p591 = pneg %p127
        $region18: #{vecset_encoder_forward.1} parent=11 // pred_check_branch
          %593 = sbr.rel (%p591) target = $region20
        $region19: #{vecset_encoder_forward.1} parent=11 // pred_region
          _
        $region20: #{vecset_encoder_forward.1} parent=11 // pred_fallthru
          _
        // Predicated region
        $region21: #{vecset_encoder_forward.1} parent=11 // pred_check
          %p594 = pneg %p148
        $region22: #{vecset_encoder_forward.1} parent=11 // pred_check_branch
          %596 = sbr.rel (%p594) target = $region24
        $region23: #{vecset_encoder_forward.1} parent=11 // pred_region
          _
        $region24: #{vecset_encoder_forward.1} parent=11 // pred_fallthru
          _
        // Predicated region
        $region25: #{vecset_encoder_forward.1} parent=11 // pred_check
          %p597 = pneg %p169
        $region26: #{vecset_encoder_forward.1} parent=11 // pred_check_branch
          %599 = sbr.rel (%p597) target = $region28
        $region27: #{vecset_encoder_forward.1} parent=11 // pred_region
          _
        $region28: #{vecset_encoder_forward.1} parent=11 // pred_fallthru
          _
        // Predicated region
        $region29: #{vecset_encoder_forward.1} parent=11 // pred_check
          %p600 = pneg %p190
        $region30: #{vecset_encoder_forward.1} parent=11 // pred_check_branch
          %602 = sbr.rel (%p600) target = $region32
        $region31: #{vecset_encoder_forward.1} parent=11 // pred_region
          _
        $region32: #{vecset_encoder_forward.1} parent=11 // pred_fallthru
          _
        // Predicated region
        $region33: #{vecset_encoder_forward.1} parent=11 // pred_check
          %p603 = pneg %p211
        $region34: #{vecset_encoder_forward.1} parent=11 // pred_check_branch
          %605 = sbr.rel (%p603) target = $region36
        $region35: #{vecset_encoder_forward.1} parent=11 // pred_region
          _
        $region36: #{vecset_encoder_forward.1} parent=11 // pred_fallthru
          _
        // Predicated region
        $region37: #{vecset_encoder_forward.1} parent=11 // pred_check
          %p606 = pneg %p232
        $region38: #{vecset_encoder_forward.1} parent=11 // pred_check_branch
          %608 = sbr.rel (%p606) target = $region40
        $region39: #{vecset_encoder_forward.1} parent=11 // pred_region
          _
        $region40: #{vecset_encoder_forward.1} parent=11 // pred_fallthru
          _
        // Predicated region
        $region41: #{vecset_encoder_forward.1} parent=11 // pred_check
          %p609 = pneg %p253
        $region42: #{vecset_encoder_forward.1} parent=11 // pred_check_branch
          %611 = sbr.rel (%p609) target = $region44
        $region43: #{vecset_encoder_forward.1} parent=11 // pred_region
          _
        $region44: #{vecset_encoder_forward.1} parent=11 // pred_fallthru
          _
        // Predicated region
        $region45: #{vecset_encoder_forward.1} parent=11 // pred_check
          %p612 = pneg %p274
        $region46: #{vecset_encoder_forward.1} parent=11 // pred_check_branch
          %614 = sbr.rel (%p612) target = $region48
        $region47: #{vecset_encoder_forward.1} parent=11 // pred_region
          _
        $region48: #{vecset_encoder_forward.1} parent=11 // pred_fallthru
          _
        // Predicated region
        $region49: #{vecset_encoder_forward.1} parent=11 // pred_check
          %p615 = pneg %p295
        $region50: #{vecset_encoder_forward.1} parent=11 // pred_check_branch
          %617 = sbr.rel (%p615) target = $region52
        $region51: #{vecset_encoder_forward.1} parent=11 // pred_region
          _
        $region52: #{vecset_encoder_forward.1} parent=11 // pred_fallthru
          _
        // Predicated region
        $region53: #{vecset_encoder_forward.1} parent=11 // pred_check
          %p618 = pneg %p316
        $region54: #{vecset_encoder_forward.1} parent=11 // pred_check_branch
          %620 = sbr.rel (%p618) target = $region56
        $region55: #{vecset_encoder_forward.1} parent=11 // pred_region
          _
        $region56: #{vecset_encoder_forward.1} parent=11 // pred_fallthru
          _
        // Predicated region
        $region57: #{vecset_encoder_forward.1} parent=11 // pred_check
          %p621 = pneg %p337
        $region58: #{vecset_encoder_forward.1} parent=11 // pred_check_branch
          %623 = sbr.rel (%p621) target = $region60
        $region59: #{vecset_encoder_forward.1} parent=11 // pred_region
          _
        $region60: #{vecset_encoder_forward.1} parent=11 // pred_fallthru
          _
        // Predicated region
        $region61: #{vecset_encoder_forward.1} parent=11 // pred_check
          %p624 = pneg %p358
        $region62: #{vecset_encoder_forward.1} parent=11 // pred_check_branch
          %626 = sbr.rel (%p624) target = $region64
        $region63: #{vecset_encoder_forward.1} parent=11 // pred_region
          _
        $region64: #{vecset_encoder_forward.1} parent=11 // pred_fallthru
          _
        // Predicated region
        $region65: #{vecset_encoder_forward.1} parent=11 // pred_check
          %p627 = pneg %p379
        $region66: #{vecset_encoder_forward.1} parent=11 // pred_check_branch
          %629 = sbr.rel (%p627) target = $region68
        $region67: #{vecset_encoder_forward.1} parent=11 // pred_region
          _
        $region68: #{vecset_encoder_forward.1} parent=11 // pred_fallthru
          _
        // Predicated region
        $region69: #{vecset_encoder_forward.1} parent=11 // pred_check
          %p630 = pneg %p400
        $region70: #{vecset_encoder_forward.1} parent=11 // pred_check_branch
          %632 = sbr.rel (%p630) target = $region72
        $region71: #{vecset_encoder_forward.1} parent=11 // pred_region
          _
        $region72: #{vecset_encoder_forward.1} parent=11 // pred_fallthru
          _
        // Predicated region
        $region73: #{vecset_encoder_forward.1} parent=11 // pred_check
          %p633 = pneg %p421
        $region74: #{vecset_encoder_forward.1} parent=11 // pred_check_branch
          %635 = sbr.rel (%p633) target = $region76
        $region75: #{vecset_encoder_forward.1} parent=11 // pred_region
          _
        $region76: #{vecset_encoder_forward.1} parent=11 // pred_fallthru
          _
        // Predicated region
        $region77: #{vecset_encoder_forward.1} parent=11 // pred_check
          %p636 = pneg %p442
        $region78: #{vecset_encoder_forward.1} parent=11 // pred_check_branch
          %638 = sbr.rel (%p636) target = $region80
        $region79: #{vecset_encoder_forward.1} parent=11 // pred_region
          _
        $region80: #{vecset_encoder_forward.1} parent=11 // pred_fallthru
          _
        // Predicated region
        $region81: #{vecset_encoder_forward.1} parent=11 // pred_check
          %p639 = pneg %p463
        $region82: #{vecset_encoder_forward.1} parent=11 // pred_check_branch
          %641 = sbr.rel (%p639) target = $region84
        $region83: #{vecset_encoder_forward.1} parent=11 // pred_region
          _
        $region84: #{vecset_encoder_forward.1} parent=11 // pred_fallthru
          _
        // Predicated region
        $region85: #{vecset_encoder_forward.1} parent=11 // pred_check
          %p642 = pneg %p484
        $region86: #{vecset_encoder_forward.1} parent=11 // pred_check_branch
          %644 = sbr.rel (%p642) target = $region88
        $region87: #{vecset_encoder_forward.1} parent=11 // pred_region
          _
        $region88: #{vecset_encoder_forward.1} parent=11 // pred_fallthru
          _
        // Predicated region
        $region89: #{vecset_encoder_forward.1} parent=11 // pred_check
          %p645 = pneg %p505
        $region90: #{vecset_encoder_forward.1} parent=11 // pred_check_branch
          %647 = sbr.rel (%p645) target = $region92
        $region91: #{vecset_encoder_forward.1} parent=11 // pred_region
          _
        $region92: #{vecset_encoder_forward.1} parent=11 // pred_fallthru
          _
        // Predicated region
        $region93: #{vecset_encoder_forward.1} parent=11 // pred_check
          %p648 = pneg %p526
        $region94: #{vecset_encoder_forward.1} parent=11 // pred_check_branch
          %650 = sbr.rel (%p648) target = $region96
        $region95: #{vecset_encoder_forward.1} parent=11 // pred_region
          _
        $region96: #{vecset_encoder_forward.1} parent=11 // pred_fallthru
          _
        // Predicated region
        $region97: #{vecset_encoder_forward.1} parent=11 // pred_check
          %p651 = pneg %p547
        $region98: #{vecset_encoder_forward.1} parent=11 // pred_check_branch
          %653 = sbr.rel (%p651) target = $region100
        $region99: #{vecset_encoder_forward.1} parent=11 // pred_region
          _
        $region100: #{vecset_encoder_forward.1} parent=11 // pred_fallthru
          _
      $region12: #{vecset_encoder_forward.1} parent=5 // pred_fallthru
        _
      %p654 = scmp.lt.s32.totalorder %s33, 2
      // Predicated region
      $region101: #{vecset_encoder_forward.1} parent=5 // pred_check
        %p655 = pneg %p654
      $region102: #{vecset_encoder_forward.1} parent=5 // pred_check_branch
        %657 = sbr.rel (%p655) target = $region104
      $region103: #{vecset_encoder_forward.1} parent=5 // pred_region
        // Predicated region
        $region105: #{vecset_encoder_forward.1} parent=103 // pred_check
          %p658 = pneg %p53
        $region106: #{vecset_encoder_forward.1} parent=103 // pred_check_branch
          %660 = sbr.rel (%p658) target = $region108
        $region107: #{vecset_encoder_forward.1} parent=103 // pred_region
          %s661 = smul.u32 2, %s33
          %p662 = scmp.lt.s32.totalorder %s661, 3
          %s663 = scalar_select %p662, %s661, 3
          %s664 = smul.addr %s663, 8
          %s665 = scalar_lea.vmem %s0, %s664
          %s666 = smul.u32 2, %s33
        $region108: #{vecset_encoder_forward.1} parent=103 // pred_fallthru
          _
        // Predicated region
        $region109: #{vecset_encoder_forward.1} parent=103 // pred_check
          %p667 = pneg %p79
        $region110: #{vecset_encoder_forward.1} parent=103 // pred_check_branch
          %669 = sbr.rel (%p667) target = $region112
        $region111: #{vecset_encoder_forward.1} parent=103 // pred_region
          %s670 = smul.u32 4, %s33
          %p671 = scmp.lt.s32.totalorder %s670, 7
          %s672 = scalar_select %p671, %s670, 7
          %s673 = smul.addr %s672, 8
          %s674 = scalar_lea.vmem %s1, %s673
          %s675 = smul.u32 4, %s33
        $region112: #{vecset_encoder_forward.1} parent=103 // pred_fallthru
          _
      $region104: #{vecset_encoder_forward.1} parent=5 // pred_fallthru
        _
      %p676 = scmp.le.s32.totalorder 1, %s33
      %p677 = scmp.lt.s32.totalorder %s33, 3
      %p678 = pnand %p676, %p677
      %p679 = pneg %p678
      // Predicated region
      $region113: #{vecset_encoder_forward.1} parent=5 // pred_check
        _
      $region114: #{vecset_encoder_forward.1} parent=5 // pred_check_branch
        %681 = sbr.rel (%p678) target = $region116
      $region115: #{vecset_encoder_forward.1} parent=5 // pred_region
        %s682 = ssub.s32 %s33, 1
        %s683 = smul.u32 2, %s38
        %p684 = scmp.lt.s32.totalorder %s683, 3
        %s685 = scalar_select %p684, %s683, 3
        %s686 = smul.addr %s685, 8
        %s687 = scalar_lea.vmem %s0, %s686
        %p688 = pneg %p59
        %p689 = pneg %p56
        %s690 = smul.u32 4, %s38
        %p691 = scmp.lt.s32.totalorder %s690, 7
        %s692 = scalar_select %p691, %s690, 7
        %s693 = smul.addr %s692, 8
        %s694 = scalar_lea.vmem %s1, %s693
        %p695 = pneg %p85
        %p696 = pneg %p82
        %p697 = pneg %p106
        %p698 = pneg %p103
        %p699 = pneg %p127
        %p700 = pneg %p124
        %p701 = pneg %p148
        %p702 = pneg %p145
        %p703 = pneg %p169
        %p704 = pneg %p166
        %p705 = pneg %p190
        %p706 = pneg %p187
        %p707 = pneg %p211
        %p708 = pneg %p208
        %p709 = pneg %p232
        %p710 = pneg %p229
        %p711 = pneg %p253
        %p712 = pneg %p250
        %p713 = pneg %p274
        %p714 = pneg %p271
        %p715 = pneg %p295
        %p716 = pneg %p292
        %p717 = pneg %p316
        %p718 = pneg %p313
        %p719 = pneg %p337
        %p720 = pneg %p334
        %p721 = pneg %p358
        %p722 = pneg %p355
        %p723 = pneg %p379
        %p724 = pneg %p376
        %p725 = pneg %p400
        %p726 = pneg %p397
        %p727 = pneg %p421
        %p728 = pneg %p418
        %p729 = pneg %p442
        %p730 = pneg %p439
        %p731 = pneg %p463
        %p732 = pneg %p460
        %p733 = pneg %p484
        %p734 = pneg %p481
        %p735 = pneg %p505
        %p736 = pneg %p502
        %p737 = pneg %p526
        %p738 = pneg %p523
        %p739 = pneg %p547
        %p740 = pneg %p544
        %p741 = pneg %p573
        %p742 = pneg %p570
        %s743 = sand.u32 %s560, 1
        %s744 = scalar_lea.sflag [#allocation3], %s743
        %s745 = sand.u32 %s560, 1
        %s746 = smul.addr %s745, 16
        %s747 = scalar_lea.vmem [#allocation2], %s746
        %s748 = smul.u32 2, %s38
        %p749 = scmp.lt.s32.totalorder %s748, 3
        %s750 = scalar_select %p749, %s748, 3
        %s751 = smul.addr %s750, 8
        %s752 = scalar_lea.vmem %s0, %s751
        %s753 = smul.u32 2, %s38
        %s754 = smul.u32 4, %s38
        %p755 = scmp.lt.s32.totalorder %s754, 7
        %s756 = scalar_select %p755, %s754, 7
        %s757 = smul.addr %s756, 8
        %s758 = scalar_lea.vmem %s1, %s757
        %s759 = smul.u32 4, %s38
        %s760 = smul.u32 2, %s38
        %v761 = vld [vmem:[%s752] sm:$0xff]
        %v762 = vld [vmem:[%s752 + $0x8] sm:$0xff]
        %v763 = vld [vmem:[%s2] sm:$0x1]
        %765 = vset.pattern.permute.xlu0 0
        %766 = vperm.xlu0 %765, %v761
        %v767 = vpop.permute.xlu0 %766
        %770 = vset.pattern.permute.xlu0 0
        %771 = vperm.xlu0 %770, %v762
        %v772 = vpop.permute.xlu0 %771
        %v774 = vperm.slane %v763, 0
        %v775 = vmul.f32 %v767, %v774
        %v776 = vmul.f32 %v772, %v774
        %v777 = vld [vmem:[%s2 + $0x1] sm:$0x1]
        %778 = vset.pattern.permute.xlu0 1
        %779 = vperm.xlu0 %778, %v761
        %v780 = vpop.permute.xlu0 %779
        %782 = vset.pattern.permute.xlu0 1
        %783 = vperm.xlu0 %782, %v762
        %v784 = vpop.permute.xlu0 %783
        %v786 = vperm.slane %v777, 0
        %v787 = vmul.f32 %v780, %v786
        %v788 = vmul.f32 %v784, %v786
        %v789 = vadd.f32 %v775, %v787
        %v790 = vadd.f32 %v776, %v788
        %v791 = vld [vmem:[%s2 + $0x2] sm:$0x1]
        %792 = vset.pattern.permute.xlu0 2
        %793 = vperm.xlu0 %792, %v761
        %v794 = vpop.permute.xlu0 %793
        %796 = vset.pattern.permute.xlu0 2
        %797 = vperm.xlu0 %796, %v762
        %v798 = vpop.permute.xlu0 %797
        %v800 = vperm.slane %v791, 0
        %v801 = vmul.f32 %v794, %v800
        %v802 = vmul.f32 %v798, %v800
        %v803 = vadd.f32 %v789, %v801
        %v804 = vadd.f32 %v790, %v802
        %v805 = vand.u32 2147483647, %v803
        %vm806 = vcmp.le.f32.partialorder %v805, 0.7853982
        %vm807 = vcmp.lt.s32.totalorder %v803, 0
        %v808 = vand.u32 %v803, 2139095040
        %v809 = vshrl.u32 %v808, 23
        %v810 = vsub.s32 %v809, 127
        %v811 = vand.u32 2147483647, %v803
        %v812 = vand.u32 %v811, 8388607
        %v813 = vor.u32 %v812, 8388608
        %v814 = vsub.s32 0, %v813
        %v815 = vadd.s32 %v810, 1
        %vm816 = vcmp.gt.s32.totalorder %v815, 0
        %v817 = vsel %vm816, %v815, 0
        %v818 = vshrl.u32 %v817, 5
        %v819 = vand.u32 %v817, 31
        %v820 = vsub.s32 32, %v819
        %v821 = vshrl.u32 683565275, %v820
        %v822 = vshll.u32 683565275, %v819
        %v823 = vshrl.u32 2475754826, %v820
        %v824 = vor.u32 %v822, %v823
        %v825 = vshll.u32 2475754826, %v819
        %v826 = vshrl.u32 2131351028, %v820
        %v827 = vor.u32 %v825, %v826
        %v828 = vshll.u32 2131351028, %v819
        %v829 = vshrl.u32 2102212464, %v820
        %v830 = vor.u32 %v828, %v829
        %v831 = vshll.u32 2102212464, %v819
        %v832 = vshrl.u32 920167782, %v820
        %v833 = vor.u32 %v831, %v832
        %v834 = vshll.u32 920167782, %v819
        %v835 = vshrl.u32 1326507024, %v820
        %v836 = vor.u32 %v834, %v835
        %vm837 = vcmp.lt.s32.totalorder %v818, 1
        %vm838 = vcmp.lt.s32.totalorder %v818, 2
        %vm839 = vcmp.lt.s32.totalorder %v818, 3
        %vm840 = vcmp.lt.s32.totalorder %v818, 4
        %v841 = vsel %vm837, %v821, %v824
        %v842 = vsel %vm840, %v830, 2102212464
        %v843 = vsel %vm839, %v827, %v842
        %v844 = vsel %vm838, %v841, %v843
        %v845 = vsel %vm837, %v824, %v827
        %v846 = vsel %vm840, %v833, 920167782
        %v847 = vsel %vm839, %v830, %v846
        %v848 = vsel %vm838, %v845, %v847
        %v849 = vsel %vm837, %v827, %v830
        %v850 = vsel %vm840, %v836, 1326507024
        %v851 = vsel %vm839, %v833, %v850
        %v852 = vsel %vm838, %v849, %v851
        %v853 = vshll.u32 %v813, 8
        %v854 = vand.u32 %v853, 65535
        %v855 = vshrl.u32 %v853, 16
        %v856 = vand.u32 %v852, 65535
        %v857 = vshrl.u32 %v852, 16
        %v858 = vmul.u32 %v854, %v856
        %v859 = vmul.u32 %v854, %v857
        %v860 = vmul.u32 %v855, %v856
        %v861 = vmul.u32 %v855, %v857
        %v862 = vshll.u32 %v859, 16
        %v863 = vshrl.u32 %v859, 16
        %v864 = vshll.u32 %v860, 16
        %v865 = vshrl.u32 %v860, 16
        %vm866 = vc.u32 %v858, %v862
        %v867 = vsel %vm866, 1, 0
        %v868 = vadd.s32 %v858, %v862
        %v869 = vadd.s32 %v861, %v867
        %vm870 = vc.u32 %v868, %v864
        %v871 = vsel %vm870, 1, 0
        %v872 = vadd.s32 %v868, %v864
        %v873 = vadd.s32 %v869, %v871
        %v874 = vadd.s32 %v873, %v863
        %v875 = vadd.s32 %v874, %v865
        %v876 = vand.u32 %v853, 65535
        %v877 = vshrl.u32 %v853, 16
        %v878 = vand.u32 %v848, 65535
        %v879 = vshrl.u32 %v848, 16
        %v880 = vmul.u32 %v876, %v878
        %v881 = vmul.u32 %v876, %v879
        %v882 = vmul.u32 %v877, %v878
        %v883 = vmul.u32 %v877, %v879
        %v884 = vshll.u32 %v881, 16
        %v885 = vshrl.u32 %v881, 16
        %v886 = vshll.u32 %v882, 16
        %v887 = vshrl.u32 %v882, 16
        %vm888 = vc.u32 %v880, %v884
        %v889 = vsel %vm888, 1, 0
        %v890 = vadd.s32 %v880, %v884
        %v891 = vadd.s32 %v883, %v889
        %vm892 = vc.u32 %v890, %v886
        %v893 = vsel %vm892, 1, 0
        %v894 = vadd.s32 %v890, %v886
        %v895 = vadd.s32 %v891, %v893
        %v896 = vadd.s32 %v895, %v885
        %v897 = vadd.s32 %v896, %v887
        %v898 = vmul.u32 %v853, %v844
        %v899 = vadd.s32 %v875, %v894
        %vm900 = vc.u32 %v875, %v894
        %v901 = vadd.s32 %v897, 1
        %v902 = vsel %vm900, %v901, %v897
        %v903 = vadd.s32 %v898, %v902
        %v904 = vadd.s32 %v903, 536870912
        %v905 = vshrl.u32 %v904, 30
        %v906 = vshll.u32 %v905, 30
        %v907 = vsub.s32 %v903, %v906
        %vm908 = vcmp.lt.s32.totalorder %v907, 0
        %v909 = vsub.s32 0, %v907
        %v910 = vsel %vm908, %v909, %v907
        %v911 = vclz %v910
        %v912 = vsub.s32 %v911, 2
        %vm913 = vcmp.gt.s32.totalorder 0, %v912
        %v914 = vsel %vm913, 0, %v912
        %v915 = vsub.s32 32, %v914
        %v916 = vshll.u32 %v907, %v914
        %v917 = vshrl.u32 %v899, %v915
        %v918 = vor.u32 %v916, %v917
        %v919 = vsub.s32 4294967266, %v914
        %v920 = vadd.s32 %v919, 127
        %v921 = vshll.u32 %v920, 23
        %v922 = vor.u32 4788187, %v921
        %v923 = vand.u32 2147483647, %v922
        %v925 = vcvt.s32.f32 %v918
        %v926 = vmul.f32 %v925, %v923
        %v927 = vxor.u32 %v926, 2147483648
        %v928 = vsel %vm807, %v927, %v926
        %v929 = vsub.s32 4, %v905
        %v930 = vsel %vm807, %v929, %v905
        %v931 = vsel %vm806, %v803, %v928
        %v932 = vsel %vm806, 0, %v930
        %v933 = vmul.f32 %v931, %v931
        %v934 = vmul.f32 %v933, -0.001358992
        %v935 = vadd.f32 %v934, 0.041655596
        %v936 = vmul.f32 %v933, %v935
        %v937 = vadd.f32 %v936, -0.4999988
        %v938 = vmul.f32 %v933, %v937
        %v939 = vadd.f32 1.0, %v938
        %v940 = vmul.f32 %v931, %v931
        %v941 = vmul.f32 %v940, -0.00019511016
        %v942 = vadd.f32 %v941, 0.008332121
        %v943 = vmul.f32 %v940, %v942
        %v944 = vadd.f32 %v943, -0.16666654
        %v945 = vmul.f32 %v940, %v944
        %v946 = vadd.f32 %v945, 1.0
        %v947 = vmul.f32 %v946, %v931
        %vm948 = vweird.f32 %v803
        %v949 = vadd.s32 %v932, 3
        %v950 = vand.u32 %v949, 3
        %vm951 = vcmp.lt.s32.totalorder %v950, 2
        %vm952 = vcmp.eq.s32.totalorder %v950, 0
        %v953 = vxor.u32 %v947, 2147483648
        %v954 = vsel %vm952, %v939, %v953
        %vm955 = vcmp.eq.s32.totalorder %v950, 2
        %v956 = vxor.u32 %v939, 2147483648
        %v957 = vsel %vm955, %v956, %v947
        %v958 = vsel %vm951, %v954, %v957
        %v959 = vsel %vm948, nan, %v958
        %v960 = vand.u32 2147483647, %v804
        %vm961 = vcmp.le.f32.partialorder %v960, 0.7853982
        %vm962 = vcmp.lt.s32.totalorder %v804, 0
        %v963 = vand.u32 %v804, 2139095040
        %v964 = vshrl.u32 %v963, 23
        %v965 = vsub.s32 %v964, 127
        %v966 = vand.u32 2147483647, %v804
        %v967 = vand.u32 %v966, 8388607
        %v968 = vor.u32 %v967, 8388608
        %v969 = vsub.s32 0, %v968
        %v970 = vadd.s32 %v965, 1
        %vm971 = vcmp.gt.s32.totalorder %v970, 0
        %v972 = vsel %vm971, %v970, 0
        %v973 = vshrl.u32 %v972, 5
        %v974 = vand.u32 %v972, 31
        %v975 = vsub.s32 32, %v974
        %v976 = vshrl.u32 683565275, %v975
        %v977 = vshll.u32 683565275, %v974
        %v978 = vshrl.u32 2475754826, %v975
        %v979 = vor.u32 %v977, %v978
        %v980 = vshll.u32 2475754826, %v974
        %v981 = vshrl.u32 2131351028, %v975
        %v982 = vor.u32 %v980, %v981
        %v983 = vshll.u32 2131351028, %v974
        %v984 = vshrl.u32 2102212464, %v975
        %v985 = vor.u32 %v983, %v984
        %v986 = vshll.u32 2102212464, %v974
        %v987 = vshrl.u32 920167782, %v975
        %v988 = vor.u32 %v986, %v987
        %v989 = vshll.u32 920167782, %v974
        %v990 = vshrl.u32 1326507024, %v975
        %v991 = vor.u32 %v989, %v990
        %vm992 = vcmp.lt.s32.totalorder %v973, 1
        %vm993 = vcmp.lt.s32.totalorder %v973, 2
        %vm994 = vcmp.lt.s32.totalorder %v973, 3
        %vm995 = vcmp.lt.s32.totalorder %v973, 4
        %v996 = vsel %vm992, %v976, %v979
        %v997 = vsel %vm995, %v985, 2102212464
        %v998 = vsel %vm994, %v982, %v997
        %v999 = vsel %vm993, %v996, %v998
        %v1000 = vsel %vm992, %v979, %v982
        %v1001 = vsel %vm995, %v988, 920167782
        %v1002 = vsel %vm994, %v985, %v1001
        %v1003 = vsel %vm993, %v1000, %v1002
        %v1004 = vsel %vm992, %v982, %v985
        %v1005 = vsel %vm995, %v991, 1326507024
        %v1006 = vsel %vm994, %v988, %v1005
        %v1007 = vsel %vm993, %v1004, %v1006
        %v1008 = vshll.u32 %v968, 8
        %v1009 = vand.u32 %v1008, 65535
        %v1010 = vshrl.u32 %v1008, 16
        %v1011 = vand.u32 %v1007, 65535
        %v1012 = vshrl.u32 %v1007, 16
        %v1013 = vmul.u32 %v1009, %v1011
        %v1014 = vmul.u32 %v1009, %v1012
        %v1015 = vmul.u32 %v1010, %v1011
        %v1016 = vmul.u32 %v1010, %v1012
        %v1017 = vshll.u32 %v1014, 16
        %v1018 = vshrl.u32 %v1014, 16
        %v1019 = vshll.u32 %v1015, 16
        %v1020 = vshrl.u32 %v1015, 16
        %vm1021 = vc.u32 %v1013, %v1017
        %v1022 = vsel %vm1021, 1, 0
        %v1023 = vadd.s32 %v1013, %v1017
        %v1024 = vadd.s32 %v1016, %v1022
        %vm1025 = vc.u32 %v1023, %v1019
        %v1026 = vsel %vm1025, 1, 0
        %v1027 = vadd.s32 %v1023, %v1019
        %v1028 = vadd.s32 %v1024, %v1026
        %v1029 = vadd.s32 %v1028, %v1018
        %v1030 = vadd.s32 %v1029, %v1020
        %v1031 = vand.u32 %v1008, 65535
        %v1032 = vshrl.u32 %v1008, 16
        %v1033 = vand.u32 %v1003, 65535
        %v1034 = vshrl.u32 %v1003, 16
        %v1035 = vmul.u32 %v1031, %v1033
        %v1036 = vmul.u32 %v1031, %v1034
        %v1037 = vmul.u32 %v1032, %v1033
        %v1038 = vmul.u32 %v1032, %v1034
        %v1039 = vshll.u32 %v1036, 16
        %v1040 = vshrl.u32 %v1036, 16
        %v1041 = vshll.u32 %v1037, 16
        %v1042 = vshrl.u32 %v1037, 16
        %vm1043 = vc.u32 %v1035, %v1039
        %v1044 = vsel %vm1043, 1, 0
        %v1045 = vadd.s32 %v1035, %v1039
        %v1046 = vadd.s32 %v1038, %v1044
        %vm1047 = vc.u32 %v1045, %v1041
        %v1048 = vsel %vm1047, 1, 0
        %v1049 = vadd.s32 %v1045, %v1041
        %v1050 = vadd.s32 %v1046, %v1048
        %v1051 = vadd.s32 %v1050, %v1040
        %v1052 = vadd.s32 %v1051, %v1042
        %v1053 = vmul.u32 %v1008, %v999
        %v1054 = vadd.s32 %v1030, %v1049
        %vm1055 = vc.u32 %v1030, %v1049
        %v1056 = vadd.s32 %v1052, 1
        %v1057 = vsel %vm1055, %v1056, %v1052
        %v1058 = vadd.s32 %v1053, %v1057
        %v1059 = vadd.s32 %v1058, 536870912
        %v1060 = vshrl.u32 %v1059, 30
        %v1061 = vshll.u32 %v1060, 30
        %v1062 = vsub.s32 %v1058, %v1061
        %vm1063 = vcmp.lt.s32.totalorder %v1062, 0
        %v1064 = vsub.s32 0, %v1062
        %v1065 = vsel %vm1063, %v1064, %v1062
        %v1066 = vclz %v1065
        %v1067 = vsub.s32 %v1066, 2
        %vm1068 = vcmp.gt.s32.totalorder 0, %v1067
        %v1069 = vsel %vm1068, 0, %v1067
        %v1070 = vsub.s32 32, %v1069
        %v1071 = vshll.u32 %v1062, %v1069
        %v1072 = vshrl.u32 %v1054, %v1070
        %v1073 = vor.u32 %v1071, %v1072
        %v1074 = vsub.s32 4294967266, %v1069
        %v1075 = vadd.s32 %v1074, 127
        %v1076 = vshll.u32 %v1075, 23
        %v1077 = vor.u32 4788187, %v1076
        %v1078 = vand.u32 2147483647, %v1077
        %v1080 = vcvt.s32.f32 %v1073
        %v1081 = vmul.f32 %v1080, %v1078
        %v1082 = vxor.u32 %v1081, 2147483648
        %v1083 = vsel %vm962, %v1082, %v1081
        %v1084 = vsub.s32 4, %v1060
        %v1085 = vsel %vm962, %v1084, %v1060
        %v1086 = vsel %vm961, %v804, %v1083
        %v1087 = vsel %vm961, 0, %v1085
        %v1088 = vmul.f32 %v1086, %v1086
        %v1089 = vmul.f32 %v1088, -0.001358992
        %v1090 = vadd.f32 %v1089, 0.041655596
        %v1091 = vmul.f32 %v1088, %v1090
        %v1092 = vadd.f32 %v1091, -0.4999988
        %v1093 = vmul.f32 %v1088, %v1092
        %v1094 = vadd.f32 1.0, %v1093
        %v1095 = vmul.f32 %v1086, %v1086
        %v1096 = vmul.f32 %v1095, -0.00019511016
        %v1097 = vadd.f32 %v1096, 0.008332121
        %v1098 = vmul.f32 %v1095, %v1097
        %v1099 = vadd.f32 %v1098, -0.16666654
        %v1100 = vmul.f32 %v1095, %v1099
        %v1101 = vadd.f32 %v1100, 1.0
        %v1102 = vmul.f32 %v1101, %v1086
        %vm1103 = vweird.f32 %v804
        %v1104 = vadd.s32 %v1087, 3
        %v1105 = vand.u32 %v1104, 3
        %vm1106 = vcmp.lt.s32.totalorder %v1105, 2
        %vm1107 = vcmp.eq.s32.totalorder %v1105, 0
        %v1108 = vxor.u32 %v1102, 2147483648
        %v1109 = vsel %vm1107, %v1094, %v1108
        %vm1110 = vcmp.eq.s32.totalorder %v1105, 2
        %v1111 = vxor.u32 %v1094, 2147483648
        %v1112 = vsel %vm1110, %v1111, %v1102
        %v1113 = vsel %vm1106, %v1109, %v1112
        %v1114 = vsel %vm1103, nan, %v1113
        %v1115 = vld [vmem:[%s3] sm:$0xff]
        %v1116 = vld [vmem:[%s3 + $0x8] sm:$0xff]
        %v1117 = vld [vmem:[%s3 + $0x10] sm:$0xff]
        %v1118 = vand.u32 2147483647, %v803
        %vm1119 = vcmp.le.f32.partialorder %v1118, 0.7853982
        %vm1120 = vcmp.lt.s32.totalorder %v803, 0
        %v1121 = vand.u32 %v803, 2139095040
        %v1122 = vshrl.u32 %v1121, 23
        %v1123 = vsub.s32 %v1122, 127
        %v1124 = vand.u32 2147483647, %v803
        %v1125 = vand.u32 %v1124, 8388607
        %v1126 = vor.u32 %v1125, 8388608
        %v1127 = vsub.s32 0, %v1126
        %v1128 = vadd.s32 %v1123, 1
        %vm1129 = vcmp.gt.s32.totalorder %v1128, 0
        %v1130 = vsel %vm1129, %v1128, 0
        %v1131 = vshrl.u32 %v1130, 5
        %v1132 = vand.u32 %v1130, 31
        %v1133 = vsub.s32 32, %v1132
        %v1134 = vshrl.u32 683565275, %v1133
        %v1135 = vshll.u32 683565275, %v1132
        %v1136 = vshrl.u32 2475754826, %v1133
        %v1137 = vor.u32 %v1135, %v1136
        %v1138 = vshll.u32 2475754826, %v1132
        %v1139 = vshrl.u32 2131351028, %v1133
        %v1140 = vor.u32 %v1138, %v1139
        %v1141 = vshll.u32 2131351028, %v1132
        %v1142 = vshrl.u32 2102212464, %v1133
        %v1143 = vor.u32 %v1141, %v1142
        %v1144 = vshll.u32 2102212464, %v1132
        %v1145 = vshrl.u32 920167782, %v1133
        %v1146 = vor.u32 %v1144, %v1145
        %v1147 = vshll.u32 920167782, %v1132
        %v1148 = vshrl.u32 1326507024, %v1133
        %v1149 = vor.u32 %v1147, %v1148
        %vm1150 = vcmp.lt.s32.totalorder %v1131, 1
        %vm1151 = vcmp.lt.s32.totalorder %v1131, 2
        %vm1152 = vcmp.lt.s32.totalorder %v1131, 3
        %vm1153 = vcmp.lt.s32.totalorder %v1131, 4
        %v1154 = vsel %vm1150, %v1134, %v1137
        %v1155 = vsel %vm1153, %v1143, 2102212464
        %v1156 = vsel %vm1152, %v1140, %v1155
        %v1157 = vsel %vm1151, %v1154, %v1156
        %v1158 = vsel %vm1150, %v1137, %v1140
        %v1159 = vsel %vm1153, %v1146, 920167782
        %v1160 = vsel %vm1152, %v1143, %v1159
        %v1161 = vsel %vm1151, %v1158, %v1160
        %v1162 = vsel %vm1150, %v1140, %v1143
        %v1163 = vsel %vm1153, %v1149, 1326507024
        %v1164 = vsel %vm1152, %v1146, %v1163
        %v1165 = vsel %vm1151, %v1162, %v1164
        %v1166 = vshll.u32 %v1126, 8
        %v1167 = vand.u32 %v1166, 65535
        %v1168 = vshrl.u32 %v1166, 16
        %v1169 = vand.u32 %v1165, 65535
        %v1170 = vshrl.u32 %v1165, 16
        %v1171 = vmul.u32 %v1167, %v1169
        %v1172 = vmul.u32 %v1167, %v1170
        %v1173 = vmul.u32 %v1168, %v1169
        %v1174 = vmul.u32 %v1168, %v1170
        %v1175 = vshll.u32 %v1172, 16
        %v1176 = vshrl.u32 %v1172, 16
        %v1177 = vshll.u32 %v1173, 16
        %v1178 = vshrl.u32 %v1173, 16
        %vm1179 = vc.u32 %v1171, %v1175
        %v1180 = vsel %vm1179, 1, 0
        %v1181 = vadd.s32 %v1171, %v1175
        %v1182 = vadd.s32 %v1174, %v1180
        %vm1183 = vc.u32 %v1181, %v1177
        %v1184 = vsel %vm1183, 1, 0
        %v1185 = vadd.s32 %v1181, %v1177
        %v1186 = vadd.s32 %v1182, %v1184
        %v1187 = vadd.s32 %v1186, %v1176
        %v1188 = vadd.s32 %v1187, %v1178
        %v1189 = vand.u32 %v1166, 65535
        %v1190 = vshrl.u32 %v1166, 16
        %v1191 = vand.u32 %v1161, 65535
        %v1192 = vshrl.u32 %v1161, 16
        %v1193 = vmul.u32 %v1189, %v1191
        %v1194 = vmul.u32 %v1189, %v1192
        %v1195 = vmul.u32 %v1190, %v1191
        %v1196 = vmul.u32 %v1190, %v1192
        %v1197 = vshll.u32 %v1194, 16
        %v1198 = vshrl.u32 %v1194, 16
        %v1199 = vshll.u32 %v1195, 16
        %v1200 = vshrl.u32 %v1195, 16
        %vm1201 = vc.u32 %v1193, %v1197
        %v1202 = vsel %vm1201, 1, 0
        %v1203 = vadd.s32 %v1193, %v1197
        %v1204 = vadd.s32 %v1196, %v1202
        %vm1205 = vc.u32 %v1203, %v1199
        %v1206 = vsel %vm1205, 1, 0
        %v1207 = vadd.s32 %v1203, %v1199
        %v1208 = vadd.s32 %v1204, %v1206
        %v1209 = vadd.s32 %v1208, %v1198
        %v1210 = vadd.s32 %v1209, %v1200
        %v1211 = vmul.u32 %v1166, %v1157
        %v1212 = vadd.s32 %v1188, %v1207
        %vm1213 = vc.u32 %v1188, %v1207
        %v1214 = vadd.s32 %v1210, 1
        %v1215 = vsel %vm1213, %v1214, %v1210
        %v1216 = vadd.s32 %v1211, %v1215
        %v1217 = vadd.s32 %v1216, 536870912
        %v1218 = vshrl.u32 %v1217, 30
        %v1219 = vshll.u32 %v1218, 30
        %v1220 = vsub.s32 %v1216, %v1219
        %vm1221 = vcmp.lt.s32.totalorder %v1220, 0
        %v1222 = vsub.s32 0, %v1220
        %v1223 = vsel %vm1221, %v1222, %v1220
        %v1224 = vclz %v1223
        %v1225 = vsub.s32 %v1224, 2
        %vm1226 = vcmp.gt.s32.totalorder 0, %v1225
        %v1227 = vsel %vm1226, 0, %v1225
        %v1228 = vsub.s32 32, %v1227
        %v1229 = vshll.u32 %v1220, %v1227
        %v1230 = vshrl.u32 %v1212, %v1228
        %v1231 = vor.u32 %v1229, %v1230
        %v1232 = vsub.s32 4294967266, %v1227
        %v1233 = vadd.s32 %v1232, 127
        %v1234 = vshll.u32 %v1233, 23
        %v1235 = vor.u32 4788187, %v1234
        %v1236 = vand.u32 2147483647, %v1235
        %v1238 = vcvt.s32.f32 %v1231
        %v1239 = vmul.f32 %v1238, %v1236
        %v1240 = vxor.u32 %v1239, 2147483648
        %v1241 = vsel %vm1120, %v1240, %v1239
        %v1242 = vsub.s32 4, %v1218
        %v1243 = vsel %vm1120, %v1242, %v1218
        %v1244 = vsel %vm1119, %v803, %v1241
        %v1245 = vsel %vm1119, 0, %v1243
        %v1246 = vmul.f32 %v1244, %v1244
        %v1247 = vmul.f32 %v1246, -0.001358992
        %v1248 = vadd.f32 %v1247, 0.041655596
        %v1249 = vmul.f32 %v1246, %v1248
        %v1250 = vadd.f32 %v1249, -0.4999988
        %v1251 = vmul.f32 %v1246, %v1250
        %v1252 = vadd.f32 1.0, %v1251
        %v1253 = vmul.f32 %v1244, %v1244
        %v1254 = vmul.f32 %v1253, -0.00019511016
        %v1255 = vadd.f32 %v1254, 0.008332121
        %v1256 = vmul.f32 %v1253, %v1255
        %v1257 = vadd.f32 %v1256, -0.16666654
        %v1258 = vmul.f32 %v1253, %v1257
        %v1259 = vadd.f32 %v1258, 1.0
        %v1260 = vmul.f32 %v1259, %v1244
        %vm1261 = vweird.f32 %v803
        %v1262 = vand.u32 %v1245, 3
        %vm1263 = vcmp.lt.s32.totalorder %v1262, 2
        %vm1264 = vcmp.eq.s32.totalorder %v1262, 0
        %v1265 = vxor.u32 %v1260, 2147483648
        %v1266 = vsel %vm1264, %v1252, %v1265
        %vm1267 = vcmp.eq.s32.totalorder %v1262, 2
        %v1268 = vxor.u32 %v1252, 2147483648
        %v1269 = vsel %vm1267, %v1268, %v1260
        %v1270 = vsel %vm1263, %v1266, %v1269
        %v1271 = vsel %vm1261, nan, %v1270
        %v1272 = vand.u32 2147483647, %v804
        %vm1273 = vcmp.le.f32.partialorder %v1272, 0.7853982
        %vm1274 = vcmp.lt.s32.totalorder %v804, 0
        %v1275 = vand.u32 %v804, 2139095040
        %v1276 = vshrl.u32 %v1275, 23
        %v1277 = vsub.s32 %v1276, 127
        %v1278 = vand.u32 2147483647, %v804
        %v1279 = vand.u32 %v1278, 8388607
        %v1280 = vor.u32 %v1279, 8388608
        %v1281 = vsub.s32 0, %v1280
        %v1282 = vadd.s32 %v1277, 1
        %vm1283 = vcmp.gt.s32.totalorder %v1282, 0
        %v1284 = vsel %vm1283, %v1282, 0
        %v1285 = vshrl.u32 %v1284, 5
        %v1286 = vand.u32 %v1284, 31
        %v1287 = vsub.s32 32, %v1286
        %v1288 = vshrl.u32 683565275, %v1287
        %v1289 = vshll.u32 683565275, %v1286
        %v1290 = vshrl.u32 2475754826, %v1287
        %v1291 = vor.u32 %v1289, %v1290
        %v1292 = vshll.u32 2475754826, %v1286
        %v1293 = vshrl.u32 2131351028, %v1287
        %v1294 = vor.u32 %v1292, %v1293
        %v1295 = vshll.u32 2131351028, %v1286
        %v1296 = vshrl.u32 2102212464, %v1287
        %v1297 = vor.u32 %v1295, %v1296
        %v1298 = vshll.u32 2102212464, %v1286
        %v1299 = vshrl.u32 920167782, %v1287
        %v1300 = vor.u32 %v1298, %v1299
        %v1301 = vshll.u32 920167782, %v1286
        %v1302 = vshrl.u32 1326507024, %v1287
        %v1303 = vor.u32 %v1301, %v1302
        %vm1304 = vcmp.lt.s32.totalorder %v1285, 1
        %vm1305 = vcmp.lt.s32.totalorder %v1285, 2
        %vm1306 = vcmp.lt.s32.totalorder %v1285, 3
        %vm1307 = vcmp.lt.s32.totalorder %v1285, 4
        %v1308 = vsel %vm1304, %v1288, %v1291
        %v1309 = vsel %vm1307, %v1297, 2102212464
        %v1310 = vsel %vm1306, %v1294, %v1309
        %v1311 = vsel %vm1305, %v1308, %v1310
        %v1312 = vsel %vm1304, %v1291, %v1294
        %v1313 = vsel %vm1307, %v1300, 920167782
        %v1314 = vsel %vm1306, %v1297, %v1313
        %v1315 = vsel %vm1305, %v1312, %v1314
        %v1316 = vsel %vm1304, %v1294, %v1297
        %v1317 = vsel %vm1307, %v1303, 1326507024
        %v1318 = vsel %vm1306, %v1300, %v1317
        %v1319 = vsel %vm1305, %v1316, %v1318
        %v1320 = vshll.u32 %v1280, 8
        %v1321 = vand.u32 %v1320, 65535
        %v1322 = vshrl.u32 %v1320, 16
        %v1323 = vand.u32 %v1319, 65535
        %v1324 = vshrl.u32 %v1319, 16
        %v1325 = vmul.u32 %v1321, %v1323
        %v1326 = vmul.u32 %v1321, %v1324
        %v1327 = vmul.u32 %v1322, %v1323
        %v1328 = vmul.u32 %v1322, %v1324
        %v1329 = vshll.u32 %v1326, 16
        %v1330 = vshrl.u32 %v1326, 16
        %v1331 = vshll.u32 %v1327, 16
        %v1332 = vshrl.u32 %v1327, 16
        %vm1333 = vc.u32 %v1325, %v1329
        %v1334 = vsel %vm1333, 1, 0
        %v1335 = vadd.s32 %v1325, %v1329
        %v1336 = vadd.s32 %v1328, %v1334
        %vm1337 = vc.u32 %v1335, %v1331
        %v1338 = vsel %vm1337, 1, 0
        %v1339 = vadd.s32 %v1335, %v1331
        %v1340 = vadd.s32 %v1336, %v1338
        %v1341 = vadd.s32 %v1340, %v1330
        %v1342 = vadd.s32 %v1341, %v1332
        %v1343 = vand.u32 %v1320, 65535
        %v1344 = vshrl.u32 %v1320, 16
        %v1345 = vand.u32 %v1315, 65535
        %v1346 = vshrl.u32 %v1315, 16
        %v1347 = vmul.u32 %v1343, %v1345
        %v1348 = vmul.u32 %v1343, %v1346
        %v1349 = vmul.u32 %v1344, %v1345
        %v1350 = vmul.u32 %v1344, %v1346
        %v1351 = vshll.u32 %v1348, 16
        %v1352 = vshrl.u32 %v1348, 16
        %v1353 = vshll.u32 %v1349, 16
        %v1354 = vshrl.u32 %v1349, 16
        %vm1355 = vc.u32 %v1347, %v1351
        %v1356 = vsel %vm1355, 1, 0
        %v1357 = vadd.s32 %v1347, %v1351
        %v1358 = vadd.s32 %v1350, %v1356
        %vm1359 = vc.u32 %v1357, %v1353
        %v1360 = vsel %vm1359, 1, 0
        %v1361 = vadd.s32 %v1357, %v1353
        %v1362 = vadd.s32 %v1358, %v1360
        %v1363 = vadd.s32 %v1362, %v1352
        %v1364 = vadd.s32 %v1363, %v1354
        %v1365 = vmul.u32 %v1320, %v1311
        %v1366 = vadd.s32 %v1342, %v1361
        %vm1367 = vc.u32 %v1342, %v1361
        %v1368 = vadd.s32 %v1364, 1
        %v1369 = vsel %vm1367, %v1368, %v1364
        %v1370 = vadd.s32 %v1365, %v1369
        %v1371 = vadd.s32 %v1370, 536870912
        %v1372 = vshrl.u32 %v1371, 30
        %v1373 = vshll.u32 %v1372, 30
        %v1374 = vsub.s32 %v1370, %v1373
        %vm1375 = vcmp.lt.s32.totalorder %v1374, 0
        %v1376 = vsub.s32 0, %v1374
        %v1377 = vsel %vm1375, %v1376, %v1374
        %v1378 = vclz %v1377
        %v1379 = vsub.s32 %v1378, 2
        %vm1380 = vcmp.gt.s32.totalorder 0, %v1379
        %v1381 = vsel %vm1380, 0, %v1379
        %v1382 = vsub.s32 32, %v1381
        %v1383 = vshll.u32 %v1374, %v1381
        %v1384 = vshrl.u32 %v1366, %v1382
        %v1385 = vor.u32 %v1383, %v1384
        %v1386 = vsub.s32 4294967266, %v1381
        %v1387 = vadd.s32 %v1386, 127
        %v1388 = vshll.u32 %v1387, 23
        %v1389 = vor.u32 4788187, %v1388
        %v1390 = vand.u32 2147483647, %v1389
        %v1392 = vcvt.s32.f32 %v1385
        %v1393 = vmul.f32 %v1392, %v1390
        %v1394 = vxor.u32 %v1393, 2147483648
        %v1395 = vsel %vm1274, %v1394, %v1393
        %v1396 = vsub.s32 4, %v1372
        %v1397 = vsel %vm1274, %v1396, %v1372
        %v1398 = vsel %vm1273, %v804, %v1395
        %v1399 = vsel %vm1273, 0, %v1397
        %v1400 = vmul.f32 %v1398, %v1398
        %v1401 = vmul.f32 %v1400, -0.001358992
        %v1402 = vadd.f32 %v1401, 0.041655596
        %v1403 = vmul.f32 %v1400, %v1402
        %v1404 = vadd.f32 %v1403, -0.4999988
        %v1405 = vmul.f32 %v1400, %v1404
        %v1406 = vadd.f32 1.0, %v1405
        %v1407 = vmul.f32 %v1398, %v1398
        %v1408 = vmul.f32 %v1407, -0.00019511016
        %v1409 = vadd.f32 %v1408, 0.008332121
        %v1410 = vmul.f32 %v1407, %v1409
        %v1411 = vadd.f32 %v1410, -0.16666654
        %v1412 = vmul.f32 %v1407, %v1411
        %v1413 = vadd.f32 %v1412, 1.0
        %v1414 = vmul.f32 %v1413, %v1398
        %vm1415 = vweird.f32 %v804
        %v1416 = vand.u32 %v1399, 3
        %vm1417 = vcmp.lt.s32.totalorder %v1416, 2
        %vm1418 = vcmp.eq.s32.totalorder %v1416, 0
        %v1419 = vxor.u32 %v1414, 2147483648
        %v1420 = vsel %vm1418, %v1406, %v1419
        %vm1421 = vcmp.eq.s32.totalorder %v1416, 2
        %v1422 = vxor.u32 %v1406, 2147483648
        %v1423 = vsel %vm1421, %v1422, %v1414
        %v1424 = vsel %vm1417, %v1420, %v1423
        %v1425 = vsel %vm1415, nan, %v1424
        %v1426 = vld [vmem:[%s4] sm:$0xff]
        %v1427 = vld [vmem:[%s4 + $0x8] sm:$0xff]
        %v1428 = vld [vmem:[%s4 + $0x10] sm:$0xff]
        %vm1429 = vcmask 195584
        %v1431 = vsel %vm1429, %v1271, 0
        %v1434 = vsel %vm1429, %v1425, 0
        %1436 = vmatpush.msra.mxu0 0.0
        %1437 = vmatpush.msra.mxu0 0.0
        %1438 = vmatpush.msra.mxu0 0.0
        %1439 = vmatpush.msra.mxu0 0.0
        %1440 = vmatpush.msra.mxu0 0.0
        %1441 = vmatpush.msra.mxu0 0.0
        %1442 = vmatpush.msra.mxu0 0.0
        %1443 = vmatpush.msra.mxu0 0.0
        %1444 = vmatpush.msra.mxu0 0.0
        %1445 = vmatpush.msra.mxu0 0.0
        %1446 = vmatpush.msra.mxu0 0.0
        %1447 = vmatpush.msra.mxu0 0.0
        %1448 = vmatpush.msra.mxu0 0.0
        %1449 = vmatpush.msra.mxu0 %v1428
        %1450 = vmatpush.msra.mxu0 %v1427
        %1451 = vmatpush.msra.mxu0 %v1426
        %1452 = vmatmul.f32.gmra.mxu0 %v1431
        %v1453 = vpop.f32.mrf.mxu0
        %v1454 = vadd.f32 0.0, %v1453
        %1455 = vmatmul.f32.gmra.mxu0 %v1434
        %v1456 = vpop.f32.mrf.mxu0
        %v1457 = vadd.f32 0.0, %v1456
        %1458 = vdwg.mxu0
        %v1460 = vsel %vm1429, %v959, 0
        %v1463 = vsel %vm1429, %v1114, 0
        %1465 = vmatpush.msra.mxu0 0.0
        %1466 = vmatpush.msra.mxu0 0.0
        %1467 = vmatpush.msra.mxu0 0.0
        %1468 = vmatpush.msra.mxu0 0.0
        %1469 = vmatpush.msra.mxu0 0.0
        %1470 = vmatpush.msra.mxu0 0.0
        %1471 = vmatpush.msra.mxu0 0.0
        %1472 = vmatpush.msra.mxu0 0.0
        %1473 = vmatpush.msra.mxu0 0.0
        %1474 = vmatpush.msra.mxu0 0.0
        %1475 = vmatpush.msra.mxu0 0.0
        %1476 = vmatpush.msra.mxu0 0.0
        %1477 = vmatpush.msra.mxu0 0.0
        %1478 = vmatpush.msra.mxu0 %v1117
        %1479 = vmatpush.msra.mxu0 %v1116
        %1480 = vmatpush.msra.mxu0 %v1115
        %1481 = vmatmul.f32.gmra.mxu0 %v1460
        %v1482 = vpop.f32.mrf.mxu0
        %v1483 = vadd.f32 %v1454, %v1482
        %1484 = vmatmul.f32.gmra.mxu0 %v1463
        %v1485 = vpop.f32.mrf.mxu0
        %v1486 = vadd.f32 %v1457, %v1485
        %1487 = vdwg.mxu0
        %v1488 = vld [vmem:[%s5] sm:$0x7]
        %vm1489 = vcmask 23552
        %v1490 = vsel %vm1489, %v761, 0
        %v1492 = vsel %vm1489, %v762, 0
        %vm1494 = vcmask 1042432
        %v1496 = vsel %vm1494, %v1488, 0
        %1498 = vmatpush.msra.mxu0 0.0
        %1499 = vmatpush.msra.mxu0 0.0
        %1500 = vmatpush.msra.mxu0 0.0
        %1501 = vmatpush.msra.mxu0 0.0
        %1502 = vmatpush.msra.mxu0 0.0
        %1503 = vmatpush.msra.mxu0 0.0
        %1504 = vmatpush.msra.mxu0 0.0
        %1505 = vmatpush.msra.mxu0 0.0
        %1506 = vmatpush.msra.mxu0 0.0
        %1507 = vmatpush.msra.mxu0 0.0
        %1508 = vmatpush.msra.mxu0 0.0
        %1509 = vmatpush.msra.mxu0 0.0
        %1510 = vmatpush.msra.mxu0 0.0
        %1511 = vmatpush.msra.mxu0 0.0
        %1512 = vmatpush.msra.mxu0 0.0
        %1513 = vmatpush.msra.mxu0 %v1496
        %1514 = vmatmul.f32.gmra.mxu0 %v1490
        %v1515 = vpop.f32.mrf.mxu0
        %v1516 = vadd.f32 0.0, %v1515
        %1517 = vmatmul.f32.gmra.mxu0 %v1492
        %v1518 = vpop.f32.mrf.mxu0
        %v1519 = vadd.f32 0.0, %v1518
        %1520 = vdwg.mxu0
        %v1521 = vadd.f32 %v1483, %v1516
        %v1522 = vadd.f32 %v1486, %v1519
        %v1523 = vld [vmem:[%s6] sm:$0x1]
        %v1525 = vperm.slane %v1523, 0
        %v1527 = vadd.f32 %v1521, %v1525
        %v1528 = vadd.f32 %v1522, %v1525
        %v1529 = vld [vmem:[%s758] sm:$0xff]
        %v1530 = vld [vmem:[%s758 + $0x8] sm:$0xff]
        %v1531 = vld [vmem:[%s758 + $0x10] sm:$0xff]
        %v1532 = vld [vmem:[%s758 + $0x18] sm:$0xff]
        %1534 = vset.pattern.permute.xlu0 0
        %1535 = vperm.xlu0 %1534, %v1529
        %v1536 = vpop.permute.xlu0 %1535
        %1539 = vset.pattern.permute.xlu0 0
        %1540 = vperm.xlu0 %1539, %v1530
        %v1541 = vpop.permute.xlu0 %1540
        %1544 = vset.pattern.permute.xlu0 0
        %1545 = vperm.xlu0 %1544, %v1531
        %v1546 = vpop.permute.xlu0 %1545
        %1549 = vset.pattern.permute.xlu0 0
        %1550 = vperm.xlu0 %1549, %v1532
        %v1551 = vpop.permute.xlu0 %1550
        %v1553 = vmul.f32 %v1536, %v774
        %v1554 = vmul.f32 %v1541, %v774
        %v1555 = vmul.f32 %v1546, %v774
        %v1556 = vmul.f32 %v1551, %v774
        %1557 = vset.pattern.permute.xlu0 1
        %1558 = vperm.xlu0 %1557, %v1529
        %v1559 = vpop.permute.xlu0 %1558
        %1561 = vset.pattern.permute.xlu0 1
        %1562 = vperm.xlu0 %1561, %v1530
        %v1563 = vpop.permute.xlu0 %1562
        %1565 = vset.pattern.permute.xlu0 1
        %1566 = vperm.xlu0 %1565, %v1531
        %v1567 = vpop.permute.xlu0 %1566
        %1569 = vset.pattern.permute.xlu0 1
        %1570 = vperm.xlu0 %1569, %v1532
        %v1571 = vpop.permute.xlu0 %1570
        %v1573 = vmul.f32 %v1559, %v786
        %v1574 = vmul.f32 %v1563, %v786
        %v1575 = vmul.f32 %v1567, %v786
        %v1576 = vmul.f32 %v1571, %v786
        %v1577 = vadd.f32 %v1553, %v1573
        %v1578 = vadd.f32 %v1554, %v1574
        %v1579 = vadd.f32 %v1555, %v1575
        %v1580 = vadd.f32 %v1556, %v1576
        %1581 = vset.pattern.permute.xlu0 2
        %1582 = vperm.xlu0 %1581, %v1529
        %v1583 = vpop.permute.xlu0 %1582
        %1585 = vset.pattern.permute.xlu0 2
        %1586 = vperm.xlu0 %1585, %v1530
        %v1587 = vpop.permute.xlu0 %1586
        %1589 = vset.pattern.permute.xlu0 2
        %1590 = vperm.xlu0 %1589, %v1531
        %v1591 = vpop.permute.xlu0 %1590
        %1593 = vset.pattern.permute.xlu0 2
        %1594 = vperm.xlu0 %1593, %v1532
        %v1595 = vpop.permute.xlu0 %1594
        %v1597 = vmul.f32 %v1583, %v800
        %v1598 = vmul.f32 %v1587, %v800
        %v1599 = vmul.f32 %v1591, %v800
        %v1600 = vmul.f32 %v1595, %v800
        %v1601 = vadd.f32 %v1577, %v1597
        %v1602 = vadd.f32 %v1578, %v1598
        %v1603 = vadd.f32 %v1579, %v1599
        %v1604 = vadd.f32 %v1580, %v1600
        %v1605 = vand.u32 2147483647, %v1601
        %vm1606 = vcmp.le.f32.partialorder %v1605, 0.7853982
        %vm1607 = vcmp.lt.s32.totalorder %v1601, 0
        %v1608 = vand.u32 %v1601, 2139095040
        %v1609 = vshrl.u32 %v1608, 23
        %v1610 = vsub.s32 %v1609, 127
        %v1611 = vand.u32 2147483647, %v1601
        %v1612 = vand.u32 %v1611, 8388607
        %v1613 = vor.u32 %v1612, 8388608
        %v1614 = vsub.s32 0, %v1613
        %v1615 = vadd.s32 %v1610, 1
        %vm1616 = vcmp.gt.s32.totalorder %v1615, 0
        %v1617 = vsel %vm1616, %v1615, 0
        %v1618 = vshrl.u32 %v1617, 5
        %v1619 = vand.u32 %v1617, 31
        %v1620 = vsub.s32 32, %v1619
        %v1621 = vshrl.u32 683565275, %v1620
        %v1622 = vshll.u32 683565275, %v1619
        %v1623 = vshrl.u32 2475754826, %v1620
        %v1624 = vor.u32 %v1622, %v1623
        %v1625 = vshll.u32 2475754826, %v1619
        %v1626 = vshrl.u32 2131351028, %v1620
        %v1627 = vor.u32 %v1625, %v1626
        %v1628 = vshll.u32 2131351028, %v1619
        %v1629 = vshrl.u32 2102212464, %v1620
        %v1630 = vor.u32 %v1628, %v1629
        %v1631 = vshll.u32 2102212464, %v1619
        %v1632 = vshrl.u32 920167782, %v1620
        %v1633 = vor.u32 %v1631, %v1632
        %v1634 = vshll.u32 920167782, %v1619
        %v1635 = vshrl.u32 1326507024, %v1620
        %v1636 = vor.u32 %v1634, %v1635
        %vm1637 = vcmp.lt.s32.totalorder %v1618, 1
        %vm1638 = vcmp.lt.s32.totalorder %v1618, 2
        %vm1639 = vcmp.lt.s32.totalorder %v1618, 3
        %vm1640 = vcmp.lt.s32.totalorder %v1618, 4
        %v1641 = vsel %vm1637, %v1621, %v1624
        %v1642 = vsel %vm1640, %v1630, 2102212464
        %v1643 = vsel %vm1639, %v1627, %v1642
        %v1644 = vsel %vm1638, %v1641, %v1643
        %v1645 = vsel %vm1637, %v1624, %v1627
        %v1646 = vsel %vm1640, %v1633, 920167782
        %v1647 = vsel %vm1639, %v1630, %v1646
        %v1648 = vsel %vm1638, %v1645, %v1647
        %v1649 = vsel %vm1637, %v1627, %v1630
        %v1650 = vsel %vm1640, %v1636, 1326507024
        %v1651 = vsel %vm1639, %v1633, %v1650
        %v1652 = vsel %vm1638, %v1649, %v1651
        %v1653 = vshll.u32 %v1613, 8
        %v1654 = vand.u32 %v1653, 65535
        %v1655 = vshrl.u32 %v1653, 16
        %v1656 = vand.u32 %v1652, 65535
        %v1657 = vshrl.u32 %v1652, 16
        %v1658 = vmul.u32 %v1654, %v1656
        %v1659 = vmul.u32 %v1654, %v1657
        %v1660 = vmul.u32 %v1655, %v1656
        %v1661 = vmul.u32 %v1655, %v1657
        %v1662 = vshll.u32 %v1659, 16
        %v1663 = vshrl.u32 %v1659, 16
        %v1664 = vshll.u32 %v1660, 16
        %v1665 = vshrl.u32 %v1660, 16
        %vm1666 = vc.u32 %v1658, %v1662
        %v1667 = vsel %vm1666, 1, 0
        %v1668 = vadd.s32 %v1658, %v1662
        %v1669 = vadd.s32 %v1661, %v1667
        %vm1670 = vc.u32 %v1668, %v1664
        %v1671 = vsel %vm1670, 1, 0
        %v1672 = vadd.s32 %v1668, %v1664
        %v1673 = vadd.s32 %v1669, %v1671
        %v1674 = vadd.s32 %v1673, %v1663
        %v1675 = vadd.s32 %v1674, %v1665
        %v1676 = vand.u32 %v1653, 65535
        %v1677 = vshrl.u32 %v1653, 16
        %v1678 = vand.u32 %v1648, 65535
        %v1679 = vshrl.u32 %v1648, 16
        %v1680 = vmul.u32 %v1676, %v1678
        %v1681 = vmul.u32 %v1676, %v1679
        %v1682 = vmul.u32 %v1677, %v1678
        %v1683 = vmul.u32 %v1677, %v1679
        %v1684 = vshll.u32 %v1681, 16
        %v1685 = vshrl.u32 %v1681, 16
        %v1686 = vshll.u32 %v1682, 16
        %v1687 = vshrl.u32 %v1682, 16
        %vm1688 = vc.u32 %v1680, %v1684
        %v1689 = vsel %vm1688, 1, 0
        %v1690 = vadd.s32 %v1680, %v1684
        %v1691 = vadd.s32 %v1683, %v1689
        %vm1692 = vc.u32 %v1690, %v1686
        %v1693 = vsel %vm1692, 1, 0
        %v1694 = vadd.s32 %v1690, %v1686
        %v1695 = vadd.s32 %v1691, %v1693
        %v1696 = vadd.s32 %v1695, %v1685
        %v1697 = vadd.s32 %v1696, %v1687
        %v1698 = vmul.u32 %v1653, %v1644
        %v1699 = vadd.s32 %v1675, %v1694
        %vm1700 = vc.u32 %v1675, %v1694
        %v1701 = vadd.s32 %v1697, 1
        %v1702 = vsel %vm1700, %v1701, %v1697
        %v1703 = vadd.s32 %v1698, %v1702
        %v1704 = vadd.s32 %v1703, 536870912
        %v1705 = vshrl.u32 %v1704, 30
        %v1706 = vshll.u32 %v1705, 30
        %v1707 = vsub.s32 %v1703, %v1706
        %vm1708 = vcmp.lt.s32.totalorder %v1707, 0
        %v1709 = vsub.s32 0, %v1707
        %v1710 = vsel %vm1708, %v1709, %v1707
        %v1711 = vclz %v1710
        %v1712 = vsub.s32 %v1711, 2
        %vm1713 = vcmp.gt.s32.totalorder 0, %v1712
        %v1714 = vsel %vm1713, 0, %v1712
        %v1715 = vsub.s32 32, %v1714
        %v1716 = vshll.u32 %v1707, %v1714
        %v1717 = vshrl.u32 %v1699, %v1715
        %v1718 = vor.u32 %v1716, %v1717
        %v1719 = vsub.s32 4294967266, %v1714
        %v1720 = vadd.s32 %v1719, 127
        %v1721 = vshll.u32 %v1720, 23
        %v1722 = vor.u32 4788187, %v1721
        %v1723 = vand.u32 2147483647, %v1722
        %v1725 = vcvt.s32.f32 %v1718
        %v1726 = vmul.f32 %v1725, %v1723
        %v1727 = vxor.u32 %v1726, 2147483648
        %v1728 = vsel %vm1607, %v1727, %v1726
        %v1729 = vsub.s32 4, %v1705
        %v1730 = vsel %vm1607, %v1729, %v1705
        %v1731 = vsel %vm1606, %v1601, %v1728
        %v1732 = vsel %vm1606, 0, %v1730
        %v1733 = vmul.f32 %v1731, %v1731
        %v1734 = vmul.f32 %v1733, -0.001358992
        %v1735 = vadd.f32 %v1734, 0.041655596
        %v1736 = vmul.f32 %v1733, %v1735
        %v1737 = vadd.f32 %v1736, -0.4999988
        %v1738 = vmul.f32 %v1733, %v1737
        %v1739 = vadd.f32 1.0, %v1738
        %v1740 = vmul.f32 %v1731, %v1731
        %v1741 = vmul.f32 %v1740, -0.00019511016
        %v1742 = vadd.f32 %v1741, 0.008332121
        %v1743 = vmul.f32 %v1740, %v1742
        %v1744 = vadd.f32 %v1743, -0.16666654
        %v1745 = vmul.f32 %v1740, %v1744
        %v1746 = vadd.f32 %v1745, 1.0
        %v1747 = vmul.f32 %v1746, %v1731
        %vm1748 = vweird.f32 %v1601
        %v1749 = vadd.s32 %v1732, 3
        %v1750 = vand.u32 %v1749, 3
        %vm1751 = vcmp.lt.s32.totalorder %v1750, 2
        %vm1752 = vcmp.eq.s32.totalorder %v1750, 0
        %v1753 = vxor.u32 %v1747, 2147483648
        %v1754 = vsel %vm1752, %v1739, %v1753
        %vm1755 = vcmp.eq.s32.totalorder %v1750, 2
        %v1756 = vxor.u32 %v1739, 2147483648
        %v1757 = vsel %vm1755, %v1756, %v1747
        %v1758 = vsel %vm1751, %v1754, %v1757
        %v1759 = vsel %vm1748, nan, %v1758
        %v1760 = vand.u32 2147483647, %v1602
        %vm1761 = vcmp.le.f32.partialorder %v1760, 0.7853982
        %vm1762 = vcmp.lt.s32.totalorder %v1602, 0
        %v1763 = vand.u32 %v1602, 2139095040
        %v1764 = vshrl.u32 %v1763, 23
        %v1765 = vsub.s32 %v1764, 127
        %v1766 = vand.u32 2147483647, %v1602
        %v1767 = vand.u32 %v1766, 8388607
        %v1768 = vor.u32 %v1767, 8388608
        %v1769 = vsub.s32 0, %v1768
        %v1770 = vadd.s32 %v1765, 1
        %vm1771 = vcmp.gt.s32.totalorder %v1770, 0
        %v1772 = vsel %vm1771, %v1770, 0
        %v1773 = vshrl.u32 %v1772, 5
        %v1774 = vand.u32 %v1772, 31
        %v1775 = vsub.s32 32, %v1774
        %v1776 = vshrl.u32 683565275, %v1775
        %v1777 = vshll.u32 683565275, %v1774
        %v1778 = vshrl.u32 2475754826, %v1775
        %v1779 = vor.u32 %v1777, %v1778
        %v1780 = vshll.u32 2475754826, %v1774
        %v1781 = vshrl.u32 2131351028, %v1775
        %v1782 = vor.u32 %v1780, %v1781
        %v1783 = vshll.u32 2131351028, %v1774
        %v1784 = vshrl.u32 2102212464, %v1775
        %v1785 = vor.u32 %v1783, %v1784
        %v1786 = vshll.u32 2102212464, %v1774
        %v1787 = vshrl.u32 920167782, %v1775
        %v1788 = vor.u32 %v1786, %v1787
        %v1789 = vshll.u32 920167782, %v1774
        %v1790 = vshrl.u32 1326507024, %v1775
        %v1791 = vor.u32 %v1789, %v1790
        %vm1792 = vcmp.lt.s32.totalorder %v1773, 1
        %vm1793 = vcmp.lt.s32.totalorder %v1773, 2
        %vm1794 = vcmp.lt.s32.totalorder %v1773, 3
        %vm1795 = vcmp.lt.s32.totalorder %v1773, 4
        %v1796 = vsel %vm1792, %v1776, %v1779
        %v1797 = vsel %vm1795, %v1785, 2102212464
        %v1798 = vsel %vm1794, %v1782, %v1797
        %v1799 = vsel %vm1793, %v1796, %v1798
        %v1800 = vsel %vm1792, %v1779, %v1782
        %v1801 = vsel %vm1795, %v1788, 920167782
        %v1802 = vsel %vm1794, %v1785, %v1801
        %v1803 = vsel %vm1793, %v1800, %v1802
        %v1804 = vsel %vm1792, %v1782, %v1785
        %v1805 = vsel %vm1795, %v1791, 1326507024
        %v1806 = vsel %vm1794, %v1788, %v1805
        %v1807 = vsel %vm1793, %v1804, %v1806
        %v1808 = vshll.u32 %v1768, 8
        %v1809 = vand.u32 %v1808, 65535
        %v1810 = vshrl.u32 %v1808, 16
        %v1811 = vand.u32 %v1807, 65535
        %v1812 = vshrl.u32 %v1807, 16
        %v1813 = vmul.u32 %v1809, %v1811
        %v1814 = vmul.u32 %v1809, %v1812
        %v1815 = vmul.u32 %v1810, %v1811
        %v1816 = vmul.u32 %v1810, %v1812
        %v1817 = vshll.u32 %v1814, 16
        %v1818 = vshrl.u32 %v1814, 16
        %v1819 = vshll.u32 %v1815, 16
        %v1820 = vshrl.u32 %v1815, 16
        %vm1821 = vc.u32 %v1813, %v1817
        %v1822 = vsel %vm1821, 1, 0
        %v1823 = vadd.s32 %v1813, %v1817
        %v1824 = vadd.s32 %v1816, %v1822
        %vm1825 = vc.u32 %v1823, %v1819
        %v1826 = vsel %vm1825, 1, 0
        %v1827 = vadd.s32 %v1823, %v1819
        %v1828 = vadd.s32 %v1824, %v1826
        %v1829 = vadd.s32 %v1828, %v1818
        %v1830 = vadd.s32 %v1829, %v1820
        %v1831 = vand.u32 %v1808, 65535
        %v1832 = vshrl.u32 %v1808, 16
        %v1833 = vand.u32 %v1803, 65535
        %v1834 = vshrl.u32 %v1803, 16
        %v1835 = vmul.u32 %v1831, %v1833
        %v1836 = vmul.u32 %v1831, %v1834
        %v1837 = vmul.u32 %v1832, %v1833
        %v1838 = vmul.u32 %v1832, %v1834
        %v1839 = vshll.u32 %v1836, 16
        %v1840 = vshrl.u32 %v1836, 16
        %v1841 = vshll.u32 %v1837, 16
        %v1842 = vshrl.u32 %v1837, 16
        %vm1843 = vc.u32 %v1835, %v1839
        %v1844 = vsel %vm1843, 1, 0
        %v1845 = vadd.s32 %v1835, %v1839
        %v1846 = vadd.s32 %v1838, %v1844
        %vm1847 = vc.u32 %v1845, %v1841
        %v1848 = vsel %vm1847, 1, 0
        %v1849 = vadd.s32 %v1845, %v1841
        %v1850 = vadd.s32 %v1846, %v1848
        %v1851 = vadd.s32 %v1850, %v1840
        %v1852 = vadd.s32 %v1851, %v1842
        %v1853 = vmul.u32 %v1808, %v1799
        %v1854 = vadd.s32 %v1830, %v1849
        %vm1855 = vc.u32 %v1830, %v1849
        %v1856 = vadd.s32 %v1852, 1
        %v1857 = vsel %vm1855, %v1856, %v1852
        %v1858 = vadd.s32 %v1853, %v1857
        %v1859 = vadd.s32 %v1858, 536870912
        %v1860 = vshrl.u32 %v1859, 30
        %v1861 = vshll.u32 %v1860, 30
        %v1862 = vsub.s32 %v1858, %v1861
        %vm1863 = vcmp.lt.s32.totalorder %v1862, 0
        %v1864 = vsub.s32 0, %v1862
        %v1865 = vsel %vm1863, %v1864, %v1862
        %v1866 = vclz %v1865
        %v1867 = vsub.s32 %v1866, 2
        %vm1868 = vcmp.gt.s32.totalorder 0, %v1867
        %v1869 = vsel %vm1868, 0, %v1867
        %v1870 = vsub.s32 32, %v1869
        %v1871 = vshll.u32 %v1862, %v1869
        %v1872 = vshrl.u32 %v1854, %v1870
        %v1873 = vor.u32 %v1871, %v1872
        %v1874 = vsub.s32 4294967266, %v1869
        %v1875 = vadd.s32 %v1874, 127
        %v1876 = vshll.u32 %v1875, 23
        %v1877 = vor.u32 4788187, %v1876
        %v1878 = vand.u32 2147483647, %v1877
        %v1880 = vcvt.s32.f32 %v1873
        %v1881 = vmul.f32 %v1880, %v1878
        %v1882 = vxor.u32 %v1881, 2147483648
        %v1883 = vsel %vm1762, %v1882, %v1881
        %v1884 = vsub.s32 4, %v1860
        %v1885 = vsel %vm1762, %v1884, %v1860
        %v1886 = vsel %vm1761, %v1602, %v1883
        %v1887 = vsel %vm1761, 0, %v1885
        %v1888 = vmul.f32 %v1886, %v1886
        %v1889 = vmul.f32 %v1888, -0.001358992
        %v1890 = vadd.f32 %v1889, 0.041655596
        %v1891 = vmul.f32 %v1888, %v1890
        %v1892 = vadd.f32 %v1891, -0.4999988
        %v1893 = vmul.f32 %v1888, %v1892
        %v1894 = vadd.f32 1.0, %v1893
        %v1895 = vmul.f32 %v1886, %v1886
        %v1896 = vmul.f32 %v1895, -0.00019511016
        %v1897 = vadd.f32 %v1896, 0.008332121
        %v1898 = vmul.f32 %v1895, %v1897
        %v1899 = vadd.f32 %v1898, -0.16666654
        %v1900 = vmul.f32 %v1895, %v1899
        %v1901 = vadd.f32 %v1900, 1.0
        %v1902 = vmul.f32 %v1901, %v1886
        %vm1903 = vweird.f32 %v1602
        %v1904 = vadd.s32 %v1887, 3
        %v1905 = vand.u32 %v1904, 3
        %vm1906 = vcmp.lt.s32.totalorder %v1905, 2
        %vm1907 = vcmp.eq.s32.totalorder %v1905, 0
        %v1908 = vxor.u32 %v1902, 2147483648
        %v1909 = vsel %vm1907, %v1894, %v1908
        %vm1910 = vcmp.eq.s32.totalorder %v1905, 2
        %v1911 = vxor.u32 %v1894, 2147483648
        %v1912 = vsel %vm1910, %v1911, %v1902
        %v1913 = vsel %vm1906, %v1909, %v1912
        %v1914 = vsel %vm1903, nan, %v1913
        %v1915 = vand.u32 2147483647, %v1603
        %vm1916 = vcmp.le.f32.partialorder %v1915, 0.7853982
        %vm1917 = vcmp.lt.s32.totalorder %v1603, 0
        %v1918 = vand.u32 %v1603, 2139095040
        %v1919 = vshrl.u32 %v1918, 23
        %v1920 = vsub.s32 %v1919, 127
        %v1921 = vand.u32 2147483647, %v1603
        %v1922 = vand.u32 %v1921, 8388607
        %v1923 = vor.u32 %v1922, 8388608
        %v1924 = vsub.s32 0, %v1923
        %v1925 = vadd.s32 %v1920, 1
        %vm1926 = vcmp.gt.s32.totalorder %v1925, 0
        %v1927 = vsel %vm1926, %v1925, 0
        %v1928 = vshrl.u32 %v1927, 5
        %v1929 = vand.u32 %v1927, 31
        %v1930 = vsub.s32 32, %v1929
        %v1931 = vshrl.u32 683565275, %v1930
        %v1932 = vshll.u32 683565275, %v1929
        %v1933 = vshrl.u32 2475754826, %v1930
        %v1934 = vor.u32 %v1932, %v1933
        %v1935 = vshll.u32 2475754826, %v1929
        %v1936 = vshrl.u32 2131351028, %v1930
        %v1937 = vor.u32 %v1935, %v1936
        %v1938 = vshll.u32 2131351028, %v1929
        %v1939 = vshrl.u32 2102212464, %v1930
        %v1940 = vor.u32 %v1938, %v1939
        %v1941 = vshll.u32 2102212464, %v1929
        %v1942 = vshrl.u32 920167782, %v1930
        %v1943 = vor.u32 %v1941, %v1942
        %v1944 = vshll.u32 920167782, %v1929
        %v1945 = vshrl.u32 1326507024, %v1930
        %v1946 = vor.u32 %v1944, %v1945
        %vm1947 = vcmp.lt.s32.totalorder %v1928, 1
        %vm1948 = vcmp.lt.s32.totalorder %v1928, 2
        %vm1949 = vcmp.lt.s32.totalorder %v1928, 3
        %vm1950 = vcmp.lt.s32.totalorder %v1928, 4
        %v1951 = vsel %vm1947, %v1931, %v1934
        %v1952 = vsel %vm1950, %v1940, 2102212464
        %v1953 = vsel %vm1949, %v1937, %v1952
        %v1954 = vsel %vm1948, %v1951, %v1953
        %v1955 = vsel %vm1947, %v1934, %v1937
        %v1956 = vsel %vm1950, %v1943, 920167782
        %v1957 = vsel %vm1949, %v1940, %v1956
        %v1958 = vsel %vm1948, %v1955, %v1957
        %v1959 = vsel %vm1947, %v1937, %v1940
        %v1960 = vsel %vm1950, %v1946, 1326507024
        %v1961 = vsel %vm1949, %v1943, %v1960
        %v1962 = vsel %vm1948, %v1959, %v1961
        %v1963 = vshll.u32 %v1923, 8
        %v1964 = vand.u32 %v1963, 65535
        %v1965 = vshrl.u32 %v1963, 16
        %v1966 = vand.u32 %v1962, 65535
        %v1967 = vshrl.u32 %v1962, 16
        %v1968 = vmul.u32 %v1964, %v1966
        %v1969 = vmul.u32 %v1964, %v1967
        %v1970 = vmul.u32 %v1965, %v1966
        %v1971 = vmul.u32 %v1965, %v1967
        %v1972 = vshll.u32 %v1969, 16
        %v1973 = vshrl.u32 %v1969, 16
        %v1974 = vshll.u32 %v1970, 16
        %v1975 = vshrl.u32 %v1970, 16
        %vm1976 = vc.u32 %v1968, %v1972
        %v1977 = vsel %vm1976, 1, 0
        %v1978 = vadd.s32 %v1968, %v1972
        %v1979 = vadd.s32 %v1971, %v1977
        %vm1980 = vc.u32 %v1978, %v1974
        %v1981 = vsel %vm1980, 1, 0
        %v1982 = vadd.s32 %v1978, %v1974
        %v1983 = vadd.s32 %v1979, %v1981
        %v1984 = vadd.s32 %v1983, %v1973
        %v1985 = vadd.s32 %v1984, %v1975
        %v1986 = vand.u32 %v1963, 65535
        %v1987 = vshrl.u32 %v1963, 16
        %v1988 = vand.u32 %v1958, 65535
        %v1989 = vshrl.u32 %v1958, 16
        %v1990 = vmul.u32 %v1986, %v1988
        %v1991 = vmul.u32 %v1986, %v1989
        %v1992 = vmul.u32 %v1987, %v1988
        %v1993 = vmul.u32 %v1987, %v1989
        %v1994 = vshll.u32 %v1991, 16
        %v1995 = vshrl.u32 %v1991, 16
        %v1996 = vshll.u32 %v1992, 16
        %v1997 = vshrl.u32 %v1992, 16
        %vm1998 = vc.u32 %v1990, %v1994
        %v1999 = vsel %vm1998, 1, 0
        %v2000 = vadd.s32 %v1990, %v1994
        %v2001 = vadd.s32 %v1993, %v1999
        %vm2002 = vc.u32 %v2000, %v1996
        %v2003 = vsel %vm2002, 1, 0
        %v2004 = vadd.s32 %v2000, %v1996
        %v2005 = vadd.s32 %v2001, %v2003
        %v2006 = vadd.s32 %v2005, %v1995
        %v2007 = vadd.s32 %v2006, %v1997
        %v2008 = vmul.u32 %v1963, %v1954
        %v2009 = vadd.s32 %v1985, %v2004
        %vm2010 = vc.u32 %v1985, %v2004
        %v2011 = vadd.s32 %v2007, 1
        %v2012 = vsel %vm2010, %v2011, %v2007
        %v2013 = vadd.s32 %v2008, %v2012
        %v2014 = vadd.s32 %v2013, 536870912
        %v2015 = vshrl.u32 %v2014, 30
        %v2016 = vshll.u32 %v2015, 30
        %v2017 = vsub.s32 %v2013, %v2016
        %vm2018 = vcmp.lt.s32.totalorder %v2017, 0
        %v2019 = vsub.s32 0, %v2017
        %v2020 = vsel %vm2018, %v2019, %v2017
        %v2021 = vclz %v2020
        %v2022 = vsub.s32 %v2021, 2
        %vm2023 = vcmp.gt.s32.totalorder 0, %v2022
        %v2024 = vsel %vm2023, 0, %v2022
        %v2025 = vsub.s32 32, %v2024
        %v2026 = vshll.u32 %v2017, %v2024
        %v2027 = vshrl.u32 %v2009, %v2025
        %v2028 = vor.u32 %v2026, %v2027
        %v2029 = vsub.s32 4294967266, %v2024
        %v2030 = vadd.s32 %v2029, 127
        %v2031 = vshll.u32 %v2030, 23
        %v2032 = vor.u32 4788187, %v2031
        %v2033 = vand.u32 2147483647, %v2032
        %v2035 = vcvt.s32.f32 %v2028
        %v2036 = vmul.f32 %v2035, %v2033
        %v2037 = vxor.u32 %v2036, 2147483648
        %v2038 = vsel %vm1917, %v2037, %v2036
        %v2039 = vsub.s32 4, %v2015
        %v2040 = vsel %vm1917, %v2039, %v2015
        %v2041 = vsel %vm1916, %v1603, %v2038
        %v2042 = vsel %vm1916, 0, %v2040
        %v2043 = vmul.f32 %v2041, %v2041
        %v2044 = vmul.f32 %v2043, -0.001358992
        %v2045 = vadd.f32 %v2044, 0.041655596
        %v2046 = vmul.f32 %v2043, %v2045
        %v2047 = vadd.f32 %v2046, -0.4999988
        %v2048 = vmul.f32 %v2043, %v2047
        %v2049 = vadd.f32 1.0, %v2048
        %v2050 = vmul.f32 %v2041, %v2041
        %v2051 = vmul.f32 %v2050, -0.00019511016
        %v2052 = vadd.f32 %v2051, 0.008332121
        %v2053 = vmul.f32 %v2050, %v2052
        %v2054 = vadd.f32 %v2053, -0.16666654
        %v2055 = vmul.f32 %v2050, %v2054
        %v2056 = vadd.f32 %v2055, 1.0
        %v2057 = vmul.f32 %v2056, %v2041
        %vm2058 = vweird.f32 %v1603
        %v2059 = vadd.s32 %v2042, 3
        %v2060 = vand.u32 %v2059, 3
        %vm2061 = vcmp.lt.s32.totalorder %v2060, 2
        %vm2062 = vcmp.eq.s32.totalorder %v2060, 0
        %v2063 = vxor.u32 %v2057, 2147483648
        %v2064 = vsel %vm2062, %v2049, %v2063
        %vm2065 = vcmp.eq.s32.totalorder %v2060, 2
        %v2066 = vxor.u32 %v2049, 2147483648
        %v2067 = vsel %vm2065, %v2066, %v2057
        %v2068 = vsel %vm2061, %v2064, %v2067
        %v2069 = vsel %vm2058, nan, %v2068
        %v2070 = vand.u32 2147483647, %v1604
        %vm2071 = vcmp.le.f32.partialorder %v2070, 0.7853982
        %vm2072 = vcmp.lt.s32.totalorder %v1604, 0
        %v2073 = vand.u32 %v1604, 2139095040
        %v2074 = vshrl.u32 %v2073, 23
        %v2075 = vsub.s32 %v2074, 127
        %v2076 = vand.u32 2147483647, %v1604
        %v2077 = vand.u32 %v2076, 8388607
        %v2078 = vor.u32 %v2077, 8388608
        %v2079 = vsub.s32 0, %v2078
        %v2080 = vadd.s32 %v2075, 1
        %vm2081 = vcmp.gt.s32.totalorder %v2080, 0
        %v2082 = vsel %vm2081, %v2080, 0
        %v2083 = vshrl.u32 %v2082, 5
        %v2084 = vand.u32 %v2082, 31
        %v2085 = vsub.s32 32, %v2084
        %v2086 = vshrl.u32 683565275, %v2085
        %v2087 = vshll.u32 683565275, %v2084
        %v2088 = vshrl.u32 2475754826, %v2085
        %v2089 = vor.u32 %v2087, %v2088
        %v2090 = vshll.u32 2475754826, %v2084
        %v2091 = vshrl.u32 2131351028, %v2085
        %v2092 = vor.u32 %v2090, %v2091
        %v2093 = vshll.u32 2131351028, %v2084
        %v2094 = vshrl.u32 2102212464, %v2085
        %v2095 = vor.u32 %v2093, %v2094
        %v2096 = vshll.u32 2102212464, %v2084
        %v2097 = vshrl.u32 920167782, %v2085
        %v2098 = vor.u32 %v2096, %v2097
        %v2099 = vshll.u32 920167782, %v2084
        %v2100 = vshrl.u32 1326507024, %v2085
        %v2101 = vor.u32 %v2099, %v2100
        %vm2102 = vcmp.lt.s32.totalorder %v2083, 1
        %vm2103 = vcmp.lt.s32.totalorder %v2083, 2
        %vm2104 = vcmp.lt.s32.totalorder %v2083, 3
        %vm2105 = vcmp.lt.s32.totalorder %v2083, 4
        %v2106 = vsel %vm2102, %v2086, %v2089
        %v2107 = vsel %vm2105, %v2095, 2102212464
        %v2108 = vsel %vm2104, %v2092, %v2107
        %v2109 = vsel %vm2103, %v2106, %v2108
        %v2110 = vsel %vm2102, %v2089, %v2092
        %v2111 = vsel %vm2105, %v2098, 920167782
        %v2112 = vsel %vm2104, %v2095, %v2111
        %v2113 = vsel %vm2103, %v2110, %v2112
        %v2114 = vsel %vm2102, %v2092, %v2095
        %v2115 = vsel %vm2105, %v2101, 1326507024
        %v2116 = vsel %vm2104, %v2098, %v2115
        %v2117 = vsel %vm2103, %v2114, %v2116
        %v2118 = vshll.u32 %v2078, 8
        %v2119 = vand.u32 %v2118, 65535
        %v2120 = vshrl.u32 %v2118, 16
        %v2121 = vand.u32 %v2117, 65535
        %v2122 = vshrl.u32 %v2117, 16
        %v2123 = vmul.u32 %v2119, %v2121
        %v2124 = vmul.u32 %v2119, %v2122
        %v2125 = vmul.u32 %v2120, %v2121
        %v2126 = vmul.u32 %v2120, %v2122
        %v2127 = vshll.u32 %v2124, 16
        %v2128 = vshrl.u32 %v2124, 16
        %v2129 = vshll.u32 %v2125, 16
        %v2130 = vshrl.u32 %v2125, 16
        %vm2131 = vc.u32 %v2123, %v2127
        %v2132 = vsel %vm2131, 1, 0
        %v2133 = vadd.s32 %v2123, %v2127
        %v2134 = vadd.s32 %v2126, %v2132
        %vm2135 = vc.u32 %v2133, %v2129
        %v2136 = vsel %vm2135, 1, 0
        %v2137 = vadd.s32 %v2133, %v2129
        %v2138 = vadd.s32 %v2134, %v2136
        %v2139 = vadd.s32 %v2138, %v2128
        %v2140 = vadd.s32 %v2139, %v2130
        %v2141 = vand.u32 %v2118, 65535
        %v2142 = vshrl.u32 %v2118, 16
        %v2143 = vand.u32 %v2113, 65535
        %v2144 = vshrl.u32 %v2113, 16
        %v2145 = vmul.u32 %v2141, %v2143
        %v2146 = vmul.u32 %v2141, %v2144
        %v2147 = vmul.u32 %v2142, %v2143
        %v2148 = vmul.u32 %v2142, %v2144
        %v2149 = vshll.u32 %v2146, 16
        %v2150 = vshrl.u32 %v2146, 16
        %v2151 = vshll.u32 %v2147, 16
        %v2152 = vshrl.u32 %v2147, 16
        %vm2153 = vc.u32 %v2145, %v2149
        %v2154 = vsel %vm2153, 1, 0
        %v2155 = vadd.s32 %v2145, %v2149
        %v2156 = vadd.s32 %v2148, %v2154
        %vm2157 = vc.u32 %v2155, %v2151
        %v2158 = vsel %vm2157, 1, 0
        %v2159 = vadd.s32 %v2155, %v2151
        %v2160 = vadd.s32 %v2156, %v2158
        %v2161 = vadd.s32 %v2160, %v2150
        %v2162 = vadd.s32 %v2161, %v2152
        %v2163 = vmul.u32 %v2118, %v2109
        %v2164 = vadd.s32 %v2140, %v2159
        %vm2165 = vc.u32 %v2140, %v2159
        %v2166 = vadd.s32 %v2162, 1
        %v2167 = vsel %vm2165, %v2166, %v2162
        %v2168 = vadd.s32 %v2163, %v2167
        %v2169 = vadd.s32 %v2168, 536870912
        %v2170 = vshrl.u32 %v2169, 30
        %v2171 = vshll.u32 %v2170, 30
        %v2172 = vsub.s32 %v2168, %v2171
        %vm2173 = vcmp.lt.s32.totalorder %v2172, 0
        %v2174 = vsub.s32 0, %v2172
        %v2175 = vsel %vm2173, %v2174, %v2172
        %v2176 = vclz %v2175
        %v2177 = vsub.s32 %v2176, 2
        %vm2178 = vcmp.gt.s32.totalorder 0, %v2177
        %v2179 = vsel %vm2178, 0, %v2177
        %v2180 = vsub.s32 32, %v2179
        %v2181 = vshll.u32 %v2172, %v2179
        %v2182 = vshrl.u32 %v2164, %v2180
        %v2183 = vor.u32 %v2181, %v2182
        %v2184 = vsub.s32 4294967266, %v2179
        %v2185 = vadd.s32 %v2184, 127
        %v2186 = vshll.u32 %v2185, 23
        %v2187 = vor.u32 4788187, %v2186
        %v2188 = vand.u32 2147483647, %v2187
        %v2190 = vcvt.s32.f32 %v2183
        %v2191 = vmul.f32 %v2190, %v2188
        %v2192 = vxor.u32 %v2191, 2147483648
        %v2193 = vsel %vm2072, %v2192, %v2191
        %v2194 = vsub.s32 4, %v2170
        %v2195 = vsel %vm2072, %v2194, %v2170
        %v2196 = vsel %vm2071, %v1604, %v2193
        %v2197 = vsel %vm2071, 0, %v2195
        %v2198 = vmul.f32 %v2196, %v2196
        %v2199 = vmul.f32 %v2198, -0.001358992
        %v2200 = vadd.f32 %v2199, 0.041655596
        %v2201 = vmul.f32 %v2198, %v2200
        %v2202 = vadd.f32 %v2201, -0.4999988
        %v2203 = vmul.f32 %v2198, %v2202
        %v2204 = vadd.f32 1.0, %v2203
        %v2205 = vmul.f32 %v2196, %v2196
        %v2206 = vmul.f32 %v2205, -0.00019511016
        %v2207 = vadd.f32 %v2206, 0.008332121
        %v2208 = vmul.f32 %v2205, %v2207
        %v2209 = vadd.f32 %v2208, -0.16666654
        %v2210 = vmul.f32 %v2205, %v2209
        %v2211 = vadd.f32 %v2210, 1.0
        %v2212 = vmul.f32 %v2211, %v2196
        %vm2213 = vweird.f32 %v1604
        %v2214 = vadd.s32 %v2197, 3
        %v2215 = vand.u32 %v2214, 3
        %vm2216 = vcmp.lt.s32.totalorder %v2215, 2
        %vm2217 = vcmp.eq.s32.totalorder %v2215, 0
        %v2218 = vxor.u32 %v2212, 2147483648
        %v2219 = vsel %vm2217, %v2204, %v2218
        %vm2220 = vcmp.eq.s32.totalorder %v2215, 2
        %v2221 = vxor.u32 %v2204, 2147483648
        %v2222 = vsel %vm2220, %v2221, %v2212
        %v2223 = vsel %vm2216, %v2219, %v2222
        %v2224 = vsel %vm2213, nan, %v2223
        %v2225 = vand.u32 2147483647, %v1601
        %vm2226 = vcmp.le.f32.partialorder %v2225, 0.7853982
        %vm2227 = vcmp.lt.s32.totalorder %v1601, 0
        %v2228 = vand.u32 %v1601, 2139095040
        %v2229 = vshrl.u32 %v2228, 23
        %v2230 = vsub.s32 %v2229, 127
        %v2231 = vand.u32 2147483647, %v1601
        %v2232 = vand.u32 %v2231, 8388607
        %v2233 = vor.u32 %v2232, 8388608
        %v2234 = vsub.s32 0, %v2233
        %v2235 = vadd.s32 %v2230, 1
        %vm2236 = vcmp.gt.s32.totalorder %v2235, 0
        %v2237 = vsel %vm2236, %v2235, 0
        %v2238 = vshrl.u32 %v2237, 5
        %v2239 = vand.u32 %v2237, 31
        %v2240 = vsub.s32 32, %v2239
        %v2241 = vshrl.u32 683565275, %v2240
        %v2242 = vshll.u32 683565275, %v2239
        %v2243 = vshrl.u32 2475754826, %v2240
        %v2244 = vor.u32 %v2242, %v2243
        %v2245 = vshll.u32 2475754826, %v2239
        %v2246 = vshrl.u32 2131351028, %v2240
        %v2247 = vor.u32 %v2245, %v2246
        %v2248 = vshll.u32 2131351028, %v2239
        %v2249 = vshrl.u32 2102212464, %v2240
        %v2250 = vor.u32 %v2248, %v2249
        %v2251 = vshll.u32 2102212464, %v2239
        %v2252 = vshrl.u32 920167782, %v2240
        %v2253 = vor.u32 %v2251, %v2252
        %v2254 = vshll.u32 920167782, %v2239
        %v2255 = vshrl.u32 1326507024, %v2240
        %v2256 = vor.u32 %v2254, %v2255
        %vm2257 = vcmp.lt.s32.totalorder %v2238, 1
        %vm2258 = vcmp.lt.s32.totalorder %v2238, 2
        %vm2259 = vcmp.lt.s32.totalorder %v2238, 3
        %vm2260 = vcmp.lt.s32.totalorder %v2238, 4
        %v2261 = vsel %vm2257, %v2241, %v2244
        %v2262 = vsel %vm2260, %v2250, 2102212464
        %v2263 = vsel %vm2259, %v2247, %v2262
        %v2264 = vsel %vm2258, %v2261, %v2263
        %v2265 = vsel %vm2257, %v2244, %v2247
        %v2266 = vsel %vm2260, %v2253, 920167782
        %v2267 = vsel %vm2259, %v2250, %v2266
        %v2268 = vsel %vm2258, %v2265, %v2267
        %v2269 = vsel %vm2257, %v2247, %v2250
        %v2270 = vsel %vm2260, %v2256, 1326507024
        %v2271 = vsel %vm2259, %v2253, %v2270
        %v2272 = vsel %vm2258, %v2269, %v2271
        %v2273 = vshll.u32 %v2233, 8
        %v2274 = vand.u32 %v2273, 65535
        %v2275 = vshrl.u32 %v2273, 16
        %v2276 = vand.u32 %v2272, 65535
        %v2277 = vshrl.u32 %v2272, 16
        %v2278 = vmul.u32 %v2274, %v2276
        %v2279 = vmul.u32 %v2274, %v2277
        %v2280 = vmul.u32 %v2275, %v2276
        %v2281 = vmul.u32 %v2275, %v2277
        %v2282 = vshll.u32 %v2279, 16
        %v2283 = vshrl.u32 %v2279, 16
        %v2284 = vshll.u32 %v2280, 16
        %v2285 = vshrl.u32 %v2280, 16
        %vm2286 = vc.u32 %v2278, %v2282
        %v2287 = vsel %vm2286, 1, 0
        %v2288 = vadd.s32 %v2278, %v2282
        %v2289 = vadd.s32 %v2281, %v2287
        %vm2290 = vc.u32 %v2288, %v2284
        %v2291 = vsel %vm2290, 1, 0
        %v2292 = vadd.s32 %v2288, %v2284
        %v2293 = vadd.s32 %v2289, %v2291
        %v2294 = vadd.s32 %v2293, %v2283
        %v2295 = vadd.s32 %v2294, %v2285
        %v2296 = vand.u32 %v2273, 65535
        %v2297 = vshrl.u32 %v2273, 16
        %v2298 = vand.u32 %v2268, 65535
        %v2299 = vshrl.u32 %v2268, 16
        %v2300 = vmul.u32 %v2296, %v2298
        %v2301 = vmul.u32 %v2296, %v2299
        %v2302 = vmul.u32 %v2297, %v2298
        %v2303 = vmul.u32 %v2297, %v2299
        %v2304 = vshll.u32 %v2301, 16
        %v2305 = vshrl.u32 %v2301, 16
        %v2306 = vshll.u32 %v2302, 16
        %v2307 = vshrl.u32 %v2302, 16
        %vm2308 = vc.u32 %v2300, %v2304
        %v2309 = vsel %vm2308, 1, 0
        %v2310 = vadd.s32 %v2300, %v2304
        %v2311 = vadd.s32 %v2303, %v2309
        %vm2312 = vc.u32 %v2310, %v2306
        %v2313 = vsel %vm2312, 1, 0
        %v2314 = vadd.s32 %v2310, %v2306
        %v2315 = vadd.s32 %v2311, %v2313
        %v2316 = vadd.s32 %v2315, %v2305
        %v2317 = vadd.s32 %v2316, %v2307
        %v2318 = vmul.u32 %v2273, %v2264
        %v2319 = vadd.s32 %v2295, %v2314
        %vm2320 = vc.u32 %v2295, %v2314
        %v2321 = vadd.s32 %v2317, 1
        %v2322 = vsel %vm2320, %v2321, %v2317
        %v2323 = vadd.s32 %v2318, %v2322
        %v2324 = vadd.s32 %v2323, 536870912
        %v2325 = vshrl.u32 %v2324, 30
        %v2326 = vshll.u32 %v2325, 30
        %v2327 = vsub.s32 %v2323, %v2326
        %vm2328 = vcmp.lt.s32.totalorder %v2327, 0
        %v2329 = vsub.s32 0, %v2327
        %v2330 = vsel %vm2328, %v2329, %v2327
        %v2331 = vclz %v2330
        %v2332 = vsub.s32 %v2331, 2
        %vm2333 = vcmp.gt.s32.totalorder 0, %v2332
        %v2334 = vsel %vm2333, 0, %v2332
        %v2335 = vsub.s32 32, %v2334
        %v2336 = vshll.u32 %v2327, %v2334
        %v2337 = vshrl.u32 %v2319, %v2335
        %v2338 = vor.u32 %v2336, %v2337
        %v2339 = vsub.s32 4294967266, %v2334
        %v2340 = vadd.s32 %v2339, 127
        %v2341 = vshll.u32 %v2340, 23
        %v2342 = vor.u32 4788187, %v2341
        %v2343 = vand.u32 2147483647, %v2342
        %v2345 = vcvt.s32.f32 %v2338
        %v2346 = vmul.f32 %v2345, %v2343
        %v2347 = vxor.u32 %v2346, 2147483648
        %v2348 = vsel %vm2227, %v2347, %v2346
        %v2349 = vsub.s32 4, %v2325
        %v2350 = vsel %vm2227, %v2349, %v2325
        %v2351 = vsel %vm2226, %v1601, %v2348
        %v2352 = vsel %vm2226, 0, %v2350
        %v2353 = vmul.f32 %v2351, %v2351
        %v2354 = vmul.f32 %v2353, -0.001358992
        %v2355 = vadd.f32 %v2354, 0.041655596
        %v2356 = vmul.f32 %v2353, %v2355
        %v2357 = vadd.f32 %v2356, -0.4999988
        %v2358 = vmul.f32 %v2353, %v2357
        %v2359 = vadd.f32 1.0, %v2358
        %v2360 = vmul.f32 %v2351, %v2351
        %v2361 = vmul.f32 %v2360, -0.00019511016
        %v2362 = vadd.f32 %v2361, 0.008332121
        %v2363 = vmul.f32 %v2360, %v2362
        %v2364 = vadd.f32 %v2363, -0.16666654
        %v2365 = vmul.f32 %v2360, %v2364
        %v2366 = vadd.f32 %v2365, 1.0
        %v2367 = vmul.f32 %v2366, %v2351
        %vm2368 = vweird.f32 %v1601
        %v2369 = vand.u32 %v2352, 3
        %vm2370 = vcmp.lt.s32.totalorder %v2369, 2
        %vm2371 = vcmp.eq.s32.totalorder %v2369, 0
        %v2372 = vxor.u32 %v2367, 2147483648
        %v2373 = vsel %vm2371, %v2359, %v2372
        %vm2374 = vcmp.eq.s32.totalorder %v2369, 2
        %v2375 = vxor.u32 %v2359, 2147483648
        %v2376 = vsel %vm2374, %v2375, %v2367
        %v2377 = vsel %vm2370, %v2373, %v2376
        %v2378 = vsel %vm2368, nan, %v2377
        %v2379 = vand.u32 2147483647, %v1602
        %vm2380 = vcmp.le.f32.partialorder %v2379, 0.7853982
        %vm2381 = vcmp.lt.s32.totalorder %v1602, 0
        %v2382 = vand.u32 %v1602, 2139095040
        %v2383 = vshrl.u32 %v2382, 23
        %v2384 = vsub.s32 %v2383, 127
        %v2385 = vand.u32 2147483647, %v1602
        %v2386 = vand.u32 %v2385, 8388607
        %v2387 = vor.u32 %v2386, 8388608
        %v2388 = vsub.s32 0, %v2387
        %v2389 = vadd.s32 %v2384, 1
        %vm2390 = vcmp.gt.s32.totalorder %v2389, 0
        %v2391 = vsel %vm2390, %v2389, 0
        %v2392 = vshrl.u32 %v2391, 5
        %v2393 = vand.u32 %v2391, 31
        %v2394 = vsub.s32 32, %v2393
        %v2395 = vshrl.u32 683565275, %v2394
        %v2396 = vshll.u32 683565275, %v2393
        %v2397 = vshrl.u32 2475754826, %v2394
        %v2398 = vor.u32 %v2396, %v2397
        %v2399 = vshll.u32 2475754826, %v2393
        %v2400 = vshrl.u32 2131351028, %v2394
        %v2401 = vor.u32 %v2399, %v2400
        %v2402 = vshll.u32 2131351028, %v2393
        %v2403 = vshrl.u32 2102212464, %v2394
        %v2404 = vor.u32 %v2402, %v2403
        %v2405 = vshll.u32 2102212464, %v2393
        %v2406 = vshrl.u32 920167782, %v2394
        %v2407 = vor.u32 %v2405, %v2406
        %v2408 = vshll.u32 920167782, %v2393
        %v2409 = vshrl.u32 1326507024, %v2394
        %v2410 = vor.u32 %v2408, %v2409
        %vm2411 = vcmp.lt.s32.totalorder %v2392, 1
        %vm2412 = vcmp.lt.s32.totalorder %v2392, 2
        %vm2413 = vcmp.lt.s32.totalorder %v2392, 3
        %vm2414 = vcmp.lt.s32.totalorder %v2392, 4
        %v2415 = vsel %vm2411, %v2395, %v2398
        %v2416 = vsel %vm2414, %v2404, 2102212464
        %v2417 = vsel %vm2413, %v2401, %v2416
        %v2418 = vsel %vm2412, %v2415, %v2417
        %v2419 = vsel %vm2411, %v2398, %v2401
        %v2420 = vsel %vm2414, %v2407, 920167782
        %v2421 = vsel %vm2413, %v2404, %v2420
        %v2422 = vsel %vm2412, %v2419, %v2421
        %v2423 = vsel %vm2411, %v2401, %v2404
        %v2424 = vsel %vm2414, %v2410, 1326507024
        %v2425 = vsel %vm2413, %v2407, %v2424
        %v2426 = vsel %vm2412, %v2423, %v2425
        %v2427 = vshll.u32 %v2387, 8
        %v2428 = vand.u32 %v2427, 65535
        %v2429 = vshrl.u32 %v2427, 16
        %v2430 = vand.u32 %v2426, 65535
        %v2431 = vshrl.u32 %v2426, 16
        %v2432 = vmul.u32 %v2428, %v2430
        %v2433 = vmul.u32 %v2428, %v2431
        %v2434 = vmul.u32 %v2429, %v2430
        %v2435 = vmul.u32 %v2429, %v2431
        %v2436 = vshll.u32 %v2433, 16
        %v2437 = vshrl.u32 %v2433, 16
        %v2438 = vshll.u32 %v2434, 16
        %v2439 = vshrl.u32 %v2434, 16
        %vm2440 = vc.u32 %v2432, %v2436
        %v2441 = vsel %vm2440, 1, 0
        %v2442 = vadd.s32 %v2432, %v2436
        %v2443 = vadd.s32 %v2435, %v2441
        %vm2444 = vc.u32 %v2442, %v2438
        %v2445 = vsel %vm2444, 1, 0
        %v2446 = vadd.s32 %v2442, %v2438
        %v2447 = vadd.s32 %v2443, %v2445
        %v2448 = vadd.s32 %v2447, %v2437
        %v2449 = vadd.s32 %v2448, %v2439
        %v2450 = vand.u32 %v2427, 65535
        %v2451 = vshrl.u32 %v2427, 16
        %v2452 = vand.u32 %v2422, 65535
        %v2453 = vshrl.u32 %v2422, 16
        %v2454 = vmul.u32 %v2450, %v2452
        %v2455 = vmul.u32 %v2450, %v2453
        %v2456 = vmul.u32 %v2451, %v2452
        %v2457 = vmul.u32 %v2451, %v2453
        %v2458 = vshll.u32 %v2455, 16
        %v2459 = vshrl.u32 %v2455, 16
        %v2460 = vshll.u32 %v2456, 16
        %v2461 = vshrl.u32 %v2456, 16
        %vm2462 = vc.u32 %v2454, %v2458
        %v2463 = vsel %vm2462, 1, 0
        %v2464 = vadd.s32 %v2454, %v2458
        %v2465 = vadd.s32 %v2457, %v2463
        %vm2466 = vc.u32 %v2464, %v2460
        %v2467 = vsel %vm2466, 1, 0
        %v2468 = vadd.s32 %v2464, %v2460
        %v2469 = vadd.s32 %v2465, %v2467
        %v2470 = vadd.s32 %v2469, %v2459
        %v2471 = vadd.s32 %v2470, %v2461
        %v2472 = vmul.u32 %v2427, %v2418
        %v2473 = vadd.s32 %v2449, %v2468
        %vm2474 = vc.u32 %v2449, %v2468
        %v2475 = vadd.s32 %v2471, 1
        %v2476 = vsel %vm2474, %v2475, %v2471
        %v2477 = vadd.s32 %v2472, %v2476
        %v2478 = vadd.s32 %v2477, 536870912
        %v2479 = vshrl.u32 %v2478, 30
        %v2480 = vshll.u32 %v2479, 30
        %v2481 = vsub.s32 %v2477, %v2480
        %vm2482 = vcmp.lt.s32.totalorder %v2481, 0
        %v2483 = vsub.s32 0, %v2481
        %v2484 = vsel %vm2482, %v2483, %v2481
        %v2485 = vclz %v2484
        %v2486 = vsub.s32 %v2485, 2
        %vm2487 = vcmp.gt.s32.totalorder 0, %v2486
        %v2488 = vsel %vm2487, 0, %v2486
        %v2489 = vsub.s32 32, %v2488
        %v2490 = vshll.u32 %v2481, %v2488
        %v2491 = vshrl.u32 %v2473, %v2489
        %v2492 = vor.u32 %v2490, %v2491
        %v2493 = vsub.s32 4294967266, %v2488
        %v2494 = vadd.s32 %v2493, 127
        %v2495 = vshll.u32 %v2494, 23
        %v2496 = vor.u32 4788187, %v2495
        %v2497 = vand.u32 2147483647, %v2496
        %v2499 = vcvt.s32.f32 %v2492
        %v2500 = vmul.f32 %v2499, %v2497
        %v2501 = vxor.u32 %v2500, 2147483648
        %v2502 = vsel %vm2381, %v2501, %v2500
        %v2503 = vsub.s32 4, %v2479
        %v2504 = vsel %vm2381, %v2503, %v2479
        %v2505 = vsel %vm2380, %v1602, %v2502
        %v2506 = vsel %vm2380, 0, %v2504
        %v2507 = vmul.f32 %v2505, %v2505
        %v2508 = vmul.f32 %v2507, -0.001358992
        %v2509 = vadd.f32 %v2508, 0.041655596
        %v2510 = vmul.f32 %v2507, %v2509
        %v2511 = vadd.f32 %v2510, -0.4999988
        %v2512 = vmul.f32 %v2507, %v2511
        %v2513 = vadd.f32 1.0, %v2512
        %v2514 = vmul.f32 %v2505, %v2505
        %v2515 = vmul.f32 %v2514, -0.00019511016
        %v2516 = vadd.f32 %v2515, 0.008332121
        %v2517 = vmul.f32 %v2514, %v2516
        %v2518 = vadd.f32 %v2517, -0.16666654
        %v2519 = vmul.f32 %v2514, %v2518
        %v2520 = vadd.f32 %v2519, 1.0
        %v2521 = vmul.f32 %v2520, %v2505
        %vm2522 = vweird.f32 %v1602
        %v2523 = vand.u32 %v2506, 3
        %vm2524 = vcmp.lt.s32.totalorder %v2523, 2
        %vm2525 = vcmp.eq.s32.totalorder %v2523, 0
        %v2526 = vxor.u32 %v2521, 2147483648
        %v2527 = vsel %vm2525, %v2513, %v2526
        %vm2528 = vcmp.eq.s32.totalorder %v2523, 2
        %v2529 = vxor.u32 %v2513, 2147483648
        %v2530 = vsel %vm2528, %v2529, %v2521
        %v2531 = vsel %vm2524, %v2527, %v2530
        %v2532 = vsel %vm2522, nan, %v2531
        %v2533 = vand.u32 2147483647, %v1603
        %vm2534 = vcmp.le.f32.partialorder %v2533, 0.7853982
        %vm2535 = vcmp.lt.s32.totalorder %v1603, 0
        %v2536 = vand.u32 %v1603, 2139095040
        %v2537 = vshrl.u32 %v2536, 23
        %v2538 = vsub.s32 %v2537, 127
        %v2539 = vand.u32 2147483647, %v1603
        %v2540 = vand.u32 %v2539, 8388607
        %v2541 = vor.u32 %v2540, 8388608
        %v2542 = vsub.s32 0, %v2541
        %v2543 = vadd.s32 %v2538, 1
        %vm2544 = vcmp.gt.s32.totalorder %v2543, 0
        %v2545 = vsel %vm2544, %v2543, 0
        %v2546 = vshrl.u32 %v2545, 5
        %v2547 = vand.u32 %v2545, 31
        %v2548 = vsub.s32 32, %v2547
        %v2549 = vshrl.u32 683565275, %v2548
        %v2550 = vshll.u32 683565275, %v2547
        %v2551 = vshrl.u32 2475754826, %v2548
        %v2552 = vor.u32 %v2550, %v2551
        %v2553 = vshll.u32 2475754826, %v2547
        %v2554 = vshrl.u32 2131351028, %v2548
        %v2555 = vor.u32 %v2553, %v2554
        %v2556 = vshll.u32 2131351028, %v2547
        %v2557 = vshrl.u32 2102212464, %v2548
        %v2558 = vor.u32 %v2556, %v2557
        %v2559 = vshll.u32 2102212464, %v2547
        %v2560 = vshrl.u32 920167782, %v2548
        %v2561 = vor.u32 %v2559, %v2560
        %v2562 = vshll.u32 920167782, %v2547
        %v2563 = vshrl.u32 1326507024, %v2548
        %v2564 = vor.u32 %v2562, %v2563
        %vm2565 = vcmp.lt.s32.totalorder %v2546, 1
        %vm2566 = vcmp.lt.s32.totalorder %v2546, 2
        %vm2567 = vcmp.lt.s32.totalorder %v2546, 3
        %vm2568 = vcmp.lt.s32.totalorder %v2546, 4
        %v2569 = vsel %vm2565, %v2549, %v2552
        %v2570 = vsel %vm2568, %v2558, 2102212464
        %v2571 = vsel %vm2567, %v2555, %v2570
        %v2572 = vsel %vm2566, %v2569, %v2571
        %v2573 = vsel %vm2565, %v2552, %v2555
        %v2574 = vsel %vm2568, %v2561, 920167782
        %v2575 = vsel %vm2567, %v2558, %v2574
        %v2576 = vsel %vm2566, %v2573, %v2575
        %v2577 = vsel %vm2565, %v2555, %v2558
        %v2578 = vsel %vm2568, %v2564, 1326507024
        %v2579 = vsel %vm2567, %v2561, %v2578
        %v2580 = vsel %vm2566, %v2577, %v2579
        %v2581 = vshll.u32 %v2541, 8
        %v2582 = vand.u32 %v2581, 65535
        %v2583 = vshrl.u32 %v2581, 16
        %v2584 = vand.u32 %v2580, 65535
        %v2585 = vshrl.u32 %v2580, 16
        %v2586 = vmul.u32 %v2582, %v2584
        %v2587 = vmul.u32 %v2582, %v2585
        %v2588 = vmul.u32 %v2583, %v2584
        %v2589 = vmul.u32 %v2583, %v2585
        %v2590 = vshll.u32 %v2587, 16
        %v2591 = vshrl.u32 %v2587, 16
        %v2592 = vshll.u32 %v2588, 16
        %v2593 = vshrl.u32 %v2588, 16
        %vm2594 = vc.u32 %v2586, %v2590
        %v2595 = vsel %vm2594, 1, 0
        %v2596 = vadd.s32 %v2586, %v2590
        %v2597 = vadd.s32 %v2589, %v2595
        %vm2598 = vc.u32 %v2596, %v2592
        %v2599 = vsel %vm2598, 1, 0
        %v2600 = vadd.s32 %v2596, %v2592
        %v2601 = vadd.s32 %v2597, %v2599
        %v2602 = vadd.s32 %v2601, %v2591
        %v2603 = vadd.s32 %v2602, %v2593
        %v2604 = vand.u32 %v2581, 65535
        %v2605 = vshrl.u32 %v2581, 16
        %v2606 = vand.u32 %v2576, 65535
        %v2607 = vshrl.u32 %v2576, 16
        %v2608 = vmul.u32 %v2604, %v2606
        %v2609 = vmul.u32 %v2604, %v2607
        %v2610 = vmul.u32 %v2605, %v2606
        %v2611 = vmul.u32 %v2605, %v2607
        %v2612 = vshll.u32 %v2609, 16
        %v2613 = vshrl.u32 %v2609, 16
        %v2614 = vshll.u32 %v2610, 16
        %v2615 = vshrl.u32 %v2610, 16
        %vm2616 = vc.u32 %v2608, %v2612
        %v2617 = vsel %vm2616, 1, 0
        %v2618 = vadd.s32 %v2608, %v2612
        %v2619 = vadd.s32 %v2611, %v2617
        %vm2620 = vc.u32 %v2618, %v2614
        %v2621 = vsel %vm2620, 1, 0
        %v2622 = vadd.s32 %v2618, %v2614
        %v2623 = vadd.s32 %v2619, %v2621
        %v2624 = vadd.s32 %v2623, %v2613
        %v2625 = vadd.s32 %v2624, %v2615
        %v2626 = vmul.u32 %v2581, %v2572
        %v2627 = vadd.s32 %v2603, %v2622
        %vm2628 = vc.u32 %v2603, %v2622
        %v2629 = vadd.s32 %v2625, 1
        %v2630 = vsel %vm2628, %v2629, %v2625
        %v2631 = vadd.s32 %v2626, %v2630
        %v2632 = vadd.s32 %v2631, 536870912
        %v2633 = vshrl.u32 %v2632, 30
        %v2634 = vshll.u32 %v2633, 30
        %v2635 = vsub.s32 %v2631, %v2634
        %vm2636 = vcmp.lt.s32.totalorder %v2635, 0
        %v2637 = vsub.s32 0, %v2635
        %v2638 = vsel %vm2636, %v2637, %v2635
        %v2639 = vclz %v2638
        %v2640 = vsub.s32 %v2639, 2
        %vm2641 = vcmp.gt.s32.totalorder 0, %v2640
        %v2642 = vsel %vm2641, 0, %v2640
        %v2643 = vsub.s32 32, %v2642
        %v2644 = vshll.u32 %v2635, %v2642
        %v2645 = vshrl.u32 %v2627, %v2643
        %v2646 = vor.u32 %v2644, %v2645
        %v2647 = vsub.s32 4294967266, %v2642
        %v2648 = vadd.s32 %v2647, 127
        %v2649 = vshll.u32 %v2648, 23
        %v2650 = vor.u32 4788187, %v2649
        %v2651 = vand.u32 2147483647, %v2650
        %v2653 = vcvt.s32.f32 %v2646
        %v2654 = vmul.f32 %v2653, %v2651
        %v2655 = vxor.u32 %v2654, 2147483648
        %v2656 = vsel %vm2535, %v2655, %v2654
        %v2657 = vsub.s32 4, %v2633
        %v2658 = vsel %vm2535, %v2657, %v2633
        %v2659 = vsel %vm2534, %v1603, %v2656
        %v2660 = vsel %vm2534, 0, %v2658
        %v2661 = vmul.f32 %v2659, %v2659
        %v2662 = vmul.f32 %v2661, -0.001358992
        %v2663 = vadd.f32 %v2662, 0.041655596
        %v2664 = vmul.f32 %v2661, %v2663
        %v2665 = vadd.f32 %v2664, -0.4999988
        %v2666 = vmul.f32 %v2661, %v2665
        %v2667 = vadd.f32 1.0, %v2666
        %v2668 = vmul.f32 %v2659, %v2659
        %v2669 = vmul.f32 %v2668, -0.00019511016
        %v2670 = vadd.f32 %v2669, 0.008332121
        %v2671 = vmul.f32 %v2668, %v2670
        %v2672 = vadd.f32 %v2671, -0.16666654
        %v2673 = vmul.f32 %v2668, %v2672
        %v2674 = vadd.f32 %v2673, 1.0
        %v2675 = vmul.f32 %v2674, %v2659
        %vm2676 = vweird.f32 %v1603
        %v2677 = vand.u32 %v2660, 3
        %vm2678 = vcmp.lt.s32.totalorder %v2677, 2
        %vm2679 = vcmp.eq.s32.totalorder %v2677, 0
        %v2680 = vxor.u32 %v2675, 2147483648
        %v2681 = vsel %vm2679, %v2667, %v2680
        %vm2682 = vcmp.eq.s32.totalorder %v2677, 2
        %v2683 = vxor.u32 %v2667, 2147483648
        %v2684 = vsel %vm2682, %v2683, %v2675
        %v2685 = vsel %vm2678, %v2681, %v2684
        %v2686 = vsel %vm2676, nan, %v2685
        %v2687 = vand.u32 2147483647, %v1604
        %vm2688 = vcmp.le.f32.partialorder %v2687, 0.7853982
        %vm2689 = vcmp.lt.s32.totalorder %v1604, 0
        %v2690 = vand.u32 %v1604, 2139095040
        %v2691 = vshrl.u32 %v2690, 23
        %v2692 = vsub.s32 %v2691, 127
        %v2693 = vand.u32 2147483647, %v1604
        %v2694 = vand.u32 %v2693, 8388607
        %v2695 = vor.u32 %v2694, 8388608
        %v2696 = vsub.s32 0, %v2695
        %v2697 = vadd.s32 %v2692, 1
        %vm2698 = vcmp.gt.s32.totalorder %v2697, 0
        %v2699 = vsel %vm2698, %v2697, 0
        %v2700 = vshrl.u32 %v2699, 5
        %v2701 = vand.u32 %v2699, 31
        %v2702 = vsub.s32 32, %v2701
        %v2703 = vshrl.u32 683565275, %v2702
        %v2704 = vshll.u32 683565275, %v2701
        %v2705 = vshrl.u32 2475754826, %v2702
        %v2706 = vor.u32 %v2704, %v2705
        %v2707 = vshll.u32 2475754826, %v2701
        %v2708 = vshrl.u32 2131351028, %v2702
        %v2709 = vor.u32 %v2707, %v2708
        %v2710 = vshll.u32 2131351028, %v2701
        %v2711 = vshrl.u32 2102212464, %v2702
        %v2712 = vor.u32 %v2710, %v2711
        %v2713 = vshll.u32 2102212464, %v2701
        %v2714 = vshrl.u32 920167782, %v2702
        %v2715 = vor.u32 %v2713, %v2714
        %v2716 = vshll.u32 920167782, %v2701
        %v2717 = vshrl.u32 1326507024, %v2702
        %v2718 = vor.u32 %v2716, %v2717
        %vm2719 = vcmp.lt.s32.totalorder %v2700, 1
        %vm2720 = vcmp.lt.s32.totalorder %v2700, 2
        %vm2721 = vcmp.lt.s32.totalorder %v2700, 3
        %vm2722 = vcmp.lt.s32.totalorder %v2700, 4
        %v2723 = vsel %vm2719, %v2703, %v2706
        %v2724 = vsel %vm2722, %v2712, 2102212464
        %v2725 = vsel %vm2721, %v2709, %v2724
        %v2726 = vsel %vm2720, %v2723, %v2725
        %v2727 = vsel %vm2719, %v2706, %v2709
        %v2728 = vsel %vm2722, %v2715, 920167782
        %v2729 = vsel %vm2721, %v2712, %v2728
        %v2730 = vsel %vm2720, %v2727, %v2729
        %v2731 = vsel %vm2719, %v2709, %v2712
        %v2732 = vsel %vm2722, %v2718, 1326507024
        %v2733 = vsel %vm2721, %v2715, %v2732
        %v2734 = vsel %vm2720, %v2731, %v2733
        %v2735 = vshll.u32 %v2695, 8
        %v2736 = vand.u32 %v2735, 65535
        %v2737 = vshrl.u32 %v2735, 16
        %v2738 = vand.u32 %v2734, 65535
        %v2739 = vshrl.u32 %v2734, 16
        %v2740 = vmul.u32 %v2736, %v2738
        %v2741 = vmul.u32 %v2736, %v2739
        %v2742 = vmul.u32 %v2737, %v2738
        %v2743 = vmul.u32 %v2737, %v2739
        %v2744 = vshll.u32 %v2741, 16
        %v2745 = vshrl.u32 %v2741, 16
        %v2746 = vshll.u32 %v2742, 16
        %v2747 = vshrl.u32 %v2742, 16
        %vm2748 = vc.u32 %v2740, %v2744
        %v2749 = vsel %vm2748, 1, 0
        %v2750 = vadd.s32 %v2740, %v2744
        %v2751 = vadd.s32 %v2743, %v2749
        %vm2752 = vc.u32 %v2750, %v2746
        %v2753 = vsel %vm2752, 1, 0
        %v2754 = vadd.s32 %v2750, %v2746
        %v2755 = vadd.s32 %v2751, %v2753
        %v2756 = vadd.s32 %v2755, %v2745
        %v2757 = vadd.s32 %v2756, %v2747
        %v2758 = vand.u32 %v2735, 65535
        %v2759 = vshrl.u32 %v2735, 16
        %v2760 = vand.u32 %v2730, 65535
        %v2761 = vshrl.u32 %v2730, 16
        %v2762 = vmul.u32 %v2758, %v2760
        %v2763 = vmul.u32 %v2758, %v2761
        %v2764 = vmul.u32 %v2759, %v2760
        %v2765 = vmul.u32 %v2759, %v2761
        %v2766 = vshll.u32 %v2763, 16
        %v2767 = vshrl.u32 %v2763, 16
        %v2768 = vshll.u32 %v2764, 16
        %v2769 = vshrl.u32 %v2764, 16
        %vm2770 = vc.u32 %v2762, %v2766
        %v2771 = vsel %vm2770, 1, 0
        %v2772 = vadd.s32 %v2762, %v2766
        %v2773 = vadd.s32 %v2765, %v2771
        %vm2774 = vc.u32 %v2772, %v2768
        %v2775 = vsel %vm2774, 1, 0
        %v2776 = vadd.s32 %v2772, %v2768
        %v2777 = vadd.s32 %v2773, %v2775
        %v2778 = vadd.s32 %v2777, %v2767
        %v2779 = vadd.s32 %v2778, %v2769
        %v2780 = vmul.u32 %v2735, %v2726
        %v2781 = vadd.s32 %v2757, %v2776
        %vm2782 = vc.u32 %v2757, %v2776
        %v2783 = vadd.s32 %v2779, 1
        %v2784 = vsel %vm2782, %v2783, %v2779
        %v2785 = vadd.s32 %v2780, %v2784
        %v2786 = vadd.s32 %v2785, 536870912
        %v2787 = vshrl.u32 %v2786, 30
        %v2788 = vshll.u32 %v2787, 30
        %v2789 = vsub.s32 %v2785, %v2788
        %vm2790 = vcmp.lt.s32.totalorder %v2789, 0
        %v2791 = vsub.s32 0, %v2789
        %v2792 = vsel %vm2790, %v2791, %v2789
        %v2793 = vclz %v2792
        %v2794 = vsub.s32 %v2793, 2
        %vm2795 = vcmp.gt.s32.totalorder 0, %v2794
        %v2796 = vsel %vm2795, 0, %v2794
        %v2797 = vsub.s32 32, %v2796
        %v2798 = vshll.u32 %v2789, %v2796
        %v2799 = vshrl.u32 %v2781, %v2797
        %v2800 = vor.u32 %v2798, %v2799
        %v2801 = vsub.s32 4294967266, %v2796
        %v2802 = vadd.s32 %v2801, 127
        %v2803 = vshll.u32 %v2802, 23
        %v2804 = vor.u32 4788187, %v2803
        %v2805 = vand.u32 2147483647, %v2804
        %v2807 = vcvt.s32.f32 %v2800
        %v2808 = vmul.f32 %v2807, %v2805
        %v2809 = vxor.u32 %v2808, 2147483648
        %v2810 = vsel %vm2689, %v2809, %v2808
        %v2811 = vsub.s32 4, %v2787
        %v2812 = vsel %vm2689, %v2811, %v2787
        %v2813 = vsel %vm2688, %v1604, %v2810
        %v2814 = vsel %vm2688, 0, %v2812
        %v2815 = vmul.f32 %v2813, %v2813
        %v2816 = vmul.f32 %v2815, -0.001358992
        %v2817 = vadd.f32 %v2816, 0.041655596
        %v2818 = vmul.f32 %v2815, %v2817
        %v2819 = vadd.f32 %v2818, -0.4999988
        %v2820 = vmul.f32 %v2815, %v2819
        %v2821 = vadd.f32 1.0, %v2820
        %v2822 = vmul.f32 %v2813, %v2813
        %v2823 = vmul.f32 %v2822, -0.00019511016
        %v2824 = vadd.f32 %v2823, 0.008332121
        %v2825 = vmul.f32 %v2822, %v2824
        %v2826 = vadd.f32 %v2825, -0.16666654
        %v2827 = vmul.f32 %v2822, %v2826
        %v2828 = vadd.f32 %v2827, 1.0
        %v2829 = vmul.f32 %v2828, %v2813
        %vm2830 = vweird.f32 %v1604
        %v2831 = vand.u32 %v2814, 3
        %vm2832 = vcmp.lt.s32.totalorder %v2831, 2
        %vm2833 = vcmp.eq.s32.totalorder %v2831, 0
        %v2834 = vxor.u32 %v2829, 2147483648
        %v2835 = vsel %vm2833, %v2821, %v2834
        %vm2836 = vcmp.eq.s32.totalorder %v2831, 2
        %v2837 = vxor.u32 %v2821, 2147483648
        %v2838 = vsel %vm2836, %v2837, %v2829
        %v2839 = vsel %vm2832, %v2835, %v2838
        %v2840 = vsel %vm2830, nan, %v2839
        %v2842 = vsel %vm1429, %v2378, 0
        %v2845 = vsel %vm1429, %v2532, 0
        %v2848 = vsel %vm1429, %v2686, 0
        %v2851 = vsel %vm1429, %v2840, 0
        %2853 = vmatpush.msra.mxu0 0.0
        %2854 = vmatpush.msra.mxu0 0.0
        %2855 = vmatpush.msra.mxu0 0.0
        %2856 = vmatpush.msra.mxu0 0.0
        %2857 = vmatpush.msra.mxu0 0.0
        %2858 = vmatpush.msra.mxu0 0.0
        %2859 = vmatpush.msra.mxu0 0.0
        %2860 = vmatpush.msra.mxu0 0.0
        %2861 = vmatpush.msra.mxu0 0.0
        %2862 = vmatpush.msra.mxu0 0.0
        %2863 = vmatpush.msra.mxu0 0.0
        %2864 = vmatpush.msra.mxu0 0.0
        %2865 = vmatpush.msra.mxu0 0.0
        %2866 = vmatpush.msra.mxu0 %v1428
        %2867 = vmatpush.msra.mxu0 %v1427
        %2868 = vmatpush.msra.mxu0 %v1426
        %2869 = vmatmul.f32.gmra.mxu0 %v2842
        %v2870 = vpop.f32.mrf.mxu0
        %v2871 = vadd.f32 0.0, %v2870
        %2872 = vmatmul.f32.gmra.mxu0 %v2845
        %v2873 = vpop.f32.mrf.mxu0
        %v2874 = vadd.f32 0.0, %v2873
        %2875 = vmatmul.f32.gmra.mxu0 %v2848
        %v2876 = vpop.f32.mrf.mxu0
        %v2877 = vadd.f32 0.0, %v2876
        %2878 = vmatmul.f32.gmra.mxu0 %v2851
        %v2879 = vpop.f32.mrf.mxu0
        %v2880 = vadd.f32 0.0, %v2879
        %2881 = vdwg.mxu0
        %v2883 = vsel %vm1429, %v1759, 0
        %v2886 = vsel %vm1429, %v1914, 0
        %v2889 = vsel %vm1429, %v2069, 0
        %v2892 = vsel %vm1429, %v2224, 0
        %2894 = vmatpush.msra.mxu0 0.0
        %2895 = vmatpush.msra.mxu0 0.0
        %2896 = vmatpush.msra.mxu0 0.0
        %2897 = vmatpush.msra.mxu0 0.0
        %2898 = vmatpush.msra.mxu0 0.0
        %2899 = vmatpush.msra.mxu0 0.0
        %2900 = vmatpush.msra.mxu0 0.0
        %2901 = vmatpush.msra.mxu0 0.0
        %2902 = vmatpush.msra.mxu0 0.0
        %2903 = vmatpush.msra.mxu0 0.0
        %2904 = vmatpush.msra.mxu0 0.0
        %2905 = vmatpush.msra.mxu0 0.0
        %2906 = vmatpush.msra.mxu0 0.0
        %2907 = vmatpush.msra.mxu0 %v1117
        %2908 = vmatpush.msra.mxu0 %v1116
        %2909 = vmatpush.msra.mxu0 %v1115
        %2910 = vmatmul.f32.gmra.mxu0 %v2883
        %v2911 = vpop.f32.mrf.mxu0
        %v2912 = vadd.f32 %v2871, %v2911
        %2913 = vmatmul.f32.gmra.mxu0 %v2886
        %v2914 = vpop.f32.mrf.mxu0
        %v2915 = vadd.f32 %v2874, %v2914
        %2916 = vmatmul.f32.gmra.mxu0 %v2889
        %v2917 = vpop.f32.mrf.mxu0
        %v2918 = vadd.f32 %v2877, %v2917
        %2919 = vmatmul.f32.gmra.mxu0 %v2892
        %v2920 = vpop.f32.mrf.mxu0
        %v2921 = vadd.f32 %v2880, %v2920
        %2922 = vdwg.mxu0
        %v2923 = vsel %vm1489, %v1529, 0
        %v2925 = vsel %vm1489, %v1530, 0
        %v2927 = vsel %vm1489, %v1531, 0
        %v2929 = vsel %vm1489, %v1532, 0
        %2931 = vmatpush.msra.mxu0 0.0
        %2932 = vmatpush.msra.mxu0 0.0
        %2933 = vmatpush.msra.mxu0 0.0
        %2934 = vmatpush.msra.mxu0 0.0
        %2935 = vmatpush.msra.mxu0 0.0
        %2936 = vmatpush.msra.mxu0 0.0
        %2937 = vmatpush.msra.mxu0 0.0
        %2938 = vmatpush.msra.mxu0 0.0
        %2939 = vmatpush.msra.mxu0 0.0
        %2940 = vmatpush.msra.mxu0 0.0
        %2941 = vmatpush.msra.mxu0 0.0
        %2942 = vmatpush.msra.mxu0 0.0
        %2943 = vmatpush.msra.mxu0 0.0
        %2944 = vmatpush.msra.mxu0 0.0
        %2945 = vmatpush.msra.mxu0 0.0
        %2946 = vmatpush.msra.mxu0 %v1496
        %2947 = vmatmul.f32.gmra.mxu0 %v2923
        %v2948 = vpop.f32.mrf.mxu0
        %v2949 = vadd.f32 0.0, %v2948
        %2950 = vmatmul.f32.gmra.mxu0 %v2925
        %v2951 = vpop.f32.mrf.mxu0
        %v2952 = vadd.f32 0.0, %v2951
        %2953 = vmatmul.f32.gmra.mxu0 %v2927
        %v2954 = vpop.f32.mrf.mxu0
        %v2955 = vadd.f32 0.0, %v2954
        %2956 = vmatmul.f32.gmra.mxu0 %v2929
        %v2957 = vpop.f32.mrf.mxu0
        %v2958 = vadd.f32 0.0, %v2957
        %2959 = vdwg.mxu0
        %v2960 = vadd.f32 %v2912, %v2949
        %v2961 = vadd.f32 %v2915, %v2952
        %v2962 = vadd.f32 %v2918, %v2955
        %v2963 = vadd.f32 %v2921, %v2958
        %v2964 = vadd.f32 %v2960, %v1525
        %v2965 = vadd.f32 %v2961, %v1525
        %v2966 = vadd.f32 %v2962, %v1525
        %v2967 = vadd.f32 %v2963, %v1525
        %v2968 = vld [vmem:[%s7] sm:$0x1]
        %v2969 = vld [vmem:[%s8] sm:$0x1]
        %2970 = vadd.xlane.f32.xlu0 %v1527
        %v2971 = vpop.xlane.xlu0 %2970
        %2972 = vadd.xlane.f32.xlu0 %v1528
        %v2973 = vpop.xlane.xlu0 %2972
        %v2974 = vrcp.pop 128.0
        %v2975 = vmul.f32 128.0, %v2974
        %v2976 = vsub.f32 1.0, %v2975
        %v2977 = vmul.f32 %v2974, %v2976
        %v2978 = vadd.f32 %v2974, %v2977
        %vm2979 = vweird.f32 %v2974
        %v2980 = vsel %vm2979, %v2974, %v2978
        %v2981 = vmul.f32 %v2971, %v2980
        %v2982 = vmul.f32 %v2973, %v2980
        %v2983 = vsub.f32 %v1527, %v2981
        %v2984 = vsub.f32 %v1528, %v2982
        %v2985 = vmul.f32 %v2983, %v2983
        %v2986 = vmul.f32 %v2984, %v2984
        %2987 = vadd.xlane.f32.xlu0 %v2985
        %v2988 = vpop.xlane.xlu0 %2987
        %2989 = vadd.xlane.f32.xlu0 %v2986
        %v2990 = vpop.xlane.xlu0 %2989
        %v2991 = vmul.f32 %v2988, %v2980
        %v2992 = vmul.f32 %v2990, %v2980
        %v2993 = vadd.f32 %v2991, 1e-05
        %v2994 = vadd.f32 %v2992, 1e-05
        %v2995 = vrsqrt.pop %v2993
        %v2996 = vmul.f32 %v2995, %v2993
        %v2997 = vmul.f32 %v2996, %v2995
        %v2998 = vmul.f32 0.5, %v2997
        %v2999 = vsub.f32 1.5, %v2998
        %v3000 = vmul.f32 %v2995, %v2999
        %vm3001 = vweird.f32 %v2993
        %vm3002 = vweird.f32 %v2995
        %vm3003 = vmor %vm3001, %vm3002
        %v3004 = vsel %vm3003, %v2995, %v3000
        %v3005 = vrsqrt.pop %v2994
        %v3006 = vmul.f32 %v3005, %v2994
        %v3007 = vmul.f32 %v3006, %v3005
        %v3008 = vmul.f32 0.5, %v3007
        %v3009 = vsub.f32 1.5, %v3008
        %v3010 = vmul.f32 %v3005, %v3009
        %vm3011 = vweird.f32 %v2994
        %vm3012 = vweird.f32 %v3005
        %vm3013 = vmor %vm3011, %vm3012
        %v3014 = vsel %vm3013, %v3005, %v3010
        %v3015 = vmul.f32 %v2983, %v3004
        %v3016 = vmul.f32 %v2984, %v3014
        %v3018 = vperm.slane %v2968, 0
        %v3020 = vmul.f32 %v3015, %v3018
        %v3021 = vmul.f32 %v3016, %v3018
        %v3023 = vperm.slane %v2969, 0
        %v3025 = vadd.f32 %v3020, %v3023
        %v3026 = vadd.f32 %v3021, %v3023
        %v3027 = vld [vmem:[%s9] sm:$0x1]
        %v3028 = vld [vmem:[%s10] sm:$0x1]
        %3029 = vadd.xlane.f32.xlu0 %v2964
        %v3030 = vpop.xlane.xlu0 %3029
        %3031 = vadd.xlane.f32.xlu0 %v2965
        %v3032 = vpop.xlane.xlu0 %3031
        %3033 = vadd.xlane.f32.xlu0 %v2966
        %v3034 = vpop.xlane.xlu0 %3033
        %3035 = vadd.xlane.f32.xlu0 %v2967
        %v3036 = vpop.xlane.xlu0 %3035
        %v3037 = vmul.f32 %v3030, %v2980
        %v3038 = vmul.f32 %v3032, %v2980
        %v3039 = vmul.f32 %v3034, %v2980
        %v3040 = vmul.f32 %v3036, %v2980
        %v3041 = vsub.f32 %v2964, %v3037
        %v3042 = vsub.f32 %v2965, %v3038
        %v3043 = vsub.f32 %v2966, %v3039
        %v3044 = vsub.f32 %v2967, %v3040
        %v3045 = vmul.f32 %v3041, %v3041
        %v3046 = vmul.f32 %v3042, %v3042
        %v3047 = vmul.f32 %v3043, %v3043
        %v3048 = vmul.f32 %v3044, %v3044
        %3049 = vadd.xlane.f32.xlu0 %v3045
        %v3050 = vpop.xlane.xlu0 %3049
        %3051 = vadd.xlane.f32.xlu0 %v3046
        %v3052 = vpop.xlane.xlu0 %3051
        %3053 = vadd.xlane.f32.xlu0 %v3047
        %v3054 = vpop.xlane.xlu0 %3053
        %3055 = vadd.xlane.f32.xlu0 %v3048
        %v3056 = vpop.xlane.xlu0 %3055
        %v3057 = vmul.f32 %v3050, %v2980
        %v3058 = vmul.f32 %v3052, %v2980
        %v3059 = vmul.f32 %v3054, %v2980
        %v3060 = vmul.f32 %v3056, %v2980
        %v3061 = vadd.f32 %v3057, 1e-05
        %v3062 = vadd.f32 %v3058, 1e-05
        %v3063 = vadd.f32 %v3059, 1e-05
        %v3064 = vadd.f32 %v3060, 1e-05
        %v3065 = vrsqrt.pop %v3061
        %v3066 = vmul.f32 %v3065, %v3061
        %v3067 = vmul.f32 %v3066, %v3065
        %v3068 = vmul.f32 0.5, %v3067
        %v3069 = vsub.f32 1.5, %v3068
        %v3070 = vmul.f32 %v3065, %v3069
        %vm3071 = vweird.f32 %v3061
        %vm3072 = vweird.f32 %v3065
        %vm3073 = vmor %vm3071, %vm3072
        %v3074 = vsel %vm3073, %v3065, %v3070
        %v3075 = vrsqrt.pop %v3062
        %v3076 = vmul.f32 %v3075, %v3062
        %v3077 = vmul.f32 %v3076, %v3075
        %v3078 = vmul.f32 0.5, %v3077
        %v3079 = vsub.f32 1.5, %v3078
        %v3080 = vmul.f32 %v3075, %v3079
        %vm3081 = vweird.f32 %v3062
        %vm3082 = vweird.f32 %v3075
        %vm3083 = vmor %vm3081, %vm3082
        %v3084 = vsel %vm3083, %v3075, %v3080
        %v3085 = vrsqrt.pop %v3063
        %v3086 = vmul.f32 %v3085, %v3063
        %v3087 = vmul.f32 %v3086, %v3085
        %v3088 = vmul.f32 0.5, %v3087
        %v3089 = vsub.f32 1.5, %v3088
        %v3090 = vmul.f32 %v3085, %v3089
        %vm3091 = vweird.f32 %v3063
        %vm3092 = vweird.f32 %v3085
        %vm3093 = vmor %vm3091, %vm3092
        %v3094 = vsel %vm3093, %v3085, %v3090
        %v3095 = vrsqrt.pop %v3064
        %v3096 = vmul.f32 %v3095, %v3064
        %v3097 = vmul.f32 %v3096, %v3095
        %v3098 = vmul.f32 0.5, %v3097
        %v3099 = vsub.f32 1.5, %v3098
        %v3100 = vmul.f32 %v3095, %v3099
        %vm3101 = vweird.f32 %v3064
        %vm3102 = vweird.f32 %v3095
        %vm3103 = vmor %vm3101, %vm3102
        %v3104 = vsel %vm3103, %v3095, %v3100
        %v3105 = vmul.f32 %v3041, %v3074
        %v3106 = vmul.f32 %v3042, %v3084
        %v3107 = vmul.f32 %v3043, %v3094
        %v3108 = vmul.f32 %v3044, %v3104
        %v3110 = vperm.slane %v3027, 0
        %v3112 = vmul.f32 %v3105, %v3110
        %v3113 = vmul.f32 %v3106, %v3110
        %v3114 = vmul.f32 %v3107, %v3110
        %v3115 = vmul.f32 %v3108, %v3110
        %v3117 = vperm.slane %v3028, 0
        %v3119 = vadd.f32 %v3112, %v3117
        %v3120 = vadd.f32 %v3113, %v3117
        %v3121 = vadd.f32 %v3114, %v3117
        %v3122 = vadd.f32 %v3115, %v3117
        %v3123 = vld [vmem:[%s11] sm:$0xff]
        %v3124 = vld [vmem:[%s11 + $0x8] sm:$0xff]
        %v3125 = vld [vmem:[%s11 + $0x10] sm:$0xff]
        %v3126 = vld [vmem:[%s11 + $0x18] sm:$0xff]
        %v3127 = vld [vmem:[%s11 + $0x20] sm:$0xff]
        %v3128 = vld [vmem:[%s11 + $0x28] sm:$0xff]
        %v3129 = vld [vmem:[%s11 + $0x30] sm:$0xff]
        %v3130 = vld [vmem:[%s11 + $0x38] sm:$0xff]
        %v3131 = vld [vmem:[%s11 + $0x40] sm:$0xff]
        %v3132 = vld [vmem:[%s11 + $0x48] sm:$0xff]
        %v3133 = vld [vmem:[%s11 + $0x50] sm:$0xff]
        %v3134 = vld [vmem:[%s11 + $0x58] sm:$0xff]
        %v3135 = vld [vmem:[%s11 + $0x60] sm:$0xff]
        %v3136 = vld [vmem:[%s11 + $0x68] sm:$0xff]
        %v3137 = vld [vmem:[%s11 + $0x70] sm:$0xff]
        %v3138 = vld [vmem:[%s11 + $0x78] sm:$0xff]
        %3139 = vmatpush.msra.mxu0 %v3138
        %3140 = vmatpush.msra.mxu0 %v3137
        %3141 = vmatpush.msra.mxu0 %v3136
        %3142 = vmatpush.msra.mxu0 %v3135
        %3143 = vmatpush.msra.mxu0 %v3134
        %3144 = vmatpush.msra.mxu0 %v3133
        %3145 = vmatpush.msra.mxu0 %v3132
        %3146 = vmatpush.msra.mxu0 %v3131
        %3147 = vmatpush.msra.mxu0 %v3130
        %3148 = vmatpush.msra.mxu0 %v3129
        %3149 = vmatpush.msra.mxu0 %v3128
        %3150 = vmatpush.msra.mxu0 %v3127
        %3151 = vmatpush.msra.mxu0 %v3126
        %3152 = vmatpush.msra.mxu0 %v3125
        %3153 = vmatpush.msra.mxu0 %v3124
        %3154 = vmatpush.msra.mxu0 %v3123
        %3155 = vmatmul.f32.gmra.mxu0 %v3025
        %v3156 = vpop.f32.mrf.mxu0
        %v3157 = vadd.f32 0.0, %v3156
        %3158 = vmatmul.f32.gmra.mxu0 %v3026
        %v3159 = vpop.f32.mrf.mxu0
        %v3160 = vadd.f32 0.0, %v3159
        %3161 = vdwg.mxu0
        %v3162 = vld [vmem:[%s12] sm:$0xff]
        %v3163 = vld [vmem:[%s12 + $0x8] sm:$0xff]
        %v3164 = vld [vmem:[%s12 + $0x10] sm:$0xff]
        %v3165 = vld [vmem:[%s12 + $0x18] sm:$0xff]
        %v3166 = vld [vmem:[%s12 + $0x20] sm:$0xff]
        %v3167 = vld [vmem:[%s12 + $0x28] sm:$0xff]
        %v3168 = vld [vmem:[%s12 + $0x30] sm:$0xff]
        %v3169 = vld [vmem:[%s12 + $0x38] sm:$0xff]
        %v3170 = vld [vmem:[%s12 + $0x40] sm:$0xff]
        %v3171 = vld [vmem:[%s12 + $0x48] sm:$0xff]
        %v3172 = vld [vmem:[%s12 + $0x50] sm:$0xff]
        %v3173 = vld [vmem:[%s12 + $0x58] sm:$0xff]
        %v3174 = vld [vmem:[%s12 + $0x60] sm:$0xff]
        %v3175 = vld [vmem:[%s12 + $0x68] sm:$0xff]
        %v3176 = vld [vmem:[%s12 + $0x70] sm:$0xff]
        %v3177 = vld [vmem:[%s12 + $0x78] sm:$0xff]
        %3178 = vmatpush.msra.mxu0 %v3177
        %3179 = vmatpush.msra.mxu0 %v3176
        %3180 = vmatpush.msra.mxu0 %v3175
        %3181 = vmatpush.msra.mxu0 %v3174
        %3182 = vmatpush.msra.mxu0 %v3173
        %3183 = vmatpush.msra.mxu0 %v3172
        %3184 = vmatpush.msra.mxu0 %v3171
        %3185 = vmatpush.msra.mxu0 %v3170
        %3186 = vmatpush.msra.mxu0 %v3169
        %3187 = vmatpush.msra.mxu0 %v3168
        %3188 = vmatpush.msra.mxu0 %v3167
        %3189 = vmatpush.msra.mxu0 %v3166
        %3190 = vmatpush.msra.mxu0 %v3165
        %3191 = vmatpush.msra.mxu0 %v3164
        %3192 = vmatpush.msra.mxu0 %v3163
        %3193 = vmatpush.msra.mxu0 %v3162
        %3194 = vmatmul.f32.gmra.mxu0 %v3119
        %v3195 = vpop.f32.mrf.mxu0
        %v3196 = vadd.f32 0.0, %v3195
        %3197 = vmatmul.f32.gmra.mxu0 %v3120
        %v3198 = vpop.f32.mrf.mxu0
        %v3199 = vadd.f32 0.0, %v3198
        %3200 = vmatmul.f32.gmra.mxu0 %v3121
        %v3201 = vpop.f32.mrf.mxu0
        %v3202 = vadd.f32 0.0, %v3201
        %3203 = vmatmul.f32.gmra.mxu0 %v3122
        %v3204 = vpop.f32.mrf.mxu0
        %v3205 = vadd.f32 0.0, %v3204
        %3206 = vdwg.mxu0
        %v3207 = vld [vmem:[%s13] sm:$0xff]
        %v3208 = vld [vmem:[%s13 + $0x8] sm:$0xff]
        %v3209 = vld [vmem:[%s13 + $0x10] sm:$0xff]
        %v3210 = vld [vmem:[%s13 + $0x18] sm:$0xff]
        %v3211 = vld [vmem:[%s13 + $0x20] sm:$0xff]
        %v3212 = vld [vmem:[%s13 + $0x28] sm:$0xff]
        %v3213 = vld [vmem:[%s13 + $0x30] sm:$0xff]
        %v3214 = vld [vmem:[%s13 + $0x38] sm:$0xff]
        %v3215 = vld [vmem:[%s13 + $0x40] sm:$0xff]
        %v3216 = vld [vmem:[%s13 + $0x48] sm:$0xff]
        %v3217 = vld [vmem:[%s13 + $0x50] sm:$0xff]
        %v3218 = vld [vmem:[%s13 + $0x58] sm:$0xff]
        %v3219 = vld [vmem:[%s13 + $0x60] sm:$0xff]
        %v3220 = vld [vmem:[%s13 + $0x68] sm:$0xff]
        %v3221 = vld [vmem:[%s13 + $0x70] sm:$0xff]
        %v3222 = vld [vmem:[%s13 + $0x78] sm:$0xff]
        %3223 = vmatpush.msra.mxu0 %v3222
        %3224 = vmatpush.msra.mxu0 %v3221
        %3225 = vmatpush.msra.mxu0 %v3220
        %3226 = vmatpush.msra.mxu0 %v3219
        %3227 = vmatpush.msra.mxu0 %v3218
        %3228 = vmatpush.msra.mxu0 %v3217
        %3229 = vmatpush.msra.mxu0 %v3216
        %3230 = vmatpush.msra.mxu0 %v3215
        %3231 = vmatpush.msra.mxu0 %v3214
        %3232 = vmatpush.msra.mxu0 %v3213
        %3233 = vmatpush.msra.mxu0 %v3212
        %3234 = vmatpush.msra.mxu0 %v3211
        %3235 = vmatpush.msra.mxu0 %v3210
        %3236 = vmatpush.msra.mxu0 %v3209
        %3237 = vmatpush.msra.mxu0 %v3208
        %3238 = vmatpush.msra.mxu0 %v3207
        %3239 = vmatmul.f32.gmra.mxu0 %v3119
        %v3240 = vpop.f32.mrf.mxu0
        %v3241 = vadd.f32 0.0, %v3240
        %3242 = vmatmul.f32.gmra.mxu0 %v3120
        %v3243 = vpop.f32.mrf.mxu0
        %v3244 = vadd.f32 0.0, %v3243
        %3245 = vmatmul.f32.gmra.mxu0 %v3121
        %v3246 = vpop.f32.mrf.mxu0
        %v3247 = vadd.f32 0.0, %v3246
        %3248 = vmatmul.f32.gmra.mxu0 %v3122
        %v3249 = vpop.f32.mrf.mxu0
        %v3250 = vadd.f32 0.0, %v3249
        %3251 = vdwg.mxu0
        %3252 = vmatpush.xpose.msra.mxu0 0.0
        %3253 = vmatpush.xpose.msra.mxu0 0.0
        %3254 = vmatpush.xpose.msra.mxu0 0.0
        %3255 = vmatpush.xpose.msra.mxu0 0.0
        %3256 = vmatpush.xpose.msra.mxu0 0.0
        %3257 = vmatpush.xpose.msra.mxu0 0.0
        %3258 = vmatpush.xpose.msra.mxu0 0.0
        %3259 = vmatpush.xpose.msra.mxu0 0.0
        %3260 = vmatpush.xpose.msra.mxu0 0.0
        %3261 = vmatpush.xpose.msra.mxu0 0.0
        %3262 = vmatpush.xpose.msra.mxu0 0.0
        %3263 = vmatpush.xpose.msra.mxu0 0.0
        %3264 = vmatpush.xpose.msra.mxu0 0.0
        %3265 = vmatpush.xpose.msra.mxu0 0.0
        %3266 = vmatpush.xpose.msra.mxu0 %v3199
        %3267 = vmatpush.xpose.msra.mxu0 %v3196
        %3268 = vmatmul.f32.gmra.mxu0 %v3157
        %v3269 = vpop.f32.mrf.mxu0
        %v3270 = vadd.f32 0.0, %v3269
        %3271 = vdwg.mxu0
        %vm3272 = vcmask 130048
        %v3273 = vsel %vm3272, %v3270, -inf
        %3274 = vmax.xlane.f32.xlu0 %v3273
        %v3275 = vpop.xlane.xlu0 %3274
        %v3276 = vsub.f32 %v3270, %v3275
        %v3277 = vmul.f32 %v3276, 1.442695
        %v3278 = vpow.pop %v3277
        %v3279 = vsel %vm3272, %v3278, 0.0
        %3280 = vadd.xlane.f32.xlu0 %v3279
        %v3281 = vpop.xlane.xlu0 %3280
        %v3282 = vrcp.pop %v3281
        %v3283 = vmul.f32 %v3281, %v3282
        %v3284 = vsub.f32 1.0, %v3283
        %v3285 = vmul.f32 %v3282, %v3284
        %v3286 = vadd.f32 %v3282, %v3285
        %vm3287 = vweird.f32 %v3281
        %vm3288 = vweird.f32 %v3282
        %vm3289 = vmor %vm3287, %vm3288
        %v3290 = vsel %vm3289, %v3282, %v3286
        %v3291 = vand.u32 2147483647, %v3281
        %vm3292 = vcmp.eq.f32.partialorder %v3291, 8.507059e+37
        %v3293 = vand.u32 %v3281, 2147483648
        %v3294 = vor.u32 1.1754944e-38, %v3293
        %v3295 = vsel %vm3292, %v3294, %v3290
        %v3296 = vmul.f32 %v3278, %v3295
        %v3298 = vsel %vm3272, %v3296, 0
        %3300 = vmatpush.msra.mxu0 0.0
        %3301 = vmatpush.msra.mxu0 0.0
        %3302 = vmatpush.msra.mxu0 0.0
        %3303 = vmatpush.msra.mxu0 0.0
        %3304 = vmatpush.msra.mxu0 0.0
        %3305 = vmatpush.msra.mxu0 0.0
        %3306 = vmatpush.msra.mxu0 0.0
        %3307 = vmatpush.msra.mxu0 0.0
        %3308 = vmatpush.msra.mxu0 0.0
        %3309 = vmatpush.msra.mxu0 0.0
        %3310 = vmatpush.msra.mxu0 0.0
        %3311 = vmatpush.msra.mxu0 0.0
        %3312 = vmatpush.msra.mxu0 0.0
        %3313 = vmatpush.msra.mxu0 0.0
        %3314 = vmatpush.msra.mxu0 %v3244
        %3315 = vmatpush.msra.mxu0 %v3241
        %3316 = vmatmul.f32.gmra.mxu0 %v3298
        %v3317 = vpop.f32.mrf.mxu0
        %v3318 = vadd.f32 0.0, %v3317
        %3319 = vdwg.mxu0
        %3320 = vmatpush.xpose.msra.mxu0 0.0
        %3321 = vmatpush.xpose.msra.mxu0 0.0
        %3322 = vmatpush.xpose.msra.mxu0 0.0
        %3323 = vmatpush.xpose.msra.mxu0 0.0
        %3324 = vmatpush.xpose.msra.mxu0 0.0
        %3325 = vmatpush.xpose.msra.mxu0 0.0
        %3326 = vmatpush.xpose.msra.mxu0 0.0
        %3327 = vmatpush.xpose.msra.mxu0 0.0
        %3328 = vmatpush.xpose.msra.mxu0 0.0
        %3329 = vmatpush.xpose.msra.mxu0 0.0
        %3330 = vmatpush.xpose.msra.mxu0 0.0
        %3331 = vmatpush.xpose.msra.mxu0 0.0
        %3332 = vmatpush.xpose.msra.mxu0 0.0
        %3333 = vmatpush.xpose.msra.mxu0 0.0
        %3334 = vmatpush.xpose.msra.mxu0 %v3205
        %3335 = vmatpush.xpose.msra.mxu0 %v3202
        %3336 = vmatmul.f32.gmra.mxu0 %v3160
        %v3337 = vpop.f32.mrf.mxu0
        %v3338 = vadd.f32 0.0, %v3337
        %3339 = vdwg.mxu0
        %v3340 = vsel %vm3272, %v3338, -inf
        %3341 = vmax.xlane.f32.xlu0 %v3340
        %v3342 = vpop.xlane.xlu0 %3341
        %v3343 = vsub.f32 %v3338, %v3342
        %v3344 = vmul.f32 %v3343, 1.442695
        %v3345 = vpow.pop %v3344
        %v3346 = vsel %vm3272, %v3345, 0.0
        %3347 = vadd.xlane.f32.xlu0 %v3346
        %v3348 = vpop.xlane.xlu0 %3347
        %v3349 = vrcp.pop %v3348
        %v3350 = vmul.f32 %v3348, %v3349
        %v3351 = vsub.f32 1.0, %v3350
        %v3352 = vmul.f32 %v3349, %v3351
        %v3353 = vadd.f32 %v3349, %v3352
        %vm3354 = vweird.f32 %v3348
        %vm3355 = vweird.f32 %v3349
        %vm3356 = vmor %vm3354, %vm3355
        %v3357 = vsel %vm3356, %v3349, %v3353
        %v3358 = vand.u32 2147483647, %v3348
        %vm3359 = vcmp.eq.f32.partialorder %v3358, 8.507059e+37
        %v3360 = vand.u32 %v3348, 2147483648
        %v3361 = vor.u32 1.1754944e-38, %v3360
        %v3362 = vsel %vm3359, %v3361, %v3357
        %v3363 = vmul.f32 %v3345, %v3362
        %v3365 = vsel %vm3272, %v3363, 0
        %3367 = vmatpush.msra.mxu0 0.0
        %3368 = vmatpush.msra.mxu0 0.0
        %3369 = vmatpush.msra.mxu0 0.0
        %3370 = vmatpush.msra.mxu0 0.0
        %3371 = vmatpush.msra.mxu0 0.0
        %3372 = vmatpush.msra.mxu0 0.0
        %3373 = vmatpush.msra.mxu0 0.0
        %3374 = vmatpush.msra.mxu0 0.0
        %3375 = vmatpush.msra.mxu0 0.0
        %3376 = vmatpush.msra.mxu0 0.0
        %3377 = vmatpush.msra.mxu0 0.0
        %3378 = vmatpush.msra.mxu0 0.0
        %3379 = vmatpush.msra.mxu0 0.0
        %3380 = vmatpush.msra.mxu0 0.0
        %3381 = vmatpush.msra.mxu0 %v3250
        %3382 = vmatpush.msra.mxu0 %v3247
        %3383 = vmatmul.f32.gmra.mxu0 %v3365
        %v3384 = vpop.f32.mrf.mxu0
        %v3385 = vadd.f32 0.0, %v3384
        %3386 = vdwg.mxu0
        %v3387 = vld [vmem:[%s14] sm:$0xff]
        %v3388 = vld [vmem:[%s14 + $0x8] sm:$0xff]
        %v3389 = vld [vmem:[%s14 + $0x10] sm:$0xff]
        %v3390 = vld [vmem:[%s14 + $0x18] sm:$0xff]
        %v3391 = vld [vmem:[%s14 + $0x20] sm:$0xff]
        %v3392 = vld [vmem:[%s14 + $0x28] sm:$0xff]
        %v3393 = vld [vmem:[%s14 + $0x30] sm:$0xff]
        %v3394 = vld [vmem:[%s14 + $0x38] sm:$0xff]
        %v3395 = vld [vmem:[%s14 + $0x40] sm:$0xff]
        %v3396 = vld [vmem:[%s14 + $0x48] sm:$0xff]
        %v3397 = vld [vmem:[%s14 + $0x50] sm:$0xff]
        %v3398 = vld [vmem:[%s14 + $0x58] sm:$0xff]
        %v3399 = vld [vmem:[%s14 + $0x60] sm:$0xff]
        %v3400 = vld [vmem:[%s14 + $0x68] sm:$0xff]
        %v3401 = vld [vmem:[%s14 + $0x70] sm:$0xff]
        %v3402 = vld [vmem:[%s14 + $0x78] sm:$0xff]
        %v3403 = vld [vmem:[%s15] sm:$0x1]
        %v3405 = vperm.slane %v3403, 0
        %3407 = vmatpush.msra.mxu0 %v3402
        %3408 = vmatpush.msra.mxu0 %v3401
        %3409 = vmatpush.msra.mxu0 %v3400
        %3410 = vmatpush.msra.mxu0 %v3399
        %3411 = vmatpush.msra.mxu0 %v3398
        %3412 = vmatpush.msra.mxu0 %v3397
        %3413 = vmatpush.msra.mxu0 %v3396
        %3414 = vmatpush.msra.mxu0 %v3395
        %3415 = vmatpush.msra.mxu0 %v3394
        %3416 = vmatpush.msra.mxu0 %v3393
        %3417 = vmatpush.msra.mxu0 %v3392
        %3418 = vmatpush.msra.mxu0 %v3391
        %3419 = vmatpush.msra.mxu0 %v3390
        %3420 = vmatpush.msra.mxu0 %v3389
        %3421 = vmatpush.msra.mxu0 %v3388
        %3422 = vmatpush.msra.mxu0 %v3387
        %3423 = vmatmul.f32.gmra.mxu0 %v3318
        %v3424 = vpop.f32.mrf.mxu0
        %v3425 = vadd.f32 %v3405, %v3424
        %3426 = vmatmul.f32.gmra.mxu0 %v3385
        %v3427 = vpop.f32.mrf.mxu0
        %v3428 = vadd.f32 %v3405, %v3427
        %3429 = vdwg.mxu0
        %v3430 = vadd.f32 %v3425, %v1527
        %v3431 = vadd.f32 %v3428, %v1528
        %v3432 = vld [vmem:[%s16] sm:$0x1]
        %v3433 = vld [vmem:[%s17] sm:$0x1]
        %3434 = vadd.xlane.f32.xlu0 %v3430
        %v3435 = vpop.xlane.xlu0 %3434
        %3436 = vadd.xlane.f32.xlu0 %v3431
        %v3437 = vpop.xlane.xlu0 %3436
        %v3438 = vmul.f32 %v3435, %v2980
        %v3439 = vmul.f32 %v3437, %v2980
        %v3440 = vsub.f32 %v3430, %v3438
        %v3441 = vsub.f32 %v3431, %v3439
        %v3442 = vmul.f32 %v3440, %v3440
        %v3443 = vmul.f32 %v3441, %v3441
        %3444 = vadd.xlane.f32.xlu0 %v3442
        %v3445 = vpop.xlane.xlu0 %3444
        %3446 = vadd.xlane.f32.xlu0 %v3443
        %v3447 = vpop.xlane.xlu0 %3446
        %v3448 = vmul.f32 %v3445, %v2980
        %v3449 = vmul.f32 %v3447, %v2980
        %v3450 = vadd.f32 %v3448, 1e-05
        %v3451 = vadd.f32 %v3449, 1e-05
        %v3452 = vrsqrt.pop %v3450
        %v3453 = vmul.f32 %v3452, %v3450
        %v3454 = vmul.f32 %v3453, %v3452
        %v3455 = vmul.f32 0.5, %v3454
        %v3456 = vsub.f32 1.5, %v3455
        %v3457 = vmul.f32 %v3452, %v3456
        %vm3458 = vweird.f32 %v3450
        %vm3459 = vweird.f32 %v3452
        %vm3460 = vmor %vm3458, %vm3459
        %v3461 = vsel %vm3460, %v3452, %v3457
        %v3462 = vrsqrt.pop %v3451
        %v3463 = vmul.f32 %v3462, %v3451
        %v3464 = vmul.f32 %v3463, %v3462
        %v3465 = vmul.f32 0.5, %v3464
        %v3466 = vsub.f32 1.5, %v3465
        %v3467 = vmul.f32 %v3462, %v3466
        %vm3468 = vweird.f32 %v3451
        %vm3469 = vweird.f32 %v3462
        %vm3470 = vmor %vm3468, %vm3469
        %v3471 = vsel %vm3470, %v3462, %v3467
        %v3472 = vmul.f32 %v3440, %v3461
        %v3473 = vmul.f32 %v3441, %v3471
        %v3475 = vperm.slane %v3432, 0
        %v3477 = vmul.f32 %v3472, %v3475
        %v3478 = vmul.f32 %v3473, %v3475
        %v3480 = vperm.slane %v3433, 0
        %v3482 = vadd.f32 %v3477, %v3480
        %v3483 = vadd.f32 %v3478, %v3480
        %v3484 = vld [vmem:[%s18] sm:$0xff]
        %v3485 = vld [vmem:[%s18 + $0x8] sm:$0xff]
        %v3486 = vld [vmem:[%s18 + $0x10] sm:$0xff]
        %v3487 = vld [vmem:[%s18 + $0x18] sm:$0xff]
        %v3488 = vld [vmem:[%s18 + $0x20] sm:$0xff]
        %v3489 = vld [vmem:[%s18 + $0x28] sm:$0xff]
        %v3490 = vld [vmem:[%s18 + $0x30] sm:$0xff]
        %v3491 = vld [vmem:[%s18 + $0x38] sm:$0xff]
        %v3492 = vld [vmem:[%s18 + $0x40] sm:$0xff]
        %v3493 = vld [vmem:[%s18 + $0x48] sm:$0xff]
        %v3494 = vld [vmem:[%s18 + $0x50] sm:$0xff]
        %v3495 = vld [vmem:[%s18 + $0x58] sm:$0xff]
        %v3496 = vld [vmem:[%s18 + $0x60] sm:$0xff]
        %v3497 = vld [vmem:[%s18 + $0x68] sm:$0xff]
        %v3498 = vld [vmem:[%s18 + $0x70] sm:$0xff]
        %v3499 = vld [vmem:[%s18 + $0x78] sm:$0xff]
        %v3500 = vld [vmem:[%s18 + $0x80] sm:$0xff]
        %v3501 = vld [vmem:[%s18 + $0x88] sm:$0xff]
        %v3502 = vld [vmem:[%s18 + $0x90] sm:$0xff]
        %v3503 = vld [vmem:[%s18 + $0x98] sm:$0xff]
        %v3504 = vld [vmem:[%s18 + $0xa0] sm:$0xff]
        %v3505 = vld [vmem:[%s18 + $0xa8] sm:$0xff]
        %v3506 = vld [vmem:[%s18 + $0xb0] sm:$0xff]
        %v3507 = vld [vmem:[%s18 + $0xb8] sm:$0xff]
        %v3508 = vld [vmem:[%s18 + $0xc0] sm:$0xff]
        %v3509 = vld [vmem:[%s18 + $0xc8] sm:$0xff]
        %v3510 = vld [vmem:[%s18 + $0xd0] sm:$0xff]
        %v3511 = vld [vmem:[%s18 + $0xd8] sm:$0xff]
        %v3512 = vld [vmem:[%s18 + $0xe0] sm:$0xff]
        %v3513 = vld [vmem:[%s18 + $0xe8] sm:$0xff]
        %v3514 = vld [vmem:[%s18 + $0xf0] sm:$0xff]
        %v3515 = vld [vmem:[%s18 + $0xf8] sm:$0xff]
        %v3516 = vld [vmem:[%s18 + $0x100] sm:$0xff]
        %v3517 = vld [vmem:[%s18 + $0x108] sm:$0xff]
        %v3518 = vld [vmem:[%s18 + $0x110] sm:$0xff]
        %v3519 = vld [vmem:[%s18 + $0x118] sm:$0xff]
        %v3520 = vld [vmem:[%s18 + $0x120] sm:$0xff]
        %v3521 = vld [vmem:[%s18 + $0x128] sm:$0xff]
        %v3522 = vld [vmem:[%s18 + $0x130] sm:$0xff]
        %v3523 = vld [vmem:[%s18 + $0x138] sm:$0xff]
        %v3524 = vld [vmem:[%s18 + $0x140] sm:$0xff]
        %v3525 = vld [vmem:[%s18 + $0x148] sm:$0xff]
        %v3526 = vld [vmem:[%s18 + $0x150] sm:$0xff]
        %v3527 = vld [vmem:[%s18 + $0x158] sm:$0xff]
        %v3528 = vld [vmem:[%s18 + $0x160] sm:$0xff]
        %v3529 = vld [vmem:[%s18 + $0x168] sm:$0xff]
        %v3530 = vld [vmem:[%s18 + $0x170] sm:$0xff]
        %v3531 = vld [vmem:[%s18 + $0x178] sm:$0xff]
        %v3532 = vld [vmem:[%s18 + $0x180] sm:$0xff]
        %v3533 = vld [vmem:[%s18 + $0x188] sm:$0xff]
        %v3534 = vld [vmem:[%s18 + $0x190] sm:$0xff]
        %v3535 = vld [vmem:[%s18 + $0x198] sm:$0xff]
        %v3536 = vld [vmem:[%s18 + $0x1a0] sm:$0xff]
        %v3537 = vld [vmem:[%s18 + $0x1a8] sm:$0xff]
        %v3538 = vld [vmem:[%s18 + $0x1b0] sm:$0xff]
        %v3539 = vld [vmem:[%s18 + $0x1b8] sm:$0xff]
        %v3540 = vld [vmem:[%s18 + $0x1c0] sm:$0xff]
        %v3541 = vld [vmem:[%s18 + $0x1c8] sm:$0xff]
        %v3542 = vld [vmem:[%s18 + $0x1d0] sm:$0xff]
        %v3543 = vld [vmem:[%s18 + $0x1d8] sm:$0xff]
        %v3544 = vld [vmem:[%s18 + $0x1e0] sm:$0xff]
        %v3545 = vld [vmem:[%s18 + $0x1e8] sm:$0xff]
        %v3546 = vld [vmem:[%s18 + $0x1f0] sm:$0xff]
        %v3547 = vld [vmem:[%s18 + $0x1f8] sm:$0xff]
        %v3548 = vld [vmem:[%s20] sm:$0xf]
        %v3550 = vperm.slane %v3548, 0
        %v3551 = vperm.slane %v3548, 1
        %v3552 = vperm.slane %v3548, 2
        %v3553 = vperm.slane %v3548, 3
        %3558 = vmatpush.msra.mxu0 %v3544
        %3559 = vmatpush.msra.mxu0 %v3540
        %3560 = vmatpush.msra.mxu0 %v3536
        %3561 = vmatpush.msra.mxu0 %v3532
        %3562 = vmatpush.msra.mxu0 %v3528
        %3563 = vmatpush.msra.mxu0 %v3524
        %3564 = vmatpush.msra.mxu0 %v3520
        %3565 = vmatpush.msra.mxu0 %v3516
        %3566 = vmatpush.msra.mxu0 %v3512
        %3567 = vmatpush.msra.mxu0 %v3508
        %3568 = vmatpush.msra.mxu0 %v3504
        %3569 = vmatpush.msra.mxu0 %v3500
        %3570 = vmatpush.msra.mxu0 %v3496
        %3571 = vmatpush.msra.mxu0 %v3492
        %3572 = vmatpush.msra.mxu0 %v3488
        %3573 = vmatpush.msra.mxu0 %v3484
        %3574 = vmatmul.f32.gmra.mxu0 %v3482
        %v3575 = vpop.f32.mrf.mxu0
        %v3576 = vadd.f32 %v3550, %v3575
        %3577 = vmatmul.f32.gmra.mxu0 %v3483
        %v3578 = vpop.f32.mrf.mxu0
        %v3579 = vadd.f32 %v3550, %v3578
        %3580 = vdwg.mxu0
        %3581 = vmatpush.msra.mxu0 %v3545
        %3582 = vmatpush.msra.mxu0 %v3541
        %3583 = vmatpush.msra.mxu0 %v3537
        %3584 = vmatpush.msra.mxu0 %v3533
        %3585 = vmatpush.msra.mxu0 %v3529
        %3586 = vmatpush.msra.mxu0 %v3525
        %3587 = vmatpush.msra.mxu0 %v3521
        %3588 = vmatpush.msra.mxu0 %v3517
        %3589 = vmatpush.msra.mxu0 %v3513
        %3590 = vmatpush.msra.mxu0 %v3509
        %3591 = vmatpush.msra.mxu0 %v3505
        %3592 = vmatpush.msra.mxu0 %v3501
        %3593 = vmatpush.msra.mxu0 %v3497
        %3594 = vmatpush.msra.mxu0 %v3493
        %3595 = vmatpush.msra.mxu0 %v3489
        %3596 = vmatpush.msra.mxu0 %v3485
        %3597 = vmatmul.f32.gmra.mxu0 %v3482
        %v3598 = vpop.f32.mrf.mxu0
        %v3599 = vadd.f32 %v3551, %v3598
        %3600 = vmatmul.f32.gmra.mxu0 %v3483
        %v3601 = vpop.f32.mrf.mxu0
        %v3602 = vadd.f32 %v3551, %v3601
        %3603 = vdwg.mxu0
        %3604 = vmatpush.msra.mxu0 %v3546
        %3605 = vmatpush.msra.mxu0 %v3542
        %3606 = vmatpush.msra.mxu0 %v3538
        %3607 = vmatpush.msra.mxu0 %v3534
        %3608 = vmatpush.msra.mxu0 %v3530
        %3609 = vmatpush.msra.mxu0 %v3526
        %3610 = vmatpush.msra.mxu0 %v3522
        %3611 = vmatpush.msra.mxu0 %v3518
        %3612 = vmatpush.msra.mxu0 %v3514
        %3613 = vmatpush.msra.mxu0 %v3510
        %3614 = vmatpush.msra.mxu0 %v3506
        %3615 = vmatpush.msra.mxu0 %v3502
        %3616 = vmatpush.msra.mxu0 %v3498
        %3617 = vmatpush.msra.mxu0 %v3494
        %3618 = vmatpush.msra.mxu0 %v3490
        %3619 = vmatpush.msra.mxu0 %v3486
        %3620 = vmatmul.f32.gmra.mxu0 %v3482
        %v3621 = vpop.f32.mrf.mxu0
        %v3622 = vadd.f32 %v3552, %v3621
        %3623 = vmatmul.f32.gmra.mxu0 %v3483
        %v3624 = vpop.f32.mrf.mxu0
        %v3625 = vadd.f32 %v3552, %v3624
        %3626 = vdwg.mxu0
        %3627 = vmatpush.msra.mxu0 %v3547
        %3628 = vmatpush.msra.mxu0 %v3543
        %3629 = vmatpush.msra.mxu0 %v3539
        %3630 = vmatpush.msra.mxu0 %v3535
        %3631 = vmatpush.msra.mxu0 %v3531
        %3632 = vmatpush.msra.mxu0 %v3527
        %3633 = vmatpush.msra.mxu0 %v3523
        %3634 = vmatpush.msra.mxu0 %v3519
        %3635 = vmatpush.msra.mxu0 %v3515
        %3636 = vmatpush.msra.mxu0 %v3511
        %3637 = vmatpush.msra.mxu0 %v3507
        %3638 = vmatpush.msra.mxu0 %v3503
        %3639 = vmatpush.msra.mxu0 %v3499
        %3640 = vmatpush.msra.mxu0 %v3495
        %3641 = vmatpush.msra.mxu0 %v3491
        %3642 = vmatpush.msra.mxu0 %v3487
        %3643 = vmatmul.f32.gmra.mxu0 %v3482
        %v3644 = vpop.f32.mrf.mxu0
        %v3645 = vadd.f32 %v3553, %v3644
        %3646 = vmatmul.f32.gmra.mxu0 %v3483
        %v3647 = vpop.f32.mrf.mxu0
        %v3648 = vadd.f32 %v3553, %v3647
        %3649 = vdwg.mxu0
        %v3650 = vld [vmem:[%s19] sm:$0xff]
        %v3651 = vld [vmem:[%s19 + $0x8] sm:$0xff]
        %v3652 = vld [vmem:[%s19 + $0x10] sm:$0xff]
        %v3653 = vld [vmem:[%s19 + $0x18] sm:$0xff]
        %v3654 = vld [vmem:[%s19 + $0x20] sm:$0xff]
        %v3655 = vld [vmem:[%s19 + $0x28] sm:$0xff]
        %v3656 = vld [vmem:[%s19 + $0x30] sm:$0xff]
        %v3657 = vld [vmem:[%s19 + $0x38] sm:$0xff]
        %v3658 = vld [vmem:[%s19 + $0x40] sm:$0xff]
        %v3659 = vld [vmem:[%s19 + $0x48] sm:$0xff]
        %v3660 = vld [vmem:[%s19 + $0x50] sm:$0xff]
        %v3661 = vld [vmem:[%s19 + $0x58] sm:$0xff]
        %v3662 = vld [vmem:[%s19 + $0x60] sm:$0xff]
        %v3663 = vld [vmem:[%s19 + $0x68] sm:$0xff]
        %v3664 = vld [vmem:[%s19 + $0x70] sm:$0xff]
        %v3665 = vld [vmem:[%s19 + $0x78] sm:$0xff]
        %v3666 = vld [vmem:[%s19 + $0x80] sm:$0xff]
        %v3667 = vld [vmem:[%s19 + $0x88] sm:$0xff]
        %v3668 = vld [vmem:[%s19 + $0x90] sm:$0xff]
        %v3669 = vld [vmem:[%s19 + $0x98] sm:$0xff]
        %v3670 = vld [vmem:[%s19 + $0xa0] sm:$0xff]
        %v3671 = vld [vmem:[%s19 + $0xa8] sm:$0xff]
        %v3672 = vld [vmem:[%s19 + $0xb0] sm:$0xff]
        %v3673 = vld [vmem:[%s19 + $0xb8] sm:$0xff]
        %v3674 = vld [vmem:[%s19 + $0xc0] sm:$0xff]
        %v3675 = vld [vmem:[%s19 + $0xc8] sm:$0xff]
        %v3676 = vld [vmem:[%s19 + $0xd0] sm:$0xff]
        %v3677 = vld [vmem:[%s19 + $0xd8] sm:$0xff]
        %v3678 = vld [vmem:[%s19 + $0xe0] sm:$0xff]
        %v3679 = vld [vmem:[%s19 + $0xe8] sm:$0xff]
        %v3680 = vld [vmem:[%s19 + $0xf0] sm:$0xff]
        %v3681 = vld [vmem:[%s19 + $0xf8] sm:$0xff]
        %v3682 = vld [vmem:[%s19 + $0x100] sm:$0xff]
        %v3683 = vld [vmem:[%s19 + $0x108] sm:$0xff]
        %v3684 = vld [vmem:[%s19 + $0x110] sm:$0xff]
        %v3685 = vld [vmem:[%s19 + $0x118] sm:$0xff]
        %v3686 = vld [vmem:[%s19 + $0x120] sm:$0xff]
        %v3687 = vld [vmem:[%s19 + $0x128] sm:$0xff]
        %v3688 = vld [vmem:[%s19 + $0x130] sm:$0xff]
        %v3689 = vld [vmem:[%s19 + $0x138] sm:$0xff]
        %v3690 = vld [vmem:[%s19 + $0x140] sm:$0xff]
        %v3691 = vld [vmem:[%s19 + $0x148] sm:$0xff]
        %v3692 = vld [vmem:[%s19 + $0x150] sm:$0xff]
        %v3693 = vld [vmem:[%s19 + $0x158] sm:$0xff]
        %v3694 = vld [vmem:[%s19 + $0x160] sm:$0xff]
        %v3695 = vld [vmem:[%s19 + $0x168] sm:$0xff]
        %v3696 = vld [vmem:[%s19 + $0x170] sm:$0xff]
        %v3697 = vld [vmem:[%s19 + $0x178] sm:$0xff]
        %v3698 = vld [vmem:[%s19 + $0x180] sm:$0xff]
        %v3699 = vld [vmem:[%s19 + $0x188] sm:$0xff]
        %v3700 = vld [vmem:[%s19 + $0x190] sm:$0xff]
        %v3701 = vld [vmem:[%s19 + $0x198] sm:$0xff]
        %v3702 = vld [vmem:[%s19 + $0x1a0] sm:$0xff]
        %v3703 = vld [vmem:[%s19 + $0x1a8] sm:$0xff]
        %v3704 = vld [vmem:[%s19 + $0x1b0] sm:$0xff]
        %v3705 = vld [vmem:[%s19 + $0x1b8] sm:$0xff]
        %v3706 = vld [vmem:[%s19 + $0x1c0] sm:$0xff]
        %v3707 = vld [vmem:[%s19 + $0x1c8] sm:$0xff]
        %v3708 = vld [vmem:[%s19 + $0x1d0] sm:$0xff]
        %v3709 = vld [vmem:[%s19 + $0x1d8] sm:$0xff]
        %v3710 = vld [vmem:[%s19 + $0x1e0] sm:$0xff]
        %v3711 = vld [vmem:[%s19 + $0x1e8] sm:$0xff]
        %v3712 = vld [vmem:[%s19 + $0x1f0] sm:$0xff]
        %v3713 = vld [vmem:[%s19 + $0x1f8] sm:$0xff]
        %v3714 = vld [vmem:[%s21] sm:$0xf]
        %v3716 = vperm.slane %v3714, 0
        %v3717 = vperm.slane %v3714, 1
        %v3718 = vperm.slane %v3714, 2
        %v3719 = vperm.slane %v3714, 3
        %3724 = vmatpush.msra.mxu0 %v3710
        %3725 = vmatpush.msra.mxu0 %v3706
        %3726 = vmatpush.msra.mxu0 %v3702
        %3727 = vmatpush.msra.mxu0 %v3698
        %3728 = vmatpush.msra.mxu0 %v3694
        %3729 = vmatpush.msra.mxu0 %v3690
        %3730 = vmatpush.msra.mxu0 %v3686
        %3731 = vmatpush.msra.mxu0 %v3682
        %3732 = vmatpush.msra.mxu0 %v3678
        %3733 = vmatpush.msra.mxu0 %v3674
        %3734 = vmatpush.msra.mxu0 %v3670
        %3735 = vmatpush.msra.mxu0 %v3666
        %3736 = vmatpush.msra.mxu0 %v3662
        %3737 = vmatpush.msra.mxu0 %v3658
        %3738 = vmatpush.msra.mxu0 %v3654
        %3739 = vmatpush.msra.mxu0 %v3650
        %3740 = vmatmul.f32.gmra.mxu0 %v3482
        %v3741 = vpop.f32.mrf.mxu0
        %v3742 = vadd.f32 %v3716, %v3741
        %3743 = vmatmul.f32.gmra.mxu0 %v3483
        %v3744 = vpop.f32.mrf.mxu0
        %v3745 = vadd.f32 %v3716, %v3744
        %3746 = vdwg.mxu0
        %3747 = vmatpush.msra.mxu0 %v3711
        %3748 = vmatpush.msra.mxu0 %v3707
        %3749 = vmatpush.msra.mxu0 %v3703
        %3750 = vmatpush.msra.mxu0 %v3699
        %3751 = vmatpush.msra.mxu0 %v3695
        %3752 = vmatpush.msra.mxu0 %v3691
        %3753 = vmatpush.msra.mxu0 %v3687
        %3754 = vmatpush.msra.mxu0 %v3683
        %3755 = vmatpush.msra.mxu0 %v3679
        %3756 = vmatpush.msra.mxu0 %v3675
        %3757 = vmatpush.msra.mxu0 %v3671
        %3758 = vmatpush.msra.mxu0 %v3667
        %3759 = vmatpush.msra.mxu0 %v3663
        %3760 = vmatpush.msra.mxu0 %v3659
        %3761 = vmatpush.msra.mxu0 %v3655
        %3762 = vmatpush.msra.mxu0 %v3651
        %3763 = vmatmul.f32.gmra.mxu0 %v3482
        %v3764 = vpop.f32.mrf.mxu0
        %v3765 = vadd.f32 %v3717, %v3764
        %3766 = vmatmul.f32.gmra.mxu0 %v3483
        %v3767 = vpop.f32.mrf.mxu0
        %v3768 = vadd.f32 %v3717, %v3767
        %3769 = vdwg.mxu0
        %3770 = vmatpush.msra.mxu0 %v3712
        %3771 = vmatpush.msra.mxu0 %v3708
        %3772 = vmatpush.msra.mxu0 %v3704
        %3773 = vmatpush.msra.mxu0 %v3700
        %3774 = vmatpush.msra.mxu0 %v3696
        %3775 = vmatpush.msra.mxu0 %v3692
        %3776 = vmatpush.msra.mxu0 %v3688
        %3777 = vmatpush.msra.mxu0 %v3684
        %3778 = vmatpush.msra.mxu0 %v3680
        %3779 = vmatpush.msra.mxu0 %v3676
        %3780 = vmatpush.msra.mxu0 %v3672
        %3781 = vmatpush.msra.mxu0 %v3668
        %3782 = vmatpush.msra.mxu0 %v3664
        %3783 = vmatpush.msra.mxu0 %v3660
        %3784 = vmatpush.msra.mxu0 %v3656
        %3785 = vmatpush.msra.mxu0 %v3652
        %3786 = vmatmul.f32.gmra.mxu0 %v3482
        %v3787 = vpop.f32.mrf.mxu0
        %v3788 = vadd.f32 %v3718, %v3787
        %3789 = vmatmul.f32.gmra.mxu0 %v3483
        %v3790 = vpop.f32.mrf.mxu0
        %v3791 = vadd.f32 %v3718, %v3790
        %3792 = vdwg.mxu0
        %3793 = vmatpush.msra.mxu0 %v3713
        %3794 = vmatpush.msra.mxu0 %v3709
        %3795 = vmatpush.msra.mxu0 %v3705
        %3796 = vmatpush.msra.mxu0 %v3701
        %3797 = vmatpush.msra.mxu0 %v3697
        %3798 = vmatpush.msra.mxu0 %v3693
        %3799 = vmatpush.msra.mxu0 %v3689
        %3800 = vmatpush.msra.mxu0 %v3685
        %3801 = vmatpush.msra.mxu0 %v3681
        %3802 = vmatpush.msra.mxu0 %v3677
        %3803 = vmatpush.msra.mxu0 %v3673
        %3804 = vmatpush.msra.mxu0 %v3669
        %3805 = vmatpush.msra.mxu0 %v3665
        %3806 = vmatpush.msra.mxu0 %v3661
        %3807 = vmatpush.msra.mxu0 %v3657
        %3808 = vmatpush.msra.mxu0 %v3653
        %3809 = vmatmul.f32.gmra.mxu0 %v3482
        %v3810 = vpop.f32.mrf.mxu0
        %v3811 = vadd.f32 %v3719, %v3810
        %3812 = vmatmul.f32.gmra.mxu0 %v3483
        %v3813 = vpop.f32.mrf.mxu0
        %v3814 = vadd.f32 %v3719, %v3813
        %3815 = vdwg.mxu0
        %v3816 = vmul.f32 %v3742, 0.5
        %v3817 = vmul.f32 %v3765, 0.5
        %v3818 = vmul.f32 %v3788, 0.5
        %v3819 = vmul.f32 %v3811, 0.5
        %v3820 = vmul.f32 %v3745, 0.5
        %v3821 = vmul.f32 %v3768, 0.5
        %v3822 = vmul.f32 %v3791, 0.5
        %v3823 = vmul.f32 %v3814, 0.5
        %v3824 = vmul.f32 %v3742, 0.70710677
        %v3825 = vmul.f32 %v3765, 0.70710677
        %v3826 = vmul.f32 %v3788, 0.70710677
        %v3827 = vmul.f32 %v3811, 0.70710677
        %v3828 = vmul.f32 %v3745, 0.70710677
        %v3829 = vmul.f32 %v3768, 0.70710677
        %v3830 = vmul.f32 %v3791, 0.70710677
        %v3831 = vmul.f32 %v3814, 0.70710677
        %v3832 = vand.u32 2147483647, %v3824
        %v3833 = vand.u32 2147483647, %v3825
        %v3834 = vand.u32 2147483647, %v3826
        %v3835 = vand.u32 2147483647, %v3827
        %v3836 = vand.u32 2147483647, %v3828
        %v3837 = vand.u32 2147483647, %v3829
        %v3838 = vand.u32 2147483647, %v3830
        %v3839 = vand.u32 2147483647, %v3831
        %v3840 = vmul.f32 %v3832, 0.3275911
        %v3841 = vmul.f32 %v3833, 0.3275911
        %v3842 = vmul.f32 %v3834, 0.3275911
        %v3843 = vmul.f32 %v3835, 0.3275911
        %v3844 = vmul.f32 %v3836, 0.3275911
        %v3845 = vmul.f32 %v3837, 0.3275911
        %v3846 = vmul.f32 %v3838, 0.3275911
        %v3847 = vmul.f32 %v3839, 0.3275911
        %v3848 = vadd.f32 %v3840, 1.0
        %v3849 = vadd.f32 %v3841, 1.0
        %v3850 = vadd.f32 %v3842, 1.0
        %v3851 = vadd.f32 %v3843, 1.0
        %v3852 = vadd.f32 %v3844, 1.0
        %v3853 = vadd.f32 %v3845, 1.0
        %v3854 = vadd.f32 %v3846, 1.0
        %v3855 = vadd.f32 %v3847, 1.0
        %v3856 = vrcp.pop %v3848
        %v3857 = vmul.f32 %v3848, %v3856
        %v3858 = vsub.f32 1.0, %v3857
        %v3859 = vmul.f32 %v3856, %v3858
        %v3860 = vadd.f32 %v3856, %v3859
        %vm3861 = vweird.f32 %v3848
        %vm3862 = vweird.f32 %v3856
        %vm3863 = vmor %vm3861, %vm3862
        %v3864 = vsel %vm3863, %v3856, %v3860
        %v3865 = vand.u32 2147483647, %v3848
        %vm3866 = vcmp.eq.f32.partialorder %v3865, 8.507059e+37
        %v3867 = vand.u32 %v3848, 2147483648
        %v3868 = vor.u32 1.1754944e-38, %v3867
        %v3869 = vsel %vm3866, %v3868, %v3864
        %v3870 = vmul.f32 1.0, %v3869
        %v3871 = vrcp.pop %v3849
        %v3872 = vmul.f32 %v3849, %v3871
        %v3873 = vsub.f32 1.0, %v3872
        %v3874 = vmul.f32 %v3871, %v3873
        %v3875 = vadd.f32 %v3871, %v3874
        %vm3876 = vweird.f32 %v3849
        %vm3877 = vweird.f32 %v3871
        %vm3878 = vmor %vm3876, %vm3877
        %v3879 = vsel %vm3878, %v3871, %v3875
        %v3880 = vand.u32 2147483647, %v3849
        %vm3881 = vcmp.eq.f32.partialorder %v3880, 8.507059e+37
        %v3882 = vand.u32 %v3849, 2147483648
        %v3883 = vor.u32 1.1754944e-38, %v3882
        %v3884 = vsel %vm3881, %v3883, %v3879
        %v3885 = vmul.f32 1.0, %v3884
        %v3886 = vrcp.pop %v3850
        %v3887 = vmul.f32 %v3850, %v3886
        %v3888 = vsub.f32 1.0, %v3887
        %v3889 = vmul.f32 %v3886, %v3888
        %v3890 = vadd.f32 %v3886, %v3889
        %vm3891 = vweird.f32 %v3850
        %vm3892 = vweird.f32 %v3886
        %vm3893 = vmor %vm3891, %vm3892
        %v3894 = vsel %vm3893, %v3886, %v3890
        %v3895 = vand.u32 2147483647, %v3850
        %vm3896 = vcmp.eq.f32.partialorder %v3895, 8.507059e+37
        %v3897 = vand.u32 %v3850, 2147483648
        %v3898 = vor.u32 1.1754944e-38, %v3897
        %v3899 = vsel %vm3896, %v3898, %v3894
        %v3900 = vmul.f32 1.0, %v3899
        %v3901 = vrcp.pop %v3851
        %v3902 = vmul.f32 %v3851, %v3901
        %v3903 = vsub.f32 1.0, %v3902
        %v3904 = vmul.f32 %v3901, %v3903
        %v3905 = vadd.f32 %v3901, %v3904
        %vm3906 = vweird.f32 %v3851
        %vm3907 = vweird.f32 %v3901
        %vm3908 = vmor %vm3906, %vm3907
        %v3909 = vsel %vm3908, %v3901, %v3905
        %v3910 = vand.u32 2147483647, %v3851
        %vm3911 = vcmp.eq.f32.partialorder %v3910, 8.507059e+37
        %v3912 = vand.u32 %v3851, 2147483648
        %v3913 = vor.u32 1.1754944e-38, %v3912
        %v3914 = vsel %vm3911, %v3913, %v3909
        %v3915 = vmul.f32 1.0, %v3914
        %v3916 = vrcp.pop %v3852
        %v3917 = vmul.f32 %v3852, %v3916
        %v3918 = vsub.f32 1.0, %v3917
        %v3919 = vmul.f32 %v3916, %v3918
        %v3920 = vadd.f32 %v3916, %v3919
        %vm3921 = vweird.f32 %v3852
        %vm3922 = vweird.f32 %v3916
        %vm3923 = vmor %vm3921, %vm3922
        %v3924 = vsel %vm3923, %v3916, %v3920
        %v3925 = vand.u32 2147483647, %v3852
        %vm3926 = vcmp.eq.f32.partialorder %v3925, 8.507059e+37
        %v3927 = vand.u32 %v3852, 2147483648
        %v3928 = vor.u32 1.1754944e-38, %v3927
        %v3929 = vsel %vm3926, %v3928, %v3924
        %v3930 = vmul.f32 1.0, %v3929
        %v3931 = vrcp.pop %v3853
        %v3932 = vmul.f32 %v3853, %v3931
        %v3933 = vsub.f32 1.0, %v3932
        %v3934 = vmul.f32 %v3931, %v3933
        %v3935 = vadd.f32 %v3931, %v3934
        %vm3936 = vweird.f32 %v3853
        %vm3937 = vweird.f32 %v3931
        %vm3938 = vmor %vm3936, %vm3937
        %v3939 = vsel %vm3938, %v3931, %v3935
        %v3940 = vand.u32 2147483647, %v3853
        %vm3941 = vcmp.eq.f32.partialorder %v3940, 8.507059e+37
        %v3942 = vand.u32 %v3853, 2147483648
        %v3943 = vor.u32 1.1754944e-38, %v3942
        %v3944 = vsel %vm3941, %v3943, %v3939
        %v3945 = vmul.f32 1.0, %v3944
        %v3946 = vrcp.pop %v3854
        %v3947 = vmul.f32 %v3854, %v3946
        %v3948 = vsub.f32 1.0, %v3947
        %v3949 = vmul.f32 %v3946, %v3948
        %v3950 = vadd.f32 %v3946, %v3949
        %vm3951 = vweird.f32 %v3854
        %vm3952 = vweird.f32 %v3946
        %vm3953 = vmor %vm3951, %vm3952
        %v3954 = vsel %vm3953, %v3946, %v3950
        %v3955 = vand.u32 2147483647, %v3854
        %vm3956 = vcmp.eq.f32.partialorder %v3955, 8.507059e+37
        %v3957 = vand.u32 %v3854, 2147483648
        %v3958 = vor.u32 1.1754944e-38, %v3957
        %v3959 = vsel %vm3956, %v3958, %v3954
        %v3960 = vmul.f32 1.0, %v3959
        %v3961 = vrcp.pop %v3855
        %v3962 = vmul.f32 %v3855, %v3961
        %v3963 = vsub.f32 1.0, %v3962
        %v3964 = vmul.f32 %v3961, %v3963
        %v3965 = vadd.f32 %v3961, %v3964
        %vm3966 = vweird.f32 %v3855
        %vm3967 = vweird.f32 %v3961
        %vm3968 = vmor %vm3966, %vm3967
        %v3969 = vsel %vm3968, %v3961, %v3965
        %v3970 = vand.u32 2147483647, %v3855
        %vm3971 = vcmp.eq.f32.partialorder %v3970, 8.507059e+37
        %v3972 = vand.u32 %v3855, 2147483648
        %v3973 = vor.u32 1.1754944e-38, %v3972
        %v3974 = vsel %vm3971, %v3973, %v3969
        %v3975 = vmul.f32 1.0, %v3974
        %v3976 = vmul.f32 %v3870, 1.0614054
        %v3977 = vmul.f32 %v3885, 1.0614054
        %v3978 = vmul.f32 %v3900, 1.0614054
        %v3979 = vmul.f32 %v3915, 1.0614054
        %v3980 = vmul.f32 %v3930, 1.0614054
        %v3981 = vmul.f32 %v3945, 1.0614054
        %v3982 = vmul.f32 %v3960, 1.0614054
        %v3983 = vmul.f32 %v3975, 1.0614054
        %v3984 = vadd.f32 %v3976, -1.4531521
        %v3985 = vadd.f32 %v3977, -1.4531521
        %v3986 = vadd.f32 %v3978, -1.4531521
        %v3987 = vadd.f32 %v3979, -1.4531521
        %v3988 = vadd.f32 %v3980, -1.4531521
        %v3989 = vadd.f32 %v3981, -1.4531521
        %v3990 = vadd.f32 %v3982, -1.4531521
        %v3991 = vadd.f32 %v3983, -1.4531521
        %v3992 = vmul.f32 %v3870, %v3984
        %v3993 = vmul.f32 %v3885, %v3985
        %v3994 = vmul.f32 %v3900, %v3986
        %v3995 = vmul.f32 %v3915, %v3987
        %v3996 = vmul.f32 %v3930, %v3988
        %v3997 = vmul.f32 %v3945, %v3989
        %v3998 = vmul.f32 %v3960, %v3990
        %v3999 = vmul.f32 %v3975, %v3991
        %v4000 = vadd.f32 %v3992, 1.4214138
        %v4001 = vadd.f32 %v3993, 1.4214138
        %v4002 = vadd.f32 %v3994, 1.4214138
        %v4003 = vadd.f32 %v3995, 1.4214138
        %v4004 = vadd.f32 %v3996, 1.4214138
        %v4005 = vadd.f32 %v3997, 1.4214138
        %v4006 = vadd.f32 %v3998, 1.4214138
        %v4007 = vadd.f32 %v3999, 1.4214138
        %v4008 = vmul.f32 %v3870, %v4000
        %v4009 = vmul.f32 %v3885, %v4001
        %v4010 = vmul.f32 %v3900, %v4002
        %v4011 = vmul.f32 %v3915, %v4003
        %v4012 = vmul.f32 %v3930, %v4004
        %v4013 = vmul.f32 %v3945, %v4005
        %v4014 = vmul.f32 %v3960, %v4006
        %v4015 = vmul.f32 %v3975, %v4007
        %v4016 = vadd.f32 %v4008, -0.28449672
        %v4017 = vadd.f32 %v4009, -0.28449672
        %v4018 = vadd.f32 %v4010, -0.28449672
        %v4019 = vadd.f32 %v4011, -0.28449672
        %v4020 = vadd.f32 %v4012, -0.28449672
        %v4021 = vadd.f32 %v4013, -0.28449672
        %v4022 = vadd.f32 %v4014, -0.28449672
        %v4023 = vadd.f32 %v4015, -0.28449672
        %v4024 = vmul.f32 %v3870, %v4016
        %v4025 = vmul.f32 %v3885, %v4017
        %v4026 = vmul.f32 %v3900, %v4018
        %v4027 = vmul.f32 %v3915, %v4019
        %v4028 = vmul.f32 %v3930, %v4020
        %v4029 = vmul.f32 %v3945, %v4021
        %v4030 = vmul.f32 %v3960, %v4022
        %v4031 = vmul.f32 %v3975, %v4023
        %v4032 = vadd.f32 %v4024, 0.2548296
        %v4033 = vadd.f32 %v4025, 0.2548296
        %v4034 = vadd.f32 %v4026, 0.2548296
        %v4035 = vadd.f32 %v4027, 0.2548296
        %v4036 = vadd.f32 %v4028, 0.2548296
        %v4037 = vadd.f32 %v4029, 0.2548296
        %v4038 = vadd.f32 %v4030, 0.2548296
        %v4039 = vadd.f32 %v4031, 0.2548296
        %v4040 = vmul.f32 %v3870, %v4032
        %v4041 = vmul.f32 %v3885, %v4033
        %v4042 = vmul.f32 %v3900, %v4034
        %v4043 = vmul.f32 %v3915, %v4035
        %v4044 = vmul.f32 %v3930, %v4036
        %v4045 = vmul.f32 %v3945, %v4037
        %v4046 = vmul.f32 %v3960, %v4038
        %v4047 = vmul.f32 %v3975, %v4039
        %v4048 = vmul.f32 %v3832, %v3832
        %v4049 = vmul.f32 %v3833, %v3833
        %v4050 = vmul.f32 %v3834, %v3834
        %v4051 = vmul.f32 %v3835, %v3835
        %v4052 = vmul.f32 %v3836, %v3836
        %v4053 = vmul.f32 %v3837, %v3837
        %v4054 = vmul.f32 %v3838, %v3838
        %v4055 = vmul.f32 %v3839, %v3839
        %v4056 = vsub.f32 0.0, %v4048
        %v4057 = vsub.f32 0.0, %v4049
        %v4058 = vsub.f32 0.0, %v4050
        %v4059 = vsub.f32 0.0, %v4051
        %v4060 = vsub.f32 0.0, %v4052
        %v4061 = vsub.f32 0.0, %v4053
        %v4062 = vsub.f32 0.0, %v4054
        %v4063 = vsub.f32 0.0, %v4055
        %v4064 = vmul.f32 %v4056, 1.442695
        %v4065 = vpow.pop %v4064
        %v4066 = vmul.f32 %v4057, 1.442695
        %v4067 = vpow.pop %v4066
        %v4068 = vmul.f32 %v4058, 1.442695
        %v4069 = vpow.pop %v4068
        %v4070 = vmul.f32 %v4059, 1.442695
        %v4071 = vpow.pop %v4070
        %v4072 = vmul.f32 %v4060, 1.442695
        %v4073 = vpow.pop %v4072
        %v4074 = vmul.f32 %v4061, 1.442695
        %v4075 = vpow.pop %v4074
        %v4076 = vmul.f32 %v4062, 1.442695
        %v4077 = vpow.pop %v4076
        %v4078 = vmul.f32 %v4063, 1.442695
        %v4079 = vpow.pop %v4078
        %v4080 = vmul.f32 %v4040, %v4065
        %v4081 = vmul.f32 %v4041, %v4067
        %v4082 = vmul.f32 %v4042, %v4069
        %v4083 = vmul.f32 %v4043, %v4071
        %v4084 = vmul.f32 %v4044, %v4073
        %v4085 = vmul.f32 %v4045, %v4075
        %v4086 = vmul.f32 %v4046, %v4077
        %v4087 = vmul.f32 %v4047, %v4079
        %v4088 = vsub.f32 1.0, %v4080
        %v4089 = vsub.f32 1.0, %v4081
        %v4090 = vsub.f32 1.0, %v4082
        %v4091 = vsub.f32 1.0, %v4083
        %v4092 = vsub.f32 1.0, %v4084
        %v4093 = vsub.f32 1.0, %v4085
        %v4094 = vsub.f32 1.0, %v4086
        %v4095 = vsub.f32 1.0, %v4087
        %vm4096 = vcmp.lt.f32.partialorder %v3824, 0.0
        %vm4097 = vcmp.lt.f32.partialorder %v3825, 0.0
        %vm4098 = vcmp.lt.f32.partialorder %v3826, 0.0
        %vm4099 = vcmp.lt.f32.partialorder %v3827, 0.0
        %vm4100 = vcmp.lt.f32.partialorder %v3828, 0.0
        %vm4101 = vcmp.lt.f32.partialorder %v3829, 0.0
        %vm4102 = vcmp.lt.f32.partialorder %v3830, 0.0
        %vm4103 = vcmp.lt.f32.partialorder %v3831, 0.0
        %v4104 = vsub.f32 0.0, %v4088
        %v4105 = vsub.f32 0.0, %v4089
        %v4106 = vsub.f32 0.0, %v4090
        %v4107 = vsub.f32 0.0, %v4091
        %v4108 = vsub.f32 0.0, %v4092
        %v4109 = vsub.f32 0.0, %v4093
        %v4110 = vsub.f32 0.0, %v4094
        %v4111 = vsub.f32 0.0, %v4095
        %v4112 = vsel %vm4096, %v4104, %v4088
        %v4113 = vsel %vm4097, %v4105, %v4089
        %v4114 = vsel %vm4098, %v4106, %v4090
        %v4115 = vsel %vm4099, %v4107, %v4091
        %v4116 = vsel %vm4100, %v4108, %v4092
        %v4117 = vsel %vm4101, %v4109, %v4093
        %v4118 = vsel %vm4102, %v4110, %v4094
        %v4119 = vsel %vm4103, %v4111, %v4095
        %v4120 = vadd.f32 %v4112, 1.0
        %v4121 = vadd.f32 %v4113, 1.0
        %v4122 = vadd.f32 %v4114, 1.0
        %v4123 = vadd.f32 %v4115, 1.0
        %v4124 = vadd.f32 %v4116, 1.0
        %v4125 = vadd.f32 %v4117, 1.0
        %v4126 = vadd.f32 %v4118, 1.0
        %v4127 = vadd.f32 %v4119, 1.0
        %v4128 = vmul.f32 %v3816, %v4120
        %v4129 = vmul.f32 %v3817, %v4121
        %v4130 = vmul.f32 %v3818, %v4122
        %v4131 = vmul.f32 %v3819, %v4123
        %v4132 = vmul.f32 %v3820, %v4124
        %v4133 = vmul.f32 %v3821, %v4125
        %v4134 = vmul.f32 %v3822, %v4126
        %v4135 = vmul.f32 %v3823, %v4127
        %v4136 = vmul.f32 %v3576, %v4128
        %v4137 = vmul.f32 %v3599, %v4129
        %v4138 = vmul.f32 %v3622, %v4130
        %v4139 = vmul.f32 %v3645, %v4131
        %v4140 = vmul.f32 %v3579, %v4132
        %v4141 = vmul.f32 %v3602, %v4133
        %v4142 = vmul.f32 %v3625, %v4134
        %v4143 = vmul.f32 %v3648, %v4135
        %v4144 = vld [vmem:[%s22] sm:$0xff]
        %v4145 = vld [vmem:[%s22 + $0x8] sm:$0xff]
        %v4146 = vld [vmem:[%s22 + $0x10] sm:$0xff]
        %v4147 = vld [vmem:[%s22 + $0x18] sm:$0xff]
        %v4148 = vld [vmem:[%s22 + $0x20] sm:$0xff]
        %v4149 = vld [vmem:[%s22 + $0x28] sm:$0xff]
        %v4150 = vld [vmem:[%s22 + $0x30] sm:$0xff]
        %v4151 = vld [vmem:[%s22 + $0x38] sm:$0xff]
        %v4152 = vld [vmem:[%s22 + $0x40] sm:$0xff]
        %v4153 = vld [vmem:[%s22 + $0x48] sm:$0xff]
        %v4154 = vld [vmem:[%s22 + $0x50] sm:$0xff]
        %v4155 = vld [vmem:[%s22 + $0x58] sm:$0xff]
        %v4156 = vld [vmem:[%s22 + $0x60] sm:$0xff]
        %v4157 = vld [vmem:[%s22 + $0x68] sm:$0xff]
        %v4158 = vld [vmem:[%s22 + $0x70] sm:$0xff]
        %v4159 = vld [vmem:[%s22 + $0x78] sm:$0xff]
        %v4160 = vld [vmem:[%s22 + $0x80] sm:$0xff]
        %v4161 = vld [vmem:[%s22 + $0x88] sm:$0xff]
        %v4162 = vld [vmem:[%s22 + $0x90] sm:$0xff]
        %v4163 = vld [vmem:[%s22 + $0x98] sm:$0xff]
        %v4164 = vld [vmem:[%s22 + $0xa0] sm:$0xff]
        %v4165 = vld [vmem:[%s22 + $0xa8] sm:$0xff]
        %v4166 = vld [vmem:[%s22 + $0xb0] sm:$0xff]
        %v4167 = vld [vmem:[%s22 + $0xb8] sm:$0xff]
        %v4168 = vld [vmem:[%s22 + $0xc0] sm:$0xff]
        %v4169 = vld [vmem:[%s22 + $0xc8] sm:$0xff]
        %v4170 = vld [vmem:[%s22 + $0xd0] sm:$0xff]
        %v4171 = vld [vmem:[%s22 + $0xd8] sm:$0xff]
        %v4172 = vld [vmem:[%s22 + $0xe0] sm:$0xff]
        %v4173 = vld [vmem:[%s22 + $0xe8] sm:$0xff]
        %v4174 = vld [vmem:[%s22 + $0xf0] sm:$0xff]
        %v4175 = vld [vmem:[%s22 + $0xf8] sm:$0xff]
        %v4176 = vld [vmem:[%s22 + $0x100] sm:$0xff]
        %v4177 = vld [vmem:[%s22 + $0x108] sm:$0xff]
        %v4178 = vld [vmem:[%s22 + $0x110] sm:$0xff]
        %v4179 = vld [vmem:[%s22 + $0x118] sm:$0xff]
        %v4180 = vld [vmem:[%s22 + $0x120] sm:$0xff]
        %v4181 = vld [vmem:[%s22 + $0x128] sm:$0xff]
        %v4182 = vld [vmem:[%s22 + $0x130] sm:$0xff]
        %v4183 = vld [vmem:[%s22 + $0x138] sm:$0xff]
        %v4184 = vld [vmem:[%s22 + $0x140] sm:$0xff]
        %v4185 = vld [vmem:[%s22 + $0x148] sm:$0xff]
        %v4186 = vld [vmem:[%s22 + $0x150] sm:$0xff]
        %v4187 = vld [vmem:[%s22 + $0x158] sm:$0xff]
        %v4188 = vld [vmem:[%s22 + $0x160] sm:$0xff]
        %v4189 = vld [vmem:[%s22 + $0x168] sm:$0xff]
        %v4190 = vld [vmem:[%s22 + $0x170] sm:$0xff]
        %v4191 = vld [vmem:[%s22 + $0x178] sm:$0xff]
        %v4192 = vld [vmem:[%s22 + $0x180] sm:$0xff]
        %v4193 = vld [vmem:[%s22 + $0x188] sm:$0xff]
        %v4194 = vld [vmem:[%s22 + $0x190] sm:$0xff]
        %v4195 = vld [vmem:[%s22 + $0x198] sm:$0xff]
        %v4196 = vld [vmem:[%s22 + $0x1a0] sm:$0xff]
        %v4197 = vld [vmem:[%s22 + $0x1a8] sm:$0xff]
        %v4198 = vld [vmem:[%s22 + $0x1b0] sm:$0xff]
        %v4199 = vld [vmem:[%s22 + $0x1b8] sm:$0xff]
        %v4200 = vld [vmem:[%s22 + $0x1c0] sm:$0xff]
        %v4201 = vld [vmem:[%s22 + $0x1c8] sm:$0xff]
        %v4202 = vld [vmem:[%s22 + $0x1d0] sm:$0xff]
        %v4203 = vld [vmem:[%s22 + $0x1d8] sm:$0xff]
        %v4204 = vld [vmem:[%s22 + $0x1e0] sm:$0xff]
        %v4205 = vld [vmem:[%s22 + $0x1e8] sm:$0xff]
        %v4206 = vld [vmem:[%s22 + $0x1f0] sm:$0xff]
        %v4207 = vld [vmem:[%s22 + $0x1f8] sm:$0xff]
        %v4208 = vld [vmem:[%s23] sm:$0x1]
        %v4210 = vperm.slane %v4208, 0
        %4212 = vmatpush.msra.mxu0 %v4159
        %4213 = vmatpush.msra.mxu0 %v4158
        %4214 = vmatpush.msra.mxu0 %v4157
        %4215 = vmatpush.msra.mxu0 %v4156
        %4216 = vmatpush.msra.mxu0 %v4155
        %4217 = vmatpush.msra.mxu0 %v4154
        %4218 = vmatpush.msra.mxu0 %v4153
        %4219 = vmatpush.msra.mxu0 %v4152
        %4220 = vmatpush.msra.mxu0 %v4151
        %4221 = vmatpush.msra.mxu0 %v4150
        %4222 = vmatpush.msra.mxu0 %v4149
        %4223 = vmatpush.msra.mxu0 %v4148
        %4224 = vmatpush.msra.mxu0 %v4147
        %4225 = vmatpush.msra.mxu0 %v4146
        %4226 = vmatpush.msra.mxu0 %v4145
        %4227 = vmatpush.msra.mxu0 %v4144
        %4228 = vmatmul.f32.gmra.mxu0 %v4136
        %v4229 = vpop.f32.mrf.mxu0
        %v4230 = vadd.f32 %v4210, %v4229
        %4231 = vmatmul.f32.gmra.mxu0 %v4140
        %v4232 = vpop.f32.mrf.mxu0
        %v4233 = vadd.f32 %v4210, %v4232
        %4234 = vdwg.mxu0
        %4235 = vmatpush.msra.mxu0 %v4175
        %4236 = vmatpush.msra.mxu0 %v4174
        %4237 = vmatpush.msra.mxu0 %v4173
        %4238 = vmatpush.msra.mxu0 %v4172
        %4239 = vmatpush.msra.mxu0 %v4171
        %4240 = vmatpush.msra.mxu0 %v4170
        %4241 = vmatpush.msra.mxu0 %v4169
        %4242 = vmatpush.msra.mxu0 %v4168
        %4243 = vmatpush.msra.mxu0 %v4167
        %4244 = vmatpush.msra.mxu0 %v4166
        %4245 = vmatpush.msra.mxu0 %v4165
        %4246 = vmatpush.msra.mxu0 %v4164
        %4247 = vmatpush.msra.mxu0 %v4163
        %4248 = vmatpush.msra.mxu0 %v4162
        %4249 = vmatpush.msra.mxu0 %v4161
        %4250 = vmatpush.msra.mxu0 %v4160
        %4251 = vmatmul.f32.gmra.mxu0 %v4137
        %v4252 = vpop.f32.mrf.mxu0
        %v4253 = vadd.f32 %v4230, %v4252
        %4254 = vmatmul.f32.gmra.mxu0 %v4141
        %v4255 = vpop.f32.mrf.mxu0
        %v4256 = vadd.f32 %v4233, %v4255
        %4257 = vdwg.mxu0
        %4258 = vmatpush.msra.mxu0 %v4191
        %4259 = vmatpush.msra.mxu0 %v4190
        %4260 = vmatpush.msra.mxu0 %v4189
        %4261 = vmatpush.msra.mxu0 %v4188
        %4262 = vmatpush.msra.mxu0 %v4187
        %4263 = vmatpush.msra.mxu0 %v4186
        %4264 = vmatpush.msra.mxu0 %v4185
        %4265 = vmatpush.msra.mxu0 %v4184
        %4266 = vmatpush.msra.mxu0 %v4183
        %4267 = vmatpush.msra.mxu0 %v4182
        %4268 = vmatpush.msra.mxu0 %v4181
        %4269 = vmatpush.msra.mxu0 %v4180
        %4270 = vmatpush.msra.mxu0 %v4179
        %4271 = vmatpush.msra.mxu0 %v4178
        %4272 = vmatpush.msra.mxu0 %v4177
        %4273 = vmatpush.msra.mxu0 %v4176
        %4274 = vmatmul.f32.gmra.mxu0 %v4138
        %v4275 = vpop.f32.mrf.mxu0
        %v4276 = vadd.f32 %v4253, %v4275
        %4277 = vmatmul.f32.gmra.mxu0 %v4142
        %v4278 = vpop.f32.mrf.mxu0
        %v4279 = vadd.f32 %v4256, %v4278
        %4280 = vdwg.mxu0
        %4281 = vmatpush.msra.mxu0 %v4207
        %4282 = vmatpush.msra.mxu0 %v4206
        %4283 = vmatpush.msra.mxu0 %v4205
        %4284 = vmatpush.msra.mxu0 %v4204
        %4285 = vmatpush.msra.mxu0 %v4203
        %4286 = vmatpush.msra.mxu0 %v4202
        %4287 = vmatpush.msra.mxu0 %v4201
        %4288 = vmatpush.msra.mxu0 %v4200
        %4289 = vmatpush.msra.mxu0 %v4199
        %4290 = vmatpush.msra.mxu0 %v4198
        %4291 = vmatpush.msra.mxu0 %v4197
        %4292 = vmatpush.msra.mxu0 %v4196
        %4293 = vmatpush.msra.mxu0 %v4195
        %4294 = vmatpush.msra.mxu0 %v4194
        %4295 = vmatpush.msra.mxu0 %v4193
        %4296 = vmatpush.msra.mxu0 %v4192
        %4297 = vmatmul.f32.gmra.mxu0 %v4139
        %v4298 = vpop.f32.mrf.mxu0
        %v4299 = vadd.f32 %v4276, %v4298
        %4300 = vmatmul.f32.gmra.mxu0 %v4143
        %v4301 = vpop.f32.mrf.mxu0
        %v4302 = vadd.f32 %v4279, %v4301
        %4303 = vdwg.mxu0
        %v4304 = vadd.f32 %v4299, %v3430
        %v4305 = vadd.f32 %v4302, %v3431
        %4306 = vst [vmem:[%s747] sm:$0xff] %v4304
        %4307 = vst [vmem:[%s747 + $0x8] sm:$0xff] %v4305
        %s4308 = sand.u32 %s560, 1
        %s4309 = scalar_lea.sflag [#allocation3], %s4308
        %s4310 = sand.u32 %s560, 1
        %s4311 = smul.addr %s4310, 16
        %s4312 = scalar_lea.vmem [#allocation2], %s4311
        // Predicated region
        $region117: #{vecset_encoder_forward.1} parent=115 // pred_check
          %p4313 = pneg %p570
        $region118: #{vecset_encoder_forward.1} parent=115 // pred_check_branch
          %4315 = sbr.rel (%p4313) target = $region120
        $region119: #{vecset_encoder_forward.1} parent=115 // pred_region
          %s4316 = smul.u32 2, %s38
          %4318 = vsyncadd %s4309, 0
          %s4319 = smul.addr %s4316, 8
          %s4320 = scalar_lea.hbm %s24, %s4319
          %s4321 = sshll.u32 %s4312, 4
          %s4322 = int_to_ptr.vmem [resolvable:$true] %s4321
          %s4323 = sshll.u32 %s4320, 4
          %s4324 = int_to_ptr.hbm [resolvable:$true] %s4323
          %4329 = dma.vmem_to_hbm [thread:$0]  %s4322, 256, %s4324, %s4309, 128, 128, 8
        $region120: #{vecset_encoder_forward.1} parent=115 // pred_fallthru
          _
      $region116: #{vecset_encoder_forward.1} parent=5 // pred_fallthru
        _
      %p4330 = scmp.le.s32.totalorder 2, %s33
      // Predicated region
      $region121: #{vecset_encoder_forward.1} parent=5 // pred_check
        %p4331 = pneg %p4330
      $region122: #{vecset_encoder_forward.1} parent=5 // pred_check_branch
        %4333 = sbr.rel (%p4331) target = $region124
      $region123: #{vecset_encoder_forward.1} parent=5 // pred_region
        %s4334 = ssub.s32 %s33, 2
        // Predicated region
        $region125: #{vecset_encoder_forward.1} parent=123 // pred_check
          %p4335 = pneg %p576
        $region126: #{vecset_encoder_forward.1} parent=123 // pred_check_branch
          %4337 = sbr.rel (%p4335) target = $region128
        $region127: #{vecset_encoder_forward.1} parent=123 // pred_region
          %s4338 = sand.u32 %s561, 1
          %s4339 = scalar_lea.sflag [#allocation3], %s4338
          %s4340 = sand.u32 %s561, 1
          %s4341 = smul.addr %s4340, 16
          %s4342 = scalar_lea.vmem [#allocation2], %s4341
          %4344 = dma.done %s4339, 256
        $region128: #{vecset_encoder_forward.1} parent=123 // pred_fallthru
          _
      $region124: #{vecset_encoder_forward.1} parent=5 // pred_fallthru
        _
    $region6: #{vecset_encoder_forward.1} parent=1 // loop_footer
      %s37 = sadd.s32 1, %s33
    $region7: #{vecset_encoder_forward.1} parent=1 // loop_footer_branch
      %32 = sbr.rel target = $region3
    $region8: #{vecset_encoder_forward.1} parent=1 // loop_exit
      _
    %4345 = vsyncpa [#allocation3], 1
    %s4346 = scalar_lea.sflag [#allocation3], 1
    %4347 = vsyncpa %s4346, 1

// kernel: vecset_encoder_forward.1
$region0: #{vecset_encoder_forward.1}
  #allocation0 [shape = 'u32[]', space=smem, size = 0x4, offset = 0x4, fixed_abs, tag = 'smem constant byte address 0x4 - core index']
  #allocation1 [shape = 'u32[72,128]{1,0:T(1,128)}', space=vmem, size = 0x9000, scoped, tag = 'internal scratch']
  %s0 = inlined_call_operand.vmem [shape: f32[32,3], index: 0, kind: input, shape index: {}]
  %s1 = inlined_call_operand.vmem [shape: f32[64,3], index: 1, kind: input, shape index: {}]
  %s2 = inlined_call_operand.vmem [shape: f32[3,24], index: 2, kind: input, shape index: {}]
  %s3 = inlined_call_operand.vmem [shape: f32[24,128], index: 3, kind: input, shape index: {}]
  %s4 = inlined_call_operand.vmem [shape: f32[24,128], index: 4, kind: input, shape index: {}]
  %s5 = inlined_call_operand.vmem [shape: f32[3,128], index: 5, kind: input, shape index: {}]
  %s6 = inlined_call_operand.vmem [shape: f32[1,128], index: 6, kind: input, shape index: {}]
  %s7 = inlined_call_operand.vmem [shape: f32[1,128], index: 7, kind: input, shape index: {}]
  %s8 = inlined_call_operand.vmem [shape: f32[1,128], index: 8, kind: input, shape index: {}]
  %s9 = inlined_call_operand.vmem [shape: f32[1,128], index: 9, kind: input, shape index: {}]
  %s10 = inlined_call_operand.vmem [shape: f32[1,128], index: 10, kind: input, shape index: {}]
  %s11 = inlined_call_operand.vmem [shape: f32[128,128], index: 11, kind: input, shape index: {}]
  %s12 = inlined_call_operand.vmem [shape: f32[128,128], index: 12, kind: input, shape index: {}]
  %s13 = inlined_call_operand.vmem [shape: f32[128,128], index: 13, kind: input, shape index: {}]
  %s14 = inlined_call_operand.vmem [shape: f32[128,128], index: 14, kind: input, shape index: {}]
  %s15 = inlined_call_operand.vmem [shape: f32[1,128], index: 15, kind: input, shape index: {}]
  %s16 = inlined_call_operand.vmem [shape: f32[1,128], index: 16, kind: input, shape index: {}]
  %s17 = inlined_call_operand.vmem [shape: f32[1,128], index: 17, kind: input, shape index: {}]
  %s18 = inlined_call_operand.vmem [shape: f32[128,512], index: 18, kind: input, shape index: {}]
  %s19 = inlined_call_operand.vmem [shape: f32[128,512], index: 19, kind: input, shape index: {}]
  %s20 = inlined_call_operand.vmem [shape: f32[1,512], index: 20, kind: input, shape index: {}]
  %s21 = inlined_call_operand.vmem [shape: f32[1,512], index: 21, kind: input, shape index: {}]
  %s22 = inlined_call_operand.vmem [shape: f32[512,128], index: 22, kind: input, shape index: {}]
  %s23 = inlined_call_operand.vmem [shape: f32[1,128], index: 23, kind: input, shape index: {}]
  %s24 = inlined_call_operand.hbm [shape: f32[32,128], index: 24, kind: output, shape index: {}]
  %s25 = sld [smem:[#allocation0]]
  $region129: #{vecset_encoder_forward.1} parent=0
    _
  %s27 = ssub.s32 1, %s25
  %s28 = scalar_select 0, %s27, %s25
  $region1: #{vecset_encoder_forward.1} parent=0
    #allocation2 [shape = 'u8[16384]{0}', space=vmem, size = 0x4000, scoped, tag = 'output window, operand 0']
    #allocation3 [shape = 's32[2]{0}', space=sflag, size = 0x8, scoped, tag = 'scoped memory for vecset_encoder_forward.1']
    %29 = vsyncpa [#allocation3], 0
    %s30 = scalar_lea.sflag [#allocation3], 1
    %31 = vsyncpa %s30, 0
    loop: start=0, step=1, limit=4
    $region2: #{vecset_encoder_forward.1} parent=1 // loop_pre_header
      _
    $region3: #{vecset_encoder_forward.1} parent=1 // loop_header
      %s33 = sphi 0, %s37
      %p34 = scmp.ge.s32.totalorder %s33, 4
      %s43 = sphi 0, %s45
      %s46 = sphi 0, %s43
      %s47 = sphi 0, %s46
      %s63 = sphi 0, %s47
      %s69 = sphi 0, %s71
      %s72 = sphi 0, %s69
      %s73 = sphi 0, %s72
      %s89 = sphi 0, %s73
      %s93 = sphi 0, %s93
      %s95 = sphi 0, %s93
      %s96 = sphi 0, %s95
      %s110 = sphi 0, %s96
      %s114 = sphi 0, %s114
      %s116 = sphi 0, %s114
      %s117 = sphi 0, %s116
      %s131 = sphi 0, %s117
      %s135 = sphi 0, %s135
      %s137 = sphi 0, %s135
      %s138 = sphi 0, %s137
      %s152 = sphi 0, %s138
      %s156 = sphi 0, %s156
      %s158 = sphi 0, %s156
      %s159 = sphi 0, %s158
      %s173 = sphi 0, %s159
      %s177 = sphi 0, %s177
      %s179 = sphi 0, %s177
      %s180 = sphi 0, %s179
      %s194 = sphi 0, %s180
      %s198 = sphi 0, %s198
      %s200 = sphi 0, %s198
      %s201 = sphi 0, %s200
      %s215 = sphi 0, %s201
      %s219 = sphi 0, %s219
      %s221 = sphi 0, %s219
      %s222 = sphi 0, %s221
      %s236 = sphi 0, %s222
      %s240 = sphi 0, %s240
      %s242 = sphi 0, %s240
      %s243 = sphi 0, %s242
      %s257 = sphi 0, %s243
      %s261 = sphi 0, %s261
      %s263 = sphi 0, %s261
      %s264 = sphi 0, %s263
      %s278 = sphi 0, %s264
      %s282 = sphi 0, %s282
      %s284 = sphi 0, %s282
      %s285 = sphi 0, %s284
      %s299 = sphi 0, %s285
      %s303 = sphi 0, %s303
      %s305 = sphi 0, %s303
      %s306 = sphi 0, %s305
      %s320 = sphi 0, %s306
      %s324 = sphi 0, %s324
      %s326 = sphi 0, %s324
      %s327 = sphi 0, %s326
      %s341 = sphi 0, %s327
      %s345 = sphi 0, %s345
      %s347 = sphi 0, %s345
      %s348 = sphi 0, %s347
      %s362 = sphi 0, %s348
      %s366 = sphi 0, %s366
      %s368 = sphi 0, %s366
      %s369 = sphi 0, %s368
      %s383 = sphi 0, %s369
      %s387 = sphi 0, %s387
      %s389 = sphi 0, %s387
      %s390 = sphi 0, %s389
      %s404 = sphi 0, %s390
      %s408 = sphi 0, %s408
      %s410 = sphi 0, %s408
      %s411 = sphi 0, %s410
      %s425 = sphi 0, %s411
      %s429 = sphi 0, %s429
      %s431 = sphi 0, %s429
      %s432 = sphi 0, %s431
      %s446 = sphi 0, %s432
      %s450 = sphi 0, %s450
      %s452 = sphi 0, %s450
      %s453 = sphi 0, %s452
      %s467 = sphi 0, %s453
      %s471 = sphi 0, %s471
      %s473 = sphi 0, %s471
      %s474 = sphi 0, %s473
      %s488 = sphi 0, %s474
      %s492 = sphi 0, %s492
      %s494 = sphi 0, %s492
      %s495 = sphi 0, %s494
      %s509 = sphi 0, %s495
      %s513 = sphi 0, %s513
      %s515 = sphi 0, %s513
      %s516 = sphi 0, %s515
      %s530 = sphi 0, %s516
      %s534 = sphi 0, %s534
      %s536 = sphi 0, %s534
      %s537 = sphi 0, %s536
      %s551 = sphi 0, %s537
      %s557 = sphi 0, %s559
      %s560 = sphi 0, %s557
      %s561 = sphi 0, %s560
      %s577 = sphi 0, %s561
    $region4: #{vecset_encoder_forward.1} parent=1 // loop_header_branch
      %36 = sbr.rel (%p34) target = $region8
    $region5: #{vecset_encoder_forward.1} parent=1 // loop_body
      %s38 = ssub.s32 %s33, 1
      %s39 = ssub.s32 %s33, 2
      %s40 = sadd.s32 %s33, 1
      %s41 = ssub.s32 %s33, %s40
      %p42 = scmp.eq.s32.totalorder %s41, 0
      %s44 = sadd.s32 %s43, 1
      %s45 = scalar_select %p42, %s43, %s44
      %p48 = pneg %p42
      %p49 = scmp.eq.s32.totalorder %s33, 1
      %p50 = por %p48, %p49
      %p51 = scmp.ne.s32.totalorder %s43, %s46
      %p52 = scmp.eq.s32.totalorder %s33, 0
      %p53 = por %p51, %p52
      %p54 = scmp.ne.s32.totalorder %s43, %s46
      %p55 = scmp.eq.s32.totalorder %s38, 1
      %p56 = por %p54, %p55
      %p57 = scmp.ne.s32.totalorder %s46, %s47
      %p58 = scmp.eq.s32.totalorder %s38, 0
      %p59 = por %p57, %p58
      %p60 = scmp.ne.s32.totalorder %s46, %s47
      %p61 = scmp.eq.s32.totalorder %s39, 1
      %p62 = por %p60, %p61
      %p64 = scmp.ne.s32.totalorder %s47, %s63
      %p65 = scmp.eq.s32.totalorder %s39, 0
      %p66 = por %p64, %p65
      %s67 = ssub.s32 %s33, %s40
      %p68 = scmp.eq.s32.totalorder %s67, 0
      %s70 = sadd.s32 %s69, 1
      %s71 = scalar_select %p68, %s69, %s70
      %p74 = pneg %p68
      %p75 = scmp.eq.s32.totalorder %s33, 1
      %p76 = por %p74, %p75
      %p77 = scmp.ne.s32.totalorder %s69, %s72
      %p78 = scmp.eq.s32.totalorder %s33, 0
      %p79 = por %p77, %p78
      %p80 = scmp.ne.s32.totalorder %s69, %s72
      %p81 = scmp.eq.s32.totalorder %s38, 1
      %p82 = por %p80, %p81
      %p83 = scmp.ne.s32.totalorder %s72, %s73
      %p84 = scmp.eq.s32.totalorder %s38, 0
      %p85 = por %p83, %p84
      %p86 = scmp.ne.s32.totalorder %s72, %s73
      %p87 = scmp.eq.s32.totalorder %s39, 1
      %p88 = por %p86, %p87
      %p90 = scmp.ne.s32.totalorder %s73, %s89
      %p91 = scmp.eq.s32.totalorder %s39, 0
      %p92 = por %p90, %p91
      %s94 = sadd.s32 %s93, 1
      %p97 = scmp.eq.s32.totalorder %s33, 1
      %p98 = scmp.ne.s32.totalorder %s93, %s95
      %p99 = scmp.eq.s32.totalorder %s33, 0
      %p100 = por %p98, %p99
      %p101 = scmp.ne.s32.totalorder %s93, %s95
      %p102 = scmp.eq.s32.totalorder %s38, 1
      %p103 = por %p101, %p102
      %p104 = scmp.ne.s32.totalorder %s95, %s96
      %p105 = scmp.eq.s32.totalorder %s38, 0
      %p106 = por %p104, %p105
      %p107 = scmp.ne.s32.totalorder %s95, %s96
      %p108 = scmp.eq.s32.totalorder %s39, 1
      %p109 = por %p107, %p108
      %p111 = scmp.ne.s32.totalorder %s96, %s110
      %p112 = scmp.eq.s32.totalorder %s39, 0
      %p113 = por %p111, %p112
      %s115 = sadd.s32 %s114, 1
      %p118 = scmp.eq.s32.totalorder %s33, 1
      %p119 = scmp.ne.s32.totalorder %s114, %s116
      %p120 = scmp.eq.s32.totalorder %s33, 0
      %p121 = por %p119, %p120
      %p122 = scmp.ne.s32.totalorder %s114, %s116
      %p123 = scmp.eq.s32.totalorder %s38, 1
      %p124 = por %p122, %p123
      %p125 = scmp.ne.s32.totalorder %s116, %s117
      %p126 = scmp.eq.s32.totalorder %s38, 0
      %p127 = por %p125, %p126
      %p128 = scmp.ne.s32.totalorder %s116, %s117
      %p129 = scmp.eq.s32.totalorder %s39, 1
      %p130 = por %p128, %p129
      %p132 = scmp.ne.s32.totalorder %s117, %s131
      %p133 = scmp.eq.s32.totalorder %s39, 0
      %p134 = por %p132, %p133
      %s136 = sadd.s32 %s135, 1
      %p139 = scmp.eq.s32.totalorder %s33, 1
      %p140 = scmp.ne.s32.totalorder %s135, %s137
      %p141 = scmp.eq.s32.totalorder %s33, 0
      %p142 = por %p140, %p141
      %p143 = scmp.ne.s32.totalorder %s135, %s137
      %p144 = scmp.eq.s32.totalorder %s38, 1
      %p145 = por %p143, %p144
      %p146 = scmp.ne.s32.totalorder %s137, %s138
      %p147 = scmp.eq.s32.totalorder %s38, 0
      %p148 = por %p146, %p147
      %p149 = scmp.ne.s32.totalorder %s137, %s138
      %p150 = scmp.eq.s32.totalorder %s39, 1
      %p151 = por %p149, %p150
      %p153 = scmp.ne.s32.totalorder %s138, %s152
      %p154 = scmp.eq.s32.totalorder %s39, 0
      %p155 = por %p153, %p154
      %s157 = sadd.s32 %s156, 1
      %p160 = scmp.eq.s32.totalorder %s33, 1
      %p161 = scmp.ne.s32.totalorder %s156, %s158
      %p162 = scmp.eq.s32.totalorder %s33, 0
      %p163 = por %p161, %p162
      %p164 = scmp.ne.s32.totalorder %s156, %s158
      %p165 = scmp.eq.s32.totalorder %s38, 1
      %p166 = por %p164, %p165
      %p167 = scmp.ne.s32.totalorder %s158, %s159
      %p168 = scmp.eq.s32.totalorder %s38, 0
      %p169 = por %p167, %p168
      %p170 = scmp.ne.s32.totalorder %s158, %s159
      %p171 = scmp.eq.s32.totalorder %s39, 1
      %p172 = por %p170, %p171
      %p174 = scmp.ne.s32.totalorder %s159, %s173
      %p175 = scmp.eq.s32.totalorder %s39, 0
      %p176 = por %p174, %p175
      %s178 = sadd.s32 %s177, 1
      %p181 = scmp.eq.s32.totalorder %s33, 1
      %p182 = scmp.ne.s32.totalorder %s177, %s179
      %p183 = scmp.eq.s32.totalorder %s33, 0
      %p184 = por %p182, %p183
      %p185 = scmp.ne.s32.totalorder %s177, %s179
      %p186 = scmp.eq.s32.totalorder %s38, 1
      %p187 = por %p185, %p186
      %p188 = scmp.ne.s32.totalorder %s179, %s180
      %p189 = scmp.eq.s32.totalorder %s38, 0
      %p190 = por %p188, %p189
      %p191 = scmp.ne.s32.totalorder %s179, %s180
      %p192 = scmp.eq.s32.totalorder %s39, 1
      %p193 = por %p191, %p192
      %p195 = scmp.ne.s32.totalorder %s180, %s194
      %p196 = scmp.eq.s32.totalorder %s39, 0
      %p197 = por %p195, %p196
      %s199 = sadd.s32 %s198, 1
      %p202 = scmp.eq.s32.totalorder %s33, 1
      %p203 = scmp.ne.s32.totalorder %s198, %s200
      %p204 = scmp.eq.s32.totalorder %s33, 0
      %p205 = por %p203, %p204
      %p206 = scmp.ne.s32.totalorder %s198, %s200
      %p207 = scmp.eq.s32.totalorder %s38, 1
      %p208 = por %p206, %p207
      %p209 = scmp.ne.s32.totalorder %s200, %s201
      %p210 = scmp.eq.s32.totalorder %s38, 0
      %p211 = por %p209, %p210
      %p212 = scmp.ne.s32.totalorder %s200, %s201
      %p213 = scmp.eq.s32.totalorder %s39, 1
      %p214 = por %p212, %p213
      %p216 = scmp.ne.s32.totalorder %s201, %s215
      %p217 = scmp.eq.s32.totalorder %s39, 0
      %p218 = por %p216, %p217
      %s220 = sadd.s32 %s219, 1
      %p223 = scmp.eq.s32.totalorder %s33, 1
      %p224 = scmp.ne.s32.totalorder %s219, %s221
      %p225 = scmp.eq.s32.totalorder %s33, 0
      %p226 = por %p224, %p225
      %p227 = scmp.ne.s32.totalorder %s219, %s221
      %p228 = scmp.eq.s32.totalorder %s38, 1
      %p229 = por %p227, %p228
      %p230 = scmp.ne.s32.totalorder %s221, %s222
      %p231 = scmp.eq.s32.totalorder %s38, 0
      %p232 = por %p230, %p231
      %p233 = scmp.ne.s32.totalorder %s221, %s222
      %p234 = scmp.eq.s32.totalorder %s39, 1
      %p235 = por %p233, %p234
      %p237 = scmp.ne.s32.totalorder %s222, %s236
      %p238 = scmp.eq.s32.totalorder %s39, 0
      %p239 = por %p237, %p238
      %s241 = sadd.s32 %s240, 1
      %p244 = scmp.eq.s32.totalorder %s33, 1
      %p245 = scmp.ne.s32.totalorder %s240, %s242
      %p246 = scmp.eq.s32.totalorder %s33, 0
      %p247 = por %p245, %p246
      %p248 = scmp.ne.s32.totalorder %s240, %s242
      %p249 = scmp.eq.s32.totalorder %s38, 1
      %p250 = por %p248, %p249
      %p251 = scmp.ne.s32.totalorder %s242, %s243
      %p252 = scmp.eq.s32.totalorder %s38, 0
      %p253 = por %p251, %p252
      %p254 = scmp.ne.s32.totalorder %s242, %s243
      %p255 = scmp.eq.s32.totalorder %s39, 1
      %p256 = por %p254, %p255
      %p258 = scmp.ne.s32.totalorder %s243, %s257
      %p259 = scmp.eq.s32.totalorder %s39, 0
      %p260 = por %p258, %p259
      %s262 = sadd.s32 %s261, 1
      %p265 = scmp.eq.s32.totalorder %s33, 1
      %p266 = scmp.ne.s32.totalorder %s261, %s263
      %p267 = scmp.eq.s32.totalorder %s33, 0
      %p268 = por %p266, %p267
      %p269 = scmp.ne.s32.totalorder %s261, %s263
      %p270 = scmp.eq.s32.totalorder %s38, 1
      %p271 = por %p269, %p270
      %p272 = scmp.ne.s32.totalorder %s263, %s264
      %p273 = scmp.eq.s32.totalorder %s38, 0
      %p274 = por %p272, %p273
      %p275 = scmp.ne.s32.totalorder %s263, %s264
      %p276 = scmp.eq.s32.totalorder %s39, 1
      %p277 = por %p275, %p276
      %p279 = scmp.ne.s32.totalorder %s264, %s278
      %p280 = scmp.eq.s32.totalorder %s39, 0
      %p281 = por %p279, %p280
      %s283 = sadd.s32 %s282, 1
      %p286 = scmp.eq.s32.totalorder %s33, 1
      %p287 = scmp.ne.s32.totalorder %s282, %s284
      %p288 = scmp.eq.s32.totalorder %s33, 0
      %p289 = por %p287, %p288
      %p290 = scmp.ne.s32.totalorder %s282, %s284
      %p291 = scmp.eq.s32.totalorder %s38, 1
      %p292 = por %p290, %p291
      %p293 = scmp.ne.s32.totalorder %s284, %s285
      %p294 = scmp.eq.s32.totalorder %s38, 0
      %p295 = por %p293, %p294
      %p296 = scmp.ne.s32.totalorder %s284, %s285
      %p297 = scmp.eq.s32.totalorder %s39, 1
      %p298 = por %p296, %p297
      %p300 = scmp.ne.s32.totalorder %s285, %s299
      %p301 = scmp.eq.s32.totalorder %s39, 0
      %p302 = por %p300, %p301
      %s304 = sadd.s32 %s303, 1
      %p307 = scmp.eq.s32.totalorder %s33, 1
      %p308 = scmp.ne.s32.totalorder %s303, %s305
      %p309 = scmp.eq.s32.totalorder %s33, 0
      %p310 = por %p308, %p309
      %p311 = scmp.ne.s32.totalorder %s303, %s305
      %p312 = scmp.eq.s32.totalorder %s38, 1
      %p313 = por %p311, %p312
      %p314 = scmp.ne.s32.totalorder %s305, %s306
      %p315 = scmp.eq.s32.totalorder %s38, 0
      %p316 = por %p314, %p315
      %p317 = scmp.ne.s32.totalorder %s305, %s306
      %p318 = scmp.eq.s32.totalorder %s39, 1
      %p319 = por %p317, %p318
      %p321 = scmp.ne.s32.totalorder %s306, %s320
      %p322 = scmp.eq.s32.totalorder %s39, 0
      %p323 = por %p321, %p322
      %s325 = sadd.s32 %s324, 1
      %p328 = scmp.eq.s32.totalorder %s33, 1
      %p329 = scmp.ne.s32.totalorder %s324, %s326
      %p330 = scmp.eq.s32.totalorder %s33, 0
      %p331 = por %p329, %p330
      %p332 = scmp.ne.s32.totalorder %s324, %s326
      %p333 = scmp.eq.s32.totalorder %s38, 1
      %p334 = por %p332, %p333
      %p335 = scmp.ne.s32.totalorder %s326, %s327
      %p336 = scmp.eq.s32.totalorder %s38, 0
      %p337 = por %p335, %p336
      %p338 = scmp.ne.s32.totalorder %s326, %s327
      %p339 = scmp.eq.s32.totalorder %s39, 1
      %p340 = por %p338, %p339
      %p342 = scmp.ne.s32.totalorder %s327, %s341
      %p343 = scmp.eq.s32.totalorder %s39, 0
      %p344 = por %p342, %p343
      %s346 = sadd.s32 %s345, 1
      %p349 = scmp.eq.s32.totalorder %s33, 1
      %p350 = scmp.ne.s32.totalorder %s345, %s347
      %p351 = scmp.eq.s32.totalorder %s33, 0
      %p352 = por %p350, %p351
      %p353 = scmp.ne.s32.totalorder %s345, %s347
      %p354 = scmp.eq.s32.totalorder %s38, 1
      %p355 = por %p353, %p354
      %p356 = scmp.ne.s32.totalorder %s347, %s348
      %p357 = scmp.eq.s32.totalorder %s38, 0
      %p358 = por %p356, %p357
      %p359 = scmp.ne.s32.totalorder %s347, %s348
      %p360 = scmp.eq.s32.totalorder %s39, 1
      %p361 = por %p359, %p360
      %p363 = scmp.ne.s32.totalorder %s348, %s362
      %p364 = scmp.eq.s32.totalorder %s39, 0
      %p365 = por %p363, %p364
      %s367 = sadd.s32 %s366, 1
      %p370 = scmp.eq.s32.totalorder %s33, 1
      %p371 = scmp.ne.s32.totalorder %s366, %s368
      %p372 = scmp.eq.s32.totalorder %s33, 0
      %p373 = por %p371, %p372
      %p374 = scmp.ne.s32.totalorder %s366, %s368
      %p375 = scmp.eq.s32.totalorder %s38, 1
      %p376 = por %p374, %p375
      %p377 = scmp.ne.s32.totalorder %s368, %s369
      %p378 = scmp.eq.s32.totalorder %s38, 0
      %p379 = por %p377, %p378
      %p380 = scmp.ne.s32.totalorder %s368, %s369
      %p381 = scmp.eq.s32.totalorder %s39, 1
      %p382 = por %p380, %p381
      %p384 = scmp.ne.s32.totalorder %s369, %s383
      %p385 = scmp.eq.s32.totalorder %s39, 0
      %p386 = por %p384, %p385
      %s388 = sadd.s32 %s387, 1
      %p391 = scmp.eq.s32.totalorder %s33, 1
      %p392 = scmp.ne.s32.totalorder %s387, %s389
      %p393 = scmp.eq.s32.totalorder %s33, 0
      %p394 = por %p392, %p393
      %p395 = scmp.ne.s32.totalorder %s387, %s389
      %p396 = scmp.eq.s32.totalorder %s38, 1
      %p397 = por %p395, %p396
      %p398 = scmp.ne.s32.totalorder %s389, %s390
      %p399 = scmp.eq.s32.totalorder %s38, 0
      %p400 = por %p398, %p399
      %p401 = scmp.ne.s32.totalorder %s389, %s390
      %p402 = scmp.eq.s32.totalorder %s39, 1
      %p403 = por %p401, %p402
      %p405 = scmp.ne.s32.totalorder %s390, %s404
      %p406 = scmp.eq.s32.totalorder %s39, 0
      %p407 = por %p405, %p406
      %s409 = sadd.s32 %s408, 1
      %p412 = scmp.eq.s32.totalorder %s33, 1
      %p413 = scmp.ne.s32.totalorder %s408, %s410
      %p414 = scmp.eq.s32.totalorder %s33, 0
      %p415 = por %p413, %p414
      %p416 = scmp.ne.s32.totalorder %s408, %s410
      %p417 = scmp.eq.s32.totalorder %s38, 1
      %p418 = por %p416, %p417
      %p419 = scmp.ne.s32.totalorder %s410, %s411
      %p420 = scmp.eq.s32.totalorder %s38, 0
      %p421 = por %p419, %p420
      %p422 = scmp.ne.s32.totalorder %s410, %s411
      %p423 = scmp.eq.s32.totalorder %s39, 1
      %p424 = por %p422, %p423
      %p426 = scmp.ne.s32.totalorder %s411, %s425
      %p427 = scmp.eq.s32.totalorder %s39, 0
      %p428 = por %p426, %p427
      %s430 = sadd.s32 %s429, 1
      %p433 = scmp.eq.s32.totalorder %s33, 1
      %p434 = scmp.ne.s32.totalorder %s429, %s431
      %p435 = scmp.eq.s32.totalorder %s33, 0
      %p436 = por %p434, %p435
      %p437 = scmp.ne.s32.totalorder %s429, %s431
      %p438 = scmp.eq.s32.totalorder %s38, 1
      %p439 = por %p437, %p438
      %p440 = scmp.ne.s32.totalorder %s431, %s432
      %p441 = scmp.eq.s32.totalorder %s38, 0
      %p442 = por %p440, %p441
      %p443 = scmp.ne.s32.totalorder %s431, %s432
      %p444 = scmp.eq.s32.totalorder %s39, 1
      %p445 = por %p443, %p444
      %p447 = scmp.ne.s32.totalorder %s432, %s446
      %p448 = scmp.eq.s32.totalorder %s39, 0
      %p449 = por %p447, %p448
      %s451 = sadd.s32 %s450, 1
      %p454 = scmp.eq.s32.totalorder %s33, 1
      %p455 = scmp.ne.s32.totalorder %s450, %s452
      %p456 = scmp.eq.s32.totalorder %s33, 0
      %p457 = por %p455, %p456
      %p458 = scmp.ne.s32.totalorder %s450, %s452
      %p459 = scmp.eq.s32.totalorder %s38, 1
      %p460 = por %p458, %p459
      %p461 = scmp.ne.s32.totalorder %s452, %s453
      %p462 = scmp.eq.s32.totalorder %s38, 0
      %p463 = por %p461, %p462
      %p464 = scmp.ne.s32.totalorder %s452, %s453
      %p465 = scmp.eq.s32.totalorder %s39, 1
      %p466 = por %p464, %p465
      %p468 = scmp.ne.s32.totalorder %s453, %s467
      %p469 = scmp.eq.s32.totalorder %s39, 0
      %p470 = por %p468, %p469
      %s472 = sadd.s32 %s471, 1
      %p475 = scmp.eq.s32.totalorder %s33, 1
      %p476 = scmp.ne.s32.totalorder %s471, %s473
      %p477 = scmp.eq.s32.totalorder %s33, 0
      %p478 = por %p476, %p477
      %p479 = scmp.ne.s32.totalorder %s471, %s473
      %p480 = scmp.eq.s32.totalorder %s38, 1
      %p481 = por %p479, %p480
      %p482 = scmp.ne.s32.totalorder %s473, %s474
      %p483 = scmp.eq.s32.totalorder %s38, 0
      %p484 = por %p482, %p483
      %p485 = scmp.ne.s32.totalorder %s473, %s474
      %p486 = scmp.eq.s32.totalorder %s39, 1
      %p487 = por %p485, %p486
      %p489 = scmp.ne.s32.totalorder %s474, %s488
      %p490 = scmp.eq.s32.totalorder %s39, 0
      %p491 = por %p489, %p490
      %s493 = sadd.s32 %s492, 1
      %p496 = scmp.eq.s32.totalorder %s33, 1
      %p497 = scmp.ne.s32.totalorder %s492, %s494
      %p498 = scmp.eq.s32.totalorder %s33, 0
      %p499 = por %p497, %p498
      %p500 = scmp.ne.s32.totalorder %s492, %s494
      %p501 = scmp.eq.s32.totalorder %s38, 1
      %p502 = por %p500, %p501
      %p503 = scmp.ne.s32.totalorder %s494, %s495
      %p504 = scmp.eq.s32.totalorder %s38, 0
      %p505 = por %p503, %p504
      %p506 = scmp.ne.s32.totalorder %s494, %s495
      %p507 = scmp.eq.s32.totalorder %s39, 1
      %p508 = por %p506, %p507
      %p510 = scmp.ne.s32.totalorder %s495, %s509
      %p511 = scmp.eq.s32.totalorder %s39, 0
      %p512 = por %p510, %p511
      %s514 = sadd.s32 %s513, 1
      %p517 = scmp.eq.s32.totalorder %s33, 1
      %p518 = scmp.ne.s32.totalorder %s513, %s515
      %p519 = scmp.eq.s32.totalorder %s33, 0
      %p520 = por %p518, %p519
      %p521 = scmp.ne.s32.totalorder %s513, %s515
      %p522 = scmp.eq.s32.totalorder %s38, 1
      %p523 = por %p521, %p522
      %p524 = scmp.ne.s32.totalorder %s515, %s516
      %p525 = scmp.eq.s32.totalorder %s38, 0
      %p526 = por %p524, %p525
      %p527 = scmp.ne.s32.totalorder %s515, %s516
      %p528 = scmp.eq.s32.totalorder %s39, 1
      %p529 = por %p527, %p528
      %p531 = scmp.ne.s32.totalorder %s516, %s530
      %p532 = scmp.eq.s32.totalorder %s39, 0
      %p533 = por %p531, %p532
      %s535 = sadd.s32 %s534, 1
      %p538 = scmp.eq.s32.totalorder %s33, 1
      %p539 = scmp.ne.s32.totalorder %s534, %s536
      %p540 = scmp.eq.s32.totalorder %s33, 0
      %p541 = por %p539, %p540
      %p542 = scmp.ne.s32.totalorder %s534, %s536
      %p543 = scmp.eq.s32.totalorder %s38, 1
      %p544 = por %p542, %p543
      %p545 = scmp.ne.s32.totalorder %s536, %s537
      %p546 = scmp.eq.s32.totalorder %s38, 0
      %p547 = por %p545, %p546
      %p548 = scmp.ne.s32.totalorder %s536, %s537
      %p549 = scmp.eq.s32.totalorder %s39, 1
      %p550 = por %p548, %p549
      %p552 = scmp.ne.s32.totalorder %s537, %s551
      %p553 = scmp.eq.s32.totalorder %s39, 0
      %p554 = por %p552, %p553
      %s555 = ssub.s32 %s33, %s40
      %p556 = scmp.eq.s32.totalorder %s555, 0
      %s558 = sadd.s32 %s557, 1
      %s559 = scalar_select %p556, %s557, %s558
      %p562 = pneg %p556
      %p563 = scmp.eq.s32.totalorder %s33, 1
      %p564 = por %p562, %p563
      %p565 = scmp.ne.s32.totalorder %s557, %s560
      %p566 = scmp.eq.s32.totalorder %s33, 0
      %p567 = por %p565, %p566
      %p568 = scmp.ne.s32.totalorder %s557, %s560
      %p569 = scmp.eq.s32.totalorder %s38, 1
      %p570 = por %p568, %p569
      %p571 = scmp.ne.s32.totalorder %s560, %s561
      %p572 = scmp.eq.s32.totalorder %s38, 0
      %p573 = por %p571, %p572
      %p574 = scmp.ne.s32.totalorder %s560, %s561
      %p575 = scmp.eq.s32.totalorder %s39, 1
      %p576 = por %p574, %p575
      %p578 = scmp.ne.s32.totalorder %s561, %s577
      %p579 = scmp.eq.s32.totalorder %s39, 0
      %p580 = por %p578, %p579
      %p581 = scmp.le.s32.totalorder 1, %s33
      %p582 = scmp.lt.s32.totalorder %s33, 3
      %p583 = pnand %p581, %p582
      %p584 = pneg %p583
      // Predicated region
      $region9: #{vecset_encoder_forward.1} parent=5 // pred_check
        _
      $region10: #{vecset_encoder_forward.1} parent=5 // pred_check_branch
        %586 = sbr.rel (%p583) target = $region12
      $region11: #{vecset_encoder_forward.1} parent=5 // pred_region
        %s587 = ssub.s32 %s33, 1
        // Predicated region
        $region13: #{vecset_encoder_forward.1} parent=11 // pred_check
          %p588 = pneg %p106
        $region14: #{vecset_encoder_forward.1} parent=11 // pred_check_branch
          %590 = sbr.rel (%p588) target = $region16
        $region15: #{vecset_encoder_forward.1} parent=11 // pred_region
          _
        $region16: #{vecset_encoder_forward.1} parent=11 // pred_fallthru
          _
        // Predicated region
        $region17: #{vecset_encoder_forward.1} parent=11 // pred_check
          %p591 = pneg %p127
        $region18: #{vecset_encoder_forward.1} parent=11 // pred_check_branch
          %593 = sbr.rel (%p591) target = $region20
        $region19: #{vecset_encoder_forward.1} parent=11 // pred_region
          _
        $region20: #{vecset_encoder_forward.1} parent=11 // pred_fallthru
          _
        // Predicated region
        $region21: #{vecset_encoder_forward.1} parent=11 // pred_check
          %p594 = pneg %p148
        $region22: #{vecset_encoder_forward.1} parent=11 // pred_check_branch
          %596 = sbr.rel (%p594) target = $region24
        $region23: #{vecset_encoder_forward.1} parent=11 // pred_region
          _
        $region24: #{vecset_encoder_forward.1} parent=11 // pred_fallthru
          _
        // Predicated region
        $region25: #{vecset_encoder_forward.1} parent=11 // pred_check
          %p597 = pneg %p169
        $region26: #{vecset_encoder_forward.1} parent=11 // pred_check_branch
          %599 = sbr.rel (%p597) target = $region28
        $region27: #{vecset_encoder_forward.1} parent=11 // pred_region
          _
        $region28: #{vecset_encoder_forward.1} parent=11 // pred_fallthru
          _
        // Predicated region
        $region29: #{vecset_encoder_forward.1} parent=11 // pred_check
          %p600 = pneg %p190
        $region30: #{vecset_encoder_forward.1} parent=11 // pred_check_branch
          %602 = sbr.rel (%p600) target = $region32
        $region31: #{vecset_encoder_forward.1} parent=11 // pred_region
          _
        $region32: #{vecset_encoder_forward.1} parent=11 // pred_fallthru
          _
        // Predicated region
        $region33: #{vecset_encoder_forward.1} parent=11 // pred_check
          %p603 = pneg %p211
        $region34: #{vecset_encoder_forward.1} parent=11 // pred_check_branch
          %605 = sbr.rel (%p603) target = $region36
        $region35: #{vecset_encoder_forward.1} parent=11 // pred_region
          _
        $region36: #{vecset_encoder_forward.1} parent=11 // pred_fallthru
          _
        // Predicated region
        $region37: #{vecset_encoder_forward.1} parent=11 // pred_check
          %p606 = pneg %p232
        $region38: #{vecset_encoder_forward.1} parent=11 // pred_check_branch
          %608 = sbr.rel (%p606) target = $region40
        $region39: #{vecset_encoder_forward.1} parent=11 // pred_region
          _
        $region40: #{vecset_encoder_forward.1} parent=11 // pred_fallthru
          _
        // Predicated region
        $region41: #{vecset_encoder_forward.1} parent=11 // pred_check
          %p609 = pneg %p253
        $region42: #{vecset_encoder_forward.1} parent=11 // pred_check_branch
          %611 = sbr.rel (%p609) target = $region44
        $region43: #{vecset_encoder_forward.1} parent=11 // pred_region
          _
        $region44: #{vecset_encoder_forward.1} parent=11 // pred_fallthru
          _
        // Predicated region
        $region45: #{vecset_encoder_forward.1} parent=11 // pred_check
          %p612 = pneg %p274
        $region46: #{vecset_encoder_forward.1} parent=11 // pred_check_branch
          %614 = sbr.rel (%p612) target = $region48
        $region47: #{vecset_encoder_forward.1} parent=11 // pred_region
          _
        $region48: #{vecset_encoder_forward.1} parent=11 // pred_fallthru
          _
        // Predicated region
        $region49: #{vecset_encoder_forward.1} parent=11 // pred_check
          %p615 = pneg %p295
        $region50: #{vecset_encoder_forward.1} parent=11 // pred_check_branch
          %617 = sbr.rel (%p615) target = $region52
        $region51: #{vecset_encoder_forward.1} parent=11 // pred_region
          _
        $region52: #{vecset_encoder_forward.1} parent=11 // pred_fallthru
          _
        // Predicated region
        $region53: #{vecset_encoder_forward.1} parent=11 // pred_check
          %p618 = pneg %p316
        $region54: #{vecset_encoder_forward.1} parent=11 // pred_check_branch
          %620 = sbr.rel (%p618) target = $region56
        $region55: #{vecset_encoder_forward.1} parent=11 // pred_region
          _
        $region56: #{vecset_encoder_forward.1} parent=11 // pred_fallthru
          _
        // Predicated region
        $region57: #{vecset_encoder_forward.1} parent=11 // pred_check
          %p621 = pneg %p337
        $region58: #{vecset_encoder_forward.1} parent=11 // pred_check_branch
          %623 = sbr.rel (%p621) target = $region60
        $region59: #{vecset_encoder_forward.1} parent=11 // pred_region
          _
        $region60: #{vecset_encoder_forward.1} parent=11 // pred_fallthru
          _
        // Predicated region
        $region61: #{vecset_encoder_forward.1} parent=11 // pred_check
          %p624 = pneg %p358
        $region62: #{vecset_encoder_forward.1} parent=11 // pred_check_branch
          %626 = sbr.rel (%p624) target = $region64
        $region63: #{vecset_encoder_forward.1} parent=11 // pred_region
          _
        $region64: #{vecset_encoder_forward.1} parent=11 // pred_fallthru
          _
        // Predicated region
        $region65: #{vecset_encoder_forward.1} parent=11 // pred_check
          %p627 = pneg %p379
        $region66: #{vecset_encoder_forward.1} parent=11 // pred_check_branch
          %629 = sbr.rel (%p627) target = $region68
        $region67: #{vecset_encoder_forward.1} parent=11 // pred_region
          _
        $region68: #{vecset_encoder_forward.1} parent=11 // pred_fallthru
          _
        // Predicated region
        $region69: #{vecset_encoder_forward.1} parent=11 // pred_check
          %p630 = pneg %p400
        $region70: #{vecset_encoder_forward.1} parent=11 // pred_check_branch
          %632 = sbr.rel (%p630) target = $region72
        $region71: #{vecset_encoder_forward.1} parent=11 // pred_region
          _
        $region72: #{vecset_encoder_forward.1} parent=11 // pred_fallthru
          _
        // Predicated region
        $region73: #{vecset_encoder_forward.1} parent=11 // pred_check
          %p633 = pneg %p421
        $region74: #{vecset_encoder_forward.1} parent=11 // pred_check_branch
          %635 = sbr.rel (%p633) target = $region76
        $region75: #{vecset_encoder_forward.1} parent=11 // pred_region
          _
        $region76: #{vecset_encoder_forward.1} parent=11 // pred_fallthru
          _
        // Predicated region
        $region77: #{vecset_encoder_forward.1} parent=11 // pred_check
          %p636 = pneg %p442
        $region78: #{vecset_encoder_forward.1} parent=11 // pred_check_branch
          %638 = sbr.rel (%p636) target = $region80
        $region79: #{vecset_encoder_forward.1} parent=11 // pred_region
          _
        $region80: #{vecset_encoder_forward.1} parent=11 // pred_fallthru
          _
        // Predicated region
        $region81: #{vecset_encoder_forward.1} parent=11 // pred_check
          %p639 = pneg %p463
        $region82: #{vecset_encoder_forward.1} parent=11 // pred_check_branch
          %641 = sbr.rel (%p639) target = $region84
        $region83: #{vecset_encoder_forward.1} parent=11 // pred_region
          _
        $region84: #{vecset_encoder_forward.1} parent=11 // pred_fallthru
          _
        // Predicated region
        $region85: #{vecset_encoder_forward.1} parent=11 // pred_check
          %p642 = pneg %p484
        $region86: #{vecset_encoder_forward.1} parent=11 // pred_check_branch
          %644 = sbr.rel (%p642) target = $region88
        $region87: #{vecset_encoder_forward.1} parent=11 // pred_region
          _
        $region88: #{vecset_encoder_forward.1} parent=11 // pred_fallthru
          _
        // Predicated region
        $region89: #{vecset_encoder_forward.1} parent=11 // pred_check
          %p645 = pneg %p505
        $region90: #{vecset_encoder_forward.1} parent=11 // pred_check_branch
          %647 = sbr.rel (%p645) target = $region92
        $region91: #{vecset_encoder_forward.1} parent=11 // pred_region
          _
        $region92: #{vecset_encoder_forward.1} parent=11 // pred_fallthru
          _
        // Predicated region
        $region93: #{vecset_encoder_forward.1} parent=11 // pred_check
          %p648 = pneg %p526
        $region94: #{vecset_encoder_forward.1} parent=11 // pred_check_branch
          %650 = sbr.rel (%p648) target = $region96
        $region95: #{vecset_encoder_forward.1} parent=11 // pred_region
          _
        $region96: #{vecset_encoder_forward.1} parent=11 // pred_fallthru
          _
        // Predicated region
        $region97: #{vecset_encoder_forward.1} parent=11 // pred_check
          %p651 = pneg %p547
        $region98: #{vecset_encoder_forward.1} parent=11 // pred_check_branch
          %653 = sbr.rel (%p651) target = $region100
        $region99: #{vecset_encoder_forward.1} parent=11 // pred_region
          _
        $region100: #{vecset_encoder_forward.1} parent=11 // pred_fallthru
          _
      $region12: #{vecset_encoder_forward.1} parent=5 // pred_fallthru
        _
      %p654 = scmp.lt.s32.totalorder %s33, 2
      // Predicated region
      $region101: #{vecset_encoder_forward.1} parent=5 // pred_check
        %p655 = pneg %p654
      $region102: #{vecset_encoder_forward.1} parent=5 // pred_check_branch
        %657 = sbr.rel (%p655) target = $region104
      $region103: #{vecset_encoder_forward.1} parent=5 // pred_region
        // Predicated region
        $region105: #{vecset_encoder_forward.1} parent=103 // pred_check
          %p658 = pneg %p53
        $region106: #{vecset_encoder_forward.1} parent=103 // pred_check_branch
          %660 = sbr.rel (%p658) target = $region108
        $region107: #{vecset_encoder_forward.1} parent=103 // pred_region
          %s661 = smul.u32 2, %s33
          %p662 = scmp.lt.s32.totalorder %s661, 3
          %s663 = scalar_select %p662, %s661, 3
          %s664 = smul.addr %s663, 8
          %s665 = scalar_lea.vmem %s0, %s664
          %s666 = smul.u32 2, %s33
        $region108: #{vecset_encoder_forward.1} parent=103 // pred_fallthru
          _
        // Predicated region
        $region109: #{vecset_encoder_forward.1} parent=103 // pred_check
          %p667 = pneg %p79
        $region110: #{vecset_encoder_forward.1} parent=103 // pred_check_branch
          %669 = sbr.rel (%p667) target = $region112
        $region111: #{vecset_encoder_forward.1} parent=103 // pred_region
          %s670 = smul.u32 4, %s33
          %p671 = scmp.lt.s32.totalorder %s670, 7
          %s672 = scalar_select %p671, %s670, 7
          %s673 = smul.addr %s672, 8
          %s674 = scalar_lea.vmem %s1, %s673
          %s675 = smul.u32 4, %s33
        $region112: #{vecset_encoder_forward.1} parent=103 // pred_fallthru
          _
      $region104: #{vecset_encoder_forward.1} parent=5 // pred_fallthru
        _
      %p676 = scmp.le.s32.totalorder 1, %s33
      %p677 = scmp.lt.s32.totalorder %s33, 3
      %p678 = pnand %p676, %p677
      %p679 = pneg %p678
      // Predicated region
      $region113: #{vecset_encoder_forward.1} parent=5 // pred_check
        _
      $region114: #{vecset_encoder_forward.1} parent=5 // pred_check_branch
        %681 = sbr.rel (%p678) target = $region116
      $region115: #{vecset_encoder_forward.1} parent=5 // pred_region
        %s682 = ssub.s32 %s33, 1
        %s683 = smul.u32 2, %s38
        %p684 = scmp.lt.s32.totalorder %s683, 3
        %s685 = scalar_select %p684, %s683, 3
        %s686 = smul.addr %s685, 8
        %s687 = scalar_lea.vmem %s0, %s686
        %p688 = pneg %p59
        %p689 = pneg %p56
        %s690 = smul.u32 4, %s38
        %p691 = scmp.lt.s32.totalorder %s690, 7
        %s692 = scalar_select %p691, %s690, 7
        %s693 = smul.addr %s692, 8
        %s694 = scalar_lea.vmem %s1, %s693
        %p695 = pneg %p85
        %p696 = pneg %p82
        %p697 = pneg %p106
        %p698 = pneg %p103
        %p699 = pneg %p127
        %p700 = pneg %p124
        %p701 = pneg %p148
        %p702 = pneg %p145
        %p703 = pneg %p169
        %p704 = pneg %p166
        %p705 = pneg %p190
        %p706 = pneg %p187
        %p707 = pneg %p211
        %p708 = pneg %p208
        %p709 = pneg %p232
        %p710 = pneg %p229
        %p711 = pneg %p253
        %p712 = pneg %p250
        %p713 = pneg %p274
        %p714 = pneg %p271
        %p715 = pneg %p295
        %p716 = pneg %p292
        %p717 = pneg %p316
        %p718 = pneg %p313
        %p719 = pneg %p337
        %p720 = pneg %p334
        %p721 = pneg %p358
        %p722 = pneg %p355
        %p723 = pneg %p379
        %p724 = pneg %p376
        %p725 = pneg %p400
        %p726 = pneg %p397
        %p727 = pneg %p421
        %p728 = pneg %p418
        %p729 = pneg %p442
        %p730 = pneg %p439
        %p731 = pneg %p463
        %p732 = pneg %p460
        %p733 = pneg %p484
        %p734 = pneg %p481
        %p735 = pneg %p505
        %p736 = pneg %p502
        %p737 = pneg %p526
        %p738 = pneg %p523
        %p739 = pneg %p547
        %p740 = pneg %p544
        %p741 = pneg %p573
        %p742 = pneg %p570
        %s743 = sand.u32 %s560, 1
        %s744 = scalar_lea.sflag [#allocation3], %s743
        %s745 = sand.u32 %s560, 1
        %s746 = smul.addr %s745, 16
        %s747 = scalar_lea.vmem [#allocation2], %s746
        %s748 = smul.u32 2, %s38
        %p749 = scmp.lt.s32.totalorder %s748, 3
        %s750 = scalar_select %p749, %s748, 3
        %s751 = smul.addr %s750, 8
        %s752 = scalar_lea.vmem %s0, %s751
        %s753 = smul.u32 2, %s38
        %s754 = smul.u32 4, %s38
        %p755 = scmp.lt.s32.totalorder %s754, 7
        %s756 = scalar_select %p755, %s754, 7
        %s757 = smul.addr %s756, 8
        %s758 = scalar_lea.vmem %s1, %s757
        %s759 = smul.u32 4, %s38
        %s760 = smul.u32 2, %s38
        %v761 = vld [vmem:[%s752] sm:$0xff]
        %v762 = vld [vmem:[%s752 + $0x8] sm:$0xff]
        %v763 = vld [vmem:[%s2] sm:$0x1]
        %765 = vset.pattern.permute.xlu0 0
        %766 = vperm.xlu0 %765, %v761
        %v767 = vpop.permute.xlu0 %766
        %770 = vset.pattern.permute.xlu0 0
        %771 = vperm.xlu0 %770, %v762
        %v772 = vpop.permute.xlu0 %771
        %v774 = vperm.slane %v763, 0
        %v775 = vmul.f32 %v767, %v774
        %v776 = vmul.f32 %v772, %v774
        %v777 = vld [vmem:[%s2 + $0x1] sm:$0x1]
        %778 = vset.pattern.permute.xlu0 1
        %779 = vperm.xlu0 %778, %v761
        %v780 = vpop.permute.xlu0 %779
        %782 = vset.pattern.permute.xlu0 1
        %783 = vperm.xlu0 %782, %v762
        %v784 = vpop.permute.xlu0 %783
        %v786 = vperm.slane %v777, 0
        %v787 = vmul.f32 %v780, %v786
        %v788 = vmul.f32 %v784, %v786
        %v789 = vadd.f32 %v775, %v787
        %v790 = vadd.f32 %v776, %v788
        %v791 = vld [vmem:[%s2 + $0x2] sm:$0x1]
        %792 = vset.pattern.permute.xlu0 2
        %793 = vperm.xlu0 %792, %v761
        %v794 = vpop.permute.xlu0 %793
        %796 = vset.pattern.permute.xlu0 2
        %797 = vperm.xlu0 %796, %v762
        %v798 = vpop.permute.xlu0 %797
        %v800 = vperm.slane %v791, 0
        %v801 = vmul.f32 %v794, %v800
        %v802 = vmul.f32 %v798, %v800
        %v803 = vadd.f32 %v789, %v801
        %v804 = vadd.f32 %v790, %v802
        %v805 = vand.u32 2147483647, %v803
        %vm806 = vcmp.le.f32.partialorder %v805, 0.7853982
        %vm807 = vcmp.lt.s32.totalorder %v803, 0
        %v808 = vand.u32 %v803, 2139095040
        %v809 = vshrl.u32 %v808, 23
        %v810 = vsub.s32 %v809, 127
        %v811 = vand.u32 2147483647, %v803
        %v812 = vand.u32 %v811, 8388607
        %v813 = vor.u32 %v812, 8388608
        %v814 = vsub.s32 0, %v813
        %v815 = vadd.s32 %v810, 1
        %vm816 = vcmp.gt.s32.totalorder %v815, 0
        %v817 = vsel %vm816, %v815, 0
        %v818 = vshrl.u32 %v817, 5
        %v819 = vand.u32 %v817, 31
        %v820 = vsub.s32 32, %v819
        %v821 = vshrl.u32 683565275, %v820
        %v822 = vshll.u32 683565275, %v819
        %v823 = vshrl.u32 2475754826, %v820
        %v824 = vor.u32 %v822, %v823
        %v825 = vshll.u32 2475754826, %v819
        %v826 = vshrl.u32 2131351028, %v820
        %v827 = vor.u32 %v825, %v826
        %v828 = vshll.u32 2131351028, %v819
        %v829 = vshrl.u32 2102212464, %v820
        %v830 = vor.u32 %v828, %v829
        %v831 = vshll.u32 2102212464, %v819
        %v832 = vshrl.u32 920167782, %v820
        %v833 = vor.u32 %v831, %v832
        %v834 = vshll.u32 920167782, %v819
        %v835 = vshrl.u32 1326507024, %v820
        %v836 = vor.u32 %v834, %v835
        %vm837 = vcmp.lt.s32.totalorder %v818, 1
        %vm838 = vcmp.lt.s32.totalorder %v818, 2
        %vm839 = vcmp.lt.s32.totalorder %v818, 3
        %vm840 = vcmp.lt.s32.totalorder %v818, 4
        %v841 = vsel %vm837, %v821, %v824
        %v842 = vsel %vm840, %v830, 2102212464
        %v843 = vsel %vm839, %v827, %v842
        %v844 = vsel %vm838, %v841, %v843
        %v845 = vsel %vm837, %v824, %v827
        %v846 = vsel %vm840, %v833, 920167782
        %v847 = vsel %vm839, %v830, %v846
        %v848 = vsel %vm838, %v845, %v847
        %v849 = vsel %vm837, %v827, %v830
        %v850 = vsel %vm840, %v836, 1326507024
        %v851 = vsel %vm839, %v833, %v850
        %v852 = vsel %vm838, %v849, %v851
        %v853 = vshll.u32 %v813, 8
        %v854 = vand.u32 %v853, 65535
        %v855 = vshrl.u32 %v853, 16
        %v856 = vand.u32 %v852, 65535
        %v857 = vshrl.u32 %v852, 16
        %v858 = vmul.u32 %v854, %v856
        %v859 = vmul.u32 %v854, %v857
        %v860 = vmul.u32 %v855, %v856
        %v861 = vmul.u32 %v855, %v857
        %v862 = vshll.u32 %v859, 16
        %v863 = vshrl.u32 %v859, 16
        %v864 = vshll.u32 %v860, 16
        %v865 = vshrl.u32 %v860, 16
        %vm866 = vc.u32 %v858, %v862
        %v867 = vsel %vm866, 1, 0
        %v868 = vadd.s32 %v858, %v862
        %v869 = vadd.s32 %v861, %v867
        %vm870 = vc.u32 %v868, %v864
        %v871 = vsel %vm870, 1, 0
        %v872 = vadd.s32 %v868, %v864
        %v873 = vadd.s32 %v869, %v871
        %v874 = vadd.s32 %v873, %v863
        %v875 = vadd.s32 %v874, %v865
        %v876 = vand.u32 %v853, 65535
        %v877 = vshrl.u32 %v853, 16
        %v878 = vand.u32 %v848, 65535
        %v879 = vshrl.u32 %v848, 16
        %v880 = vmul.u32 %v876, %v878
        %v881 = vmul.u32 %v876, %v879
        %v882 = vmul.u32 %v877, %v878
        %v883 = vmul.u32 %v877, %v879
        %v884 = vshll.u32 %v881, 16
        %v885 = vshrl.u32 %v881, 16
        %v886 = vshll.u32 %v882, 16
        %v887 = vshrl.u32 %v882, 16
        %vm888 = vc.u32 %v880, %v884
        %v889 = vsel %vm888, 1, 0
        %v890 = vadd.s32 %v880, %v884
        %v891 = vadd.s32 %v883, %v889
        %vm892 = vc.u32 %v890, %v886
        %v893 = vsel %vm892, 1, 0
        %v894 = vadd.s32 %v890, %v886
        %v895 = vadd.s32 %v891, %v893
        %v896 = vadd.s32 %v895, %v885
        %v897 = vadd.s32 %v896, %v887
        %v898 = vmul.u32 %v853, %v844
        %v899 = vadd.s32 %v875, %v894
        %vm900 = vc.u32 %v875, %v894
        %v901 = vadd.s32 %v897, 1
        %v902 = vsel %vm900, %v901, %v897
        %v903 = vadd.s32 %v898, %v902
        %v904 = vadd.s32 %v903, 536870912
        %v905 = vshrl.u32 %v904, 30
        %v906 = vshll.u32 %v905, 30
        %v907 = vsub.s32 %v903, %v906
        %vm908 = vcmp.lt.s32.totalorder %v907, 0
        %v909 = vsub.s32 0, %v907
        %v910 = vsel %vm908, %v909, %v907
        %v911 = vclz %v910
        %v912 = vsub.s32 %v911, 2
        %vm913 = vcmp.gt.s32.totalorder 0, %v912
        %v914 = vsel %vm913, 0, %v912
        %v915 = vsub.s32 32, %v914
        %v916 = vshll.u32 %v907, %v914
        %v917 = vshrl.u32 %v899, %v915
        %v918 = vor.u32 %v916, %v917
        %v919 = vsub.s32 4294967266, %v914
        %v920 = vadd.s32 %v919, 127
        %v921 = vshll.u32 %v920, 23
        %v922 = vor.u32 4788187, %v921
        %v923 = vand.u32 2147483647, %v922
        %v925 = vcvt.s32.f32 %v918
        %v926 = vmul.f32 %v925, %v923
        %v927 = vxor.u32 %v926, 2147483648
        %v928 = vsel %vm807, %v927, %v926
        %v929 = vsub.s32 4, %v905
        %v930 = vsel %vm807, %v929, %v905
        %v931 = vsel %vm806, %v803, %v928
        %v932 = vsel %vm806, 0, %v930
        %v933 = vmul.f32 %v931, %v931
        %v934 = vmul.f32 %v933, -0.001358992
        %v935 = vadd.f32 %v934, 0.041655596
        %v936 = vmul.f32 %v933, %v935
        %v937 = vadd.f32 %v936, -0.4999988
        %v938 = vmul.f32 %v933, %v937
        %v939 = vadd.f32 1.0, %v938
        %v940 = vmul.f32 %v931, %v931
        %v941 = vmul.f32 %v940, -0.00019511016
        %v942 = vadd.f32 %v941, 0.008332121
        %v943 = vmul.f32 %v940, %v942
        %v944 = vadd.f32 %v943, -0.16666654
        %v945 = vmul.f32 %v940, %v944
        %v946 = vadd.f32 %v945, 1.0
        %v947 = vmul.f32 %v946, %v931
        %vm948 = vweird.f32 %v803
        %v949 = vadd.s32 %v932, 3
        %v950 = vand.u32 %v949, 3
        %vm951 = vcmp.lt.s32.totalorder %v950, 2
        %vm952 = vcmp.eq.s32.totalorder %v950, 0
        %v953 = vxor.u32 %v947, 2147483648
        %v954 = vsel %vm952, %v939, %v953
        %vm955 = vcmp.eq.s32.totalorder %v950, 2
        %v956 = vxor.u32 %v939, 2147483648
        %v957 = vsel %vm955, %v956, %v947
        %v958 = vsel %vm951, %v954, %v957
        %v959 = vsel %vm948, nan, %v958
        %v960 = vand.u32 2147483647, %v804
        %vm961 = vcmp.le.f32.partialorder %v960, 0.7853982
        %vm962 = vcmp.lt.s32.totalorder %v804, 0
        %v963 = vand.u32 %v804, 2139095040
        %v964 = vshrl.u32 %v963, 23
        %v965 = vsub.s32 %v964, 127
        %v966 = vand.u32 2147483647, %v804
        %v967 = vand.u32 %v966, 8388607
        %v968 = vor.u32 %v967, 8388608
        %v969 = vsub.s32 0, %v968
        %v970 = vadd.s32 %v965, 1
        %vm971 = vcmp.gt.s32.totalorder %v970, 0
        %v972 = vsel %vm971, %v970, 0
        %v973 = vshrl.u32 %v972, 5
        %v974 = vand.u32 %v972, 31
        %v975 = vsub.s32 32, %v974
        %v976 = vshrl.u32 683565275, %v975
        %v977 = vshll.u32 683565275, %v974
        %v978 = vshrl.u32 2475754826, %v975
        %v979 = vor.u32 %v977, %v978
        %v980 = vshll.u32 2475754826, %v974
        %v981 = vshrl.u32 2131351028, %v975
        %v982 = vor.u32 %v980, %v981
        %v983 = vshll.u32 2131351028, %v974
        %v984 = vshrl.u32 2102212464, %v975
        %v985 = vor.u32 %v983, %v984
        %v986 = vshll.u32 2102212464, %v974
        %v987 = vshrl.u32 920167782, %v975
        %v988 = vor.u32 %v986, %v987
        %v989 = vshll.u32 920167782, %v974
        %v990 = vshrl.u32 1326507024, %v975
        %v991 = vor.u32 %v989, %v990
        %vm992 = vcmp.lt.s32.totalorder %v973, 1
        %vm993 = vcmp.lt.s32.totalorder %v973, 2
        %vm994 = vcmp.lt.s32.totalorder %v973, 3
        %vm995 = vcmp.lt.s32.totalorder %v973, 4
        %v996 = vsel %vm992, %v976, %v979
        %v997 = vsel %vm995, %v985, 2102212464
        %v998 = vsel %vm994, %v982, %v997
        %v999 = vsel %vm993, %v996, %v998
        %v1000 = vsel %vm992, %v979, %v982
        %v1001 = vsel %vm995, %v988, 920167782
        %v1002 = vsel %vm994, %v985, %v1001
        %v1003 = vsel %vm993, %v1000, %v1002
        %v1004 = vsel %vm992, %v982, %v985
        %v1005 = vsel %vm995, %v991, 1326507024
        %v1006 = vsel %vm994, %v988, %v1005
        %v1007 = vsel %vm993, %v1004, %v1006
        %v1008 = vshll.u32 %v968, 8
        %v1009 = vand.u32 %v1008, 65535
        %v1010 = vshrl.u32 %v1008, 16
        %v1011 = vand.u32 %v1007, 65535
        %v1012 = vshrl.u32 %v1007, 16
        %v1013 = vmul.u32 %v1009, %v1011
        %v1014 = vmul.u32 %v1009, %v1012
        %v1015 = vmul.u32 %v1010, %v1011
        %v1016 = vmul.u32 %v1010, %v1012
        %v1017 = vshll.u32 %v1014, 16
        %v1018 = vshrl.u32 %v1014, 16
        %v1019 = vshll.u32 %v1015, 16
        %v1020 = vshrl.u32 %v1015, 16
        %vm1021 = vc.u32 %v1013, %v1017
        %v1022 = vsel %vm1021, 1, 0
        %v1023 = vadd.s32 %v1013, %v1017
        %v1024 = vadd.s32 %v1016, %v1022
        %vm1025 = vc.u32 %v1023, %v1019
        %v1026 = vsel %vm1025, 1, 0
        %v1027 = vadd.s32 %v1023, %v1019
        %v1028 = vadd.s32 %v1024, %v1026
        %v1029 = vadd.s32 %v1028, %v1018
        %v1030 = vadd.s32 %v1029, %v1020
        %v1031 = vand.u32 %v1008, 65535
        %v1032 = vshrl.u32 %v1008, 16
        %v1033 = vand.u32 %v1003, 65535
        %v1034 = vshrl.u32 %v1003, 16
        %v1035 = vmul.u32 %v1031, %v1033
        %v1036 = vmul.u32 %v1031, %v1034
        %v1037 = vmul.u32 %v1032, %v1033
        %v1038 = vmul.u32 %v1032, %v1034
        %v1039 = vshll.u32 %v1036, 16
        %v1040 = vshrl.u32 %v1036, 16
        %v1041 = vshll.u32 %v1037, 16
        %v1042 = vshrl.u32 %v1037, 16
        %vm1043 = vc.u32 %v1035, %v1039
        %v1044 = vsel %vm1043, 1, 0
        %v1045 = vadd.s32 %v1035, %v1039
        %v1046 = vadd.s32 %v1038, %v1044
        %vm1047 = vc.u32 %v1045, %v1041
        %v1048 = vsel %vm1047, 1, 0
        %v1049 = vadd.s32 %v1045, %v1041
        %v1050 = vadd.s32 %v1046, %v1048
        %v1051 = vadd.s32 %v1050, %v1040
        %v1052 = vadd.s32 %v1051, %v1042
        %v1053 = vmul.u32 %v1008, %v999
        %v1054 = vadd.s32 %v1030, %v1049
        %vm1055 = vc.u32 %v1030, %v1049
        %v1056 = vadd.s32 %v1052, 1
        %v1057 = vsel %vm1055, %v1056, %v1052
        %v1058 = vadd.s32 %v1053, %v1057
        %v1059 = vadd.s32 %v1058, 536870912
        %v1060 = vshrl.u32 %v1059, 30
        %v1061 = vshll.u32 %v1060, 30
        %v1062 = vsub.s32 %v1058, %v1061
        %vm1063 = vcmp.lt.s32.totalorder %v1062, 0
        %v1064 = vsub.s32 0, %v1062
        %v1065 = vsel %vm1063, %v1064, %v1062
        %v1066 = vclz %v1065
        %v1067 = vsub.s32 %v1066, 2
        %vm1068 = vcmp.gt.s32.totalorder 0, %v1067
        %v1069 = vsel %vm1068, 0, %v1067
        %v1070 = vsub.s32 32, %v1069
        %v1071 = vshll.u32 %v1062, %v1069
        %v1072 = vshrl.u32 %v1054, %v1070
        %v1073 = vor.u32 %v1071, %v1072
        %v1074 = vsub.s32 4294967266, %v1069
        %v1075 = vadd.s32 %v1074, 127
        %v1076 = vshll.u32 %v1075, 23
        %v1077 = vor.u32 4788187, %v1076
        %v1078 = vand.u32 2147483647, %v1077
        %v1080 = vcvt.s32.f32 %v1073
        %v1081 = vmul.f32 %v1080, %v1078
        %v1082 = vxor.u32 %v1081, 2147483648
        %v1083 = vsel %vm962, %v1082, %v1081
        %v1084 = vsub.s32 4, %v1060
        %v1085 = vsel %vm962, %v1084, %v1060
        %v1086 = vsel %vm961, %v804, %v1083
        %v1087 = vsel %vm961, 0, %v1085
        %v1088 = vmul.f32 %v1086, %v1086
        %v1089 = vmul.f32 %v1088, -0.001358992
        %v1090 = vadd.f32 %v1089, 0.041655596
        %v1091 = vmul.f32 %v1088, %v1090
        %v1092 = vadd.f32 %v1091, -0.4999988
        %v1093 = vmul.f32 %v1088, %v1092
        %v1094 = vadd.f32 1.0, %v1093
        %v1095 = vmul.f32 %v1086, %v1086
        %v1096 = vmul.f32 %v1095, -0.00019511016
        %v1097 = vadd.f32 %v1096, 0.008332121
        %v1098 = vmul.f32 %v1095, %v1097
        %v1099 = vadd.f32 %v1098, -0.16666654
        %v1100 = vmul.f32 %v1095, %v1099
        %v1101 = vadd.f32 %v1100, 1.0
        %v1102 = vmul.f32 %v1101, %v1086
        %vm1103 = vweird.f32 %v804
        %v1104 = vadd.s32 %v1087, 3
        %v1105 = vand.u32 %v1104, 3
        %vm1106 = vcmp.lt.s32.totalorder %v1105, 2
        %vm1107 = vcmp.eq.s32.totalorder %v1105, 0
        %v1108 = vxor.u32 %v1102, 2147483648
        %v1109 = vsel %vm1107, %v1094, %v1108
        %vm1110 = vcmp.eq.s32.totalorder %v1105, 2
        %v1111 = vxor.u32 %v1094, 2147483648
        %v1112 = vsel %vm1110, %v1111, %v1102
        %v1113 = vsel %vm1106, %v1109, %v1112
        %v1114 = vsel %vm1103, nan, %v1113
        %v1115 = vld [vmem:[%s3] sm:$0xff]
        %v1116 = vld [vmem:[%s3 + $0x8] sm:$0xff]
        %v1117 = vld [vmem:[%s3 + $0x10] sm:$0xff]
        %v1118 = vand.u32 2147483647, %v803
        %vm1119 = vcmp.le.f32.partialorder %v1118, 0.7853982
        %vm1120 = vcmp.lt.s32.totalorder %v803, 0
        %v1121 = vand.u32 %v803, 2139095040
        %v1122 = vshrl.u32 %v1121, 23
        %v1123 = vsub.s32 %v1122, 127
        %v1124 = vand.u32 2147483647, %v803
        %v1125 = vand.u32 %v1124, 8388607
        %v1126 = vor.u32 %v1125, 8388608
        %v1127 = vsub.s32 0, %v1126
        %v1128 = vadd.s32 %v1123, 1
        %vm1129 = vcmp.gt.s32.totalorder %v1128, 0
        %v1130 = vsel %vm1129, %v1128, 0
        %v1131 = vshrl.u32 %v1130, 5
        %v1132 = vand.u32 %v1130, 31
        %v1133 = vsub.s32 32, %v1132
        %v1134 = vshrl.u32 683565275, %v1133
        %v1135 = vshll.u32 683565275, %v1132
        %v1136 = vshrl.u32 2475754826, %v1133
        %v1137 = vor.u32 %v1135, %v1136
        %v1138 = vshll.u32 2475754826, %v1132
        %v1139 = vshrl.u32 2131351028, %v1133
        %v1140 = vor.u32 %v1138, %v1139
        %v1141 = vshll.u32 2131351028, %v1132
        %v1142 = vshrl.u32 2102212464, %v1133
        %v1143 = vor.u32 %v1141, %v1142
        %v1144 = vshll.u32 2102212464, %v1132
        %v1145 = vshrl.u32 920167782, %v1133
        %v1146 = vor.u32 %v1144, %v1145
        %v1147 = vshll.u32 920167782, %v1132
        %v1148 = vshrl.u32 1326507024, %v1133
        %v1149 = vor.u32 %v1147, %v1148
        %vm1150 = vcmp.lt.s32.totalorder %v1131, 1
        %vm1151 = vcmp.lt.s32.totalorder %v1131, 2
        %vm1152 = vcmp.lt.s32.totalorder %v1131, 3
        %vm1153 = vcmp.lt.s32.totalorder %v1131, 4
        %v1154 = vsel %vm1150, %v1134, %v1137
        %v1155 = vsel %vm1153, %v1143, 2102212464
        %v1156 = vsel %vm1152, %v1140, %v1155
        %v1157 = vsel %vm1151, %v1154, %v1156
        %v1158 = vsel %vm1150, %v1137, %v1140
        %v1159 = vsel %vm1153, %v1146, 920167782
        %v1160 = vsel %vm1152, %v1143, %v1159
        %v1161 = vsel %vm1151, %v1158, %v1160
        %v1162 = vsel %vm1150, %v1140, %v1143
        %v1163 = vsel %vm1153, %v1149, 1326507024
        %v1164 = vsel %vm1152, %v1146, %v1163
        %v1165 = vsel %vm1151, %v1162, %v1164
        %v1166 = vshll.u32 %v1126, 8
        %v1167 = vand.u32 %v1166, 65535
        %v1168 = vshrl.u32 %v1166, 16
        %v1169 = vand.u32 %v1165, 65535
        %v1170 = vshrl.u32 %v1165, 16
        %v1171 = vmul.u32 %v1167, %v1169
        %v1172 = vmul.u32 %v1167, %v1170
        %v1173 = vmul.u32 %v1168, %v1169
        %v1174 = vmul.u32 %v1168, %v1170
        %v1175 = vshll.u32 %v1172, 16
        %v1176 = vshrl.u32 %v1172, 16
        %v1177 = vshll.u32 %v1173, 16
        %v1178 = vshrl.u32 %v1173, 16
        %vm1179 = vc.u32 %v1171, %v1175
        %v1180 = vsel %vm1179, 1, 0
        %v1181 = vadd.s32 %v1171, %v1175
        %v1182 = vadd.s32 %v1174, %v1180
        %vm1183 = vc.u32 %v1181, %v1177
        %v1184 = vsel %vm1183, 1, 0
        %v1185 = vadd.s32 %v1181, %v1177
        %v1186 = vadd.s32 %v1182, %v1184
        %v1187 = vadd.s32 %v1186, %v1176
        %v1188 = vadd.s32 %v1187, %v1178
        %v1189 = vand.u32 %v1166, 65535
        %v1190 = vshrl.u32 %v1166, 16
        %v1191 = vand.u32 %v1161, 65535
        %v1192 = vshrl.u32 %v1161, 16
        %v1193 = vmul.u32 %v1189, %v1191
        %v1194 = vmul.u32 %v1189, %v1192
        %v1195 = vmul.u32 %v1190, %v1191
        %v1196 = vmul.u32 %v1190, %v1192
        %v1197 = vshll.u32 %v1194, 16
        %v1198 = vshrl.u32 %v1194, 16
        %v1199 = vshll.u32 %v1195, 16
        %v1200 = vshrl.u32 %v1195, 16
        %vm1201 = vc.u32 %v1193, %v1197
        %v1202 = vsel %vm1201, 1, 0
        %v1203 = vadd.s32 %v1193, %v1197
        %v1204 = vadd.s32 %v1196, %v1202
        %vm1205 = vc.u32 %v1203, %v1199
        %v1206 = vsel %vm1205, 1, 0
        %v1207 = vadd.s32 %v1203, %v1199
        %v1208 = vadd.s32 %v1204, %v1206
        %v1209 = vadd.s32 %v1208, %v1198
        %v1210 = vadd.s32 %v1209, %v1200
        %v1211 = vmul.u32 %v1166, %v1157
        %v1212 = vadd.s32 %v1188, %v1207
        %vm1213 = vc.u32 %v1188, %v1207
        %v1214 = vadd.s32 %v1210, 1
        %v1215 = vsel %vm1213, %v1214, %v1210
        %v1216 = vadd.s32 %v1211, %v1215
        %v1217 = vadd.s32 %v1216, 536870912
        %v1218 = vshrl.u32 %v1217, 30
        %v1219 = vshll.u32 %v1218, 30
        %v1220 = vsub.s32 %v1216, %v1219
        %vm1221 = vcmp.lt.s32.totalorder %v1220, 0
        %v1222 = vsub.s32 0, %v1220
        %v1223 = vsel %vm1221, %v1222, %v1220
        %v1224 = vclz %v1223
        %v1225 = vsub.s32 %v1224, 2
        %vm1226 = vcmp.gt.s32.totalorder 0, %v1225
        %v1227 = vsel %vm1226, 0, %v1225
        %v1228 = vsub.s32 32, %v1227
        %v1229 = vshll.u32 %v1220, %v1227
        %v1230 = vshrl.u32 %v1212, %v1228
        %v1231 = vor.u32 %v1229, %v1230
        %v1232 = vsub.s32 4294967266, %v1227
        %v1233 = vadd.s32 %v1232, 127
        %v1234 = vshll.u32 %v1233, 23
        %v1235 = vor.u32 4788187, %v1234
        %v1236 = vand.u32 2147483647, %v1235
        %v1238 = vcvt.s32.f32 %v1231
        %v1239 = vmul.f32 %v1238, %v1236
        %v1240 = vxor.u32 %v1239, 2147483648
        %v1241 = vsel %vm1120, %v1240, %v1239
        %v1242 = vsub.s32 4, %v1218
        %v1243 = vsel %vm1120, %v1242, %v1218
        %v1244 = vsel %vm1119, %v803, %v1241
        %v1245 = vsel %vm1119, 0, %v1243
        %v1246 = vmul.f32 %v1244, %v1244
        %v1247 = vmul.f32 %v1246, -0.001358992
        %v1248 = vadd.f32 %v1247, 0.041655596
        %v1249 = vmul.f32 %v1246, %v1248
        %v1250 = vadd.f32 %v1249, -0.4999988
        %v1251 = vmul.f32 %v1246, %v1250
        %v1252 = vadd.f32 1.0, %v1251
        %v1253 = vmul.f32 %v1244, %v1244
        %v1254 = vmul.f32 %v1253, -0.00019511016
        %v1255 = vadd.f32 %v1254, 0.008332121
        %v1256 = vmul.f32 %v1253, %v1255
        %v1257 = vadd.f32 %v1256, -0.16666654
        %v1258 = vmul.f32 %v1253, %v1257
        %v1259 = vadd.f32 %v1258, 1.0
        %v1260 = vmul.f32 %v1259, %v1244
        %vm1261 = vweird.f32 %v803
        %v1262 = vand.u32 %v1245, 3
        %vm1263 = vcmp.lt.s32.totalorder %v1262, 2
        %vm1264 = vcmp.eq.s32.totalorder %v1262, 0
        %v1265 = vxor.u32 %v1260, 2147483648
        %v1266 = vsel %vm1264, %v1252, %v1265
        %vm1267 = vcmp.eq.s32.totalorder %v1262, 2
        %v1268 = vxor.u32 %v1252, 2147483648
        %v1269 = vsel %vm1267, %v1268, %v1260
        %v1270 = vsel %vm1263, %v1266, %v1269
        %v1271 = vsel %vm1261, nan, %v1270
        %v1272 = vand.u32 2147483647, %v804
        %vm1273 = vcmp.le.f32.partialorder %v1272, 0.7853982
        %vm1274 = vcmp.lt.s32.totalorder %v804, 0
        %v1275 = vand.u32 %v804, 2139095040
        %v1276 = vshrl.u32 %v1275, 23
        %v1277 = vsub.s32 %v1276, 127
        %v1278 = vand.u32 2147483647, %v804
        %v1279 = vand.u32 %v1278, 8388607
        %v1280 = vor.u32 %v1279, 8388608
        %v1281 = vsub.s32 0, %v1280
        %v1282 = vadd.s32 %v1277, 1
        %vm1283 = vcmp.gt.s32.totalorder %v1282, 0
        %v1284 = vsel %vm1283, %v1282, 0
        %v1285 = vshrl.u32 %v1284, 5
        %v1286 = vand.u32 %v1284, 31
        %v1287 = vsub.s32 32, %v1286
        %v1288 = vshrl.u32 683565275, %v1287
        %v1289 = vshll.u32 683565275, %v1286
        %v1290 = vshrl.u32 2475754826, %v1287
        %v1291 = vor.u32 %v1289, %v1290
        %v1292 = vshll.u32 2475754826, %v1286
        %v1293 = vshrl.u32 2131351028, %v1287
        %v1294 = vor.u32 %v1292, %v1293
        %v1295 = vshll.u32 2131351028, %v1286
        %v1296 = vshrl.u32 2102212464, %v1287
        %v1297 = vor.u32 %v1295, %v1296
        %v1298 = vshll.u32 2102212464, %v1286
        %v1299 = vshrl.u32 920167782, %v1287
        %v1300 = vor.u32 %v1298, %v1299
        %v1301 = vshll.u32 920167782, %v1286
        %v1302 = vshrl.u32 1326507024, %v1287
        %v1303 = vor.u32 %v1301, %v1302
        %vm1304 = vcmp.lt.s32.totalorder %v1285, 1
        %vm1305 = vcmp.lt.s32.totalorder %v1285, 2
        %vm1306 = vcmp.lt.s32.totalorder %v1285, 3
        %vm1307 = vcmp.lt.s32.totalorder %v1285, 4
        %v1308 = vsel %vm1304, %v1288, %v1291
        %v1309 = vsel %vm1307, %v1297, 2102212464
        %v1310 = vsel %vm1306, %v1294, %v1309
        %v1311 = vsel %vm1305, %v1308, %v1310
        %v1312 = vsel %vm1304, %v1291, %v1294
        %v1313 = vsel %vm1307, %v1300, 920167782
        %v1314 = vsel %vm1306, %v1297, %v1313
        %v1315 = vsel %vm1305, %v1312, %v1314
        %v1316 = vsel %vm1304, %v1294, %v1297
        %v1317 = vsel %vm1307, %v1303, 1326507024
        %v1318 = vsel %vm1306, %v1300, %v1317
        %v1319 = vsel %vm1305, %v1316, %v1318
        %v1320 = vshll.u32 %v1280, 8
        %v1321 = vand.u32 %v1320, 65535
        %v1322 = vshrl.u32 %v1320, 16
        %v1323 = vand.u32 %v1319, 65535
        %v1324 = vshrl.u32 %v1319, 16
        %v1325 = vmul.u32 %v1321, %v1323
        %v1326 = vmul.u32 %v1321, %v1324
        %v1327 = vmul.u32 %v1322, %v1323
        %v1328 = vmul.u32 %v1322, %v1324
        %v1329 = vshll.u32 %v1326, 16
        %v1330 = vshrl.u32 %v1326, 16
        %v1331 = vshll.u32 %v1327, 16
        %v1332 = vshrl.u32 %v1327, 16
        %vm1333 = vc.u32 %v1325, %v1329
        %v1334 = vsel %vm1333, 1, 0
        %v1335 = vadd.s32 %v1325, %v1329
        %v1336 = vadd.s32 %v1328, %v1334
        %vm1337 = vc.u32 %v1335, %v1331
        %v1338 = vsel %vm1337, 1, 0
        %v1339 = vadd.s32 %v1335, %v1331
        %v1340 = vadd.s32 %v1336, %v1338
        %v1341 = vadd.s32 %v1340, %v1330
        %v1342 = vadd.s32 %v1341, %v1332
        %v1343 = vand.u32 %v1320, 65535
        %v1344 = vshrl.u32 %v1320, 16
        %v1345 = vand.u32 %v1315, 65535
        %v1346 = vshrl.u32 %v1315, 16
        %v1347 = vmul.u32 %v1343, %v1345
        %v1348 = vmul.u32 %v1343, %v1346
        %v1349 = vmul.u32 %v1344, %v1345
        %v1350 = vmul.u32 %v1344, %v1346
        %v1351 = vshll.u32 %v1348, 16
        %v1352 = vshrl.u32 %v1348, 16
        %v1353 = vshll.u32 %v1349, 16
        %v1354 = vshrl.u32 %v1349, 16
        %vm1355 = vc.u32 %v1347, %v1351
        %v1356 = vsel %vm1355, 1, 0
        %v1357 = vadd.s32 %v1347, %v1351
        %v1358 = vadd.s32 %v1350, %v1356
        %vm1359 = vc.u32 %v1357, %v1353
        %v1360 = vsel %vm1359, 1, 0
        %v1361 = vadd.s32 %v1357, %v1353
        %v1362 = vadd.s32 %v1358, %v1360
        %v1363 = vadd.s32 %v1362, %v1352
        %v1364 = vadd.s32 %v1363, %v1354
        %v1365 = vmul.u32 %v1320, %v1311
        %v1366 = vadd.s32 %v1342, %v1361
        %vm1367 = vc.u32 %v1342, %v1361
        %v1368 = vadd.s32 %v1364, 1
        %v1369 = vsel %vm1367, %v1368, %v1364
        %v1370 = vadd.s32 %v1365, %v1369
        %v1371 = vadd.s32 %v1370, 536870912
        %v1372 = vshrl.u32 %v1371, 30
        %v1373 = vshll.u32 %v1372, 30
        %v1374 = vsub.s32 %v1370, %v1373
        %vm1375 = vcmp.lt.s32.totalorder %v1374, 0
        %v1376 = vsub.s32 0, %v1374
        %v1377 = vsel %vm1375, %v1376, %v1374
        %v1378 = vclz %v1377
        %v1379 = vsub.s32 %v1378, 2
        %vm1380 = vcmp.gt.s32.totalorder 0, %v1379
        %v1381 = vsel %vm1380, 0, %v1379
        %v1382 = vsub.s32 32, %v1381
        %v1383 = vshll.u32 %v1374, %v1381
        %v1384 = vshrl.u32 %v1366, %v1382
        %v1385 = vor.u32 %v1383, %v1384
        %v1386 = vsub.s32 4294967266, %v1381
        %v1387 = vadd.s32 %v1386, 127
        %v1388 = vshll.u32 %v1387, 23
        %v1389 = vor.u32 4788187, %v1388
        %v1390 = vand.u32 2147483647, %v1389
        %v1392 = vcvt.s32.f32 %v1385
        %v1393 = vmul.f32 %v1392, %v1390
        %v1394 = vxor.u32 %v1393, 2147483648
        %v1395 = vsel %vm1274, %v1394, %v1393
        %v1396 = vsub.s32 4, %v1372
        %v1397 = vsel %vm1274, %v1396, %v1372
        %v1398 = vsel %vm1273, %v804, %v1395
        %v1399 = vsel %vm1273, 0, %v1397
        %v1400 = vmul.f32 %v1398, %v1398
        %v1401 = vmul.f32 %v1400, -0.001358992
        %v1402 = vadd.f32 %v1401, 0.041655596
        %v1403 = vmul.f32 %v1400, %v1402
        %v1404 = vadd.f32 %v1403, -0.4999988
        %v1405 = vmul.f32 %v1400, %v1404
        %v1406 = vadd.f32 1.0, %v1405
        %v1407 = vmul.f32 %v1398, %v1398
        %v1408 = vmul.f32 %v1407, -0.00019511016
        %v1409 = vadd.f32 %v1408, 0.008332121
        %v1410 = vmul.f32 %v1407, %v1409
        %v1411 = vadd.f32 %v1410, -0.16666654
        %v1412 = vmul.f32 %v1407, %v1411
        %v1413 = vadd.f32 %v1412, 1.0
        %v1414 = vmul.f32 %v1413, %v1398
        %vm1415 = vweird.f32 %v804
        %v1416 = vand.u32 %v1399, 3
        %vm1417 = vcmp.lt.s32.totalorder %v1416, 2
        %vm1418 = vcmp.eq.s32.totalorder %v1416, 0
        %v1419 = vxor.u32 %v1414, 2147483648
        %v1420 = vsel %vm1418, %v1406, %v1419
        %vm1421 = vcmp.eq.s32.totalorder %v1416, 2
        %v1422 = vxor.u32 %v1406, 2147483648
        %v1423 = vsel %vm1421, %v1422, %v1414
        %v1424 = vsel %vm1417, %v1420, %v1423
        %v1425 = vsel %vm1415, nan, %v1424
        %v1426 = vld [vmem:[%s4] sm:$0xff]
        %v1427 = vld [vmem:[%s4 + $0x8] sm:$0xff]
        %v1428 = vld [vmem:[%s4 + $0x10] sm:$0xff]
        %vm1429 = vcmask 195584
        %v1431 = vsel %vm1429, %v1271, 0
        %v1434 = vsel %vm1429, %v1425, 0
        %1436 = vmatpush.msra.mxu0 0.0
        %1437 = vmatpush.msra.mxu0 0.0
        %1438 = vmatpush.msra.mxu0 0.0
        %1439 = vmatpush.msra.mxu0 0.0
        %1440 = vmatpush.msra.mxu0 0.0
        %1441 = vmatpush.msra.mxu0 0.0
        %1442 = vmatpush.msra.mxu0 0.0
        %1443 = vmatpush.msra.mxu0 0.0
        %1444 = vmatpush.msra.mxu0 0.0
        %1445 = vmatpush.msra.mxu0 0.0
        %1446 = vmatpush.msra.mxu0 0.0
        %1447 = vmatpush.msra.mxu0 0.0
        %1448 = vmatpush.msra.mxu0 0.0
        %1449 = vmatpush.msra.mxu0 %v1428
        %1450 = vmatpush.msra.mxu0 %v1427
        %1451 = vmatpush.msra.mxu0 %v1426
        %1452 = vmatmul.f32.gmra.mxu0 %v1431
        %v1453 = vpop.f32.mrf.mxu0
        %v1454 = vadd.f32 0.0, %v1453
        %1455 = vmatmul.f32.gmra.mxu0 %v1434
        %v1456 = vpop.f32.mrf.mxu0
        %v1457 = vadd.f32 0.0, %v1456
        %1458 = vdwg.mxu0
        %v1460 = vsel %vm1429, %v959, 0
        %v1463 = vsel %vm1429, %v1114, 0
        %1465 = vmatpush.msra.mxu0 0.0
        %1466 = vmatpush.msra.mxu0 0.0
        %1467 = vmatpush.msra.mxu0 0.0
        %1468 = vmatpush.msra.mxu0 0.0
        %1469 = vmatpush.msra.mxu0 0.0
        %1470 = vmatpush.msra.mxu0 0.0
        %1471 = vmatpush.msra.mxu0 0.0
        %1472 = vmatpush.msra.mxu0 0.0
        %1473 = vmatpush.msra.mxu0 0.0
        %1474 = vmatpush.msra.mxu0 0.0
        %1475 = vmatpush.msra.mxu0 0.0
        %1476 = vmatpush.msra.mxu0 0.0
        %1477 = vmatpush.msra.mxu0 0.0
        %1478 = vmatpush.msra.mxu0 %v1117
        %1479 = vmatpush.msra.mxu0 %v1116
        %1480 = vmatpush.msra.mxu0 %v1115
        %1481 = vmatmul.f32.gmra.mxu0 %v1460
        %v1482 = vpop.f32.mrf.mxu0
        %v1483 = vadd.f32 %v1454, %v1482
        %1484 = vmatmul.f32.gmra.mxu0 %v1463
        %v1485 = vpop.f32.mrf.mxu0
        %v1486 = vadd.f32 %v1457, %v1485
        %1487 = vdwg.mxu0
        %v1488 = vld [vmem:[%s5] sm:$0x7]
        %vm1489 = vcmask 23552
        %v1490 = vsel %vm1489, %v761, 0
        %v1492 = vsel %vm1489, %v762, 0
        %vm1494 = vcmask 1042432
        %v1496 = vsel %vm1494, %v1488, 0
        %1498 = vmatpush.msra.mxu0 0.0
        %1499 = vmatpush.msra.mxu0 0.0
        %1500 = vmatpush.msra.mxu0 0.0
        %1501 = vmatpush.msra.mxu0 0.0
        %1502 = vmatpush.msra.mxu0 0.0
        %1503 = vmatpush.msra.mxu0 0.0
        %1504 = vmatpush.msra.mxu0 0.0
        %1505 = vmatpush.msra.mxu0 0.0
        %1506 = vmatpush.msra.mxu0 0.0
        %1507 = vmatpush.msra.mxu0 0.0
        %1508 = vmatpush.msra.mxu0 0.0
        %1509 = vmatpush.msra.mxu0 0.0
        %1510 = vmatpush.msra.mxu0 0.0
        %1511 = vmatpush.msra.mxu0 0.0
        %1512 = vmatpush.msra.mxu0 0.0
        %1513 = vmatpush.msra.mxu0 %v1496
        %1514 = vmatmul.f32.gmra.mxu0 %v1490
        %v1515 = vpop.f32.mrf.mxu0
        %v1516 = vadd.f32 0.0, %v1515
        %1517 = vmatmul.f32.gmra.mxu0 %v1492
        %v1518 = vpop.f32.mrf.mxu0
        %v1519 = vadd.f32 0.0, %v1518
        %1520 = vdwg.mxu0
        %v1521 = vadd.f32 %v1483, %v1516
        %v1522 = vadd.f32 %v1486, %v1519
        %v1523 = vld [vmem:[%s6] sm:$0x1]
        %v1525 = vperm.slane %v1523, 0
        %v1527 = vadd.f32 %v1521, %v1525
        %v1528 = vadd.f32 %v1522, %v1525
        %v1529 = vld [vmem:[%s758] sm:$0xff]
        %v1530 = vld [vmem:[%s758 + $0x8] sm:$0xff]
        %v1531 = vld [vmem:[%s758 + $0x10] sm:$0xff]
        %v1532 = vld [vmem:[%s758 + $0x18] sm:$0xff]
        %1534 = vset.pattern.permute.xlu0 0
        %1535 = vperm.xlu0 %1534, %v1529
        %v1536 = vpop.permute.xlu0 %1535
        %1539 = vset.pattern.permute.xlu0 0
        %1540 = vperm.xlu0 %1539, %v1530
        %v1541 = vpop.permute.xlu0 %1540
        %1544 = vset.pattern.permute.xlu0 0
        %1545 = vperm.xlu0 %1544, %v1531
        %v1546 = vpop.permute.xlu0 %1545
        %1549 = vset.pattern.permute.xlu0 0
        %1550 = vperm.xlu0 %1549, %v1532
        %v1551 = vpop.permute.xlu0 %1550
        %v1553 = vmul.f32 %v1536, %v774
        %v1554 = vmul.f32 %v1541, %v774
        %v1555 = vmul.f32 %v1546, %v774
        %v1556 = vmul.f32 %v1551, %v774
        %1557 = vset.pattern.permute.xlu0 1
        %1558 = vperm.xlu0 %1557, %v1529
        %v1559 = vpop.permute.xlu0 %1558
        %1561 = vset.pattern.permute.xlu0 1
        %1562 = vperm.xlu0 %1561, %v1530
        %v1563 = vpop.permute.xlu0 %1562
        %1565 = vset.pattern.permute.xlu0 1
        %1566 = vperm.xlu0 %1565, %v1531
        %v1567 = vpop.permute.xlu0 %1566
        %1569 = vset.pattern.permute.xlu0 1
        %1570 = vperm.xlu0 %1569, %v1532
        %v1571 = vpop.permute.xlu0 %1570
        %v1573 = vmul.f32 %v1559, %v786
        %v1574 = vmul.f32 %v1563, %v786
        %v1575 = vmul.f32 %v1567, %v786
        %v1576 = vmul.f32 %v1571, %v786
        %v1577 = vadd.f32 %v1553, %v1573
        %v1578 = vadd.f32 %v1554, %v1574
        %v1579 = vadd.f32 %v1555, %v1575
        %v1580 = vadd.f32 %v1556, %v1576
        %1581 = vset.pattern.permute.xlu0 2
        %1582 = vperm.xlu0 %1581, %v1529
        %v1583 = vpop.permute.xlu0 %1582
        %1585 = vset.pattern.permute.xlu0 2
        %1586 = vperm.xlu0 %1585, %v1530
        %v1587 = vpop.permute.xlu0 %1586
        %1589 = vset.pattern.permute.xlu0 2
        %1590 = vperm.xlu0 %1589, %v1531
        %v1591 = vpop.permute.xlu0 %1590
        %1593 = vset.pattern.permute.xlu0 2
        %1594 = vperm.xlu0 %1593, %v1532
        %v1595 = vpop.permute.xlu0 %1594
        %v1597 = vmul.f32 %v1583, %v800
        %v1598 = vmul.f32 %v1587, %v800
        %v1599 = vmul.f32 %v1591, %v800
        %v1600 = vmul.f32 %v1595, %v800
        %v1601 = vadd.f32 %v1577, %v1597
        %v1602 = vadd.f32 %v1578, %v1598
        %v1603 = vadd.f32 %v1579, %v1599
        %v1604 = vadd.f32 %v1580, %v1600
        %v1605 = vand.u32 2147483647, %v1601
        %vm1606 = vcmp.le.f32.partialorder %v1605, 0.7853982
        %vm1607 = vcmp.lt.s32.totalorder %v1601, 0
        %v1608 = vand.u32 %v1601, 2139095040
        %v1609 = vshrl.u32 %v1608, 23
        %v1610 = vsub.s32 %v1609, 127
        %v1611 = vand.u32 2147483647, %v1601
        %v1612 = vand.u32 %v1611, 8388607
        %v1613 = vor.u32 %v1612, 8388608
        %v1614 = vsub.s32 0, %v1613
        %v1615 = vadd.s32 %v1610, 1
        %vm1616 = vcmp.gt.s32.totalorder %v1615, 0
        %v1617 = vsel %vm1616, %v1615, 0
        %v1618 = vshrl.u32 %v1617, 5
        %v1619 = vand.u32 %v1617, 31
        %v1620 = vsub.s32 32, %v1619
        %v1621 = vshrl.u32 683565275, %v1620
        %v1622 = vshll.u32 683565275, %v1619
        %v1623 = vshrl.u32 2475754826, %v1620
        %v1624 = vor.u32 %v1622, %v1623
        %v1625 = vshll.u32 2475754826, %v1619
        %v1626 = vshrl.u32 2131351028, %v1620
        %v1627 = vor.u32 %v1625, %v1626
        %v1628 = vshll.u32 2131351028, %v1619
        %v1629 = vshrl.u32 2102212464, %v1620
        %v1630 = vor.u32 %v1628, %v1629
        %v1631 = vshll.u32 2102212464, %v1619
        %v1632 = vshrl.u32 920167782, %v1620
        %v1633 = vor.u32 %v1631, %v1632
        %v1634 = vshll.u32 920167782, %v1619
        %v1635 = vshrl.u32 1326507024, %v1620
        %v1636 = vor.u32 %v1634, %v1635
        %vm1637 = vcmp.lt.s32.totalorder %v1618, 1
        %vm1638 = vcmp.lt.s32.totalorder %v1618, 2
        %vm1639 = vcmp.lt.s32.totalorder %v1618, 3
        %vm1640 = vcmp.lt.s32.totalorder %v1618, 4
        %v1641 = vsel %vm1637, %v1621, %v1624
        %v1642 = vsel %vm1640, %v1630, 2102212464
        %v1643 = vsel %vm1639, %v1627, %v1642
        %v1644 = vsel %vm1638, %v1641, %v1643
        %v1645 = vsel %vm1637, %v1624, %v1627
        %v1646 = vsel %vm1640, %v1633, 920167782
        %v1647 = vsel %vm1639, %v1630, %v1646
        %v1648 = vsel %vm1638, %v1645, %v1647
        %v1649 = vsel %vm1637, %v1627, %v1630
        %v1650 = vsel %vm1640, %v1636, 1326507024
        %v1651 = vsel %vm1639, %v1633, %v1650
        %v1652 = vsel %vm1638, %v1649, %v1651
        %v1653 = vshll.u32 %v1613, 8
        %v1654 = vand.u32 %v1653, 65535
        %v1655 = vshrl.u32 %v1653, 16
        %v1656 = vand.u32 %v1652, 65535
        %v1657 = vshrl.u32 %v1652, 16
        %v1658 = vmul.u32 %v1654, %v1656
        %v1659 = vmul.u32 %v1654, %v1657
        %v1660 = vmul.u32 %v1655, %v1656
        %v1661 = vmul.u32 %v1655, %v1657
        %v1662 = vshll.u32 %v1659, 16
        %v1663 = vshrl.u32 %v1659, 16
        %v1664 = vshll.u32 %v1660, 16
        %v1665 = vshrl.u32 %v1660, 16
        %vm1666 = vc.u32 %v1658, %v1662
        %v1667 = vsel %vm1666, 1, 0
        %v1668 = vadd.s32 %v1658, %v1662
        %v1669 = vadd.s32 %v1661, %v1667
        %vm1670 = vc.u32 %v1668, %v1664
        %v1671 = vsel %vm1670, 1, 0
        %v1672 = vadd.s32 %v1668, %v1664
        %v1673 = vadd.s32 %v1669, %v1671
        %v1674 = vadd.s32 %v1673, %v1663
        %v1675 = vadd.s32 %v1674, %v1665
        %v1676 = vand.u32 %v1653, 65535
        %v1677 = vshrl.u32 %v1653, 16
        %v1678 = vand.u32 %v1648, 65535
        %v1679 = vshrl.u32 %v1648, 16
        %v1680 = vmul.u32 %v1676, %v1678
        %v1681 = vmul.u32 %v1676, %v1679
        %v1682 = vmul.u32 %v1677, %v1678
        %v1683 = vmul.u32 %v1677, %v1679
        %v1684 = vshll.u32 %v1681, 16
        %v1685 = vshrl.u32 %v1681, 16
        %v1686 = vshll.u32 %v1682, 16
        %v1687 = vshrl.u32 %v1682, 16
        %vm1688 = vc.u32 %v1680, %v1684
        %v1689 = vsel %vm1688, 1, 0
        %v1690 = vadd.s32 %v1680, %v1684
        %v1691 = vadd.s32 %v1683, %v1689
        %vm1692 = vc.u32 %v1690, %v1686
        %v1693 = vsel %vm1692, 1, 0
        %v1694 = vadd.s32 %v1690, %v1686
        %v1695 = vadd.s32 %v1691, %v1693
        %v1696 = vadd.s32 %v1695, %v1685
        %v1697 = vadd.s32 %v1696, %v1687
        %v1698 = vmul.u32 %v1653, %v1644
        %v1699 = vadd.s32 %v1675, %v1694
        %vm1700 = vc.u32 %v1675, %v1694
        %v1701 = vadd.s32 %v1697, 1
        %v1702 = vsel %vm1700, %v1701, %v1697
        %v1703 = vadd.s32 %v1698, %v1702
        %v1704 = vadd.s32 %v1703, 536870912
        %v1705 = vshrl.u32 %v1704, 30
        %v1706 = vshll.u32 %v1705, 30
        %v1707 = vsub.s32 %v1703, %v1706
        %vm1708 = vcmp.lt.s32.totalorder %v1707, 0
        %v1709 = vsub.s32 0, %v1707
        %v1710 = vsel %vm1708, %v1709, %v1707
        %v1711 = vclz %v1710
        %v1712 = vsub.s32 %v1711, 2
        %vm1713 = vcmp.gt.s32.totalorder 0, %v1712
        %v1714 = vsel %vm1713, 0, %v1712
        %v1715 = vsub.s32 32, %v1714
        %v1716 = vshll.u32 %v1707, %v1714
        %v1717 = vshrl.u32 %v1699, %v1715
        %v1718 = vor.u32 %v1716, %v1717
        %v1719 = vsub.s32 4294967266, %v1714
        %v1720 = vadd.s32 %v1719, 127
        %v1721 = vshll.u32 %v1720, 23
        %v1722 = vor.u32 4788187, %v1721
        %v1723 = vand.u32 2147483647, %v1722
        %v1725 = vcvt.s32.f32 %v1718
        %v1726 = vmul.f32 %v1725, %v1723
        %v1727 = vxor.u32 %v1726, 2147483648
        %v1728 = vsel %vm1607, %v1727, %v1726
        %v1729 = vsub.s32 4, %v1705
        %v1730 = vsel %vm1607, %v1729, %v1705
        %v1731 = vsel %vm1606, %v1601, %v1728
        %v1732 = vsel %vm1606, 0, %v1730
        %v1733 = vmul.f32 %v1731, %v1731
        %v1734 = vmul.f32 %v1733, -0.001358992
        %v1735 = vadd.f32 %v1734, 0.041655596
        %v1736 = vmul.f32 %v1733, %v1735
        %v1737 = vadd.f32 %v1736, -0.4999988
        %v1738 = vmul.f32 %v1733, %v1737
        %v1739 = vadd.f32 1.0, %v1738
        %v1740 = vmul.f32 %v1731, %v1731
        %v1741 = vmul.f32 %v1740, -0.00019511016
        %v1742 = vadd.f32 %v1741, 0.008332121
        %v1743 = vmul.f32 %v1740, %v1742
        %v1744 = vadd.f32 %v1743, -0.16666654
        %v1745 = vmul.f32 %v1740, %v1744
        %v1746 = vadd.f32 %v1745, 1.0
        %v1747 = vmul.f32 %v1746, %v1731
        %vm1748 = vweird.f32 %v1601
        %v1749 = vadd.s32 %v1732, 3
        %v1750 = vand.u32 %v1749, 3
        %vm1751 = vcmp.lt.s32.totalorder %v1750, 2
        %vm1752 = vcmp.eq.s32.totalorder %v1750, 0
        %v1753 = vxor.u32 %v1747, 2147483648
        %v1754 = vsel %vm1752, %v1739, %v1753
        %vm1755 = vcmp.eq.s32.totalorder %v1750, 2
        %v1756 = vxor.u32 %v1739, 2147483648
        %v1757 = vsel %vm1755, %v1756, %v1747
        %v1758 = vsel %vm1751, %v1754, %v1757
        %v1759 = vsel %vm1748, nan, %v1758
        %v1760 = vand.u32 2147483647, %v1602
        %vm1761 = vcmp.le.f32.partialorder %v1760, 0.7853982
        %vm1762 = vcmp.lt.s32.totalorder %v1602, 0
        %v1763 = vand.u32 %v1602, 2139095040
        %v1764 = vshrl.u32 %v1763, 23
        %v1765 = vsub.s32 %v1764, 127
        %v1766 = vand.u32 2147483647, %v1602
        %v1767 = vand.u32 %v1766, 8388607
        %v1768 = vor.u32 %v1767, 8388608
        %v1769 = vsub.s32 0, %v1768
        %v1770 = vadd.s32 %v1765, 1
        %vm1771 = vcmp.gt.s32.totalorder %v1770, 0
        %v1772 = vsel %vm1771, %v1770, 0
        %v1773 = vshrl.u32 %v1772, 5
        %v1774 = vand.u32 %v1772, 31
        %v1775 = vsub.s32 32, %v1774
        %v1776 = vshrl.u32 683565275, %v1775
        %v1777 = vshll.u32 683565275, %v1774
        %v1778 = vshrl.u32 2475754826, %v1775
        %v1779 = vor.u32 %v1777, %v1778
        %v1780 = vshll.u32 2475754826, %v1774
        %v1781 = vshrl.u32 2131351028, %v1775
        %v1782 = vor.u32 %v1780, %v1781
        %v1783 = vshll.u32 2131351028, %v1774
        %v1784 = vshrl.u32 2102212464, %v1775
        %v1785 = vor.u32 %v1783, %v1784
        %v1786 = vshll.u32 2102212464, %v1774
        %v1787 = vshrl.u32 920167782, %v1775
        %v1788 = vor.u32 %v1786, %v1787
        %v1789 = vshll.u32 920167782, %v1774
        %v1790 = vshrl.u32 1326507024, %v1775
        %v1791 = vor.u32 %v1789, %v1790
        %vm1792 = vcmp.lt.s32.totalorder %v1773, 1
        %vm1793 = vcmp.lt.s32.totalorder %v1773, 2
        %vm1794 = vcmp.lt.s32.totalorder %v1773, 3
        %vm1795 = vcmp.lt.s32.totalorder %v1773, 4
        %v1796 = vsel %vm1792, %v1776, %v1779
        %v1797 = vsel %vm1795, %v1785, 2102212464
        %v1798 = vsel %vm1794, %v1782, %v1797
        %v1799 = vsel %vm1793, %v1796, %v1798
        %v1800 = vsel %vm1792, %v1779, %v1782
        %v1801 = vsel %vm1795, %v1788, 920167782
        %v1802 = vsel %vm1794, %v1785, %v1801
        %v1803 = vsel %vm1793, %v1800, %v1802
        %v1804 = vsel %vm1792, %v1782, %v1785
        %v1805 = vsel %vm1795, %v1791, 1326507024
        %v1806 = vsel %vm1794, %v1788, %v1805
        %v1807 = vsel %vm1793, %v1804, %v1806
        %v1808 = vshll.u32 %v1768, 8
        %v1809 = vand.u32 %v1808, 65535
        %v1810 = vshrl.u32 %v1808, 16
        %v1811 = vand.u32 %v1807, 65535
        %v1812 = vshrl.u32 %v1807, 16
        %v1813 = vmul.u32 %v1809, %v1811
        %v1814 = vmul.u32 %v1809, %v1812
        %v1815 = vmul.u32 %v1810, %v1811
        %v1816 = vmul.u32 %v1810, %v1812
        %v1817 = vshll.u32 %v1814, 16
        %v1818 = vshrl.u32 %v1814, 16
        %v1819 = vshll.u32 %v1815, 16
        %v1820 = vshrl.u32 %v1815, 16
        %vm1821 = vc.u32 %v1813, %v1817
        %v1822 = vsel %vm1821, 1, 0
        %v1823 = vadd.s32 %v1813, %v1817
        %v1824 = vadd.s32 %v1816, %v1822
        %vm1825 = vc.u32 %v1823, %v1819
        %v1826 = vsel %vm1825, 1, 0
        %v1827 = vadd.s32 %v1823, %v1819
        %v1828 = vadd.s32 %v1824, %v1826
        %v1829 = vadd.s32 %v1828, %v1818
        %v1830 = vadd.s32 %v1829, %v1820
        %v1831 = vand.u32 %v1808, 65535
        %v1832 = vshrl.u32 %v1808, 16
        %v1833 = vand.u32 %v1803, 65535
        %v1834 = vshrl.u32 %v1803, 16
        %v1835 = vmul.u32 %v1831, %v1833
        %v1836 = vmul.u32 %v1831, %v1834
        %v1837 = vmul.u32 %v1832, %v1833
        %v1838 = vmul.u32 %v1832, %v1834
        %v1839 = vshll.u32 %v1836, 16
        %v1840 = vshrl.u32 %v1836, 16
        %v1841 = vshll.u32 %v1837, 16
        %v1842 = vshrl.u32 %v1837, 16
        %vm1843 = vc.u32 %v1835, %v1839
        %v1844 = vsel %vm1843, 1, 0
        %v1845 = vadd.s32 %v1835, %v1839
        %v1846 = vadd.s32 %v1838, %v1844
        %vm1847 = vc.u32 %v1845, %v1841
        %v1848 = vsel %vm1847, 1, 0
        %v1849 = vadd.s32 %v1845, %v1841
        %v1850 = vadd.s32 %v1846, %v1848
        %v1851 = vadd.s32 %v1850, %v1840
        %v1852 = vadd.s32 %v1851, %v1842
        %v1853 = vmul.u32 %v1808, %v1799
        %v1854 = vadd.s32 %v1830, %v1849
        %vm1855 = vc.u32 %v1830, %v1849
        %v1856 = vadd.s32 %v1852, 1
        %v1857 = vsel %vm1855, %v1856, %v1852
        %v1858 = vadd.s32 %v1853, %v1857
        %v1859 = vadd.s32 %v1858, 536870912
        %v1860 = vshrl.u32 %v1859, 30
        %v1861 = vshll.u32 %v1860, 30
        %v1862 = vsub.s32 %v1858, %v1861
        %vm1863 = vcmp.lt.s32.totalorder %v1862, 0
        %v1864 = vsub.s32 0, %v1862
        %v1865 = vsel %vm1863, %v1864, %v1862
        %v1866 = vclz %v1865
        %v1867 = vsub.s32 %v1866, 2
        %vm1868 = vcmp.gt.s32.totalorder 0, %v1867
        %v1869 = vsel %vm1868, 0, %v1867
        %v1870 = vsub.s32 32, %v1869
        %v1871 = vshll.u32 %v1862, %v1869
        %v1872 = vshrl.u32 %v1854, %v1870
        %v1873 = vor.u32 %v1871, %v1872
        %v1874 = vsub.s32 4294967266, %v1869
        %v1875 = vadd.s32 %v1874, 127
        %v1876 = vshll.u32 %v1875, 23
        %v1877 = vor.u32 4788187, %v1876
        %v1878 = vand.u32 2147483647, %v1877
        %v1880 = vcvt.s32.f32 %v1873
        %v1881 = vmul.f32 %v1880, %v1878
        %v1882 = vxor.u32 %v1881, 2147483648
        %v1883 = vsel %vm1762, %v1882, %v1881
        %v1884 = vsub.s32 4, %v1860
        %v1885 = vsel %vm1762, %v1884, %v1860
        %v1886 = vsel %vm1761, %v1602, %v1883
        %v1887 = vsel %vm1761, 0, %v1885
        %v1888 = vmul.f32 %v1886, %v1886
        %v1889 = vmul.f32 %v1888, -0.001358992
        %v1890 = vadd.f32 %v1889, 0.041655596
        %v1891 = vmul.f32 %v1888, %v1890
        %v1892 = vadd.f32 %v1891, -0.4999988
        %v1893 = vmul.f32 %v1888, %v1892
        %v1894 = vadd.f32 1.0, %v1893
        %v1895 = vmul.f32 %v1886, %v1886
        %v1896 = vmul.f32 %v1895, -0.00019511016
        %v1897 = vadd.f32 %v1896, 0.008332121
        %v1898 = vmul.f32 %v1895, %v1897
        %v1899 = vadd.f32 %v1898, -0.16666654
        %v1900 = vmul.f32 %v1895, %v1899
        %v1901 = vadd.f32 %v1900, 1.0
        %v1902 = vmul.f32 %v1901, %v1886
        %vm1903 = vweird.f32 %v1602
        %v1904 = vadd.s32 %v1887, 3
        %v1905 = vand.u32 %v1904, 3
        %vm1906 = vcmp.lt.s32.totalorder %v1905, 2
        %vm1907 = vcmp.eq.s32.totalorder %v1905, 0
        %v1908 = vxor.u32 %v1902, 2147483648
        %v1909 = vsel %vm1907, %v1894, %v1908
        %vm1910 = vcmp.eq.s32.totalorder %v1905, 2
        %v1911 = vxor.u32 %v1894, 2147483648
        %v1912 = vsel %vm1910, %v1911, %v1902
        %v1913 = vsel %vm1906, %v1909, %v1912
        %v1914 = vsel %vm1903, nan, %v1913
        %v1915 = vand.u32 2147483647, %v1603
        %vm1916 = vcmp.le.f32.partialorder %v1915, 0.7853982
        %vm1917 = vcmp.lt.s32.totalorder %v1603, 0
        %v1918 = vand.u32 %v1603, 2139095040
        %v1919 = vshrl.u32 %v1918, 23
        %v1920 = vsub.s32 %v1919, 127
        %v1921 = vand.u32 2147483647, %v1603
        %v1922 = vand.u32 %v1921, 8388607
        %v1923 = vor.u32 %v1922, 8388608
        %v1924 = vsub.s32 0, %v1923
        %v1925 = vadd.s32 %v1920, 1
        %vm1926 = vcmp.gt.s32.totalorder %v1925, 0
        %v1927 = vsel %vm1926, %v1925, 0
        %v1928 = vshrl.u32 %v1927, 5
        %v1929 = vand.u32 %v1927, 31
        %v1930 = vsub.s32 32, %v1929
        %v1931 = vshrl.u32 683565275, %v1930
        %v1932 = vshll.u32 683565275, %v1929
        %v1933 = vshrl.u32 2475754826, %v1930
        %v1934 = vor.u32 %v1932, %v1933
        %v1935 = vshll.u32 2475754826, %v1929
        %v1936 = vshrl.u32 2131351028, %v1930
        %v1937 = vor.u32 %v1935, %v1936
        %v1938 = vshll.u32 2131351028, %v1929
        %v1939 = vshrl.u32 2102212464, %v1930
        %v1940 = vor.u32 %v1938, %v1939
        %v1941 = vshll.u32 2102212464, %v1929
        %v1942 = vshrl.u32 920167782, %v1930
        %v1943 = vor.u32 %v1941, %v1942
        %v1944 = vshll.u32 920167782, %v1929
        %v1945 = vshrl.u32 1326507024, %v1930
        %v1946 = vor.u32 %v1944, %v1945
        %vm1947 = vcmp.lt.s32.totalorder %v1928, 1
        %vm1948 = vcmp.lt.s32.totalorder %v1928, 2
        %vm1949 = vcmp.lt.s32.totalorder %v1928, 3
        %vm1950 = vcmp.lt.s32.totalorder %v1928, 4
        %v1951 = vsel %vm1947, %v1931, %v1934
        %v1952 = vsel %vm1950, %v1940, 2102212464
        %v1953 = vsel %vm1949, %v1937, %v1952
        %v1954 = vsel %vm1948, %v1951, %v1953
        %v1955 = vsel %vm1947, %v1934, %v1937
        %v1956 = vsel %vm1950, %v1943, 920167782
        %v1957 = vsel %vm1949, %v1940, %v1956
        %v1958 = vsel %vm1948, %v1955, %v1957
        %v1959 = vsel %vm1947, %v1937, %v1940
        %v1960 = vsel %vm1950, %v1946, 1326507024
        %v1961 = vsel %vm1949, %v1943, %v1960
        %v1962 = vsel %vm1948, %v1959, %v1961
        %v1963 = vshll.u32 %v1923, 8
        %v1964 = vand.u32 %v1963, 65535
        %v1965 = vshrl.u32 %v1963, 16
        %v1966 = vand.u32 %v1962, 65535
        %v1967 = vshrl.u32 %v1962, 16
        %v1968 = vmul.u32 %v1964, %v1966
        %v1969 = vmul.u32 %v1964, %v1967
        %v1970 = vmul.u32 %v1965, %v1966
        %v1971 = vmul.u32 %v1965, %v1967
        %v1972 = vshll.u32 %v1969, 16
        %v1973 = vshrl.u32 %v1969, 16
        %v1974 = vshll.u32 %v1970, 16
        %v1975 = vshrl.u32 %v1970, 16
        %vm1976 = vc.u32 %v1968, %v1972
        %v1977 = vsel %vm1976, 1, 0
        %v1978 = vadd.s32 %v1968, %v1972
        %v1979 = vadd.s32 %v1971, %v1977
        %vm1980 = vc.u32 %v1978, %v1974
        %v1981 = vsel %vm1980, 1, 0
        %v1982 = vadd.s32 %v1978, %v1974
        %v1983 = vadd.s32 %v1979, %v1981
        %v1984 = vadd.s32 %v1983, %v1973
        %v1985 = vadd.s32 %v1984, %v1975
        %v1986 = vand.u32 %v1963, 65535
        %v1987 = vshrl.u32 %v1963, 16
        %v1988 = vand.u32 %v1958, 65535
        %v1989 = vshrl.u32 %v1958, 16
        %v1990 = vmul.u32 %v1986, %v1988
        %v1991 = vmul.u32 %v1986, %v1989
        %v1992 = vmul.u32 %v1987, %v1988
        %v1993 = vmul.u32 %v1987, %v1989
        %v1994 = vshll.u32 %v1991, 16
        %v1995 = vshrl.u32 %v1991, 16
        %v1996 = vshll.u32 %v1992, 16
        %v1997 = vshrl.u32 %v1992, 16
        %vm1998 = vc.u32 %v1990, %v1994
        %v1999 = vsel %vm1998, 1, 0
        %v2000 = vadd.s32 %v1990, %v1994
        %v2001 = vadd.s32 %v1993, %v1999
        %vm2002 = vc.u32 %v2000, %v1996
        %v2003 = vsel %vm2002, 1, 0
        %v2004 = vadd.s32 %v2000, %v1996
        %v2005 = vadd.s32 %v2001, %v2003
        %v2006 = vadd.s32 %v2005, %v1995
        %v2007 = vadd.s32 %v2006, %v1997
        %v2008 = vmul.u32 %v1963, %v1954
        %v2009 = vadd.s32 %v1985, %v2004
        %vm2010 = vc.u32 %v1985, %v2004
        %v2011 = vadd.s32 %v2007, 1
        %v2012 = vsel %vm2010, %v2011, %v2007
        %v2013 = vadd.s32 %v2008, %v2012
        %v2014 = vadd.s32 %v2013, 536870912
        %v2015 = vshrl.u32 %v2014, 30
        %v2016 = vshll.u32 %v2015, 30
        %v2017 = vsub.s32 %v2013, %v2016
        %vm2018 = vcmp.lt.s32.totalorder %v2017, 0
        %v2019 = vsub.s32 0, %v2017
        %v2020 = vsel %vm2018, %v2019, %v2017
        %v2021 = vclz %v2020
        %v2022 = vsub.s32 %v2021, 2
        %vm2023 = vcmp.gt.s32.totalorder 0, %v2022
        %v2024 = vsel %vm2023, 0, %v2022
        %v2025 = vsub.s32 32, %v2024
        %v2026 = vshll.u32 %v2017, %v2024
        %v2027 = vshrl.u32 %v2009, %v2025
        %v2028 = vor.u32 %v2026, %v2027
        %v2029 = vsub.s32 4294967266, %v2024
        %v2030 = vadd.s32 %v2029, 127
        %v2031 = vshll.u32 %v2030, 23
        %v2032 = vor.u32 4788187, %v2031
        %v2033 = vand.u32 2147483647, %v2032
        %v2035 = vcvt.s32.f32 %v2028
        %v2036 = vmul.f32 %v2035, %v2033
        %v2037 = vxor.u32 %v2036, 2147483648
        %v2038 = vsel %vm1917, %v2037, %v2036
        %v2039 = vsub.s32 4, %v2015
        %v2040 = vsel %vm1917, %v2039, %v2015
        %v2041 = vsel %vm1916, %v1603, %v2038
        %v2042 = vsel %vm1916, 0, %v2040
        %v2043 = vmul.f32 %v2041, %v2041
        %v2044 = vmul.f32 %v2043, -0.001358992
        %v2045 = vadd.f32 %v2044, 0.041655596
        %v2046 = vmul.f32 %v2043, %v2045
        %v2047 = vadd.f32 %v2046, -0.4999988
        %v2048 = vmul.f32 %v2043, %v2047
        %v2049 = vadd.f32 1.0, %v2048
        %v2050 = vmul.f32 %v2041, %v2041
        %v2051 = vmul.f32 %v2050, -0.00019511016
        %v2052 = vadd.f32 %v2051, 0.008332121
        %v2053 = vmul.f32 %v2050, %v2052
        %v2054 = vadd.f32 %v2053, -0.16666654
        %v2055 = vmul.f32 %v2050, %v2054
        %v2056 = vadd.f32 %v2055, 1.0
        %v2057 = vmul.f32 %v2056, %v2041
        %vm2058 = vweird.f32 %v1603
        %v2059 = vadd.s32 %v2042, 3
        %v2060 = vand.u32 %v2059, 3
        %vm2061 = vcmp.lt.s32.totalorder %v2060, 2
        %vm2062 = vcmp.eq.s32.totalorder %v2060, 0
        %v2063 = vxor.u32 %v2057, 2147483648
        %v2064 = vsel %vm2062, %v2049, %v2063
        %vm2065 = vcmp.eq.s32.totalorder %v2060, 2
        %v2066 = vxor.u32 %v2049, 2147483648
        %v2067 = vsel %vm2065, %v2066, %v2057
        %v2068 = vsel %vm2061, %v2064, %v2067
        %v2069 = vsel %vm2058, nan, %v2068
        %v2070 = vand.u32 2147483647, %v1604
        %vm2071 = vcmp.le.f32.partialorder %v2070, 0.7853982
        %vm2072 = vcmp.lt.s32.totalorder %v1604, 0
        %v2073 = vand.u32 %v1604, 2139095040
        %v2074 = vshrl.u32 %v2073, 23
        %v2075 = vsub.s32 %v2074, 127
        %v2076 = vand.u32 2147483647, %v1604
        %v2077 = vand.u32 %v2076, 8388607
        %v2078 = vor.u32 %v2077, 8388608
        %v2079 = vsub.s32 0, %v2078
        %v2080 = vadd.s32 %v2075, 1
        %vm2081 = vcmp.gt.s32.totalorder %v2080, 0
        %v2082 = vsel %vm2081, %v2080, 0
        %v2083 = vshrl.u32 %v2082, 5
        %v2084 = vand.u32 %v2082, 31
        %v2085 = vsub.s32 32, %v2084
        %v2086 = vshrl.u32 683565275, %v2085
        %v2087 = vshll.u32 683565275, %v2084
        %v2088 = vshrl.u32 2475754826, %v2085
        %v2089 = vor.u32 %v2087, %v2088
        %v2090 = vshll.u32 2475754826, %v2084
        %v2091 = vshrl.u32 2131351028, %v2085
        %v2092 = vor.u32 %v2090, %v2091
        %v2093 = vshll.u32 2131351028, %v2084
        %v2094 = vshrl.u32 2102212464, %v2085
        %v2095 = vor.u32 %v2093, %v2094
        %v2096 = vshll.u32 2102212464, %v2084
        %v2097 = vshrl.u32 920167782, %v2085
        %v2098 = vor.u32 %v2096, %v2097
        %v2099 = vshll.u32 920167782, %v2084
        %v2100 = vshrl.u32 1326507024, %v2085
        %v2101 = vor.u32 %v2099, %v2100
        %vm2102 = vcmp.lt.s32.totalorder %v2083, 1
        %vm2103 = vcmp.lt.s32.totalorder %v2083, 2
        %vm2104 = vcmp.lt.s32.totalorder %v2083, 3
        %vm2105 = vcmp.lt.s32.totalorder %v2083, 4
        %v2106 = vsel %vm2102, %v2086, %v2089
        %v2107 = vsel %vm2105, %v2095, 2102212464
        %v2108 = vsel %vm2104, %v2092, %v2107
        %v2109 = vsel %vm2103, %v2106, %v2108
        %v2110 = vsel %vm2102, %v2089, %v2092
        %v2111 = vsel %vm2105, %v2098, 920167782
        %v2112 = vsel %vm2104, %v2095, %v2111
        %v2113 = vsel %vm2103, %v2110, %v2112
        %v2114 = vsel %vm2102, %v2092, %v2095
        %v2115 = vsel %vm2105, %v2101, 1326507024
        %v2116 = vsel %vm2104, %v2098, %v2115
        %v2117 = vsel %vm2103, %v2114, %v2116
        %v2118 = vshll.u32 %v2078, 8
        %v2119 = vand.u32 %v2118, 65535
        %v2120 = vshrl.u32 %v2118, 16
        %v2121 = vand.u32 %v2117, 65535
        %v2122 = vshrl.u32 %v2117, 16
        %v2123 = vmul.u32 %v2119, %v2121
        %v2124 = vmul.u32 %v2119, %v2122
        %v2125 = vmul.u32 %v2120, %v2121
        %v2126 = vmul.u32 %v2120, %v2122
        %v2127 = vshll.u32 %v2124, 16
        %v2128 = vshrl.u32 %v2124, 16
        %v2129 = vshll.u32 %v2125, 16
        %v2130 = vshrl.u32 %v2125, 16
        %vm2131 = vc.u32 %v2123, %v2127
        %v2132 = vsel %vm2131, 1, 0
        %v2133 = vadd.s32 %v2123, %v2127
        %v2134 = vadd.s32 %v2126, %v2132
        %vm2135 = vc.u32 %v2133, %v2129
        %v2136 = vsel %vm2135, 1, 0
        %v2137 = vadd.s32 %v2133, %v2129
        %v2138 = vadd.s32 %v2134, %v2136
        %v2139 = vadd.s32 %v2138, %v2128
        %v2140 = vadd.s32 %v2139, %v2130
        %v2141 = vand.u32 %v2118, 65535
        %v2142 = vshrl.u32 %v2118, 16
        %v2143 = vand.u32 %v2113, 65535
        %v2144 = vshrl.u32 %v2113, 16
        %v2145 = vmul.u32 %v2141, %v2143
        %v2146 = vmul.u32 %v2141, %v2144
        %v2147 = vmul.u32 %v2142, %v2143
        %v2148 = vmul.u32 %v2142, %v2144
        %v2149 = vshll.u32 %v2146, 16
        %v2150 = vshrl.u32 %v2146, 16
        %v2151 = vshll.u32 %v2147, 16
        %v2152 = vshrl.u32 %v2147, 16
        %vm2153 = vc.u32 %v2145, %v2149
        %v2154 = vsel %vm2153, 1, 0
        %v2155 = vadd.s32 %v2145, %v2149
        %v2156 = vadd.s32 %v2148, %v2154
        %vm2157 = vc.u32 %v2155, %v2151
        %v2158 = vsel %vm2157, 1, 0
        %v2159 = vadd.s32 %v2155, %v2151
        %v2160 = vadd.s32 %v2156, %v2158
        %v2161 = vadd.s32 %v2160, %v2150
        %v2162 = vadd.s32 %v2161, %v2152
        %v2163 = vmul.u32 %v2118, %v2109
        %v2164 = vadd.s32 %v2140, %v2159
        %vm2165 = vc.u32 %v2140, %v2159
        %v2166 = vadd.s32 %v2162, 1
        %v2167 = vsel %vm2165, %v2166, %v2162
        %v2168 = vadd.s32 %v2163, %v2167
        %v2169 = vadd.s32 %v2168, 536870912
        %v2170 = vshrl.u32 %v2169, 30
        %v2171 = vshll.u32 %v2170, 30
        %v2172 = vsub.s32 %v2168, %v2171
        %vm2173 = vcmp.lt.s32.totalorder %v2172, 0
        %v2174 = vsub.s32 0, %v2172
        %v2175 = vsel %vm2173, %v2174, %v2172
        %v2176 = vclz %v2175
        %v2177 = vsub.s32 %v2176, 2
        %vm2178 = vcmp.gt.s32.totalorder 0, %v2177
        %v2179 = vsel %vm2178, 0, %v2177
        %v2180 = vsub.s32 32, %v2179
        %v2181 = vshll.u32 %v2172, %v2179
        %v2182 = vshrl.u32 %v2164, %v2180
        %v2183 = vor.u32 %v2181, %v2182
        %v2184 = vsub.s32 4294967266, %v2179
        %v2185 = vadd.s32 %v2184, 127
        %v2186 = vshll.u32 %v2185, 23
        %v2187 = vor.u32 4788187, %v2186
        %v2188 = vand.u32 2147483647, %v2187
        %v2190 = vcvt.s32.f32 %v2183
        %v2191 = vmul.f32 %v2190, %v2188
        %v2192 = vxor.u32 %v2191, 2147483648
        %v2193 = vsel %vm2072, %v2192, %v2191
        %v2194 = vsub.s32 4, %v2170
        %v2195 = vsel %vm2072, %v2194, %v2170
        %v2196 = vsel %vm2071, %v1604, %v2193
        %v2197 = vsel %vm2071, 0, %v2195
        %v2198 = vmul.f32 %v2196, %v2196
        %v2199 = vmul.f32 %v2198, -0.001358992
        %v2200 = vadd.f32 %v2199, 0.041655596
        %v2201 = vmul.f32 %v2198, %v2200
        %v2202 = vadd.f32 %v2201, -0.4999988
        %v2203 = vmul.f32 %v2198, %v2202
        %v2204 = vadd.f32 1.0, %v2203
        %v2205 = vmul.f32 %v2196, %v2196
        %v2206 = vmul.f32 %v2205, -0.00019511016
        %v2207 = vadd.f32 %v2206, 0.008332121
        %v2208 = vmul.f32 %v2205, %v2207
        %v2209 = vadd.f32 %v2208, -0.16666654
        %v2210 = vmul.f32 %v2205, %v2209
        %v2211 = vadd.f32 %v2210, 1.0
        %v2212 = vmul.f32 %v2211, %v2196
        %vm2213 = vweird.f32 %v1604
        %v2214 = vadd.s32 %v2197, 3
        %v2215 = vand.u32 %v2214, 3
        %vm2216 = vcmp.lt.s32.totalorder %v2215, 2
        %vm2217 = vcmp.eq.s32.totalorder %v2215, 0
        %v2218 = vxor.u32 %v2212, 2147483648
        %v2219 = vsel %vm2217, %v2204, %v2218
        %vm2220 = vcmp.eq.s32.totalorder %v2215, 2
        %v2221 = vxor.u32 %v2204, 2147483648
        %v2222 = vsel %vm2220, %v2221, %v2212
        %v2223 = vsel %vm2216, %v2219, %v2222
        %v2224 = vsel %vm2213, nan, %v2223
        %v2225 = vand.u32 2147483647, %v1601
        %vm2226 = vcmp.le.f32.partialorder %v2225, 0.7853982
        %vm2227 = vcmp.lt.s32.totalorder %v1601, 0
        %v2228 = vand.u32 %v1601, 2139095040
        %v2229 = vshrl.u32 %v2228, 23
        %v2230 = vsub.s32 %v2229, 127
        %v2231 = vand.u32 2147483647, %v1601
        %v2232 = vand.u32 %v2231, 8388607
        %v2233 = vor.u32 %v2232, 8388608
        %v2234 = vsub.s32 0, %v2233
        %v2235 = vadd.s32 %v2230, 1
        %vm2236 = vcmp.gt.s32.totalorder %v2235, 0
        %v2237 = vsel %vm2236, %v2235, 0
        %v2238 = vshrl.u32 %v2237, 5
        %v2239 = vand.u32 %v2237, 31
        %v2240 = vsub.s32 32, %v2239
        %v2241 = vshrl.u32 683565275, %v2240
        %v2242 = vshll.u32 683565275, %v2239
        %v2243 = vshrl.u32 2475754826, %v2240
        %v2244 = vor.u32 %v2242, %v2243
        %v2245 = vshll.u32 2475754826, %v2239
        %v2246 = vshrl.u32 2131351028, %v2240
        %v2247 = vor.u32 %v2245, %v2246
        %v2248 = vshll.u32 2131351028, %v2239
        %v2249 = vshrl.u32 2102212464, %v2240
        %v2250 = vor.u32 %v2248, %v2249
        %v2251 = vshll.u32 2102212464, %v2239
        %v2252 = vshrl.u32 920167782, %v2240
        %v2253 = vor.u32 %v2251, %v2252
        %v2254 = vshll.u32 920167782, %v2239
        %v2255 = vshrl.u32 1326507024, %v2240
        %v2256 = vor.u32 %v2254, %v2255
        %vm2257 = vcmp.lt.s32.totalorder %v2238, 1
        %vm2258 = vcmp.lt.s32.totalorder %v2238, 2
        %vm2259 = vcmp.lt.s32.totalorder %v2238, 3
        %vm2260 = vcmp.lt.s32.totalorder %v2238, 4
        %v2261 = vsel %vm2257, %v2241, %v2244
        %v2262 = vsel %vm2260, %v2250, 2102212464
        %v2263 = vsel %vm2259, %v2247, %v2262
        %v2264 = vsel %vm2258, %v2261, %v2263
        %v2265 = vsel %vm2257, %v2244, %v2247
        %v2266 = vsel %vm2260, %v2253, 920167782
        %v2267 = vsel %vm2259, %v2250, %v2266
        %v2268 = vsel %vm2258, %v2265, %v2267
        %v2269 = vsel %vm2257, %v2247, %v2250
        %v2270 = vsel %vm2260, %v2256, 1326507024
        %v2271 = vsel %vm2259, %v2253, %v2270
        %v2272 = vsel %vm2258, %v2269, %v2271
        %v2273 = vshll.u32 %v2233, 8
        %v2274 = vand.u32 %v2273, 65535
        %v2275 = vshrl.u32 %v2273, 16
        %v2276 = vand.u32 %v2272, 65535
        %v2277 = vshrl.u32 %v2272, 16
        %v2278 = vmul.u32 %v2274, %v2276
        %v2279 = vmul.u32 %v2274, %v2277
        %v2280 = vmul.u32 %v2275, %v2276
        %v2281 = vmul.u32 %v2275, %v2277
        %v2282 = vshll.u32 %v2279, 16
        %v2283 = vshrl.u32 %v2279, 16
        %v2284 = vshll.u32 %v2280, 16
        %v2285 = vshrl.u32 %v2280, 16
        %vm2286 = vc.u32 %v2278, %v2282
        %v2287 = vsel %vm2286, 1, 0
        %v2288 = vadd.s32 %v2278, %v2282
        %v2289 = vadd.s32 %v2281, %v2287
        %vm2290 = vc.u32 %v2288, %v2284
        %v2291 = vsel %vm2290, 1, 0
        %v2292 = vadd.s32 %v2288, %v2284
        %v2293 = vadd.s32 %v2289, %v2291
        %v2294 = vadd.s32 %v2293, %v2283
        %v2295 = vadd.s32 %v2294, %v2285
        %v2296 = vand.u32 %v2273, 65535
        %v2297 = vshrl.u32 %v2273, 16
        %v2298 = vand.u32 %v2268, 65535
        %v2299 = vshrl.u32 %v2268, 16
        %v2300 = vmul.u32 %v2296, %v2298
        %v2301 = vmul.u32 %v2296, %v2299
        %v2302 = vmul.u32 %v2297, %v2298
        %v2303 = vmul.u32 %v2297, %v2299
        %v2304 = vshll.u32 %v2301, 16
        %v2305 = vshrl.u32 %v2301, 16
        %v2306 = vshll.u32 %v2302, 16
        %v2307 = vshrl.u32 %v2302, 16
        %vm2308 = vc.u32 %v2300, %v2304
        %v2309 = vsel %vm2308, 1, 0
        %v2310 = vadd.s32 %v2300, %v2304
        %v2311 = vadd.s32 %v2303, %v2309
        %vm2312 = vc.u32 %v2310, %v2306
        %v2313 = vsel %vm2312, 1, 0
        %v2314 = vadd.s32 %v2310, %v2306
        %v2315 = vadd.s32 %v2311, %v2313
        %v2316 = vadd.s32 %v2315, %v2305
        %v2317 = vadd.s32 %v2316, %v2307
        %v2318 = vmul.u32 %v2273, %v2264
        %v2319 = vadd.s32 %v2295, %v2314
        %vm2320 = vc.u32 %v2295, %v2314
        %v2321 = vadd.s32 %v2317, 1
        %v2322 = vsel %vm2320, %v2321, %v2317
        %v2323 = vadd.s32 %v2318, %v2322
        %v2324 = vadd.s32 %v2323, 536870912
        %v2325 = vshrl.u32 %v2324, 30
        %v2326 = vshll.u32 %v2325, 30
        %v2327 = vsub.s32 %v2323, %v2326
        %vm2328 = vcmp.lt.s32.totalorder %v2327, 0
        %v2329 = vsub.s32 0, %v2327
        %v2330 = vsel %vm2328, %v2329, %v2327
        %v2331 = vclz %v2330
        %v2332 = vsub.s32 %v2331, 2
        %vm2333 = vcmp.gt.s32.totalorder 0, %v2332
        %v2334 = vsel %vm2333, 0, %v2332
        %v2335 = vsub.s32 32, %v2334
        %v2336 = vshll.u32 %v2327, %v2334
        %v2337 = vshrl.u32 %v2319, %v2335
        %v2338 = vor.u32 %v2336, %v2337
        %v2339 = vsub.s32 4294967266, %v2334
        %v2340 = vadd.s32 %v2339, 127
        %v2341 = vshll.u32 %v2340, 23
        %v2342 = vor.u32 4788187, %v2341
        %v2343 = vand.u32 2147483647, %v2342
        %v2345 = vcvt.s32.f32 %v2338
        %v2346 = vmul.f32 %v2345, %v2343
        %v2347 = vxor.u32 %v2346, 2147483648
        %v2348 = vsel %vm2227, %v2347, %v2346
        %v2349 = vsub.s32 4, %v2325
        %v2350 = vsel %vm2227, %v2349, %v2325
        %v2351 = vsel %vm2226, %v1601, %v2348
        %v2352 = vsel %vm2226, 0, %v2350
        %v2353 = vmul.f32 %v2351, %v2351
        %v2354 = vmul.f32 %v2353, -0.001358992
        %v2355 = vadd.f32 %v2354, 0.041655596
        %v2356 = vmul.f32 %v2353, %v2355
        %v2357 = vadd.f32 %v2356, -0.4999988
        %v2358 = vmul.f32 %v2353, %v2357
        %v2359 = vadd.f32 1.0, %v2358
        %v2360 = vmul.f32 %v2351, %v2351
        %v2361 = vmul.f32 %v2360, -0.00019511016
        %v2362 = vadd.f32 %v2361, 0.008332121
        %v2363 = vmul.f32 %v2360, %v2362
        %v2364 = vadd.f32 %v2363, -0.16666654
        %v2365 = vmul.f32 %v2360, %v2364
        %v2366 = vadd.f32 %v2365, 1.0
        %v2367 = vmul.f32 %v2366, %v2351
        %vm2368 = vweird.f32 %v1601
        %v2369 = vand.u32 %v2352, 3
        %vm2370 = vcmp.lt.s32.totalorder %v2369, 2
        %vm2371 = vcmp.eq.s32.totalorder %v2369, 0
        %v2372 = vxor.u32 %v2367, 2147483648
        %v2373 = vsel %vm2371, %v2359, %v2372
        %vm2374 = vcmp.eq.s32.totalorder %v2369, 2
        %v2375 = vxor.u32 %v2359, 2147483648
        %v2376 = vsel %vm2374, %v2375, %v2367
        %v2377 = vsel %vm2370, %v2373, %v2376
        %v2378 = vsel %vm2368, nan, %v2377
        %v2379 = vand.u32 2147483647, %v1602
        %vm2380 = vcmp.le.f32.partialorder %v2379, 0.7853982
        %vm2381 = vcmp.lt.s32.totalorder %v1602, 0
        %v2382 = vand.u32 %v1602, 2139095040
        %v2383 = vshrl.u32 %v2382, 23
        %v2384 = vsub.s32 %v2383, 127
        %v2385 = vand.u32 2147483647, %v1602
        %v2386 = vand.u32 %v2385, 8388607
        %v2387 = vor.u32 %v2386, 8388608
        %v2388 = vsub.s32 0, %v2387
        %v2389 = vadd.s32 %v2384, 1
        %vm2390 = vcmp.gt.s32.totalorder %v2389, 0
        %v2391 = vsel %vm2390, %v2389, 0
        %v2392 = vshrl.u32 %v2391, 5
        %v2393 = vand.u32 %v2391, 31
        %v2394 = vsub.s32 32, %v2393
        %v2395 = vshrl.u32 683565275, %v2394
        %v2396 = vshll.u32 683565275, %v2393
        %v2397 = vshrl.u32 2475754826, %v2394
        %v2398 = vor.u32 %v2396, %v2397
        %v2399 = vshll.u32 2475754826, %v2393
        %v2400 = vshrl.u32 2131351028, %v2394
        %v2401 = vor.u32 %v2399, %v2400
        %v2402 = vshll.u32 2131351028, %v2393
        %v2403 = vshrl.u32 2102212464, %v2394
        %v2404 = vor.u32 %v2402, %v2403
        %v2405 = vshll.u32 2102212464, %v2393
        %v2406 = vshrl.u32 920167782, %v2394
        %v2407 = vor.u32 %v2405, %v2406
        %v2408 = vshll.u32 920167782, %v2393
        %v2409 = vshrl.u32 1326507024, %v2394
        %v2410 = vor.u32 %v2408, %v2409
        %vm2411 = vcmp.lt.s32.totalorder %v2392, 1
        %vm2412 = vcmp.lt.s32.totalorder %v2392, 2
        %vm2413 = vcmp.lt.s32.totalorder %v2392, 3
        %vm2414 = vcmp.lt.s32.totalorder %v2392, 4
        %v2415 = vsel %vm2411, %v2395, %v2398
        %v2416 = vsel %vm2414, %v2404, 2102212464
        %v2417 = vsel %vm2413, %v2401, %v2416
        %v2418 = vsel %vm2412, %v2415, %v2417
        %v2419 = vsel %vm2411, %v2398, %v2401
        %v2420 = vsel %vm2414, %v2407, 920167782
        %v2421 = vsel %vm2413, %v2404, %v2420
        %v2422 = vsel %vm2412, %v2419, %v2421
        %v2423 = vsel %vm2411, %v2401, %v2404
        %v2424 = vsel %vm2414, %v2410, 1326507024
        %v2425 = vsel %vm2413, %v2407, %v2424
        %v2426 = vsel %vm2412, %v2423, %v2425
        %v2427 = vshll.u32 %v2387, 8
        %v2428 = vand.u32 %v2427, 65535
        %v2429 = vshrl.u32 %v2427, 16
        %v2430 = vand.u32 %v2426, 65535
        %v2431 = vshrl.u32 %v2426, 16
        %v2432 = vmul.u32 %v2428, %v2430
        %v2433 = vmul.u32 %v2428, %v2431
        %v2434 = vmul.u32 %v2429, %v2430
        %v2435 = vmul.u32 %v2429, %v2431
        %v2436 = vshll.u32 %v2433, 16
        %v2437 = vshrl.u32 %v2433, 16
        %v2438 = vshll.u32 %v2434, 16
        %v2439 = vshrl.u32 %v2434, 16
        %vm2440 = vc.u32 %v2432, %v2436
        %v2441 = vsel %vm2440, 1, 0
        %v2442 = vadd.s32 %v2432, %v2436
        %v2443 = vadd.s32 %v2435, %v2441
        %vm2444 = vc.u32 %v2442, %v2438
        %v2445 = vsel %vm2444, 1, 0
        %v2446 = vadd.s32 %v2442, %v2438
        %v2447 = vadd.s32 %v2443, %v2445
        %v2448 = vadd.s32 %v2447, %v2437
        %v2449 = vadd.s32 %v2448, %v2439
        %v2450 = vand.u32 %v2427, 65535
        %v2451 = vshrl.u32 %v2427, 16
        %v2452 = vand.u32 %v2422, 65535
        %v2453 = vshrl.u32 %v2422, 16
        %v2454 = vmul.u32 %v2450, %v2452
        %v2455 = vmul.u32 %v2450, %v2453
        %v2456 = vmul.u32 %v2451, %v2452
        %v2457 = vmul.u32 %v2451, %v2453
        %v2458 = vshll.u32 %v2455, 16
        %v2459 = vshrl.u32 %v2455, 16
        %v2460 = vshll.u32 %v2456, 16
        %v2461 = vshrl.u32 %v2456, 16
        %vm2462 = vc.u32 %v2454, %v2458
        %v2463 = vsel %vm2462, 1, 0
        %v2464 = vadd.s32 %v2454, %v2458
        %v2465 = vadd.s32 %v2457, %v2463
        %vm2466 = vc.u32 %v2464, %v2460
        %v2467 = vsel %vm2466, 1, 0
        %v2468 = vadd.s32 %v2464, %v2460
        %v2469 = vadd.s32 %v2465, %v2467
        %v2470 = vadd.s32 %v2469, %v2459
        %v2471 = vadd.s32 %v2470, %v2461
        %v2472 = vmul.u32 %v2427, %v2418
        %v2473 = vadd.s32 %v2449, %v2468
        %vm2474 = vc.u32 %v2449, %v2468
        %v2475 = vadd.s32 %v2471, 1
        %v2476 = vsel %vm2474, %v2475, %v2471
        %v2477 = vadd.s32 %v2472, %v2476
        %v2478 = vadd.s32 %v2477, 536870912
        %v2479 = vshrl.u32 %v2478, 30
        %v2480 = vshll.u32 %v2479, 30
        %v2481 = vsub.s32 %v2477, %v2480
        %vm2482 = vcmp.lt.s32.totalorder %v2481, 0
        %v2483 = vsub.s32 0, %v2481
        %v2484 = vsel %vm2482, %v2483, %v2481
        %v2485 = vclz %v2484
        %v2486 = vsub.s32 %v2485, 2
        %vm2487 = vcmp.gt.s32.totalorder 0, %v2486
        %v2488 = vsel %vm2487, 0, %v2486
        %v2489 = vsub.s32 32, %v2488
        %v2490 = vshll.u32 %v2481, %v2488
        %v2491 = vshrl.u32 %v2473, %v2489
        %v2492 = vor.u32 %v2490, %v2491
        %v2493 = vsub.s32 4294967266, %v2488
        %v2494 = vadd.s32 %v2493, 127
        %v2495 = vshll.u32 %v2494, 23
        %v2496 = vor.u32 4788187, %v2495
        %v2497 = vand.u32 2147483647, %v2496
        %v2499 = vcvt.s32.f32 %v2492
        %v2500 = vmul.f32 %v2499, %v2497
        %v2501 = vxor.u32 %v2500, 2147483648
        %v2502 = vsel %vm2381, %v2501, %v2500
        %v2503 = vsub.s32 4, %v2479
        %v2504 = vsel %vm2381, %v2503, %v2479
        %v2505 = vsel %vm2380, %v1602, %v2502
        %v2506 = vsel %vm2380, 0, %v2504
        %v2507 = vmul.f32 %v2505, %v2505
        %v2508 = vmul.f32 %v2507, -0.001358992
        %v2509 = vadd.f32 %v2508, 0.041655596
        %v2510 = vmul.f32 %v2507, %v2509
        %v2511 = vadd.f32 %v2510, -0.4999988
        %v2512 = vmul.f32 %v2507, %v2511
        %v2513 = vadd.f32 1.0, %v2512
        %v2514 = vmul.f32 %v2505, %v2505
        %v2515 = vmul.f32 %v2514, -0.00019511016
        %v2516 = vadd.f32 %v2515, 0.008332121
        %v2517 = vmul.f32 %v2514, %v2516
        %v2518 = vadd.f32 %v2517, -0.16666654
        %v2519 = vmul.f32 %v2514, %v2518
        %v2520 = vadd.f32 %v2519, 1.0
        %v2521 = vmul.f32 %v2520, %v2505
        %vm2522 = vweird.f32 %v1602
        %v2523 = vand.u32 %v2506, 3
        %vm2524 = vcmp.lt.s32.totalorder %v2523, 2
        %vm2525 = vcmp.eq.s32.totalorder %v2523, 0
        %v2526 = vxor.u32 %v2521, 2147483648
        %v2527 = vsel %vm2525, %v2513, %v2526
        %vm2528 = vcmp.eq.s32.totalorder %v2523, 2
        %v2529 = vxor.u32 %v2513, 2147483648
        %v2530 = vsel %vm2528, %v2529, %v2521
        %v2531 = vsel %vm2524, %v2527, %v2530
        %v2532 = vsel %vm2522, nan, %v2531
        %v2533 = vand.u32 2147483647, %v1603
        %vm2534 = vcmp.le.f32.partialorder %v2533, 0.7853982
        %vm2535 = vcmp.lt.s32.totalorder %v1603, 0
        %v2536 = vand.u32 %v1603, 2139095040
        %v2537 = vshrl.u32 %v2536, 23
        %v2538 = vsub.s32 %v2537, 127
        %v2539 = vand.u32 2147483647, %v1603
        %v2540 = vand.u32 %v2539, 8388607
        %v2541 = vor.u32 %v2540, 8388608
        %v2542 = vsub.s32 0, %v2541
        %v2543 = vadd.s32 %v2538, 1
        %vm2544 = vcmp.gt.s32.totalorder %v2543, 0
        %v2545 = vsel %vm2544, %v2543, 0
        %v2546 = vshrl.u32 %v2545, 5
        %v2547 = vand.u32 %v2545, 31
        %v2548 = vsub.s32 32, %v2547
        %v2549 = vshrl.u32 683565275, %v2548
        %v2550 = vshll.u32 683565275, %v2547
        %v2551 = vshrl.u32 2475754826, %v2548
        %v2552 = vor.u32 %v2550, %v2551
        %v2553 = vshll.u32 2475754826, %v2547
        %v2554 = vshrl.u32 2131351028, %v2548
        %v2555 = vor.u32 %v2553, %v2554
        %v2556 = vshll.u32 2131351028, %v2547
        %v2557 = vshrl.u32 2102212464, %v2548
        %v2558 = vor.u32 %v2556, %v2557
        %v2559 = vshll.u32 2102212464, %v2547
        %v2560 = vshrl.u32 920167782, %v2548
        %v2561 = vor.u32 %v2559, %v2560
        %v2562 = vshll.u32 920167782, %v2547
        %v2563 = vshrl.u32 1326507024, %v2548
        %v2564 = vor.u32 %v2562, %v2563
        %vm2565 = vcmp.lt.s32.totalorder %v2546, 1
        %vm2566 = vcmp.lt.s32.totalorder %v2546, 2
        %vm2567 = vcmp.lt.s32.totalorder %v2546, 3
        %vm2568 = vcmp.lt.s32.totalorder %v2546, 4
        %v2569 = vsel %vm2565, %v2549, %v2552
        %v2570 = vsel %vm2568, %v2558, 2102212464
        %v2571 = vsel %vm2567, %v2555, %v2570
        %v2572 = vsel %vm2566, %v2569, %v2571
        %v2573 = vsel %vm2565, %v2552, %v2555
        %v2574 = vsel %vm2568, %v2561, 920167782
        %v2575 = vsel %vm2567, %v2558, %v2574
        %v2576 = vsel %vm2566, %v2573, %v2575
        %v2577 = vsel %vm2565, %v2555, %v2558
        %v2578 = vsel %vm2568, %v2564, 1326507024
        %v2579 = vsel %vm2567, %v2561, %v2578
        %v2580 = vsel %vm2566, %v2577, %v2579
        %v2581 = vshll.u32 %v2541, 8
        %v2582 = vand.u32 %v2581, 65535
        %v2583 = vshrl.u32 %v2581, 16
        %v2584 = vand.u32 %v2580, 65535
        %v2585 = vshrl.u32 %v2580, 16
        %v2586 = vmul.u32 %v2582, %v2584
        %v2587 = vmul.u32 %v2582, %v2585
        %v2588 = vmul.u32 %v2583, %v2584
        %v2589 = vmul.u32 %v2583, %v2585
        %v2590 = vshll.u32 %v2587, 16
        %v2591 = vshrl.u32 %v2587, 16
        %v2592 = vshll.u32 %v2588, 16
        %v2593 = vshrl.u32 %v2588, 16
        %vm2594 = vc.u32 %v2586, %v2590
        %v2595 = vsel %vm2594, 1, 0
        %v2596 = vadd.s32 %v2586, %v2590
        %v2597 = vadd.s32 %v2589, %v2595
        %vm2598 = vc.u32 %v2596, %v2592
        %v2599 = vsel %vm2598, 1, 0
        %v2600 = vadd.s32 %v2596, %v2592
        %v2601 = vadd.s32 %v2597, %v2599
        %v2602 = vadd.s32 %v2601, %v2591
        %v2603 = vadd.s32 %v2602, %v2593
        %v2604 = vand.u32 %v2581, 65535
        %v2605 = vshrl.u32 %v2581, 16
        %v2606 = vand.u32 %v2576, 65535
        %v2607 = vshrl.u32 %v2576, 16
        %v2608 = vmul.u32 %v2604, %v2606
        %v2609 = vmul.u32 %v2604, %v2607
        %v2610 = vmul.u32 %v2605, %v2606
        %v2611 = vmul.u32 %v2605, %v2607
        %v2612 = vshll.u32 %v2609, 16
        %v2613 = vshrl.u32 %v2609, 16
        %v2614 = vshll.u32 %v2610, 16
        %v2615 = vshrl.u32 %v2610, 16
        %vm2616 = vc.u32 %v2608, %v2612
        %v2617 = vsel %vm2616, 1, 0
        %v2618 = vadd.s32 %v2608, %v2612
        %v2619 = vadd.s32 %v2611, %v2617
        %vm2620 = vc.u32 %v2618, %v2614
        %v2621 = vsel %vm2620, 1, 0
        %v2622 = vadd.s32 %v2618, %v2614
        %v2623 = vadd.s32 %v2619, %v2621
        %v2624 = vadd.s32 %v2623, %v2613
        %v2625 = vadd.s32 %v2624, %v2615
        %v2626 = vmul.u32 %v2581, %v2572
        %v2627 = vadd.s32 %v2603, %v2622
        %vm2628 = vc.u32 %v2603, %v2622
        %v2629 = vadd.s32 %v2625, 1
        %v2630 = vsel %vm2628, %v2629, %v2625
        %v2631 = vadd.s32 %v2626, %v2630
        %v2632 = vadd.s32 %v2631, 536870912
        %v2633 = vshrl.u32 %v2632, 30
        %v2634 = vshll.u32 %v2633, 30
        %v2635 = vsub.s32 %v2631, %v2634
        %vm2636 = vcmp.lt.s32.totalorder %v2635, 0
        %v2637 = vsub.s32 0, %v2635
        %v2638 = vsel %vm2636, %v2637, %v2635
        %v2639 = vclz %v2638
        %v2640 = vsub.s32 %v2639, 2
        %vm2641 = vcmp.gt.s32.totalorder 0, %v2640
        %v2642 = vsel %vm2641, 0, %v2640
        %v2643 = vsub.s32 32, %v2642
        %v2644 = vshll.u32 %v2635, %v2642
        %v2645 = vshrl.u32 %v2627, %v2643
        %v2646 = vor.u32 %v2644, %v2645
        %v2647 = vsub.s32 4294967266, %v2642
        %v2648 = vadd.s32 %v2647, 127
        %v2649 = vshll.u32 %v2648, 23
        %v2650 = vor.u32 4788187, %v2649
        %v2651 = vand.u32 2147483647, %v2650
        %v2653 = vcvt.s32.f32 %v2646
        %v2654 = vmul.f32 %v2653, %v2651
        %v2655 = vxor.u32 %v2654, 2147483648
        %v2656 = vsel %vm2535, %v2655, %v2654
        %v2657 = vsub.s32 4, %v2633
        %v2658 = vsel %vm2535, %v2657, %v2633
        %v2659 = vsel %vm2534, %v1603, %v2656
        %v2660 = vsel %vm2534, 0, %v2658
        %v2661 = vmul.f32 %v2659, %v2659
        %v2662 = vmul.f32 %v2661, -0.001358992
        %v2663 = vadd.f32 %v2662, 0.041655596
        %v2664 = vmul.f32 %v2661, %v2663
        %v2665 = vadd.f32 %v2664, -0.4999988
        %v2666 = vmul.f32 %v2661, %v2665
        %v2667 = vadd.f32 1.0, %v2666
        %v2668 = vmul.f32 %v2659, %v2659
        %v2669 = vmul.f32 %v2668, -0.00019511016
        %v2670 = vadd.f32 %v2669, 0.008332121
        %v2671 = vmul.f32 %v2668, %v2670
        %v2672 = vadd.f32 %v2671, -0.16666654
        %v2673 = vmul.f32 %v2668, %v2672
        %v2674 = vadd.f32 %v2673, 1.0
        %v2675 = vmul.f32 %v2674, %v2659
        %vm2676 = vweird.f32 %v1603
        %v2677 = vand.u32 %v2660, 3
        %vm2678 = vcmp.lt.s32.totalorder %v2677, 2
        %vm2679 = vcmp.eq.s32.totalorder %v2677, 0
        %v2680 = vxor.u32 %v2675, 2147483648
        %v2681 = vsel %vm2679, %v2667, %v2680
        %vm2682 = vcmp.eq.s32.totalorder %v2677, 2
        %v2683 = vxor.u32 %v2667, 2147483648
        %v2684 = vsel %vm2682, %v2683, %v2675
        %v2685 = vsel %vm2678, %v2681, %v2684
        %v2686 = vsel %vm2676, nan, %v2685
        %v2687 = vand.u32 2147483647, %v1604
        %vm2688 = vcmp.le.f32.partialorder %v2687, 0.7853982
        %vm2689 = vcmp.lt.s32.totalorder %v1604, 0
        %v2690 = vand.u32 %v1604, 2139095040
        %v2691 = vshrl.u32 %v2690, 23
        %v2692 = vsub.s32 %v2691, 127
        %v2693 = vand.u32 2147483647, %v1604
        %v2694 = vand.u32 %v2693, 8388607
        %v2695 = vor.u32 %v2694, 8388608
        %v2696 = vsub.s32 0, %v2695
        %v2697 = vadd.s32 %v2692, 1
        %vm2698 = vcmp.gt.s32.totalorder %v2697, 0
        %v2699 = vsel %vm2698, %v2697, 0
        %v2700 = vshrl.u32 %v2699, 5
        %v2701 = vand.u32 %v2699, 31
        %v2702 = vsub.s32 32, %v2701
        %v2703 = vshrl.u32 683565275, %v2702
        %v2704 = vshll.u32 683565275, %v2701
        %v2705 = vshrl.u32 2475754826, %v2702
        %v2706 = vor.u32 %v2704, %v2705
        %v2707 = vshll.u32 2475754826, %v2701
        %v2708 = vshrl.u32 2131351028, %v2702
        %v2709 = vor.u32 %v2707, %v2708
        %v2710 = vshll.u32 2131351028, %v2701
        %v2711 = vshrl.u32 2102212464, %v2702
        %v2712 = vor.u32 %v2710, %v2711
        %v2713 = vshll.u32 2102212464, %v2701
        %v2714 = vshrl.u32 920167782, %v2702
        %v2715 = vor.u32 %v2713, %v2714
        %v2716 = vshll.u32 920167782, %v2701
        %v2717 = vshrl.u32 1326507024, %v2702
        %v2718 = vor.u32 %v2716, %v2717
        %vm2719 = vcmp.lt.s32.totalorder %v2700, 1
        %vm2720 = vcmp.lt.s32.totalorder %v2700, 2
        %vm2721 = vcmp.lt.s32.totalorder %v2700, 3
        %vm2722 = vcmp.lt.s32.totalorder %v2700, 4
        %v2723 = vsel %vm2719, %v2703, %v2706
        %v2724 = vsel %vm2722, %v2712, 2102212464
        %v2725 = vsel %vm2721, %v2709, %v2724
        %v2726 = vsel %vm2720, %v2723, %v2725
        %v2727 = vsel %vm2719, %v2706, %v2709
        %v2728 = vsel %vm2722, %v2715, 920167782
        %v2729 = vsel %vm2721, %v2712, %v2728
        %v2730 = vsel %vm2720, %v2727, %v2729
        %v2731 = vsel %vm2719, %v2709, %v2712
        %v2732 = vsel %vm2722, %v2718, 1326507024
        %v2733 = vsel %vm2721, %v2715, %v2732
        %v2734 = vsel %vm2720, %v2731, %v2733
        %v2735 = vshll.u32 %v2695, 8
        %v2736 = vand.u32 %v2735, 65535
        %v2737 = vshrl.u32 %v2735, 16
        %v2738 = vand.u32 %v2734, 65535
        %v2739 = vshrl.u32 %v2734, 16
        %v2740 = vmul.u32 %v2736, %v2738
        %v2741 = vmul.u32 %v2736, %v2739
        %v2742 = vmul.u32 %v2737, %v2738
        %v2743 = vmul.u32 %v2737, %v2739
        %v2744 = vshll.u32 %v2741, 16
        %v2745 = vshrl.u32 %v2741, 16
        %v2746 = vshll.u32 %v2742, 16
        %v2747 = vshrl.u32 %v2742, 16
        %vm2748 = vc.u32 %v2740, %v2744
        %v2749 = vsel %vm2748, 1, 0
        %v2750 = vadd.s32 %v2740, %v2744
        %v2751 = vadd.s32 %v2743, %v2749
        %vm2752 = vc.u32 %v2750, %v2746
        %v2753 = vsel %vm2752, 1, 0
        %v2754 = vadd.s32 %v2750, %v2746
        %v2755 = vadd.s32 %v2751, %v2753
        %v2756 = vadd.s32 %v2755, %v2745
        %v2757 = vadd.s32 %v2756, %v2747
        %v2758 = vand.u32 %v2735, 65535
        %v2759 = vshrl.u32 %v2735, 16
        %v2760 = vand.u32 %v2730, 65535
        %v2761 = vshrl.u32 %v2730, 16
        %v2762 = vmul.u32 %v2758, %v2760
        %v2763 = vmul.u32 %v2758, %v2761
        %v2764 = vmul.u32 %v2759, %v2760
        %v2765 = vmul.u32 %v2759, %v2761
        %v2766 = vshll.u32 %v2763, 16
        %v2767 = vshrl.u32 %v2763, 16
        %v2768 = vshll.u32 %v2764, 16
        %v2769 = vshrl.u32 %v2764, 16
        %vm2770 = vc.u32 %v2762, %v2766
        %v2771 = vsel %vm2770, 1, 0
        %v2772 = vadd.s32 %v2762, %v2766
        %v2773 = vadd.s32 %v2765, %v2771
        %vm2774 = vc.u32 %v2772, %v2768
        %v2775 = vsel %vm2774, 1, 0
        %v2776 = vadd.s32 %v2772, %v2768
        %v2777 = vadd.s32 %v2773, %v2775
        %v2778 = vadd.s32 %v2777, %v2767
        %v2779 = vadd.s32 %v2778, %v2769
        %v2780 = vmul.u32 %v2735, %v2726
        %v2781 = vadd.s32 %v2757, %v2776
        %vm2782 = vc.u32 %v2757, %v2776
        %v2783 = vadd.s32 %v2779, 1
        %v2784 = vsel %vm2782, %v2783, %v2779
        %v2785 = vadd.s32 %v2780, %v2784
        %v2786 = vadd.s32 %v2785, 536870912
        %v2787 = vshrl.u32 %v2786, 30
        %v2788 = vshll.u32 %v2787, 30
        %v2789 = vsub.s32 %v2785, %v2788
        %vm2790 = vcmp.lt.s32.totalorder %v2789, 0
        %v2791 = vsub.s32 0, %v2789
        %v2792 = vsel %vm2790, %v2791, %v2789
        %v2793 = vclz %v2792
        %v2794 = vsub.s32 %v2793, 2
        %vm2795 = vcmp.gt.s32.totalorder 0, %v2794
        %v2796 = vsel %vm2795, 0, %v2794
        %v2797 = vsub.s32 32, %v2796
        %v2798 = vshll.u32 %v2789, %v2796
        %v2799 = vshrl.u32 %v2781, %v2797
        %v2800 = vor.u32 %v2798, %v2799
        %v2801 = vsub.s32 4294967266, %v2796
        %v2802 = vadd.s32 %v2801, 127
        %v2803 = vshll.u32 %v2802, 23
        %v2804 = vor.u32 4788187, %v2803
        %v2805 = vand.u32 2147483647, %v2804
        %v2807 = vcvt.s32.f32 %v2800
        %v2808 = vmul.f32 %v2807, %v2805
        %v2809 = vxor.u32 %v2808, 2147483648
        %v2810 = vsel %vm2689, %v2809, %v2808
        %v2811 = vsub.s32 4, %v2787
        %v2812 = vsel %vm2689, %v2811, %v2787
        %v2813 = vsel %vm2688, %v1604, %v2810
        %v2814 = vsel %vm2688, 0, %v2812
        %v2815 = vmul.f32 %v2813, %v2813
        %v2816 = vmul.f32 %v2815, -0.001358992
        %v2817 = vadd.f32 %v2816, 0.041655596
        %v2818 = vmul.f32 %v2815, %v2817
        %v2819 = vadd.f32 %v2818, -0.4999988
        %v2820 = vmul.f32 %v2815, %v2819
        %v2821 = vadd.f32 1.0, %v2820
        %v2822 = vmul.f32 %v2813, %v2813
        %v2823 = vmul.f32 %v2822, -0.00019511016
        %v2824 = vadd.f32 %v2823, 0.008332121
        %v2825 = vmul.f32 %v2822, %v2824
        %v2826 = vadd.f32 %v2825, -0.16666654
        %v2827 = vmul.f32 %v2822, %v2826
        %v2828 = vadd.f32 %v2827, 1.0
        %v2829 = vmul.f32 %v2828, %v2813
        %vm2830 = vweird.f32 %v1604
        %v2831 = vand.u32 %v2814, 3
        %vm2832 = vcmp.lt.s32.totalorder %v2831, 2
        %vm2833 = vcmp.eq.s32.totalorder %v2831, 0
        %v2834 = vxor.u32 %v2829, 2147483648
        %v2835 = vsel %vm2833, %v2821, %v2834
        %vm2836 = vcmp.eq.s32.totalorder %v2831, 2
        %v2837 = vxor.u32 %v2821, 2147483648
        %v2838 = vsel %vm2836, %v2837, %v2829
        %v2839 = vsel %vm2832, %v2835, %v2838
        %v2840 = vsel %vm2830, nan, %v2839
        %v2842 = vsel %vm1429, %v2378, 0
        %v2845 = vsel %vm1429, %v2532, 0
        %v2848 = vsel %vm1429, %v2686, 0
        %v2851 = vsel %vm1429, %v2840, 0
        %2853 = vmatpush.msra.mxu0 0.0
        %2854 = vmatpush.msra.mxu0 0.0
        %2855 = vmatpush.msra.mxu0 0.0
        %2856 = vmatpush.msra.mxu0 0.0
        %2857 = vmatpush.msra.mxu0 0.0
        %2858 = vmatpush.msra.mxu0 0.0
        %2859 = vmatpush.msra.mxu0 0.0
        %2860 = vmatpush.msra.mxu0 0.0
        %2861 = vmatpush.msra.mxu0 0.0
        %2862 = vmatpush.msra.mxu0 0.0
        %2863 = vmatpush.msra.mxu0 0.0
        %2864 = vmatpush.msra.mxu0 0.0
        %2865 = vmatpush.msra.mxu0 0.0
        %2866 = vmatpush.msra.mxu0 %v1428
        %2867 = vmatpush.msra.mxu0 %v1427
        %2868 = vmatpush.msra.mxu0 %v1426
        %2869 = vmatmul.f32.gmra.mxu0 %v2842
        %v2870 = vpop.f32.mrf.mxu0
        %v2871 = vadd.f32 0.0, %v2870
        %2872 = vmatmul.f32.gmra.mxu0 %v2845
        %v2873 = vpop.f32.mrf.mxu0
        %v2874 = vadd.f32 0.0, %v2873
        %2875 = vmatmul.f32.gmra.mxu0 %v2848
        %v2876 = vpop.f32.mrf.mxu0
        %v2877 = vadd.f32 0.0, %v2876
        %2878 = vmatmul.f32.gmra.mxu0 %v2851
        %v2879 = vpop.f32.mrf.mxu0
        %v2880 = vadd.f32 0.0, %v2879
        %2881 = vdwg.mxu0
        %v2883 = vsel %vm1429, %v1759, 0
        %v2886 = vsel %vm1429, %v1914, 0
        %v2889 = vsel %vm1429, %v2069, 0
        %v2892 = vsel %vm1429, %v2224, 0
        %2894 = vmatpush.msra.mxu0 0.0
        %2895 = vmatpush.msra.mxu0 0.0
        %2896 = vmatpush.msra.mxu0 0.0
        %2897 = vmatpush.msra.mxu0 0.0
        %2898 = vmatpush.msra.mxu0 0.0
        %2899 = vmatpush.msra.mxu0 0.0
        %2900 = vmatpush.msra.mxu0 0.0
        %2901 = vmatpush.msra.mxu0 0.0
        %2902 = vmatpush.msra.mxu0 0.0
        %2903 = vmatpush.msra.mxu0 0.0
        %2904 = vmatpush.msra.mxu0 0.0
        %2905 = vmatpush.msra.mxu0 0.0
        %2906 = vmatpush.msra.mxu0 0.0
        %2907 = vmatpush.msra.mxu0 %v1117
        %2908 = vmatpush.msra.mxu0 %v1116
        %2909 = vmatpush.msra.mxu0 %v1115
        %2910 = vmatmul.f32.gmra.mxu0 %v2883
        %v2911 = vpop.f32.mrf.mxu0
        %v2912 = vadd.f32 %v2871, %v2911
        %2913 = vmatmul.f32.gmra.mxu0 %v2886
        %v2914 = vpop.f32.mrf.mxu0
        %v2915 = vadd.f32 %v2874, %v2914
        %2916 = vmatmul.f32.gmra.mxu0 %v2889
        %v2917 = vpop.f32.mrf.mxu0
        %v2918 = vadd.f32 %v2877, %v2917
        %2919 = vmatmul.f32.gmra.mxu0 %v2892
        %v2920 = vpop.f32.mrf.mxu0
        %v2921 = vadd.f32 %v2880, %v2920
        %2922 = vdwg.mxu0
        %v2923 = vsel %vm1489, %v1529, 0
        %v2925 = vsel %vm1489, %v1530, 0
        %v2927 = vsel %vm1489, %v1531, 0
        %v2929 = vsel %vm1489, %v1532, 0
        %2931 = vmatpush.msra.mxu0 0.0
        %2932 = vmatpush.msra.mxu0 0.0
        %2933 = vmatpush.msra.mxu0 0.0
        %2934 = vmatpush.msra.mxu0 0.0
        %2935 = vmatpush.msra.mxu0 0.0
        %2936 = vmatpush.msra.mxu0 0.0
        %2937 = vmatpush.msra.mxu0 0.0
        %2938 = vmatpush.msra.mxu0 0.0
        %2939 = vmatpush.msra.mxu0 0.0
        %2940 = vmatpush.msra.mxu0 0.0
        %2941 = vmatpush.msra.mxu0 0.0
        %2942 = vmatpush.msra.mxu0 0.0
        %2943 = vmatpush.msra.mxu0 0.0
        %2944 = vmatpush.msra.mxu0 0.0
        %2945 = vmatpush.msra.mxu0 0.0
        %2946 = vmatpush.msra.mxu0 %v1496
        %2947 = vmatmul.f32.gmra.mxu0 %v2923
        %v2948 = vpop.f32.mrf.mxu0
        %v2949 = vadd.f32 0.0, %v2948
        %2950 = vmatmul.f32.gmra.mxu0 %v2925
        %v2951 = vpop.f32.mrf.mxu0
        %v2952 = vadd.f32 0.0, %v2951
        %2953 = vmatmul.f32.gmra.mxu0 %v2927
        %v2954 = vpop.f32.mrf.mxu0
        %v2955 = vadd.f32 0.0, %v2954
        %2956 = vmatmul.f32.gmra.mxu0 %v2929
        %v2957 = vpop.f32.mrf.mxu0
        %v2958 = vadd.f32 0.0, %v2957
        %2959 = vdwg.mxu0
        %v2960 = vadd.f32 %v2912, %v2949
        %v2961 = vadd.f32 %v2915, %v2952
        %v2962 = vadd.f32 %v2918, %v2955
        %v2963 = vadd.f32 %v2921, %v2958
        %v2964 = vadd.f32 %v2960, %v1525
        %v2965 = vadd.f32 %v2961, %v1525
        %v2966 = vadd.f32 %v2962, %v1525
        %v2967 = vadd.f32 %v2963, %v1525
        %v2968 = vld [vmem:[%s7] sm:$0x1]
        %v2969 = vld [vmem:[%s8] sm:$0x1]
        %2970 = vadd.xlane.f32.xlu0 %v1527
        %v2971 = vpop.xlane.xlu0 %2970
        %2972 = vadd.xlane.f32.xlu0 %v1528
        %v2973 = vpop.xlane.xlu0 %2972
        %v2974 = vrcp.pop 128.0
        %v2975 = vmul.f32 128.0, %v2974
        %v2976 = vsub.f32 1.0, %v2975
        %v2977 = vmul.f32 %v2974, %v2976
        %v2978 = vadd.f32 %v2974, %v2977
        %vm2979 = vweird.f32 %v2974
        %v2980 = vsel %vm2979, %v2974, %v2978
        %v2981 = vmul.f32 %v2971, %v2980
        %v2982 = vmul.f32 %v2973, %v2980
        %v2983 = vsub.f32 %v1527, %v2981
        %v2984 = vsub.f32 %v1528, %v2982
        %v2985 = vmul.f32 %v2983, %v2983
        %v2986 = vmul.f32 %v2984, %v2984
        %2987 = vadd.xlane.f32.xlu0 %v2985
        %v2988 = vpop.xlane.xlu0 %2987
        %2989 = vadd.xlane.f32.xlu0 %v2986
        %v2990 = vpop.xlane.xlu0 %2989
        %v2991 = vmul.f32 %v2988, %v2980
        %v2992 = vmul.f32 %v2990, %v2980
        %v2993 = vadd.f32 %v2991, 1e-05
        %v2994 = vadd.f32 %v2992, 1e-05
        %v2995 = vrsqrt.pop %v2993
        %v2996 = vmul.f32 %v2995, %v2993
        %v2997 = vmul.f32 %v2996, %v2995
        %v2998 = vmul.f32 0.5, %v2997
        %v2999 = vsub.f32 1.5, %v2998
        %v3000 = vmul.f32 %v2995, %v2999
        %vm3001 = vweird.f32 %v2993
        %vm3002 = vweird.f32 %v2995
        %vm3003 = vmor %vm3001, %vm3002
        %v3004 = vsel %vm3003, %v2995, %v3000
        %v3005 = vrsqrt.pop %v2994
        %v3006 = vmul.f32 %v3005, %v2994
        %v3007 = vmul.f32 %v3006, %v3005
        %v3008 = vmul.f32 0.5, %v3007
        %v3009 = vsub.f32 1.5, %v3008
        %v3010 = vmul.f32 %v3005, %v3009
        %vm3011 = vweird.f32 %v2994
        %vm3012 = vweird.f32 %v3005
        %vm3013 = vmor %vm3011, %vm3012
        %v3014 = vsel %vm3013, %v3005, %v3010
        %v3015 = vmul.f32 %v2983, %v3004
        %v3016 = vmul.f32 %v2984, %v3014
        %v3018 = vperm.slane %v2968, 0
        %v3020 = vmul.f32 %v3015, %v3018
        %v3021 = vmul.f32 %v3016, %v3018
        %v3023 = vperm.slane %v2969, 0
        %v3025 = vadd.f32 %v3020, %v3023
        %v3026 = vadd.f32 %v3021, %v3023
        %v3027 = vld [vmem:[%s9] sm:$0x1]
        %v3028 = vld [vmem:[%s10] sm:$0x1]
        %3029 = vadd.xlane.f32.xlu0 %v2964
        %v3030 = vpop.xlane.xlu0 %3029
        %3031 = vadd.xlane.f32.xlu0 %v2965
        %v3032 = vpop.xlane.xlu0 %3031
        %3033 = vadd.xlane.f32.xlu0 %v2966
        %v3034 = vpop.xlane.xlu0 %3033
        %3035 = vadd.xlane.f32.xlu0 %v2967
        %v3036 = vpop.xlane.xlu0 %3035
        %v3037 = vmul.f32 %v3030, %v2980
        %v3038 = vmul.f32 %v3032, %v2980
        %v3039 = vmul.f32 %v3034, %v2980
        %v3040 = vmul.f32 %v3036, %v2980
        %v3041 = vsub.f32 %v2964, %v3037
        %v3042 = vsub.f32 %v2965, %v3038
        %v3043 = vsub.f32 %v2966, %v3039
        %v3044 = vsub.f32 %v2967, %v3040
        %v3045 = vmul.f32 %v3041, %v3041
        %v3046 = vmul.f32 %v3042, %v3042
        %v3047 = vmul.f32 %v3043, %v3043
        %v3048 = vmul.f32 %v3044, %v3044
        %3049 = vadd.xlane.f32.xlu0 %v3045
        %v3050 = vpop.xlane.xlu0 %3049
        %3051 = vadd.xlane.f32.xlu0 %v3046
        %v3052 = vpop.xlane.xlu0 %3051
        %3053 = vadd.xlane.f32.xlu0 %v3047
        %v3054 = vpop.xlane.xlu0 %3053
        %3055 = vadd.xlane.f32.xlu0 %v3048
        %v3056 = vpop.xlane.xlu0 %3055
        %v3057 = vmul.f32 %v3050, %v2980
        %v3058 = vmul.f32 %v3052, %v2980
        %v3059 = vmul.f32 %v3054, %v2980
        %v3060 = vmul.f32 %v3056, %v2980
        %v3061 = vadd.f32 %v3057, 1e-05
        %v3062 = vadd.f32 %v3058, 1e-05
        %v3063 = vadd.f32 %v3059, 1e-05
        %v3064 = vadd.f32 %v3060, 1e-05
        %v3065 = vrsqrt.pop %v3061
        %v3066 = vmul.f32 %v3065, %v3061
        %v3067 = vmul.f32 %v3066, %v3065
        %v3068 = vmul.f32 0.5, %v3067
        %v3069 = vsub.f32 1.5, %v3068
        %v3070 = vmul.f32 %v3065, %v3069
        %vm3071 = vweird.f32 %v3061
        %vm3072 = vweird.f32 %v3065
        %vm3073 = vmor %vm3071, %vm3072
        %v3074 = vsel %vm3073, %v3065, %v3070
        %v3075 = vrsqrt.pop %v3062
        %v3076 = vmul.f32 %v3075, %v3062
        %v3077 = vmul.f32 %v3076, %v3075
        %v3078 = vmul.f32 0.5, %v3077
        %v3079 = vsub.f32 1.5, %v3078
        %v3080 = vmul.f32 %v3075, %v3079
        %vm3081 = vweird.f32 %v3062
        %vm3082 = vweird.f32 %v3075
        %vm3083 = vmor %vm3081, %vm3082
        %v3084 = vsel %vm3083, %v3075, %v3080
        %v3085 = vrsqrt.pop %v3063
        %v3086 = vmul.f32 %v3085, %v3063
        %v3087 = vmul.f32 %v3086, %v3085
        %v3088 = vmul.f32 0.5, %v3087
        %v3089 = vsub.f32 1.5, %v3088
        %v3090 = vmul.f32 %v3085, %v3089
        %vm3091 = vweird.f32 %v3063
        %vm3092 = vweird.f32 %v3085
        %vm3093 = vmor %vm3091, %vm3092
        %v3094 = vsel %vm3093, %v3085, %v3090
        %v3095 = vrsqrt.pop %v3064
        %v3096 = vmul.f32 %v3095, %v3064
        %v3097 = vmul.f32 %v3096, %v3095
        %v3098 = vmul.f32 0.5, %v3097
        %v3099 = vsub.f32 1.5, %v3098
        %v3100 = vmul.f32 %v3095, %v3099
        %vm3101 = vweird.f32 %v3064
        %vm3102 = vweird.f32 %v3095
        %vm3103 = vmor %vm3101, %vm3102
        %v3104 = vsel %vm3103, %v3095, %v3100
        %v3105 = vmul.f32 %v3041, %v3074
        %v3106 = vmul.f32 %v3042, %v3084
        %v3107 = vmul.f32 %v3043, %v3094
        %v3108 = vmul.f32 %v3044, %v3104
        %v3110 = vperm.slane %v3027, 0
        %v3112 = vmul.f32 %v3105, %v3110
        %v3113 = vmul.f32 %v3106, %v3110
        %v3114 = vmul.f32 %v3107, %v3110
        %v3115 = vmul.f32 %v3108, %v3110
        %v3117 = vperm.slane %v3028, 0
        %v3119 = vadd.f32 %v3112, %v3117
        %v3120 = vadd.f32 %v3113, %v3117
        %v3121 = vadd.f32 %v3114, %v3117
        %v3122 = vadd.f32 %v3115, %v3117
        %v3123 = vld [vmem:[%s11] sm:$0xff]
        %v3124 = vld [vmem:[%s11 + $0x8] sm:$0xff]
        %v3125 = vld [vmem:[%s11 + $0x10] sm:$0xff]
        %v3126 = vld [vmem:[%s11 + $0x18] sm:$0xff]
        %v3127 = vld [vmem:[%s11 + $0x20] sm:$0xff]
        %v3128 = vld [vmem:[%s11 + $0x28] sm:$0xff]
        %v3129 = vld [vmem:[%s11 + $0x30] sm:$0xff]
        %v3130 = vld [vmem:[%s11 + $0x38] sm:$0xff]
        %v3131 = vld [vmem:[%s11 + $0x40] sm:$0xff]
        %v3132 = vld [vmem:[%s11 + $0x48] sm:$0xff]
        %v3133 = vld [vmem:[%s11 + $0x50] sm:$0xff]
        %v3134 = vld [vmem:[%s11 + $0x58] sm:$0xff]
        %v3135 = vld [vmem:[%s11 + $0x60] sm:$0xff]
        %v3136 = vld [vmem:[%s11 + $0x68] sm:$0xff]
        %v3137 = vld [vmem:[%s11 + $0x70] sm:$0xff]
        %v3138 = vld [vmem:[%s11 + $0x78] sm:$0xff]
        %3139 = vmatpush.msra.mxu0 %v3138
        %3140 = vmatpush.msra.mxu0 %v3137
        %3141 = vmatpush.msra.mxu0 %v3136
        %3142 = vmatpush.msra.mxu0 %v3135
        %3143 = vmatpush.msra.mxu0 %v3134
        %3144 = vmatpush.msra.mxu0 %v3133
        %3145 = vmatpush.msra.mxu0 %v3132
        %3146 = vmatpush.msra.mxu0 %v3131
        %3147 = vmatpush.msra.mxu0 %v3130
        %3148 = vmatpush.msra.mxu0 %v3129
        %3149 = vmatpush.msra.mxu0 %v3128
        %3150 = vmatpush.msra.mxu0 %v3127
        %3151 = vmatpush.msra.mxu0 %v3126
        %3152 = vmatpush.msra.mxu0 %v3125
        %3153 = vmatpush.msra.mxu0 %v3124
        %3154 = vmatpush.msra.mxu0 %v3123
        %3155 = vmatmul.f32.gmra.mxu0 %v3025
        %v3156 = vpop.f32.mrf.mxu0
        %v3157 = vadd.f32 0.0, %v3156
        %3158 = vmatmul.f32.gmra.mxu0 %v3026
        %v3159 = vpop.f32.mrf.mxu0
        %v3160 = vadd.f32 0.0, %v3159
        %3161 = vdwg.mxu0
        %v3162 = vld [vmem:[%s12] sm:$0xff]
        %v3163 = vld [vmem:[%s12 + $0x8] sm:$0xff]
        %v3164 = vld [vmem:[%s12 + $0x10] sm:$0xff]
        %v3165 = vld [vmem:[%s12 + $0x18] sm:$0xff]
        %v3166 = vld [vmem:[%s12 + $0x20] sm:$0xff]
        %v3167 = vld [vmem:[%s12 + $0x28] sm:$0xff]
        %v3168 = vld [vmem:[%s12 + $0x30] sm:$0xff]
        %v3169 = vld [vmem:[%s12 + $0x38] sm:$0xff]
        %v3170 = vld [vmem:[%s12 + $0x40] sm:$0xff]
        %v3171 = vld [vmem:[%s12 + $0x48] sm:$0xff]
        %v3172 = vld [vmem:[%s12 + $0x50] sm:$0xff]
        %v3173 = vld [vmem:[%s12 + $0x58] sm:$0xff]
        %v3174 = vld [vmem:[%s12 + $0x60] sm:$0xff]
        %v3175 = vld [vmem:[%s12 + $0x68] sm:$0xff]
        %v3176 = vld [vmem:[%s12 + $0x70] sm:$0xff]
        %v3177 = vld [vmem:[%s12 + $0x78] sm:$0xff]
        %3178 = vmatpush.msra.mxu0 %v3177
        %3179 = vmatpush.msra.mxu0 %v3176
        %3180 = vmatpush.msra.mxu0 %v3175
        %3181 = vmatpush.msra.mxu0 %v3174
        %3182 = vmatpush.msra.mxu0 %v3173
        %3183 = vmatpush.msra.mxu0 %v3172
        %3184 = vmatpush.msra.mxu0 %v3171
        %3185 = vmatpush.msra.mxu0 %v3170
        %3186 = vmatpush.msra.mxu0 %v3169
        %3187 = vmatpush.msra.mxu0 %v3168
        %3188 = vmatpush.msra.mxu0 %v3167
        %3189 = vmatpush.msra.mxu0 %v3166
        %3190 = vmatpush.msra.mxu0 %v3165
        %3191 = vmatpush.msra.mxu0 %v3164
        %3192 = vmatpush.msra.mxu0 %v3163
        %3193 = vmatpush.msra.mxu0 %v3162
        %3194 = vmatmul.f32.gmra.mxu0 %v3119
        %v3195 = vpop.f32.mrf.mxu0
        %v3196 = vadd.f32 0.0, %v3195
        %3197 = vmatmul.f32.gmra.mxu0 %v3120
        %v3198 = vpop.f32.mrf.mxu0
        %v3199 = vadd.f32 0.0, %v3198
        %3200 = vmatmul.f32.gmra.mxu0 %v3121
        %v3201 = vpop.f32.mrf.mxu0
        %v3202 = vadd.f32 0.0, %v3201
        %3203 = vmatmul.f32.gmra.mxu0 %v3122
        %v3204 = vpop.f32.mrf.mxu0
        %v3205 = vadd.f32 0.0, %v3204
        %3206 = vdwg.mxu0
        %v3207 = vld [vmem:[%s13] sm:$0xff]
        %v3208 = vld [vmem:[%s13 + $0x8] sm:$0xff]
        %v3209 = vld [vmem:[%s13 + $0x10] sm:$0xff]
        %v3210 = vld [vmem:[%s13 + $0x18] sm:$0xff]
        %v3211 = vld [vmem:[%s13 + $0x20] sm:$0xff]
        %v3212 = vld [vmem:[%s13 + $0x28] sm:$0xff]
        %v3213 = vld [vmem:[%s13 + $0x30] sm:$0xff]
        %v3214 = vld [vmem:[%s13 + $0x38] sm:$0xff]
        %v3215 = vld [vmem:[%s13 + $0x40] sm:$0xff]
        %v3216 = vld [vmem:[%s13 + $0x48] sm:$0xff]
        %v3217 = vld [vmem:[%s13 + $0x50] sm:$0xff]
        %v3218 = vld [vmem:[%s13 + $0x58] sm:$0xff]
        %v3219 = vld [vmem:[%s13 + $0x60] sm:$0xff]
        %v3220 = vld [vmem:[%s13 + $0x68] sm:$0xff]
        %v3221 = vld [vmem:[%s13 + $0x70] sm:$0xff]
        %v3222 = vld [vmem:[%s13 + $0x78] sm:$0xff]
        %3223 = vmatpush.msra.mxu0 %v3222
        %3224 = vmatpush.msra.mxu0 %v3221
        %3225 = vmatpush.msra.mxu0 %v3220
        %3226 = vmatpush.msra.mxu0 %v3219
        %3227 = vmatpush.msra.mxu0 %v3218
        %3228 = vmatpush.msra.mxu0 %v3217
        %3229 = vmatpush.msra.mxu0 %v3216
        %3230 = vmatpush.msra.mxu0 %v3215
        %3231 = vmatpush.msra.mxu0 %v3214
        %3232 = vmatpush.msra.mxu0 %v3213
        %3233 = vmatpush.msra.mxu0 %v3212
        %3234 = vmatpush.msra.mxu0 %v3211
        %3235 = vmatpush.msra.mxu0 %v3210
        %3236 = vmatpush.msra.mxu0 %v3209
        %3237 = vmatpush.msra.mxu0 %v3208
        %3238 = vmatpush.msra.mxu0 %v3207
        %3239 = vmatmul.f32.gmra.mxu0 %v3119
        %v3240 = vpop.f32.mrf.mxu0
        %v3241 = vadd.f32 0.0, %v3240
        %3242 = vmatmul.f32.gmra.mxu0 %v3120
        %v3243 = vpop.f32.mrf.mxu0
        %v3244 = vadd.f32 0.0, %v3243
        %3245 = vmatmul.f32.gmra.mxu0 %v3121
        %v3246 = vpop.f32.mrf.mxu0
        %v3247 = vadd.f32 0.0, %v3246
        %3248 = vmatmul.f32.gmra.mxu0 %v3122
        %v3249 = vpop.f32.mrf.mxu0
        %v3250 = vadd.f32 0.0, %v3249
        %3251 = vdwg.mxu0
        %3252 = vmatpush.xpose.msra.mxu0 0.0
        %3253 = vmatpush.xpose.msra.mxu0 0.0
        %3254 = vmatpush.xpose.msra.mxu0 0.0
        %3255 = vmatpush.xpose.msra.mxu0 0.0
        %3256 = vmatpush.xpose.msra.mxu0 0.0
        %3257 = vmatpush.xpose.msra.mxu0 0.0
        %3258 = vmatpush.xpose.msra.mxu0 0.0
        %3259 = vmatpush.xpose.msra.mxu0 0.0
        %3260 = vmatpush.xpose.msra.mxu0 0.0
        %3261 = vmatpush.xpose.msra.mxu0 0.0
        %3262 = vmatpush.xpose.msra.mxu0 0.0
        %3263 = vmatpush.xpose.msra.mxu0 0.0
        %3264 = vmatpush.xpose.msra.mxu0 0.0
        %3265 = vmatpush.xpose.msra.mxu0 0.0
        %3266 = vmatpush.xpose.msra.mxu0 %v3199
        %3267 = vmatpush.xpose.msra.mxu0 %v3196
        %3268 = vmatmul.f32.gmra.mxu0 %v3157
        %v3269 = vpop.f32.mrf.mxu0
        %v3270 = vadd.f32 0.0, %v3269
        %3271 = vdwg.mxu0
        %vm3272 = vcmask 130048
        %v3273 = vsel %vm3272, %v3270, -inf
        %3274 = vmax.xlane.f32.xlu0 %v3273
        %v3275 = vpop.xlane.xlu0 %3274
        %v3276 = vsub.f32 %v3270, %v3275
        %v3277 = vmul.f32 %v3276, 1.442695
        %v3278 = vpow.pop %v3277
        %v3279 = vsel %vm3272, %v3278, 0.0
        %3280 = vadd.xlane.f32.xlu0 %v3279
        %v3281 = vpop.xlane.xlu0 %3280
        %v3282 = vrcp.pop %v3281
        %v3283 = vmul.f32 %v3281, %v3282
        %v3284 = vsub.f32 1.0, %v3283
        %v3285 = vmul.f32 %v3282, %v3284
        %v3286 = vadd.f32 %v3282, %v3285
        %vm3287 = vweird.f32 %v3281
        %vm3288 = vweird.f32 %v3282
        %vm3289 = vmor %vm3287, %vm3288
        %v3290 = vsel %vm3289, %v3282, %v3286
        %v3291 = vand.u32 2147483647, %v3281
        %vm3292 = vcmp.eq.f32.partialorder %v3291, 8.507059e+37
        %v3293 = vand.u32 %v3281, 2147483648
        %v3294 = vor.u32 1.1754944e-38, %v3293
        %v3295 = vsel %vm3292, %v3294, %v3290
        %v3296 = vmul.f32 %v3278, %v3295
        %v3298 = vsel %vm3272, %v3296, 0
        %3300 = vmatpush.msra.mxu0 0.0
        %3301 = vmatpush.msra.mxu0 0.0
        %3302 = vmatpush.msra.mxu0 0.0
        %3303 = vmatpush.msra.mxu0 0.0
        %3304 = vmatpush.msra.mxu0 0.0
        %3305 = vmatpush.msra.mxu0 0.0
        %3306 = vmatpush.msra.mxu0 0.0
        %3307 = vmatpush.msra.mxu0 0.0
        %3308 = vmatpush.msra.mxu0 0.0
        %3309 = vmatpush.msra.mxu0 0.0
        %3310 = vmatpush.msra.mxu0 0.0
        %3311 = vmatpush.msra.mxu0 0.0
        %3312 = vmatpush.msra.mxu0 0.0
        %3313 = vmatpush.msra.mxu0 0.0
        %3314 = vmatpush.msra.mxu0 %v3244
        %3315 = vmatpush.msra.mxu0 %v3241
        %3316 = vmatmul.f32.gmra.mxu0 %v3298
        %v3317 = vpop.f32.mrf.mxu0
        %v3318 = vadd.f32 0.0, %v3317
        %3319 = vdwg.mxu0
        %3320 = vmatpush.xpose.msra.mxu0 0.0
        %3321 = vmatpush.xpose.msra.mxu0 0.0
        %3322 = vmatpush.xpose.msra.mxu0 0.0
        %3323 = vmatpush.xpose.msra.mxu0 0.0
        %3324 = vmatpush.xpose.msra.mxu0 0.0
        %3325 = vmatpush.xpose.msra.mxu0 0.0
        %3326 = vmatpush.xpose.msra.mxu0 0.0
        %3327 = vmatpush.xpose.msra.mxu0 0.0
        %3328 = vmatpush.xpose.msra.mxu0 0.0
        %3329 = vmatpush.xpose.msra.mxu0 0.0
        %3330 = vmatpush.xpose.msra.mxu0 0.0
        %3331 = vmatpush.xpose.msra.mxu0 0.0
        %3332 = vmatpush.xpose.msra.mxu0 0.0
        %3333 = vmatpush.xpose.msra.mxu0 0.0
        %3334 = vmatpush.xpose.msra.mxu0 %v3205
        %3335 = vmatpush.xpose.msra.mxu0 %v3202
        %3336 = vmatmul.f32.gmra.mxu0 %v3160
        %v3337 = vpop.f32.mrf.mxu0
        %v3338 = vadd.f32 0.0, %v3337
        %3339 = vdwg.mxu0
        %v3340 = vsel %vm3272, %v3338, -inf
        %3341 = vmax.xlane.f32.xlu0 %v3340
        %v3342 = vpop.xlane.xlu0 %3341
        %v3343 = vsub.f32 %v3338, %v3342
        %v3344 = vmul.f32 %v3343, 1.442695
        %v3345 = vpow.pop %v3344
        %v3346 = vsel %vm3272, %v3345, 0.0
        %3347 = vadd.xlane.f32.xlu0 %v3346
        %v3348 = vpop.xlane.xlu0 %3347
        %v3349 = vrcp.pop %v3348
        %v3350 = vmul.f32 %v3348, %v3349
        %v3351 = vsub.f32 1.0, %v3350
        %v3352 = vmul.f32 %v3349, %v3351
        %v3353 = vadd.f32 %v3349, %v3352
        %vm3354 = vweird.f32 %v3348
        %vm3355 = vweird.f32 %v3349
        %vm3356 = vmor %vm3354, %vm3355
        %v3357 = vsel %vm3356, %v3349, %v3353
        %v3358 = vand.u32 2147483647, %v3348
        %vm3359 = vcmp.eq.f32.partialorder %v3358, 8.507059e+37
        %v3360 = vand.u32 %v3348, 2147483648
        %v3361 = vor.u32 1.1754944e-38, %v3360
        %v3362 = vsel %vm3359, %v3361, %v3357
        %v3363 = vmul.f32 %v3345, %v3362
        %v3365 = vsel %vm3272, %v3363, 0
        %3367 = vmatpush.msra.mxu0 0.0
        %3368 = vmatpush.msra.mxu0 0.0
        %3369 = vmatpush.msra.mxu0 0.0
        %3370 = vmatpush.msra.mxu0 0.0
        %3371 = vmatpush.msra.mxu0 0.0
        %3372 = vmatpush.msra.mxu0 0.0
        %3373 = vmatpush.msra.mxu0 0.0
        %3374 = vmatpush.msra.mxu0 0.0
        %3375 = vmatpush.msra.mxu0 0.0
        %3376 = vmatpush.msra.mxu0 0.0
        %3377 = vmatpush.msra.mxu0 0.0
        %3378 = vmatpush.msra.mxu0 0.0
        %3379 = vmatpush.msra.mxu0 0.0
        %3380 = vmatpush.msra.mxu0 0.0
        %3381 = vmatpush.msra.mxu0 %v3250
        %3382 = vmatpush.msra.mxu0 %v3247
        %3383 = vmatmul.f32.gmra.mxu0 %v3365
        %v3384 = vpop.f32.mrf.mxu0
        %v3385 = vadd.f32 0.0, %v3384
        %3386 = vdwg.mxu0
        %v3387 = vld [vmem:[%s14] sm:$0xff]
        %v3388 = vld [vmem:[%s14 + $0x8] sm:$0xff]
        %v3389 = vld [vmem:[%s14 + $0x10] sm:$0xff]
        %v3390 = vld [vmem:[%s14 + $0x18] sm:$0xff]
        %v3391 = vld [vmem:[%s14 + $0x20] sm:$0xff]
        %v3392 = vld [vmem:[%s14 + $0x28] sm:$0xff]
        %v3393 = vld [vmem:[%s14 + $0x30] sm:$0xff]
        %v3394 = vld [vmem:[%s14 + $0x38] sm:$0xff]
        %v3395 = vld [vmem:[%s14 + $0x40] sm:$0xff]
        %v3396 = vld [vmem:[%s14 + $0x48] sm:$0xff]
        %v3397 = vld [vmem:[%s14 + $0x50] sm:$0xff]
        %v3398 = vld [vmem:[%s14 + $0x58] sm:$0xff]
        %v3399 = vld [vmem:[%s14 + $0x60] sm:$0xff]
        %v3400 = vld [vmem:[%s14 + $0x68] sm:$0xff]
        %v3401 = vld [vmem:[%s14 + $0x70] sm:$0xff]
        %v3402 = vld [vmem:[%s14 + $0x78] sm:$0xff]
        %v3403 = vld [vmem:[%s15] sm:$0x1]
        %v3405 = vperm.slane %v3403, 0
        %3407 = vmatpush.msra.mxu0 %v3402
        %3408 = vmatpush.msra.mxu0 %v3401
        %3409 = vmatpush.msra.mxu0 %v3400
        %3410 = vmatpush.msra.mxu0 %v3399
        %3411 = vmatpush.msra.mxu0 %v3398
        %3412 = vmatpush.msra.mxu0 %v3397
        %3413 = vmatpush.msra.mxu0 %v3396
        %3414 = vmatpush.msra.mxu0 %v3395
        %3415 = vmatpush.msra.mxu0 %v3394
        %3416 = vmatpush.msra.mxu0 %v3393
        %3417 = vmatpush.msra.mxu0 %v3392
        %3418 = vmatpush.msra.mxu0 %v3391
        %3419 = vmatpush.msra.mxu0 %v3390
        %3420 = vmatpush.msra.mxu0 %v3389
        %3421 = vmatpush.msra.mxu0 %v3388
        %3422 = vmatpush.msra.mxu0 %v3387
        %3423 = vmatmul.f32.gmra.mxu0 %v3318
        %v3424 = vpop.f32.mrf.mxu0
        %v3425 = vadd.f32 %v3405, %v3424
        %3426 = vmatmul.f32.gmra.mxu0 %v3385
        %v3427 = vpop.f32.mrf.mxu0
        %v3428 = vadd.f32 %v3405, %v3427
        %3429 = vdwg.mxu0
        %v3430 = vadd.f32 %v3425, %v1527
        %v3431 = vadd.f32 %v3428, %v1528
        %v3432 = vld [vmem:[%s16] sm:$0x1]
        %v3433 = vld [vmem:[%s17] sm:$0x1]
        %3434 = vadd.xlane.f32.xlu0 %v3430
        %v3435 = vpop.xlane.xlu0 %3434
        %3436 = vadd.xlane.f32.xlu0 %v3431
        %v3437 = vpop.xlane.xlu0 %3436
        %v3438 = vmul.f32 %v3435, %v2980
        %v3439 = vmul.f32 %v3437, %v2980
        %v3440 = vsub.f32 %v3430, %v3438
        %v3441 = vsub.f32 %v3431, %v3439
        %v3442 = vmul.f32 %v3440, %v3440
        %v3443 = vmul.f32 %v3441, %v3441
        %3444 = vadd.xlane.f32.xlu0 %v3442
        %v3445 = vpop.xlane.xlu0 %3444
        %3446 = vadd.xlane.f32.xlu0 %v3443
        %v3447 = vpop.xlane.xlu0 %3446
        %v3448 = vmul.f32 %v3445, %v2980
        %v3449 = vmul.f32 %v3447, %v2980
        %v3450 = vadd.f32 %v3448, 1e-05
        %v3451 = vadd.f32 %v3449, 1e-05
        %v3452 = vrsqrt.pop %v3450
        %v3453 = vmul.f32 %v3452, %v3450
        %v3454 = vmul.f32 %v3453, %v3452
        %v3455 = vmul.f32 0.5, %v3454
        %v3456 = vsub.f32 1.5, %v3455
        %v3457 = vmul.f32 %v3452, %v3456
        %vm3458 = vweird.f32 %v3450
        %vm3459 = vweird.f32 %v3452
        %vm3460 = vmor %vm3458, %vm3459
        %v3461 = vsel %vm3460, %v3452, %v3457
        %v3462 = vrsqrt.pop %v3451
        %v3463 = vmul.f32 %v3462, %v3451
        %v3464 = vmul.f32 %v3463, %v3462
        %v3465 = vmul.f32 0.5, %v3464
        %v3466 = vsub.f32 1.5, %v3465
        %v3467 = vmul.f32 %v3462, %v3466
        %vm3468 = vweird.f32 %v3451
        %vm3469 = vweird.f32 %v3462
        %vm3470 = vmor %vm3468, %vm3469
        %v3471 = vsel %vm3470, %v3462, %v3467
        %v3472 = vmul.f32 %v3440, %v3461
        %v3473 = vmul.f32 %v3441, %v3471
        %v3475 = vperm.slane %v3432, 0
        %v3477 = vmul.f32 %v3472, %v3475
        %v3478 = vmul.f32 %v3473, %v3475
        %v3480 = vperm.slane %v3433, 0
        %v3482 = vadd.f32 %v3477, %v3480
        %v3483 = vadd.f32 %v3478, %v3480
        %v3484 = vld [vmem:[%s18] sm:$0xff]
        %v3485 = vld [vmem:[%s18 + $0x8] sm:$0xff]
        %v3486 = vld [vmem:[%s18 + $0x10] sm:$0xff]
        %v3487 = vld [vmem:[%s18 + $0x18] sm:$0xff]
        %v3488 = vld [vmem:[%s18 + $0x20] sm:$0xff]
        %v3489 = vld [vmem:[%s18 + $0x28] sm:$0xff]
        %v3490 = vld [vmem:[%s18 + $0x30] sm:$0xff]
        %v3491 = vld [vmem:[%s18 + $0x38] sm:$0xff]
        %v3492 = vld [vmem:[%s18 + $0x40] sm:$0xff]
        %v3493 = vld [vmem:[%s18 + $0x48] sm:$0xff]
        %v3494 = vld [vmem:[%s18 + $0x50] sm:$0xff]
        %v3495 = vld [vmem:[%s18 + $0x58] sm:$0xff]
        %v3496 = vld [vmem:[%s18 + $0x60] sm:$0xff]
        %v3497 = vld [vmem:[%s18 + $0x68] sm:$0xff]
        %v3498 = vld [vmem:[%s18 + $0x70] sm:$0xff]
        %v3499 = vld [vmem:[%s18 + $0x78] sm:$0xff]
        %v3500 = vld [vmem:[%s18 + $0x80] sm:$0xff]
        %v3501 = vld [vmem:[%s18 + $0x88] sm:$0xff]
        %v3502 = vld [vmem:[%s18 + $0x90] sm:$0xff]
        %v3503 = vld [vmem:[%s18 + $0x98] sm:$0xff]
        %v3504 = vld [vmem:[%s18 + $0xa0] sm:$0xff]
        %v3505 = vld [vmem:[%s18 + $0xa8] sm:$0xff]
        %v3506 = vld [vmem:[%s18 + $0xb0] sm:$0xff]
        %v3507 = vld [vmem:[%s18 + $0xb8] sm:$0xff]
        %v3508 = vld [vmem:[%s18 + $0xc0] sm:$0xff]
        %v3509 = vld [vmem:[%s18 + $0xc8] sm:$0xff]
        %v3510 = vld [vmem:[%s18 + $0xd0] sm:$0xff]
        %v3511 = vld [vmem:[%s18 + $0xd8] sm:$0xff]
        %v3512 = vld [vmem:[%s18 + $0xe0] sm:$0xff]
        %v3513 = vld [vmem:[%s18 + $0xe8] sm:$0xff]
        %v3514 = vld [vmem:[%s18 + $0xf0] sm:$0xff]
        %v3515 = vld [vmem:[%s18 + $0xf8] sm:$0xff]
        %v3516 = vld [vmem:[%s18 + $0x100] sm:$0xff]
        %v3517 = vld [vmem:[%s18 + $0x108] sm:$0xff]
        %v3518 = vld [vmem:[%s18 + $0x110] sm:$0xff]
        %v3519 = vld [vmem:[%s18 + $0x118] sm:$0xff]
        %v3520 = vld [vmem:[%s18 + $0x120] sm:$0xff]
        %v3521 = vld [vmem:[%s18 + $0x128] sm:$0xff]
        %v3522 = vld [vmem:[%s18 + $0x130] sm:$0xff]
        %v3523 = vld [vmem:[%s18 + $0x138] sm:$0xff]
        %v3524 = vld [vmem:[%s18 + $0x140] sm:$0xff]
        %v3525 = vld [vmem:[%s18 + $0x148] sm:$0xff]
        %v3526 = vld [vmem:[%s18 + $0x150] sm:$0xff]
        %v3527 = vld [vmem:[%s18 + $0x158] sm:$0xff]
        %v3528 = vld [vmem:[%s18 + $0x160] sm:$0xff]
        %v3529 = vld [vmem:[%s18 + $0x168] sm:$0xff]
        %v3530 = vld [vmem:[%s18 + $0x170] sm:$0xff]
        %v3531 = vld [vmem:[%s18 + $0x178] sm:$0xff]
        %v3532 = vld [vmem:[%s18 + $0x180] sm:$0xff]
        %v3533 = vld [vmem:[%s18 + $0x188] sm:$0xff]
        %v3534 = vld [vmem:[%s18 + $0x190] sm:$0xff]
        %v3535 = vld [vmem:[%s18 + $0x198] sm:$0xff]
        %v3536 = vld [vmem:[%s18 + $0x1a0] sm:$0xff]
        %v3537 = vld [vmem:[%s18 + $0x1a8] sm:$0xff]
        %v3538 = vld [vmem:[%s18 + $0x1b0] sm:$0xff]
        %v3539 = vld [vmem:[%s18 + $0x1b8] sm:$0xff]
        %v3540 = vld [vmem:[%s18 + $0x1c0] sm:$0xff]
        %v3541 = vld [vmem:[%s18 + $0x1c8] sm:$0xff]
        %v3542 = vld [vmem:[%s18 + $0x1d0] sm:$0xff]
        %v3543 = vld [vmem:[%s18 + $0x1d8] sm:$0xff]
        %v3544 = vld [vmem:[%s18 + $0x1e0] sm:$0xff]
        %v3545 = vld [vmem:[%s18 + $0x1e8] sm:$0xff]
        %v3546 = vld [vmem:[%s18 + $0x1f0] sm:$0xff]
        %v3547 = vld [vmem:[%s18 + $0x1f8] sm:$0xff]
        %v3548 = vld [vmem:[%s20] sm:$0xf]
        %v3550 = vperm.slane %v3548, 0
        %v3551 = vperm.slane %v3548, 1
        %v3552 = vperm.slane %v3548, 2
        %v3553 = vperm.slane %v3548, 3
        %3558 = vmatpush.msra.mxu0 %v3544
        %3559 = vmatpush.msra.mxu0 %v3540
        %3560 = vmatpush.msra.mxu0 %v3536
        %3561 = vmatpush.msra.mxu0 %v3532
        %3562 = vmatpush.msra.mxu0 %v3528
        %3563 = vmatpush.msra.mxu0 %v3524
        %3564 = vmatpush.msra.mxu0 %v3520
        %3565 = vmatpush.msra.mxu0 %v3516
        %3566 = vmatpush.msra.mxu0 %v3512
        %3567 = vmatpush.msra.mxu0 %v3508
        %3568 = vmatpush.msra.mxu0 %v3504
        %3569 = vmatpush.msra.mxu0 %v3500
        %3570 = vmatpush.msra.mxu0 %v3496
        %3571 = vmatpush.msra.mxu0 %v3492
        %3572 = vmatpush.msra.mxu0 %v3488
        %3573 = vmatpush.msra.mxu0 %v3484
        %3574 = vmatmul.f32.gmra.mxu0 %v3482
        %v3575 = vpop.f32.mrf.mxu0
        %v3576 = vadd.f32 %v3550, %v3575
        %3577 = vmatmul.f32.gmra.mxu0 %v3483
        %v3578 = vpop.f32.mrf.mxu0
        %v3579 = vadd.f32 %v3550, %v3578
        %3580 = vdwg.mxu0
        %3581 = vmatpush.msra.mxu0 %v3545
        %3582 = vmatpush.msra.mxu0 %v3541
        %3583 = vmatpush.msra.mxu0 %v3537
        %3584 = vmatpush.msra.mxu0 %v3533
        %3585 = vmatpush.msra.mxu0 %v3529
        %3586 = vmatpush.msra.mxu0 %v3525
        %3587 = vmatpush.msra.mxu0 %v3521
        %3588 = vmatpush.msra.mxu0 %v3517
        %3589 = vmatpush.msra.mxu0 %v3513
        %3590 = vmatpush.msra.mxu0 %v3509
        %3591 = vmatpush.msra.mxu0 %v3505
        %3592 = vmatpush.msra.mxu0 %v3501
        %3593 = vmatpush.msra.mxu0 %v3497
        %3594 = vmatpush.msra.mxu0 %v3493
        %3595 = vmatpush.msra.mxu0 %v3489
        %3596 = vmatpush.msra.mxu0 %v3485
        %3597 = vmatmul.f32.gmra.mxu0 %v3482
        %v3598 = vpop.f32.mrf.mxu0
        %v3599 = vadd.f32 %v3551, %v3598
        %3600 = vmatmul.f32.gmra.mxu0 %v3483
        %v3601 = vpop.f32.mrf.mxu0
        %v3602 = vadd.f32 %v3551, %v3601
        %3603 = vdwg.mxu0
        %3604 = vmatpush.msra.mxu0 %v3546
        %3605 = vmatpush.msra.mxu0 %v3542
        %3606 = vmatpush.msra.mxu0 %v3538
        %3607 = vmatpush.msra.mxu0 %v3534
        %3608 = vmatpush.msra.mxu0 %v3530
        %3609 = vmatpush.msra.mxu0 %v3526
        %3610 = vmatpush.msra.mxu0 %v3522
        %3611 = vmatpush.msra.mxu0 %v3518
        %3612 = vmatpush.msra.mxu0 %v3514
        %3613 = vmatpush.msra.mxu0 %v3510
        %3614 = vmatpush.msra.mxu0 %v3506
        %3615 = vmatpush.msra.mxu0 %v3502
        %3616 = vmatpush.msra.mxu0 %v3498
        %3617 = vmatpush.msra.mxu0 %v3494
        %3618 = vmatpush.msra.mxu0 %v3490
        %3619 = vmatpush.msra.mxu0 %v3486
        %3620 = vmatmul.f32.gmra.mxu0 %v3482
        %v3621 = vpop.f32.mrf.mxu0
        %v3622 = vadd.f32 %v3552, %v3621
        %3623 = vmatmul.f32.gmra.mxu0 %v3483
        %v3624 = vpop.f32.mrf.mxu0
        %v3625 = vadd.f32 %v3552, %v3624
        %3626 = vdwg.mxu0
        %3627 = vmatpush.msra.mxu0 %v3547
        %3628 = vmatpush.msra.mxu0 %v3543
        %3629 = vmatpush.msra.mxu0 %v3539
        %3630 = vmatpush.msra.mxu0 %v3535
        %3631 = vmatpush.msra.mxu0 %v3531
        %3632 = vmatpush.msra.mxu0 %v3527
        %3633 = vmatpush.msra.mxu0 %v3523
        %3634 = vmatpush.msra.mxu0 %v3519
        %3635 = vmatpush.msra.mxu0 %v3515
        %3636 = vmatpush.msra.mxu0 %v3511
        %3637 = vmatpush.msra.mxu0 %v3507
        %3638 = vmatpush.msra.mxu0 %v3503
        %3639 = vmatpush.msra.mxu0 %v3499
        %3640 = vmatpush.msra.mxu0 %v3495
        %3641 = vmatpush.msra.mxu0 %v3491
        %3642 = vmatpush.msra.mxu0 %v3487
        %3643 = vmatmul.f32.gmra.mxu0 %v3482
        %v3644 = vpop.f32.mrf.mxu0
        %v3645 = vadd.f32 %v3553, %v3644
        %3646 = vmatmul.f32.gmra.mxu0 %v3483
        %v3647 = vpop.f32.mrf.mxu0
        %v3648 = vadd.f32 %v3553, %v3647
        %3649 = vdwg.mxu0
        %v3650 = vld [vmem:[%s19] sm:$0xff]
        %v3651 = vld [vmem:[%s19 + $0x8] sm:$0xff]
        %v3652 = vld [vmem:[%s19 + $0x10] sm:$0xff]
        %v3653 = vld [vmem:[%s19 + $0x18] sm:$0xff]
        %v3654 = vld [vmem:[%s19 + $0x20] sm:$0xff]
        %v3655 = vld [vmem:[%s19 + $0x28] sm:$0xff]
        %v3656 = vld [vmem:[%s19 + $0x30] sm:$0xff]
        %v3657 = vld [vmem:[%s19 + $0x38] sm:$0xff]
        %v3658 = vld [vmem:[%s19 + $0x40] sm:$0xff]
        %v3659 = vld [vmem:[%s19 + $0x48] sm:$0xff]
        %v3660 = vld [vmem:[%s19 + $0x50] sm:$0xff]
        %v3661 = vld [vmem:[%s19 + $0x58] sm:$0xff]
        %v3662 = vld [vmem:[%s19 + $0x60] sm:$0xff]
        %v3663 = vld [vmem:[%s19 + $0x68] sm:$0xff]
        %v3664 = vld [vmem:[%s19 + $0x70] sm:$0xff]
        %v3665 = vld [vmem:[%s19 + $0x78] sm:$0xff]
        %v3666 = vld [vmem:[%s19 + $0x80] sm:$0xff]
        %v3667 = vld [vmem:[%s19 + $0x88] sm:$0xff]
        %v3668 = vld [vmem:[%s19 + $0x90] sm:$0xff]
        %v3669 = vld [vmem:[%s19 + $0x98] sm:$0xff]
        %v3670 = vld [vmem:[%s19 + $0xa0] sm:$0xff]
        %v3671 = vld [vmem:[%s19 + $0xa8] sm:$0xff]
        %v3672 = vld [vmem:[%s19 + $0xb0] sm:$0xff]
        %v3673 = vld [vmem:[%s19 + $0xb8] sm:$0xff]
        %v3674 = vld [vmem:[%s19 + $0xc0] sm:$0xff]
        %v3675 = vld [vmem:[%s19 + $0xc8] sm:$0xff]
        %v3676 = vld [vmem:[%s19 + $0xd0] sm:$0xff]
        %v3677 = vld [vmem:[%s19 + $0xd8] sm:$0xff]
        %v3678 = vld [vmem:[%s19 + $0xe0] sm:$0xff]
        %v3679 = vld [vmem:[%s19 + $0xe8] sm:$0xff]
        %v3680 = vld [vmem:[%s19 + $0xf0] sm:$0xff]
        %v3681 = vld [vmem:[%s19 + $0xf8] sm:$0xff]
        %v3682 = vld [vmem:[%s19 + $0x100] sm:$0xff]
        %v3683 = vld [vmem:[%s19 + $0x108] sm:$0xff]
        %v3684 = vld [vmem:[%s19 + $0x110] sm:$0xff]
        %v3685 = vld [vmem:[%s19 + $0x118] sm:$0xff]
        %v3686 = vld [vmem:[%s19 + $0x120] sm:$0xff]
        %v3687 = vld [vmem:[%s19 + $0x128] sm:$0xff]
        %v3688 = vld [vmem:[%s19 + $0x130] sm:$0xff]
        %v3689 = vld [vmem:[%s19 + $0x138] sm:$0xff]
        %v3690 = vld [vmem:[%s19 + $0x140] sm:$0xff]
        %v3691 = vld [vmem:[%s19 + $0x148] sm:$0xff]
        %v3692 = vld [vmem:[%s19 + $0x150] sm:$0xff]
        %v3693 = vld [vmem:[%s19 + $0x158] sm:$0xff]
        %v3694 = vld [vmem:[%s19 + $0x160] sm:$0xff]
        %v3695 = vld [vmem:[%s19 + $0x168] sm:$0xff]
        %v3696 = vld [vmem:[%s19 + $0x170] sm:$0xff]
        %v3697 = vld [vmem:[%s19 + $0x178] sm:$0xff]
        %v3698 = vld [vmem:[%s19 + $0x180] sm:$0xff]
        %v3699 = vld [vmem:[%s19 + $0x188] sm:$0xff]
        %v3700 = vld [vmem:[%s19 + $0x190] sm:$0xff]
        %v3701 = vld [vmem:[%s19 + $0x198] sm:$0xff]
        %v3702 = vld [vmem:[%s19 + $0x1a0] sm:$0xff]
        %v3703 = vld [vmem:[%s19 + $0x1a8] sm:$0xff]
        %v3704 = vld [vmem:[%s19 + $0x1b0] sm:$0xff]
        %v3705 = vld [vmem:[%s19 + $0x1b8] sm:$0xff]
        %v3706 = vld [vmem:[%s19 + $0x1c0] sm:$0xff]
        %v3707 = vld [vmem:[%s19 + $0x1c8] sm:$0xff]
        %v3708 = vld [vmem:[%s19 + $0x1d0] sm:$0xff]
        %v3709 = vld [vmem:[%s19 + $0x1d8] sm:$0xff]
        %v3710 = vld [vmem:[%s19 + $0x1e0] sm:$0xff]
        %v3711 = vld [vmem:[%s19 + $0x1e8] sm:$0xff]
        %v3712 = vld [vmem:[%s19 + $0x1f0] sm:$0xff]
        %v3713 = vld [vmem:[%s19 + $0x1f8] sm:$0xff]
        %v3714 = vld [vmem:[%s21] sm:$0xf]
        %v3716 = vperm.slane %v3714, 0
        %v3717 = vperm.slane %v3714, 1
        %v3718 = vperm.slane %v3714, 2
        %v3719 = vperm.slane %v3714, 3
        %3724 = vmatpush.msra.mxu0 %v3710
        %3725 = vmatpush.msra.mxu0 %v3706
        %3726 = vmatpush.msra.mxu0 %v3702
        %3727 = vmatpush.msra.mxu0 %v3698
        %3728 = vmatpush.msra.mxu0 %v3694
        %3729 = vmatpush.msra.mxu0 %v3690
        %3730 = vmatpush.msra.mxu0 %v3686
        %3731 = vmatpush.msra.mxu0 %v3682
        %3732 = vmatpush.msra.mxu0 %v3678
        %3733 = vmatpush.msra.mxu0 %v3674
        %3734 = vmatpush.msra.mxu0 %v3670
        %3735 = vmatpush.msra.mxu0 %v3666
        %3736 = vmatpush.msra.mxu0 %v3662
        %3737 = vmatpush.msra.mxu0 %v3658
        %3738 = vmatpush.msra.mxu0 %v3654
        %3739 = vmatpush.msra.mxu0 %v3650
        %3740 = vmatmul.f32.gmra.mxu0 %v3482
        %v3741 = vpop.f32.mrf.mxu0
        %v3742 = vadd.f32 %v3716, %v3741
        %3743 = vmatmul.f32.gmra.mxu0 %v3483
        %v3744 = vpop.f32.mrf.mxu0
        %v3745 = vadd.f32 %v3716, %v3744
        %3746 = vdwg.mxu0
        %3747 = vmatpush.msra.mxu0 %v3711
        %3748 = vmatpush.msra.mxu0 %v3707
        %3749 = vmatpush.msra.mxu0 %v3703
        %3750 = vmatpush.msra.mxu0 %v3699
        %3751 = vmatpush.msra.mxu0 %v3695
        %3752 = vmatpush.msra.mxu0 %v3691
        %3753 = vmatpush.msra.mxu0 %v3687
        %3754 = vmatpush.msra.mxu0 %v3683
        %3755 = vmatpush.msra.mxu0 %v3679
        %3756 = vmatpush.msra.mxu0 %v3675
        %3757 = vmatpush.msra.mxu0 %v3671
        %3758 = vmatpush.msra.mxu0 %v3667
        %3759 = vmatpush.msra.mxu0 %v3663
        %3760 = vmatpush.msra.mxu0 %v3659
        %3761 = vmatpush.msra.mxu0 %v3655
        %3762 = vmatpush.msra.mxu0 %v3651
        %3763 = vmatmul.f32.gmra.mxu0 %v3482
        %v3764 = vpop.f32.mrf.mxu0
        %v3765 = vadd.f32 %v3717, %v3764
        %3766 = vmatmul.f32.gmra.mxu0 %v3483
        %v3767 = vpop.f32.mrf.mxu0
        %v3768 = vadd.f32 %v3717, %v3767
        %3769 = vdwg.mxu0
        %3770 = vmatpush.msra.mxu0 %v3712
        %3771 = vmatpush.msra.mxu0 %v3708
        %3772 = vmatpush.msra.mxu0 %v3704
        %3773 = vmatpush.msra.mxu0 %v3700
        %3774 = vmatpush.msra.mxu0 %v3696
        %3775 = vmatpush.msra.mxu0 %v3692
        %3776 = vmatpush.msra.mxu0 %v3688
        %3777 = vmatpush.msra.mxu0 %v3684
        %3778 = vmatpush.msra.mxu0 %v3680
        %3779 = vmatpush.msra.mxu0 %v3676
        %3780 = vmatpush.msra.mxu0 %v3672
        %3781 = vmatpush.msra.mxu0 %v3668
        %3782 = vmatpush.msra.mxu0 %v3664
        %3783 = vmatpush.msra.mxu0 %v3660
        %3784 = vmatpush.msra.mxu0 %v3656
        %3785 = vmatpush.msra.mxu0 %v3652
        %3786 = vmatmul.f32.gmra.mxu0 %v3482
        %v3787 = vpop.f32.mrf.mxu0
        %v3788 = vadd.f32 %v3718, %v3787
        %3789 = vmatmul.f32.gmra.mxu0 %v3483
        %v3790 = vpop.f32.mrf.mxu0
        %v3791 = vadd.f32 %v3718, %v3790
        %3792 = vdwg.mxu0
        %3793 = vmatpush.msra.mxu0 %v3713
        %3794 = vmatpush.msra.mxu0 %v3709
        %3795 = vmatpush.msra.mxu0 %v3705
        %3796 = vmatpush.msra.mxu0 %v3701
        %3797 = vmatpush.msra.mxu0 %v3697
        %3798 = vmatpush.msra.mxu0 %v3693
        %3799 = vmatpush.msra.mxu0 %v3689
        %3800 = vmatpush.msra.mxu0 %v3685
        %3801 = vmatpush.msra.mxu0 %v3681
        %3802 = vmatpush.msra.mxu0 %v3677
        %3803 = vmatpush.msra.mxu0 %v3673
        %3804 = vmatpush.msra.mxu0 %v3669
        %3805 = vmatpush.msra.mxu0 %v3665
        %3806 = vmatpush.msra.mxu0 %v3661
        %3807 = vmatpush.msra.mxu0 %v3657
        %3808 = vmatpush.msra.mxu0 %v3653
        %3809 = vmatmul.f32.gmra.mxu0 %v3482
        %v3810 = vpop.f32.mrf.mxu0
        %v3811 = vadd.f32 %v3719, %v3810
        %3812 = vmatmul.f32.gmra.mxu0 %v3483
        %v3813 = vpop.f32.mrf.mxu0
        %v3814 = vadd.f32 %v3719, %v3813
        %3815 = vdwg.mxu0
        %v3816 = vmul.f32 %v3742, 0.5
        %v3817 = vmul.f32 %v3765, 0.5
        %v3818 = vmul.f32 %v3788, 0.5
        %v3819 = vmul.f32 %v3811, 0.5
        %v3820 = vmul.f32 %v3745, 0.5
        %v3821 = vmul.f32 %v3768, 0.5
        %v3822 = vmul.f32 %v3791, 0.5
        %v3823 = vmul.f32 %v3814, 0.5
        %v3824 = vmul.f32 %v3742, 0.70710677
        %v3825 = vmul.f32 %v3765, 0.70710677
        %v3826 = vmul.f32 %v3788, 0.70710677
        %v3827 = vmul.f32 %v3811, 0.70710677
        %v3828 = vmul.f32 %v3745, 0.70710677
        %v3829 = vmul.f32 %v3768, 0.70710677
        %v3830 = vmul.f32 %v3791, 0.70710677
        %v3831 = vmul.f32 %v3814, 0.70710677
        %v3832 = vand.u32 2147483647, %v3824
        %v3833 = vand.u32 2147483647, %v3825
        %v3834 = vand.u32 2147483647, %v3826
        %v3835 = vand.u32 2147483647, %v3827
        %v3836 = vand.u32 2147483647, %v3828
        %v3837 = vand.u32 2147483647, %v3829
        %v3838 = vand.u32 2147483647, %v3830
        %v3839 = vand.u32 2147483647, %v3831
        %v3840 = vmul.f32 %v3832, 0.3275911
        %v3841 = vmul.f32 %v3833, 0.3275911
        %v3842 = vmul.f32 %v3834, 0.3275911
        %v3843 = vmul.f32 %v3835, 0.3275911
        %v3844 = vmul.f32 %v3836, 0.3275911
        %v3845 = vmul.f32 %v3837, 0.3275911
        %v3846 = vmul.f32 %v3838, 0.3275911
        %v3847 = vmul.f32 %v3839, 0.3275911
        %v3848 = vadd.f32 %v3840, 1.0
        %v3849 = vadd.f32 %v3841, 1.0
        %v3850 = vadd.f32 %v3842, 1.0
        %v3851 = vadd.f32 %v3843, 1.0
        %v3852 = vadd.f32 %v3844, 1.0
        %v3853 = vadd.f32 %v3845, 1.0
        %v3854 = vadd.f32 %v3846, 1.0
        %v3855 = vadd.f32 %v3847, 1.0
        %v3856 = vrcp.pop %v3848
        %v3857 = vmul.f32 %v3848, %v3856
        %v3858 = vsub.f32 1.0, %v3857
        %v3859 = vmul.f32 %v3856, %v3858
        %v3860 = vadd.f32 %v3856, %v3859
        %vm3861 = vweird.f32 %v3848
        %vm3862 = vweird.f32 %v3856
        %vm3863 = vmor %vm3861, %vm3862
        %v3864 = vsel %vm3863, %v3856, %v3860
        %v3865 = vand.u32 2147483647, %v3848
        %vm3866 = vcmp.eq.f32.partialorder %v3865, 8.507059e+37
        %v3867 = vand.u32 %v3848, 2147483648
        %v3868 = vor.u32 1.1754944e-38, %v3867
        %v3869 = vsel %vm3866, %v3868, %v3864
        %v3870 = vmul.f32 1.0, %v3869
        %v3871 = vrcp.pop %v3849
        %v3872 = vmul.f32 %v3849, %v3871
        %v3873 = vsub.f32 1.0, %v3872
        %v3874 = vmul.f32 %v3871, %v3873
        %v3875 = vadd.f32 %v3871, %v3874
        %vm3876 = vweird.f32 %v3849
        %vm3877 = vweird.f32 %v3871
        %vm3878 = vmor %vm3876, %vm3877
        %v3879 = vsel %vm3878, %v3871, %v3875
        %v3880 = vand.u32 2147483647, %v3849
        %vm3881 = vcmp.eq.f32.partialorder %v3880, 8.507059e+37
        %v3882 = vand.u32 %v3849, 2147483648
        %v3883 = vor.u32 1.1754944e-38, %v3882
        %v3884 = vsel %vm3881, %v3883, %v3879
        %v3885 = vmul.f32 1.0, %v3884
        %v3886 = vrcp.pop %v3850
        %v3887 = vmul.f32 %v3850, %v3886
        %v3888 = vsub.f32 1.0, %v3887
        %v3889 = vmul.f32 %v3886, %v3888
        %v3890 = vadd.f32 %v3886, %v3889
        %vm3891 = vweird.f32 %v3850
        %vm3892 = vweird.f32 %v3886
        %vm3893 = vmor %vm3891, %vm3892
        %v3894 = vsel %vm3893, %v3886, %v3890
        %v3895 = vand.u32 2147483647, %v3850
        %vm3896 = vcmp.eq.f32.partialorder %v3895, 8.507059e+37
        %v3897 = vand.u32 %v3850, 2147483648
        %v3898 = vor.u32 1.1754944e-38, %v3897
        %v3899 = vsel %vm3896, %v3898, %v3894
        %v3900 = vmul.f32 1.0, %v3899
        %v3901 = vrcp.pop %v3851
        %v3902 = vmul.f32 %v3851, %v3901
        %v3903 = vsub.f32 1.0, %v3902
        %v3904 = vmul.f32 %v3901, %v3903
        %v3905 = vadd.f32 %v3901, %v3904
        %vm3906 = vweird.f32 %v3851
        %vm3907 = vweird.f32 %v3901
        %vm3908 = vmor %vm3906, %vm3907
        %v3909 = vsel %vm3908, %v3901, %v3905
        %v3910 = vand.u32 2147483647, %v3851
        %vm3911 = vcmp.eq.f32.partialorder %v3910, 8.507059e+37
        %v3912 = vand.u32 %v3851, 2147483648
        %v3913 = vor.u32 1.1754944e-38, %v3912
        %v3914 = vsel %vm3911, %v3913, %v3909
        %v3915 = vmul.f32 1.0, %v3914
        %v3916 = vrcp.pop %v3852
        %v3917 = vmul.f32 %v3852, %v3916
        %v3918 = vsub.f32 1.0, %v3917
        %v3919 = vmul.f32 %v3916, %v3918
        %v3920 = vadd.f32 %v3916, %v3919
        %vm3921 = vweird.f32 %v3852
        %vm3922 = vweird.f32 %v3916
        %vm3923 = vmor %vm3921, %vm3922
        %v3924 = vsel %vm3923, %v3916, %v3920
        %v3925 = vand.u32 2147483647, %v3852
        %vm3926 = vcmp.eq.f32.partialorder %v3925, 8.507059e+37
        %v3927 = vand.u32 %v3852, 2147483648
        %v3928 = vor.u32 1.1754944e-38, %v3927
        %v3929 = vsel %vm3926, %v3928, %v3924
        %v3930 = vmul.f32 1.0, %v3929
        %v3931 = vrcp.pop %v3853
        %v3932 = vmul.f32 %v3853, %v3931
        %v3933 = vsub.f32 1.0, %v3932
        %v3934 = vmul.f32 %v3931, %v3933
        %v3935 = vadd.f32 %v3931, %v3934
        %vm3936 = vweird.f32 %v3853
        %vm3937 = vweird.f32 %v3931
        %vm3938 = vmor %vm3936, %vm3937
        %v3939 = vsel %vm3938, %v3931, %v3935
        %v3940 = vand.u32 2147483647, %v3853
        %vm3941 = vcmp.eq.f32.partialorder %v3940, 8.507059e+37
        %v3942 = vand.u32 %v3853, 2147483648
        %v3943 = vor.u32 1.1754944e-38, %v3942
        %v3944 = vsel %vm3941, %v3943, %v3939
        %v3945 = vmul.f32 1.0, %v3944
        %v3946 = vrcp.pop %v3854
        %v3947 = vmul.f32 %v3854, %v3946
        %v3948 = vsub.f32 1.0, %v3947
        %v3949 = vmul.f32 %v3946, %v3948
        %v3950 = vadd.f32 %v3946, %v3949
        %vm3951 = vweird.f32 %v3854
        %vm3952 = vweird.f32 %v3946
        %vm3953 = vmor %vm3951, %vm3952
        %v3954 = vsel %vm3953, %v3946, %v3950
        %v3955 = vand.u32 2147483647, %v3854
        %vm3956 = vcmp.eq.f32.partialorder %v3955, 8.507059e+37
        %v3957 = vand.u32 %v3854, 2147483648
        %v3958 = vor.u32 1.1754944e-38, %v3957
        %v3959 = vsel %vm3956, %v3958, %v3954
        %v3960 = vmul.f32 1.0, %v3959
        %v3961 = vrcp.pop %v3855
        %v3962 = vmul.f32 %v3855, %v3961
        %v3963 = vsub.f32 1.0, %v3962
        %v3964 = vmul.f32 %v3961, %v3963
        %v3965 = vadd.f32 %v3961, %v3964
        %vm3966 = vweird.f32 %v3855
        %vm3967 = vweird.f32 %v3961
        %vm3968 = vmor %vm3966, %vm3967
        %v3969 = vsel %vm3968, %v3961, %v3965
        %v3970 = vand.u32 2147483647, %v3855
        %vm3971 = vcmp.eq.f32.partialorder %v3970, 8.507059e+37
        %v3972 = vand.u32 %v3855, 2147483648
        %v3973 = vor.u32 1.1754944e-38, %v3972
        %v3974 = vsel %vm3971, %v3973, %v3969
        %v3975 = vmul.f32 1.0, %v3974
        %v3976 = vmul.f32 %v3870, 1.0614054
        %v3977 = vmul.f32 %v3885, 1.0614054
        %v3978 = vmul.f32 %v3900, 1.0614054
        %v3979 = vmul.f32 %v3915, 1.0614054
        %v3980 = vmul.f32 %v3930, 1.0614054
        %v3981 = vmul.f32 %v3945, 1.0614054
        %v3982 = vmul.f32 %v3960, 1.0614054
        %v3983 = vmul.f32 %v3975, 1.0614054
        %v3984 = vadd.f32 %v3976, -1.4531521
        %v3985 = vadd.f32 %v3977, -1.4531521
        %v3986 = vadd.f32 %v3978, -1.4531521
        %v3987 = vadd.f32 %v3979, -1.4531521
        %v3988 = vadd.f32 %v3980, -1.4531521
        %v3989 = vadd.f32 %v3981, -1.4531521
        %v3990 = vadd.f32 %v3982, -1.4531521
        %v3991 = vadd.f32 %v3983, -1.4531521
        %v3992 = vmul.f32 %v3870, %v3984
        %v3993 = vmul.f32 %v3885, %v3985
        %v3994 = vmul.f32 %v3900, %v3986
        %v3995 = vmul.f32 %v3915, %v3987
        %v3996 = vmul.f32 %v3930, %v3988
        %v3997 = vmul.f32 %v3945, %v3989
        %v3998 = vmul.f32 %v3960, %v3990
        %v3999 = vmul.f32 %v3975, %v3991
        %v4000 = vadd.f32 %v3992, 1.4214138
        %v4001 = vadd.f32 %v3993, 1.4214138
        %v4002 = vadd.f32 %v3994, 1.4214138
        %v4003 = vadd.f32 %v3995, 1.4214138
        %v4004 = vadd.f32 %v3996, 1.4214138
        %v4005 = vadd.f32 %v3997, 1.4214138
        %v4006 = vadd.f32 %v3998, 1.4214138
        %v4007 = vadd.f32 %v3999, 1.4214138
        %v4008 = vmul.f32 %v3870, %v4000
        %v4009 = vmul.f32 %v3885, %v4001
        %v4010 = vmul.f32 %v3900, %v4002
        %v4011 = vmul.f32 %v3915, %v4003
        %v4012 = vmul.f32 %v3930, %v4004
        %v4013 = vmul.f32 %v3945, %v4005
        %v4014 = vmul.f32 %v3960, %v4006
        %v4015 = vmul.f32 %v3975, %v4007
        %v4016 = vadd.f32 %v4008, -0.28449672
        %v4017 = vadd.f32 %v4009, -0.28449672
        %v4018 = vadd.f32 %v4010, -0.28449672
        %v4019 = vadd.f32 %v4011, -0.28449672
        %v4020 = vadd.f32 %v4012, -0.28449672
        %v4021 = vadd.f32 %v4013, -0.28449672
        %v4022 = vadd.f32 %v4014, -0.28449672
        %v4023 = vadd.f32 %v4015, -0.28449672
        %v4024 = vmul.f32 %v3870, %v4016
        %v4025 = vmul.f32 %v3885, %v4017
        %v4026 = vmul.f32 %v3900, %v4018
        %v4027 = vmul.f32 %v3915, %v4019
        %v4028 = vmul.f32 %v3930, %v4020
        %v4029 = vmul.f32 %v3945, %v4021
        %v4030 = vmul.f32 %v3960, %v4022
        %v4031 = vmul.f32 %v3975, %v4023
        %v4032 = vadd.f32 %v4024, 0.2548296
        %v4033 = vadd.f32 %v4025, 0.2548296
        %v4034 = vadd.f32 %v4026, 0.2548296
        %v4035 = vadd.f32 %v4027, 0.2548296
        %v4036 = vadd.f32 %v4028, 0.2548296
        %v4037 = vadd.f32 %v4029, 0.2548296
        %v4038 = vadd.f32 %v4030, 0.2548296
        %v4039 = vadd.f32 %v4031, 0.2548296
        %v4040 = vmul.f32 %v3870, %v4032
        %v4041 = vmul.f32 %v3885, %v4033
        %v4042 = vmul.f32 %v3900, %v4034
        %v4043 = vmul.f32 %v3915, %v4035
        %v4044 = vmul.f32 %v3930, %v4036
        %v4045 = vmul.f32 %v3945, %v4037
        %v4046 = vmul.f32 %v3960, %v4038
        %v4047 = vmul.f32 %v3975, %v4039
        %v4048 = vmul.f32 %v3832, %v3832
        %v4049 = vmul.f32 %v3833, %v3833
        %v4050 = vmul.f32 %v3834, %v3834
        %v4051 = vmul.f32 %v3835, %v3835
        %v4052 = vmul.f32 %v3836, %v3836
        %v4053 = vmul.f32 %v3837, %v3837
        %v4054 = vmul.f32 %v3838, %v3838
        %v4055 = vmul.f32 %v3839, %v3839
        %v4056 = vsub.f32 0.0, %v4048
        %v4057 = vsub.f32 0.0, %v4049
        %v4058 = vsub.f32 0.0, %v4050
        %v4059 = vsub.f32 0.0, %v4051
        %v4060 = vsub.f32 0.0, %v4052
        %v4061 = vsub.f32 0.0, %v4053
        %v4062 = vsub.f32 0.0, %v4054
        %v4063 = vsub.f32 0.0, %v4055
        %v4064 = vmul.f32 %v4056, 1.442695
        %v4065 = vpow.pop %v4064
        %v4066 = vmul.f32 %v4057, 1.442695
        %v4067 = vpow.pop %v4066
        %v4068 = vmul.f32 %v4058, 1.442695
        %v4069 = vpow.pop %v4068
        %v4070 = vmul.f32 %v4059, 1.442695
        %v4071 = vpow.pop %v4070
        %v4072 = vmul.f32 %v4060, 1.442695
        %v4073 = vpow.pop %v4072
        %v4074 = vmul.f32 %v4061, 1.442695
        %v4075 = vpow.pop %v4074
        %v4076 = vmul.f32 %v4062, 1.442695
        %v4077 = vpow.pop %v4076
        %v4078 = vmul.f32 %v4063, 1.442695
        %v4079 = vpow.pop %v4078
        %v4080 = vmul.f32 %v4040, %v4065
        %v4081 = vmul.f32 %v4041, %v4067
        %v4082 = vmul.f32 %v4042, %v4069
        %v4083 = vmul.f32 %v4043, %v4071
        %v4084 = vmul.f32 %v4044, %v4073
        %v4085 = vmul.f32 %v4045, %v4075
        %v4086 = vmul.f32 %v4046, %v4077
        %v4087 = vmul.f32 %v4047, %v4079
        %v4088 = vsub.f32 1.0, %v4080
        %v4089 = vsub.f32 1.0, %v4081
        %v4090 = vsub.f32 1.0, %v4082
        %v4091 = vsub.f32 1.0, %v4083
        %v4092 = vsub.f32 1.0, %v4084
        %v4093 = vsub.f32 1.0, %v4085
        %v4094 = vsub.f32 1.0, %v4086
        %v4095 = vsub.f32 1.0, %v4087
        %vm4096 = vcmp.lt.f32.partialorder %v3824, 0.0
        %vm4097 = vcmp.lt.f32.partialorder %v3825, 0.0
        %vm4098 = vcmp.lt.f32.partialorder %v3826, 0.0
        %vm4099 = vcmp.lt.f32.partialorder %v3827, 0.0
        %vm4100 = vcmp.lt.f32.partialorder %v3828, 0.0
        %vm4101 = vcmp.lt.f32.partialorder %v3829, 0.0
        %vm4102 = vcmp.lt.f32.partialorder %v3830, 0.0
        %vm4103 = vcmp.lt.f32.partialorder %v3831, 0.0
        %v4104 = vsub.f32 0.0, %v4088
        %v4105 = vsub.f32 0.0, %v4089
        %v4106 = vsub.f32 0.0, %v4090
        %v4107 = vsub.f32 0.0, %v4091
        %v4108 = vsub.f32 0.0, %v4092
        %v4109 = vsub.f32 0.0, %v4093
        %v4110 = vsub.f32 0.0, %v4094
        %v4111 = vsub.f32 0.0, %v4095
        %v4112 = vsel %vm4096, %v4104, %v4088
        %v4113 = vsel %vm4097, %v4105, %v4089
        %v4114 = vsel %vm4098, %v4106, %v4090
        %v4115 = vsel %vm4099, %v4107, %v4091
        %v4116 = vsel %vm4100, %v4108, %v4092
        %v4117 = vsel %vm4101, %v4109, %v4093
        %v4118 = vsel %vm4102, %v4110, %v4094
        %v4119 = vsel %vm4103, %v4111, %v4095
        %v4120 = vadd.f32 %v4112, 1.0
        %v4121 = vadd.f32 %v4113, 1.0
        %v4122 = vadd.f32 %v4114, 1.0
        %v4123 = vadd.f32 %v4115, 1.0
        %v4124 = vadd.f32 %v4116, 1.0
        %v4125 = vadd.f32 %v4117, 1.0
        %v4126 = vadd.f32 %v4118, 1.0
        %v4127 = vadd.f32 %v4119, 1.0
        %v4128 = vmul.f32 %v3816, %v4120
        %v4129 = vmul.f32 %v3817, %v4121
        %v4130 = vmul.f32 %v3818, %v4122
        %v4131 = vmul.f32 %v3819, %v4123
        %v4132 = vmul.f32 %v3820, %v4124
        %v4133 = vmul.f32 %v3821, %v4125
        %v4134 = vmul.f32 %v3822, %v4126
        %v4135 = vmul.f32 %v3823, %v4127
        %v4136 = vmul.f32 %v3576, %v4128
        %v4137 = vmul.f32 %v3599, %v4129
        %v4138 = vmul.f32 %v3622, %v4130
        %v4139 = vmul.f32 %v3645, %v4131
        %v4140 = vmul.f32 %v3579, %v4132
        %v4141 = vmul.f32 %v3602, %v4133
        %v4142 = vmul.f32 %v3625, %v4134
        %v4143 = vmul.f32 %v3648, %v4135
        %v4144 = vld [vmem:[%s22] sm:$0xff]
        %v4145 = vld [vmem:[%s22 + $0x8] sm:$0xff]
        %v4146 = vld [vmem:[%s22 + $0x10] sm:$0xff]
        %v4147 = vld [vmem:[%s22 + $0x18] sm:$0xff]
        %v4148 = vld [vmem:[%s22 + $0x20] sm:$0xff]
        %v4149 = vld [vmem:[%s22 + $0x28] sm:$0xff]
        %v4150 = vld [vmem:[%s22 + $0x30] sm:$0xff]
        %v4151 = vld [vmem:[%s22 + $0x38] sm:$0xff]
        %v4152 = vld [vmem:[%s22 + $0x40] sm:$0xff]
        %v4153 = vld [vmem:[%s22 + $0x48] sm:$0xff]
        %v4154 = vld [vmem:[%s22 + $0x50] sm:$0xff]
        %v4155 = vld [vmem:[%s22 + $0x58] sm:$0xff]
        %v4156 = vld [vmem:[%s22 + $0x60] sm:$0xff]
        %v4157 = vld [vmem:[%s22 + $0x68] sm:$0xff]
        %v4158 = vld [vmem:[%s22 + $0x70] sm:$0xff]
        %v4159 = vld [vmem:[%s22 + $0x78] sm:$0xff]
        %v4160 = vld [vmem:[%s22 + $0x80] sm:$0xff]
        %v4161 = vld [vmem:[%s22 + $0x88] sm:$0xff]
        %v4162 = vld [vmem:[%s22 + $0x90] sm:$0xff]
        %v4163 = vld [vmem:[%s22 + $0x98] sm:$0xff]
        %v4164 = vld [vmem:[%s22 + $0xa0] sm:$0xff]
        %v4165 = vld [vmem:[%s22 + $0xa8] sm:$0xff]
        %v4166 = vld [vmem:[%s22 + $0xb0] sm:$0xff]
        %v4167 = vld [vmem:[%s22 + $0xb8] sm:$0xff]
        %v4168 = vld [vmem:[%s22 + $0xc0] sm:$0xff]
        %v4169 = vld [vmem:[%s22 + $0xc8] sm:$0xff]
        %v4170 = vld [vmem:[%s22 + $0xd0] sm:$0xff]
        %v4171 = vld [vmem:[%s22 + $0xd8] sm:$0xff]
        %v4172 = vld [vmem:[%s22 + $0xe0] sm:$0xff]
        %v4173 = vld [vmem:[%s22 + $0xe8] sm:$0xff]
        %v4174 = vld [vmem:[%s22 + $0xf0] sm:$0xff]
        %v4175 = vld [vmem:[%s22 + $0xf8] sm:$0xff]
        %v4176 = vld [vmem:[%s22 + $0x100] sm:$0xff]
        %v4177 = vld [vmem:[%s22 + $0x108] sm:$0xff]
        %v4178 = vld [vmem:[%s22 + $0x110] sm:$0xff]
        %v4179 = vld [vmem:[%s22 + $0x118] sm:$0xff]
        %v4180 = vld [vmem:[%s22 + $0x120] sm:$0xff]
        %v4181 = vld [vmem:[%s22 + $0x128] sm:$0xff]
        %v4182 = vld [vmem:[%s22 + $0x130] sm:$0xff]
        %v4183 = vld [vmem:[%s22 + $0x138] sm:$0xff]
        %v4184 = vld [vmem:[%s22 + $0x140] sm:$0xff]
        %v4185 = vld [vmem:[%s22 + $0x148] sm:$0xff]
        %v4186 = vld [vmem:[%s22 + $0x150] sm:$0xff]
        %v4187 = vld [vmem:[%s22 + $0x158] sm:$0xff]
        %v4188 = vld [vmem:[%s22 + $0x160] sm:$0xff]
        %v4189 = vld [vmem:[%s22 + $0x168] sm:$0xff]
        %v4190 = vld [vmem:[%s22 + $0x170] sm:$0xff]
        %v4191 = vld [vmem:[%s22 + $0x178] sm:$0xff]
        %v4192 = vld [vmem:[%s22 + $0x180] sm:$0xff]
        %v4193 = vld [vmem:[%s22 + $0x188] sm:$0xff]
        %v4194 = vld [vmem:[%s22 + $0x190] sm:$0xff]
        %v4195 = vld [vmem:[%s22 + $0x198] sm:$0xff]
        %v4196 = vld [vmem:[%s22 + $0x1a0] sm:$0xff]
        %v4197 = vld [vmem:[%s22 + $0x1a8] sm:$0xff]
        %v4198 = vld [vmem:[%s22 + $0x1b0] sm:$0xff]
        %v4199 = vld [vmem:[%s22 + $0x1b8] sm:$0xff]
        %v4200 = vld [vmem:[%s22 + $0x1c0] sm:$0xff]
        %v4201 = vld [vmem:[%s22 + $0x1c8] sm:$0xff]
        %v4202 = vld [vmem:[%s22 + $0x1d0] sm:$0xff]
        %v4203 = vld [vmem:[%s22 + $0x1d8] sm:$0xff]
        %v4204 = vld [vmem:[%s22 + $0x1e0] sm:$0xff]
        %v4205 = vld [vmem:[%s22 + $0x1e8] sm:$0xff]
        %v4206 = vld [vmem:[%s22 + $0x1f0] sm:$0xff]
        %v4207 = vld [vmem:[%s22 + $0x1f8] sm:$0xff]
        %v4208 = vld [vmem:[%s23] sm:$0x1]
        %v4210 = vperm.slane %v4208, 0
        %4212 = vmatpush.msra.mxu0 %v4159
        %4213 = vmatpush.msra.mxu0 %v4158
        %4214 = vmatpush.msra.mxu0 %v4157
        %4215 = vmatpush.msra.mxu0 %v4156
        %4216 = vmatpush.msra.mxu0 %v4155
        %4217 = vmatpush.msra.mxu0 %v4154
        %4218 = vmatpush.msra.mxu0 %v4153
        %4219 = vmatpush.msra.mxu0 %v4152
        %4220 = vmatpush.msra.mxu0 %v4151
        %4221 = vmatpush.msra.mxu0 %v4150
        %4222 = vmatpush.msra.mxu0 %v4149
        %4223 = vmatpush.msra.mxu0 %v4148
        %4224 = vmatpush.msra.mxu0 %v4147
        %4225 = vmatpush.msra.mxu0 %v4146
        %4226 = vmatpush.msra.mxu0 %v4145
        %4227 = vmatpush.msra.mxu0 %v4144
        %4228 = vmatmul.f32.gmra.mxu0 %v4136
        %v4229 = vpop.f32.mrf.mxu0
        %v4230 = vadd.f32 %v4210, %v4229
        %4231 = vmatmul.f32.gmra.mxu0 %v4140
        %v4232 = vpop.f32.mrf.mxu0
        %v4233 = vadd.f32 %v4210, %v4232
        %4234 = vdwg.mxu0
        %4235 = vmatpush.msra.mxu0 %v4175
        %4236 = vmatpush.msra.mxu0 %v4174
        %4237 = vmatpush.msra.mxu0 %v4173
        %4238 = vmatpush.msra.mxu0 %v4172
        %4239 = vmatpush.msra.mxu0 %v4171
        %4240 = vmatpush.msra.mxu0 %v4170
        %4241 = vmatpush.msra.mxu0 %v4169
        %4242 = vmatpush.msra.mxu0 %v4168
        %4243 = vmatpush.msra.mxu0 %v4167
        %4244 = vmatpush.msra.mxu0 %v4166
        %4245 = vmatpush.msra.mxu0 %v4165
        %4246 = vmatpush.msra.mxu0 %v4164
        %4247 = vmatpush.msra.mxu0 %v4163
        %4248 = vmatpush.msra.mxu0 %v4162
        %4249 = vmatpush.msra.mxu0 %v4161
        %4250 = vmatpush.msra.mxu0 %v4160
        %4251 = vmatmul.f32.gmra.mxu0 %v4137
        %v4252 = vpop.f32.mrf.mxu0
        %v4253 = vadd.f32 %v4230, %v4252
        %4254 = vmatmul.f32.gmra.mxu0 %v4141
        %v4255 = vpop.f32.mrf.mxu0
        %v4256 = vadd.f32 %v4233, %v4255
        %4257 = vdwg.mxu0
        %4258 = vmatpush.msra.mxu0 %v4191
        %4259 = vmatpush.msra.mxu0 %v4190
        %4260 = vmatpush.msra.mxu0 %v4189
        %4261 = vmatpush.msra.mxu0 %v4188
        %4262 = vmatpush.msra.mxu0 %v4187
        %4263 = vmatpush.msra.mxu0 %v4186
        %4264 = vmatpush.msra.mxu0 %v4185
        %4265 = vmatpush.msra.mxu0 %v4184
        %4266 = vmatpush.msra.mxu0 %v4183
        %4267 = vmatpush.msra.mxu0 %v4182
        %4268 = vmatpush.msra.mxu0 %v4181
        %4269 = vmatpush.msra.mxu0 %v4180
        %4270 = vmatpush.msra.mxu0 %v4179
        %4271 = vmatpush.msra.mxu0 %v4178
        %4272 = vmatpush.msra.mxu0 %v4177
        %4273 = vmatpush.msra.mxu0 %v4176
        %4274 = vmatmul.f32.gmra.mxu0 %v4138
        %v4275 = vpop.f32.mrf.mxu0
        %v4276 = vadd.f32 %v4253, %v4275
        %4277 = vmatmul.f32.gmra.mxu0 %v4142
        %v4278 = vpop.f32.mrf.mxu0
        %v4279 = vadd.f32 %v4256, %v4278
        %4280 = vdwg.mxu0
        %4281 = vmatpush.msra.mxu0 %v4207
        %4282 = vmatpush.msra.mxu0 %v4206
        %4283 = vmatpush.msra.mxu0 %v4205
        %4284 = vmatpush.msra.mxu0 %v4204
        %4285 = vmatpush.msra.mxu0 %v4203
        %4286 = vmatpush.msra.mxu0 %v4202
        %4287 = vmatpush.msra.mxu0 %v4201
        %4288 = vmatpush.msra.mxu0 %v4200
        %4289 = vmatpush.msra.mxu0 %v4199
        %4290 = vmatpush.msra.mxu0 %v4198
        %4291 = vmatpush.msra.mxu0 %v4197
        %4292 = vmatpush.msra.mxu0 %v4196
        %4293 = vmatpush.msra.mxu0 %v4195
        %4294 = vmatpush.msra.mxu0 %v4194
        %4295 = vmatpush.msra.mxu0 %v4193
        %4296 = vmatpush.msra.mxu0 %v4192
        %4297 = vmatmul.f32.gmra.mxu0 %v4139
        %v4298 = vpop.f32.mrf.mxu0
        %v4299 = vadd.f32 %v4276, %v4298
        %4300 = vmatmul.f32.gmra.mxu0 %v4143
        %v4301 = vpop.f32.mrf.mxu0
        %v4302 = vadd.f32 %v4279, %v4301
        %4303 = vdwg.mxu0
        %v4304 = vadd.f32 %v4299, %v3430
        %v4305 = vadd.f32 %v4302, %v3431
        %4306 = vst [vmem:[%s747] sm:$0xff] %v4304
        %4307 = vst [vmem:[%s747 + $0x8] sm:$0xff] %v4305
        %s4308 = sand.u32 %s560, 1
        %s4309 = scalar_lea.sflag [#allocation3], %s4308
        %s4310 = sand.u32 %s560, 1
        %s4311 = smul.addr %s4310, 16
        %s4312 = scalar_lea.vmem [#allocation2], %s4311
        // Predicated region
        $region117: #{vecset_encoder_forward.1} parent=115 // pred_check
          %p4313 = pneg %p570
        $region118: #{vecset_encoder_forward.1} parent=115 // pred_check_branch
          %4315 = sbr.rel (%p4313) target = $region120
        $region119: #{vecset_encoder_forward.1} parent=115 // pred_region
          %s4316 = smul.u32 2, %s38
          %4318 = vsyncadd %s4309, 0
          %s4319 = smul.addr %s4316, 8
          %s4320 = scalar_lea.hbm %s24, %s4319
          %s4321 = sshll.u32 %s4312, 4
          %s4322 = int_to_ptr.vmem [resolvable:$true] %s4321
          %s4323 = sshll.u32 %s4320, 4
          %s4324 = int_to_ptr.hbm [resolvable:$true] %s4323
          %4329 = dma.vmem_to_hbm [thread:$0]  %s4322, 256, %s4324, %s4309, 128, 128, 8
        $region120: #{vecset_encoder_forward.1} parent=115 // pred_fallthru
          _
      $region116: #{vecset_encoder_forward.1} parent=5 // pred_fallthru
        _
      %p4330 = scmp.le.s32.totalorder 2, %s33
      // Predicated region
      $region121: #{vecset_encoder_forward.1} parent=5 // pred_check
        %p4331 = pneg %p4330
      $region122: #{vecset_encoder_forward.1} parent=5 // pred_check_branch
        %4333 = sbr.rel (%p4331) target = $region124
      $region123: #{vecset_encoder_forward.1} parent=5 // pred_region
        %s4334 = ssub.s32 %s33, 2
        // Predicated region
        $region125: #{vecset_encoder_forward.1} parent=123 // pred_check
          %p4335 = pneg %p576
        $region126: #{vecset_encoder_forward.1} parent=123 // pred_check_branch
          %4337 = sbr.rel (%p4335) target = $region128
        $region127: #{vecset_encoder_forward.1} parent=123 // pred_region
          %s4338 = sand.u32 %s561, 1
          %s4339 = scalar_lea.sflag [#allocation3], %s4338
          %s4340 = sand.u32 %s561, 1
          %s4341 = smul.addr %s4340, 16
          %s4342 = scalar_lea.vmem [#allocation2], %s4341
          %4344 = dma.done %s4339, 256
        $region128: #{vecset_encoder_forward.1} parent=123 // pred_fallthru
          _
      $region124: #{vecset_encoder_forward.1} parent=5 // pred_fallthru
        _
    $region6: #{vecset_encoder_forward.1} parent=1 // loop_footer
      %s37 = sadd.s32 1, %s33
    $region7: #{vecset_encoder_forward.1} parent=1 // loop_footer_branch
      %32 = sbr.rel target = $region3
    $region8: #{vecset_encoder_forward.1} parent=1 // loop_exit
      _
    %4345 = vsyncpa [#allocation3], 1
    %s4346 = scalar_lea.sflag [#allocation3], 1
    %4347 = vsyncpa %s4346, 1

</llo_original>
